<compile_context>
chip_gen: v7x
topology: tpu7x:2x2x1
jax: 0.10.0
libtpu: 0.0.40
codegen_flags: <defaults>
</compile_context>

<pallas_src>
import numpy as np
import jax
import jax.numpy as jnp
from jax import lax
from jax.experimental import pallas as pl
from jax.experimental.pallas import tpu as pltpu

H0 = W0 = 28            # input spatial size implied by Linear(16*14*14, 14)
HPAD, WPAD = 34, 32     # padded input slab (conv pad + alignment rows/cols, zeros)
C1 = C2 = 16
H1 = W1 = 14            # post-pool spatial size
NCLS = 14
NPAD = 128              # lane-padded classifier width
BN_EPS = 1e-5
BLOCK_B = 8             # images per grid step

LC1 = 16 * C1           # 256 lanes: (w_pad(16), c1)  pooled conv1 map incl. zero-pad cols
LC2 = W1 * C2           # 224 lanes: (w_out(14), c2)  conv2 / feature lanes


# ---------------------------------------------------------------------------
# Fused kernel: conv1+BN+ReLU+pool -> conv2+BN+ReLU -> Linear, for BLOCK_B images
# ---------------------------------------------------------------------------
def fused_forward_kernel(xp_ref, w1m_ref, sb1_ref, w2m_ref, sb2_ref, wfc_ref,
                         fcb_ref, y_ref, out_ref, y1pad_ref):
    # xp_ref   : [Bc, 34, 32]    zero-padded inputs (rows/cols 1..28 hold the image)
    # w1m_ref  : [3, 2, 32, 256] banded conv1 mats [dy, w_parity]; cols=(w_pad, c1)
    # sb1_ref  : [2, 256]        folded BN1 scale/bias per lane (0 on pad columns)
    # w2m_ref  : [3, 256, 224]   banded conv2 mats [dy]; rows=(w_pad, c1), cols=(w, c2)
    # sb2_ref  : [2, 224]        folded BN2 scale/bias per lane
    # wfc_ref  : [14, 224, 128]  classifier weight [h, (w, c2), class_padded]
    # fcb_ref  : [1, 128]        classifier bias (lane padded)
    # y_ref    : [Bc, 14, 224]   feature map output, rows=h, lanes=(w, c2)
    # out_ref  : [Bc, 128]       logits output (lane padded)
    # y1pad_ref: [Bc, 18, 256]   scratch: pooled conv1 map, zero-padded for conv2
    Bc = xp_ref.shape[0]
    f32 = jnp.float32

    # --- conv1 + BN + ReLU + 2x2 max-pool (banded matmuls, pooled via 4 phase maxes)
    y1pad_ref[...] = jnp.zeros_like(y1pad_ref)
    for hp in range(2):                      # pooling-window row parity
        for wp in range(2):                  # pooling-window col parity
            acc = jnp.zeros((Bc * 16, LC1), f32)
            for dy in range(3):
                rows = xp_ref[:, pl.ds(hp + dy, 16, stride=2), :]      # [Bc,16,32]
                acc = acc + jnp.dot(rows.reshape(Bc * 16, WPAD),
                                    w1m_ref[dy, wp],
                                    preferred_element_type=f32)
            z = jnp.maximum(acc * sb1_ref[0:1, :] + sb1_ref[1:2, :], 0.0)
            z = z.reshape(Bc, 16, LC1)[:, 0:14, :]                     # drop junk rows
            cur = y1pad_ref[:, pl.ds(1, 14), :]
            y1pad_ref[:, pl.ds(1, 14), :] = jnp.maximum(cur, z)        # ReLU >= 0

    # --- conv2 + BN + ReLU (banded matmuls over the zero-padded pooled map)
    z2 = jnp.zeros((Bc * 16, LC2), f32)
    for dy in range(3):
        rows = y1pad_ref[:, pl.ds(dy, 16), :]                          # [Bc,16,256]
        z2 = z2 + jnp.dot(rows.reshape(Bc * 16, LC1), w2m_ref[dy],
                          preferred_element_type=f32)
    y2 = jnp.maximum(z2 * sb2_ref[0:1, :] + sb2_ref[1:2, :], 0.0)      # [Bc*16, 224]
    y_ref[...] = y2.reshape(Bc, 16, LC2)[:, 0:14, :]                   # NHWC features

    # --- classifier Linear(3136 -> 14), accumulated per feature row h
    acc = jnp.zeros((Bc, NPAD), f32)
    for h in range(H1):
        acc = acc + jnp.dot(y_ref[:, h, :], wfc_ref[h],
                            preferred_element_type=f32)
    out_ref[...] = acc + fcb_ref[...]


# ---------------------------------------------------------------------------
# Parameter init (deterministic, synthetic) and weight preprocessing
# ---------------------------------------------------------------------------
def init_params(key):
    ks = jax.random.split(key, 14)
    p = {}
    p["w1"] = 0.2 * jax.random.normal(ks[0], (3, 3, 1, C1), jnp.float32)      # HWIO
    p["b1"] = 0.1 * jax.random.normal(ks[1], (C1,), jnp.float32)
    p["bn1_gamma"] = 1.0 + 0.1 * jax.random.normal(ks[2], (C1,), jnp.float32)
    p["bn1_beta"] = 0.1 * jax.random.normal(ks[3], (C1,), jnp.float32)
    p["bn1_mean"] = 0.1 * jax.random.normal(ks[4], (C1,), jnp.float32)
    p["bn1_var"] = 0.5 + jax.random.uniform(ks[5], (C1,), jnp.float32)
    p["w2"] = 0.1 * jax.random.normal(ks[6], (3, 3, C1, C2), jnp.float32)     # HWIO
    p["b2"] = 0.1 * jax.random.normal(ks[7], (C2,), jnp.float32)
    p["bn2_gamma"] = 1.0 + 0.1 * jax.random.normal(ks[8], (C2,), jnp.float32)
    p["bn2_beta"] = 0.1 * jax.random.normal(ks[9], (C2,), jnp.float32)
    p["bn2_mean"] = 0.1 * jax.random.normal(ks[10], (C2,), jnp.float32)
    p["bn2_var"] = 0.5 + jax.random.uniform(ks[11], (C2,), jnp.float32)
    p["fc_w"] = 0.02 * jax.random.normal(ks[12], (NCLS, C2 * H1 * W1), jnp.float32)
    p["fc_b"] = 0.01 * jax.random.normal(ks[13], (NCLS,), jnp.float32)
    return p


def fold_bn(gamma, beta, mean, var, conv_bias):
    scale = gamma / jnp.sqrt(var + BN_EPS)
    shift = beta + scale * (conv_bias - mean)
    return scale, shift


def build_conv1_mats(w1_hwio):
    """conv1 HWIO weight [3,3,1,16] -> banded matrices [3(dy), 2(w_parity), 32, 256].

    Row j = padded input column.  Column (w_pad, c): w_pad in 1..14 is pooled output
    column (conv output w = 2*(w_pad-1)+parity), w_pad 0/15 are zero (conv2 padding)."""
    w = w1_hwio[:, :, 0, :]                                   # [3(dy), 3(dx), 16]
    j = jnp.arange(WPAD)[:, None]                             # [32, 1]
    wpad = jnp.arange(16)[None, :]                            # [1, 16]
    mats = []
    for dy in range(3):
        per_par = []
        for wp in range(2):
            dx = j - (2 * (wpad - 1) + wp)                    # [32, 16]
            valid = (wpad >= 1) & (wpad <= 14) & (dx >= 0) & (dx <= 2)
            dxc = jnp.clip(dx, 0, 2)
            m = jnp.where(valid[:, :, None], w[dy][dxc], 0.0)  # [32, 16, 16]
            per_par.append(m.reshape(WPAD, LC1))
        mats.append(jnp.stack(per_par, axis=0))
    return jnp.stack(mats, axis=0)                            # [3, 2, 32, 256]


def build_conv2_mats(w2_hwio):
    """conv2 HWIO weight [3,3,16,16] -> banded matrices [3(dy), 256, 224]."""
    wpad = jnp.arange(16)[:, None]                            # padded input column
    wout = jnp.arange(W1)[None, :]                            # output column
    dx = wpad - wout
    valid = (dx >= 0) & (dx <= 2)
    dxc = jnp.clip(dx, 0, 2)
    mats = []
    for dy in range(3):
        t = jnp.where(valid[:, :, None, None], w2_hwio[dy][dxc], 0.0)  # (wpad,wout,ci,co)
        t = jnp.transpose(t, (0, 2, 1, 3))                             # (wpad,ci,wout,co)
        mats.append(t.reshape(LC1, LC2))
    return jnp.stack(mats, axis=0)                            # [3, 256, 224]


def build_fc_weight(fc_w, fc_b):
    """Linear(3136,14) -> [14(h), 224(w,c), 128], honouring PyTorch NCHW .view order."""
    t = fc_w.reshape(NCLS, C2, H1, W1)                        # (n, c, h, w)
    t = jnp.transpose(t, (2, 3, 1, 0))                        # (h, w, c, n)
    t = t.reshape(H1, LC2, NCLS)
    wfc = jnp.pad(t, ((0, 0), (0, 0), (0, NPAD - NCLS)))
    fcb = jnp.pad(fc_b, (0, NPAD - NCLS))[None, :]
    return wfc, fcb


# ---------------------------------------------------------------------------
# Forward pass (single fused Pallas call)
# ---------------------------------------------------------------------------
def forward_pallas(x_nchw, p, block_b=BLOCK_B):
    B = x_nchw.shape[0]
    nblk = -(-B // block_b)
    Bp = nblk * block_b

    # channel-squeezed, zero-padded input slab (lane-dense DMA)
    x = x_nchw[:, 0, :, :].astype(jnp.float32)                      # [B, 28, 28]
    xp = jnp.pad(x, ((0, Bp - B), (1, HPAD - H0 - 1), (1, WPAD - W0 - 1)))

    s1, t1 = fold_bn(p["bn1_gamma"], p["bn1_beta"], p["bn1_mean"], p["bn1_var"], p["b1"])
    s2, t2 = fold_bn(p["bn2_gamma"], p["bn2_beta"], p["bn2_mean"], p["bn2_var"], p["b2"])
    z16 = jnp.zeros((C1,), jnp.float32)
    sb1 = jnp.stack([jnp.concatenate([z16, jnp.tile(s1, W1), z16]),
                     jnp.concatenate([z16, jnp.tile(t1, W1), z16])], axis=0)   # [2, 256]
    sb2 = jnp.stack([jnp.tile(s2, W1), jnp.tile(t2, W1)], axis=0)              # [2, 224]
    w1m = build_conv1_mats(p["w1"])                                            # [3,2,32,256]
    w2m = build_conv2_mats(p["w2"])                                            # [3,256,224]
    wfc, fcb = build_fc_weight(p["fc_w"], p["fc_b"])                           # [14,224,128],[1,128]

    y_raw, logits = pl.pallas_call(
        fused_forward_kernel,
        out_shape=(jax.ShapeDtypeStruct((Bp, H1, LC2), jnp.float32),
                   jax.ShapeDtypeStruct((Bp, NPAD), jnp.float32)),
        grid=(nblk,),
        in_specs=[
            pl.BlockSpec((block_b, HPAD, WPAD), lambda i: (i, 0, 0)),
            pl.BlockSpec((3, 2, WPAD, LC1), lambda i: (0, 0, 0, 0)),
            pl.BlockSpec((2, LC1), lambda i: (0, 0)),
            pl.BlockSpec((3, LC1, LC2), lambda i: (0, 0, 0)),
            pl.BlockSpec((2, LC2), lambda i: (0, 0)),
            pl.BlockSpec((H1, LC2, NPAD), lambda i: (0, 0, 0)),
            pl.BlockSpec((1, NPAD), lambda i: (0, 0)),
        ],
        out_specs=(
            pl.BlockSpec((block_b, H1, LC2), lambda i: (i, 0, 0)),
            pl.BlockSpec((block_b, NPAD), lambda i: (i, 0)),
        ),
        scratch_shapes=[pltpu.VMEM((block_b, 18, LC1), jnp.float32)],
        compiler_params=pltpu.CompilerParams(dimension_semantics=("parallel",)),
    )(xp, w1m, sb1, w2m, sb2, wfc, fcb)

    y_nhwc = y_raw[:B].reshape(B, H1, W1, C2)
    y_nchw = jnp.transpose(y_nhwc, (0, 3, 1, 2))                # PyTorch feature map
    out = logits[:B, :NCLS]
    return y_nchw, out


# ---------------------------------------------------------------------------
# Pure-JAX reference (independent: lax.conv / reduce_window) for validation
# ---------------------------------------------------------------------------
def forward_reference(x_nchw, p):
    x = jnp.transpose(x_nchw, (0, 2, 3, 1)).astype(jnp.float32)

    def conv(h, w, b):
        y = lax.conv_general_dilated(h, w, (1, 1), ((1, 1), (1, 1)),
                                     dimension_numbers=("NHWC", "HWIO", "NHWC"),
                                     precision=lax.Precision.HIGHEST)
        return y + b[None, None, None, :]

    def bn(h, g, bt, m, v):
        return g * (h - m) / jnp.sqrt(v + BN_EPS) + bt

    h = jnp.maximum(bn(conv(x, p["w1"], p["b1"]),
                       p["bn1_gamma"], p["bn1_beta"], p["bn1_mean"], p["bn1_var"]), 0.0)
    h = lax.reduce_window(h, -jnp.inf, lax.max, (1, 2, 2, 1), (1, 2, 2, 1), "VALID")
    h = jnp.maximum(bn(conv(h, p["w2"], p["b2"]),
                       p["bn2_gamma"], p["bn2_beta"], p["bn2_mean"], p["bn2_var"]), 0.0)
    y_nchw = jnp.transpose(h, (0, 3, 1, 2))
    flat = y_nchw.reshape(x.shape[0], -1)
    out = jnp.dot(flat, p["fc_w"].T, precision=lax.Precision.HIGHEST) + p["fc_b"][None, :]
    return y_nchw, out


if __name__ == "__main__":
    key = jax.random.PRNGKey(0)
    k_x, k_p = jax.random.split(key)
    B = 10                                                   # exercises 2 grid steps + batch padding
    x = jax.random.normal(k_x, (B, 1, H0, W0), jnp.float32)  # NCHW, like PyTorch
    params = init_params(k_p)

    y, out = jax.jit(forward_pallas)(x, params)
    y = jax.block_until_ready(y)
    out = jax.block_until_ready(out)

    y_want, out_want = forward_reference(x, params)
    # tolerance reflects default (bf16 MXU) matmul precision in the kernel vs f32 reference
    np.testing.assert_allclose(np.asarray(y), np.asarray(y_want), rtol=2e-2, atol=2e-2)
    np.testing.assert_allclose(np.asarray(out), np.asarray(out_want), rtol=2e-2, atol=2e-2)
    assert y.shape == (B, C2, H1, W1) and out.shape == (B, NCLS)

    print("KERNEL_OK")
</pallas_src>

<mosaic_0001>
module attributes {stable_mosaic.version = 11 : i64} {
  func.func @fused_forward_kernel(%arg0: i32, %arg1: memref<8x34x32xf32, #tpu.memory_space<vmem>>, %arg2: memref<3x2x32x256xf32, #tpu.memory_space<vmem>>, %arg3: memref<2x256xf32, #tpu.memory_space<vmem>>, %arg4: memref<3x256x224xf32, #tpu.memory_space<vmem>>, %arg5: memref<2x224xf32, #tpu.memory_space<vmem>>, %arg6: memref<14x224x128xf32, #tpu.memory_space<vmem>>, %arg7: memref<1x128xf32, #tpu.memory_space<vmem>>, %arg8: memref<8x14x224xf32, #tpu.memory_space<vmem>>, %arg9: memref<8x128xf32, #tpu.memory_space<vmem>>, %arg10: memref<8x18x256xf32, #tpu.memory_space<vmem>>) attributes {dimension_semantics = [#tpu.dimension_semantics<parallel>], iteration_bounds = array<i64: 2>, scalar_prefetch = 0 : i64, scratch_operands = 1 : i64, tpu.core_type = #tpu.core_type<tc>, window_params = [{transform_indices = @transform_0, window_bounds = array<i64: 8, 34, 32>}, {pipeline_mode = #tpu.pipeline_mode<synchronous>, transform_indices = @transform_1, window_bounds = array<i64: 3, 2, 32, 256>}, {pipeline_mode = #tpu.pipeline_mode<synchronous>, transform_indices = @transform_2, window_bounds = array<i64: 2, 256>}, {pipeline_mode = #tpu.pipeline_mode<synchronous>, transform_indices = @transform_3, window_bounds = array<i64: 3, 256, 224>}, {pipeline_mode = #tpu.pipeline_mode<synchronous>, transform_indices = @transform_4, window_bounds = array<i64: 2, 224>}, {pipeline_mode = #tpu.pipeline_mode<synchronous>, transform_indices = @transform_5, window_bounds = array<i64: 14, 224, 128>}, {pipeline_mode = #tpu.pipeline_mode<synchronous>, transform_indices = @transform_6, window_bounds = array<i64: 1, 128>}, {transform_indices = @transform_7, window_bounds = array<i64: 8, 14, 224>}, {transform_indices = @transform_8, window_bounds = array<i64: 8, 128>}]} {
    %cst = arith.constant 0.000000e+00 : f32
    %0 = vector.broadcast %cst : f32 to vector<8x18x256xf32>
    %c0 = arith.constant 0 : index
    %c0_0 = arith.constant 0 : index
    %c0_1 = arith.constant 0 : index
    %1 = vector.load %arg10[%c0, %c0_0, %c0_1] : memref<8x18x256xf32, #tpu.memory_space<vmem>>, vector<8x18x256xf32>
    tpu.vector_store %arg10[%c0, %c0_0, %c0_1], %0 {strides = array<i32>} : memref<8x18x256xf32, #tpu.memory_space<vmem>>, vector<8x18x256xf32>,
    %cst_2 = arith.constant 0.000000e+00 : f32
    %2 = vector.broadcast %cst_2 : f32 to vector<128x256xf32>
    %c0_3 = arith.constant 0 : index
    %c0_4 = arith.constant 0 : index
    %c0_5 = arith.constant 0 : index
    %3 = tpu.strided_load %arg1[%c0_3, %c0_4, %c0_5] {strides = array<i32: 1, 2, 1>} : memref<8x34x32xf32, #tpu.memory_space<vmem>>, vector<8x16x32xf32>
    %4 = vector.shape_cast %3 : vector<8x16x32xf32> to vector<128x32xf32>
    %c0_6 = arith.constant 0 : index
    %c0_7 = arith.constant 0 : index
    %c0_8 = arith.constant 0 : index
    %c0_9 = arith.constant 0 : index
    %5 = vector.load %arg2[%c0_6, %c0_7, %c0_8, %c0_9] : memref<3x2x32x256xf32, #tpu.memory_space<vmem>>, vector<1x1x32x256xf32>
    %6 = vector.shape_cast %5 : vector<1x1x32x256xf32> to vector<32x256xf32>
    %cst_10 = arith.constant dense<0.000000e+00> : vector<128x256xf32>
    %7 = tpu.matmul %4, %6, %cst_10 {dimension_numbers = #tpu.dot_dimension_numbers<[1], [0], [0], [1], [0, 0, 1, 1], [], []>} : vector<128x32xf32>, vector<32x256xf32>, vector<128x256xf32> -> vector<128x256xf32>
    %8 = arith.addf %2, %7 : vector<128x256xf32>
    %c0_11 = arith.constant 0 : index
    %c1 = arith.constant 1 : index
    %c0_12 = arith.constant 0 : index
    %9 = tpu.strided_load %arg1[%c0_11, %c1, %c0_12] {strides = array<i32: 1, 2, 1>} : memref<8x34x32xf32, #tpu.memory_space<vmem>>, vector<8x16x32xf32>
    %10 = vector.shape_cast %9 : vector<8x16x32xf32> to vector<128x32xf32>
    %c1_13 = arith.constant 1 : index
    %c0_14 = arith.constant 0 : index
    %c0_15 = arith.constant 0 : index
    %c0_16 = arith.constant 0 : index
    %11 = vector.load %arg2[%c1_13, %c0_14, %c0_15, %c0_16] : memref<3x2x32x256xf32, #tpu.memory_space<vmem>>, vector<1x1x32x256xf32>
    %12 = vector.shape_cast %11 : vector<1x1x32x256xf32> to vector<32x256xf32>
    %cst_17 = arith.constant dense<0.000000e+00> : vector<128x256xf32>
    %13 = tpu.matmul %10, %12, %cst_17 {dimension_numbers = #tpu.dot_dimension_numbers<[1], [0], [0], [1], [0, 0, 1, 1], [], []>} : vector<128x32xf32>, vector<32x256xf32>, vector<128x256xf32> -> vector<128x256xf32>
    %14 = arith.addf %8, %13 : vector<128x256xf32>
    %c0_18 = arith.constant 0 : index
    %c2 = arith.constant 2 : index
    %c0_19 = arith.constant 0 : index
    %15 = tpu.strided_load %arg1[%c0_18, %c2, %c0_19] {strides = array<i32: 1, 2, 1>} : memref<8x34x32xf32, #tpu.memory_space<vmem>>, vector<8x16x32xf32>
    %16 = vector.shape_cast %15 : vector<8x16x32xf32> to vector<128x32xf32>
    %c2_20 = arith.constant 2 : index
    %c0_21 = arith.constant 0 : index
    %c0_22 = arith.constant 0 : index
    %c0_23 = arith.constant 0 : index
    %17 = vector.load %arg2[%c2_20, %c0_21, %c0_22, %c0_23] : memref<3x2x32x256xf32, #tpu.memory_space<vmem>>, vector<1x1x32x256xf32>
    %18 = vector.shape_cast %17 : vector<1x1x32x256xf32> to vector<32x256xf32>
    %cst_24 = arith.constant dense<0.000000e+00> : vector<128x256xf32>
    %19 = tpu.matmul %16, %18, %cst_24 {dimension_numbers = #tpu.dot_dimension_numbers<[1], [0], [0], [1], [0, 0, 1, 1], [], []>} : vector<128x32xf32>, vector<32x256xf32>, vector<128x256xf32> -> vector<128x256xf32>
    %20 = arith.addf %14, %19 : vector<128x256xf32>
    %c0_25 = arith.constant 0 : index
    %c0_26 = arith.constant 0 : index
    %21 = vector.load %arg3[%c0_25, %c0_26] : memref<2x256xf32, #tpu.memory_space<vmem>>, vector<1x256xf32>
    %22 = vector.broadcast %21 : vector<1x256xf32> to vector<128x256xf32>
    %23 = arith.mulf %20, %22 : vector<128x256xf32>
    %c1_27 = arith.constant 1 : index
    %c0_28 = arith.constant 0 : index
    %24 = vector.load %arg3[%c1_27, %c0_28] : memref<2x256xf32, #tpu.memory_space<vmem>>, vector<1x256xf32>
    %25 = vector.broadcast %24 : vector<1x256xf32> to vector<128x256xf32>
    %26 = arith.addf %23, %25 : vector<128x256xf32>
    %cst_29 = arith.constant 0.000000e+00 : f32
    %27 = vector.broadcast %cst_29 : f32 to vector<128x256xf32>
    %28 = arith.maximumf %26, %27 : vector<128x256xf32>
    %29 = vector.shape_cast %28 : vector<128x256xf32> to vector<8x16x256xf32>
    %30 = vector.extract_strided_slice %29 {offsets = [0, 0, 0], sizes = [8, 14, 256], strides = [1, 1, 1]} : vector<8x16x256xf32> to vector<8x14x256xf32>
    %c0_30 = arith.constant 0 : index
    %c1_31 = arith.constant 1 : index
    %c0_32 = arith.constant 0 : index
    %31 = vector.load %arg10[%c0_30, %c1_31, %c0_32] : memref<8x18x256xf32, #tpu.memory_space<vmem>>, vector<8x14x256xf32>
    %32 = arith.maximumf %31, %30 : vector<8x14x256xf32>
    %c0_33 = arith.constant 0 : index
    %c1_34 = arith.constant 1 : index
    %c0_35 = arith.constant 0 : index
    %33 = vector.load %arg10[%c0_33, %c1_34, %c0_35] : memref<8x18x256xf32, #tpu.memory_space<vmem>>, vector<8x14x256xf32>
    tpu.vector_store %arg10[%c0_33, %c1_34, %c0_35], %32 {strides = array<i32>} : memref<8x18x256xf32, #tpu.memory_space<vmem>>, vector<8x14x256xf32>,
    %cst_36 = arith.constant 0.000000e+00 : f32
    %34 = vector.broadcast %cst_36 : f32 to vector<128x256xf32>
    %c0_37 = arith.constant 0 : index
    %c0_38 = arith.constant 0 : index
    %c0_39 = arith.constant 0 : index
    %35 = tpu.strided_load %arg1[%c0_37, %c0_38, %c0_39] {strides = array<i32: 1, 2, 1>} : memref<8x34x32xf32, #tpu.memory_space<vmem>>, vector<8x16x32xf32>
    %36 = vector.shape_cast %35 : vector<8x16x32xf32> to vector<128x32xf32>
    %c0_40 = arith.constant 0 : index
    %c1_41 = arith.constant 1 : index
    %c0_42 = arith.constant 0 : index
    %c0_43 = arith.constant 0 : index
    %37 = vector.load %arg2[%c0_40, %c1_41, %c0_42, %c0_43] : memref<3x2x32x256xf32, #tpu.memory_space<vmem>>, vector<1x1x32x256xf32>
    %38 = vector.shape_cast %37 : vector<1x1x32x256xf32> to vector<32x256xf32>
    %cst_44 = arith.constant dense<0.000000e+00> : vector<128x256xf32>
    %39 = tpu.matmul %36, %38, %cst_44 {dimension_numbers = #tpu.dot_dimension_numbers<[1], [0], [0], [1], [0, 0, 1, 1], [], []>} : vector<128x32xf32>, vector<32x256xf32>, vector<128x256xf32> -> vector<128x256xf32>
    %40 = arith.addf %34, %39 : vector<128x256xf32>
    %c0_45 = arith.constant 0 : index
    %c1_46 = arith.constant 1 : index
    %c0_47 = arith.constant 0 : index
    %41 = tpu.strided_load %arg1[%c0_45, %c1_46, %c0_47] {strides = array<i32: 1, 2, 1>} : memref<8x34x32xf32, #tpu.memory_space<vmem>>, vector<8x16x32xf32>
    %42 = vector.shape_cast %41 : vector<8x16x32xf32> to vector<128x32xf32>
    %c1_48 = arith.constant 1 : index
    %c1_49 = arith.constant 1 : index
    %c0_50 = arith.constant 0 : index
    %c0_51 = arith.constant 0 : index
    %43 = vector.load %arg2[%c1_48, %c1_49, %c0_50, %c0_51] : memref<3x2x32x256xf32, #tpu.memory_space<vmem>>, vector<1x1x32x256xf32>
    %44 = vector.shape_cast %43 : vector<1x1x32x256xf32> to vector<32x256xf32>
    %cst_52 = arith.constant dense<0.000000e+00> : vector<128x256xf32>
    %45 = tpu.matmul %42, %44, %cst_52 {dimension_numbers = #tpu.dot_dimension_numbers<[1], [0], [0], [1], [0, 0, 1, 1], [], []>} : vector<128x32xf32>, vector<32x256xf32>, vector<128x256xf32> -> vector<128x256xf32>
    %46 = arith.addf %40, %45 : vector<128x256xf32>
    %c0_53 = arith.constant 0 : index
    %c2_54 = arith.constant 2 : index
    %c0_55 = arith.constant 0 : index
    %47 = tpu.strided_load %arg1[%c0_53, %c2_54, %c0_55] {strides = array<i32: 1, 2, 1>} : memref<8x34x32xf32, #tpu.memory_space<vmem>>, vector<8x16x32xf32>
    %48 = vector.shape_cast %47 : vector<8x16x32xf32> to vector<128x32xf32>
    %c2_56 = arith.constant 2 : index
    %c1_57 = arith.constant 1 : index
    %c0_58 = arith.constant 0 : index
    %c0_59 = arith.constant 0 : index
    %49 = vector.load %arg2[%c2_56, %c1_57, %c0_58, %c0_59] : memref<3x2x32x256xf32, #tpu.memory_space<vmem>>, vector<1x1x32x256xf32>
    %50 = vector.shape_cast %49 : vector<1x1x32x256xf32> to vector<32x256xf32>
    %cst_60 = arith.constant dense<0.000000e+00> : vector<128x256xf32>
    %51 = tpu.matmul %48, %50, %cst_60 {dimension_numbers = #tpu.dot_dimension_numbers<[1], [0], [0], [1], [0, 0, 1, 1], [], []>} : vector<128x32xf32>, vector<32x256xf32>, vector<128x256xf32> -> vector<128x256xf32>
    %52 = arith.addf %46, %51 : vector<128x256xf32>
    %c0_61 = arith.constant 0 : index
    %c0_62 = arith.constant 0 : index
    %53 = vector.load %arg3[%c0_61, %c0_62] : memref<2x256xf32, #tpu.memory_space<vmem>>, vector<1x256xf32>
    %54 = vector.broadcast %53 : vector<1x256xf32> to vector<128x256xf32>
    %55 = arith.mulf %52, %54 : vector<128x256xf32>
    %c1_63 = arith.constant 1 : index
    %c0_64 = arith.constant 0 : index
    %56 = vector.load %arg3[%c1_63, %c0_64] : memref<2x256xf32, #tpu.memory_space<vmem>>, vector<1x256xf32>
    %57 = vector.broadcast %56 : vector<1x256xf32> to vector<128x256xf32>
    %58 = arith.addf %55, %57 : vector<128x256xf32>
    %cst_65 = arith.constant 0.000000e+00 : f32
    %59 = vector.broadcast %cst_65 : f32 to vector<128x256xf32>
    %60 = arith.maximumf %58, %59 : vector<128x256xf32>
    %61 = vector.shape_cast %60 : vector<128x256xf32> to vector<8x16x256xf32>
    %62 = vector.extract_strided_slice %61 {offsets = [0, 0, 0], sizes = [8, 14, 256], strides = [1, 1, 1]} : vector<8x16x256xf32> to vector<8x14x256xf32>
    %c0_66 = arith.constant 0 : index
    %c1_67 = arith.constant 1 : index
    %c0_68 = arith.constant 0 : index
    %63 = vector.load %arg10[%c0_66, %c1_67, %c0_68] : memref<8x18x256xf32, #tpu.memory_space<vmem>>, vector<8x14x256xf32>
    %64 = arith.maximumf %63, %62 : vector<8x14x256xf32>
    %c0_69 = arith.constant 0 : index
    %c1_70 = arith.constant 1 : index
    %c0_71 = arith.constant 0 : index
    %65 = vector.load %arg10[%c0_69, %c1_70, %c0_71] : memref<8x18x256xf32, #tpu.memory_space<vmem>>, vector<8x14x256xf32>
    tpu.vector_store %arg10[%c0_69, %c1_70, %c0_71], %64 {strides = array<i32>} : memref<8x18x256xf32, #tpu.memory_space<vmem>>, vector<8x14x256xf32>,
    %cst_72 = arith.constant 0.000000e+00 : f32
    %66 = vector.broadcast %cst_72 : f32 to vector<128x256xf32>
    %c0_73 = arith.constant 0 : index
    %c1_74 = arith.constant 1 : index
    %c0_75 = arith.constant 0 : index
    %67 = tpu.strided_load %arg1[%c0_73, %c1_74, %c0_75] {strides = array<i32: 1, 2, 1>} : memref<8x34x32xf32, #tpu.memory_space<vmem>>, vector<8x16x32xf32>
    %68 = vector.shape_cast %67 : vector<8x16x32xf32> to vector<128x32xf32>
    %c0_76 = arith.constant 0 : index
    %c0_77 = arith.constant 0 : index
    %c0_78 = arith.constant 0 : index
    %c0_79 = arith.constant 0 : index
    %69 = vector.load %arg2[%c0_76, %c0_77, %c0_78, %c0_79] : memref<3x2x32x256xf32, #tpu.memory_space<vmem>>, vector<1x1x32x256xf32>
    %70 = vector.shape_cast %69 : vector<1x1x32x256xf32> to vector<32x256xf32>
    %cst_80 = arith.constant dense<0.000000e+00> : vector<128x256xf32>
    %71 = tpu.matmul %68, %70, %cst_80 {dimension_numbers = #tpu.dot_dimension_numbers<[1], [0], [0], [1], [0, 0, 1, 1], [], []>} : vector<128x32xf32>, vector<32x256xf32>, vector<128x256xf32> -> vector<128x256xf32>
    %72 = arith.addf %66, %71 : vector<128x256xf32>
    %c0_81 = arith.constant 0 : index
    %c2_82 = arith.constant 2 : index
    %c0_83 = arith.constant 0 : index
    %73 = tpu.strided_load %arg1[%c0_81, %c2_82, %c0_83] {strides = array<i32: 1, 2, 1>} : memref<8x34x32xf32, #tpu.memory_space<vmem>>, vector<8x16x32xf32>
    %74 = vector.shape_cast %73 : vector<8x16x32xf32> to vector<128x32xf32>
    %c1_84 = arith.constant 1 : index
    %c0_85 = arith.constant 0 : index
    %c0_86 = arith.constant 0 : index
    %c0_87 = arith.constant 0 : index
    %75 = vector.load %arg2[%c1_84, %c0_85, %c0_86, %c0_87] : memref<3x2x32x256xf32, #tpu.memory_space<vmem>>, vector<1x1x32x256xf32>
    %76 = vector.shape_cast %75 : vector<1x1x32x256xf32> to vector<32x256xf32>
    %cst_88 = arith.constant dense<0.000000e+00> : vector<128x256xf32>
    %77 = tpu.matmul %74, %76, %cst_88 {dimension_numbers = #tpu.dot_dimension_numbers<[1], [0], [0], [1], [0, 0, 1, 1], [], []>} : vector<128x32xf32>, vector<32x256xf32>, vector<128x256xf32> -> vector<128x256xf32>
    %78 = arith.addf %72, %77 : vector<128x256xf32>
    %c0_89 = arith.constant 0 : index
    %c3 = arith.constant 3 : index
    %c0_90 = arith.constant 0 : index
    %79 = tpu.strided_load %arg1[%c0_89, %c3, %c0_90] {strides = array<i32: 1, 2, 1>} : memref<8x34x32xf32, #tpu.memory_space<vmem>>, vector<8x16x32xf32>
    %80 = vector.shape_cast %79 : vector<8x16x32xf32> to vector<128x32xf32>
    %c2_91 = arith.constant 2 : index
    %c0_92 = arith.constant 0 : index
    %c0_93 = arith.constant 0 : index
    %c0_94 = arith.constant 0 : index
    %81 = vector.load %arg2[%c2_91, %c0_92, %c0_93, %c0_94] : memref<3x2x32x256xf32, #tpu.memory_space<vmem>>, vector<1x1x32x256xf32>
    %82 = vector.shape_cast %81 : vector<1x1x32x256xf32> to vector<32x256xf32>
    %cst_95 = arith.constant dense<0.000000e+00> : vector<128x256xf32>
    %83 = tpu.matmul %80, %82, %cst_95 {dimension_numbers = #tpu.dot_dimension_numbers<[1], [0], [0], [1], [0, 0, 1, 1], [], []>} : vector<128x32xf32>, vector<32x256xf32>, vector<128x256xf32> -> vector<128x256xf32>
    %84 = arith.addf %78, %83 : vector<128x256xf32>
    %c0_96 = arith.constant 0 : index
    %c0_97 = arith.constant 0 : index
    %85 = vector.load %arg3[%c0_96, %c0_97] : memref<2x256xf32, #tpu.memory_space<vmem>>, vector<1x256xf32>
    %86 = vector.broadcast %85 : vector<1x256xf32> to vector<128x256xf32>
    %87 = arith.mulf %84, %86 : vector<128x256xf32>
    %c1_98 = arith.constant 1 : index
    %c0_99 = arith.constant 0 : index
    %88 = vector.load %arg3[%c1_98, %c0_99] : memref<2x256xf32, #tpu.memory_space<vmem>>, vector<1x256xf32>
    %89 = vector.broadcast %88 : vector<1x256xf32> to vector<128x256xf32>
    %90 = arith.addf %87, %89 : vector<128x256xf32>
    %cst_100 = arith.constant 0.000000e+00 : f32
    %91 = vector.broadcast %cst_100 : f32 to vector<128x256xf32>
    %92 = arith.maximumf %90, %91 : vector<128x256xf32>
    %93 = vector.shape_cast %92 : vector<128x256xf32> to vector<8x16x256xf32>
    %94 = vector.extract_strided_slice %93 {offsets = [0, 0, 0], sizes = [8, 14, 256], strides = [1, 1, 1]} : vector<8x16x256xf32> to vector<8x14x256xf32>
    %c0_101 = arith.constant 0 : index
    %c1_102 = arith.constant 1 : index
    %c0_103 = arith.constant 0 : index
    %95 = vector.load %arg10[%c0_101, %c1_102, %c0_103] : memref<8x18x256xf32, #tpu.memory_space<vmem>>, vector<8x14x256xf32>
    %96 = arith.maximumf %95, %94 : vector<8x14x256xf32>
    %c0_104 = arith.constant 0 : index
    %c1_105 = arith.constant 1 : index
    %c0_106 = arith.constant 0 : index
    %97 = vector.load %arg10[%c0_104, %c1_105, %c0_106] : memref<8x18x256xf32, #tpu.memory_space<vmem>>, vector<8x14x256xf32>
    tpu.vector_store %arg10[%c0_104, %c1_105, %c0_106], %96 {strides = array<i32>} : memref<8x18x256xf32, #tpu.memory_space<vmem>>, vector<8x14x256xf32>,
    %cst_107 = arith.constant 0.000000e+00 : f32
    %98 = vector.broadcast %cst_107 : f32 to vector<128x256xf32>
    %c0_108 = arith.constant 0 : index
    %c1_109 = arith.constant 1 : index
    %c0_110 = arith.constant 0 : index
    %99 = tpu.strided_load %arg1[%c0_108, %c1_109, %c0_110] {strides = array<i32: 1, 2, 1>} : memref<8x34x32xf32, #tpu.memory_space<vmem>>, vector<8x16x32xf32>
    %100 = vector.shape_cast %99 : vector<8x16x32xf32> to vector<128x32xf32>
    %c0_111 = arith.constant 0 : index
    %c1_112 = arith.constant 1 : index
    %c0_113 = arith.constant 0 : index
    %c0_114 = arith.constant 0 : index
    %101 = vector.load %arg2[%c0_111, %c1_112, %c0_113, %c0_114] : memref<3x2x32x256xf32, #tpu.memory_space<vmem>>, vector<1x1x32x256xf32>
    %102 = vector.shape_cast %101 : vector<1x1x32x256xf32> to vector<32x256xf32>
    %cst_115 = arith.constant dense<0.000000e+00> : vector<128x256xf32>
    %103 = tpu.matmul %100, %102, %cst_115 {dimension_numbers = #tpu.dot_dimension_numbers<[1], [0], [0], [1], [0, 0, 1, 1], [], []>} : vector<128x32xf32>, vector<32x256xf32>, vector<128x256xf32> -> vector<128x256xf32>
    %104 = arith.addf %98, %103 : vector<128x256xf32>
    %c0_116 = arith.constant 0 : index
    %c2_117 = arith.constant 2 : index
    %c0_118 = arith.constant 0 : index
    %105 = tpu.strided_load %arg1[%c0_116, %c2_117, %c0_118] {strides = array<i32: 1, 2, 1>} : memref<8x34x32xf32, #tpu.memory_space<vmem>>, vector<8x16x32xf32>
    %106 = vector.shape_cast %105 : vector<8x16x32xf32> to vector<128x32xf32>
    %c1_119 = arith.constant 1 : index
    %c1_120 = arith.constant 1 : index
    %c0_121 = arith.constant 0 : index
    %c0_122 = arith.constant 0 : index
    %107 = vector.load %arg2[%c1_119, %c1_120, %c0_121, %c0_122] : memref<3x2x32x256xf32, #tpu.memory_space<vmem>>, vector<1x1x32x256xf32>
    %108 = vector.shape_cast %107 : vector<1x1x32x256xf32> to vector<32x256xf32>
    %cst_123 = arith.constant dense<0.000000e+00> : vector<128x256xf32>
    %109 = tpu.matmul %106, %108, %cst_123 {dimension_numbers = #tpu.dot_dimension_numbers<[1], [0], [0], [1], [0, 0, 1, 1], [], []>} : vector<128x32xf32>, vector<32x256xf32>, vector<128x256xf32> -> vector<128x256xf32>
    %110 = arith.addf %104, %109 : vector<128x256xf32>
    %c0_124 = arith.constant 0 : index
    %c3_125 = arith.constant 3 : index
    %c0_126 = arith.constant 0 : index
    %111 = tpu.strided_load %arg1[%c0_124, %c3_125, %c0_126] {strides = array<i32: 1, 2, 1>} : memref<8x34x32xf32, #tpu.memory_space<vmem>>, vector<8x16x32xf32>
    %112 = vector.shape_cast %111 : vector<8x16x32xf32> to vector<128x32xf32>
    %c2_127 = arith.constant 2 : index
    %c1_128 = arith.constant 1 : index
    %c0_129 = arith.constant 0 : index
    %c0_130 = arith.constant 0 : index
    %113 = vector.load %arg2[%c2_127, %c1_128, %c0_129, %c0_130] : memref<3x2x32x256xf32, #tpu.memory_space<vmem>>, vector<1x1x32x256xf32>
    %114 = vector.shape_cast %113 : vector<1x1x32x256xf32> to vector<32x256xf32>
    %cst_131 = arith.constant dense<0.000000e+00> : vector<128x256xf32>
    %115 = tpu.matmul %112, %114, %cst_131 {dimension_numbers = #tpu.dot_dimension_numbers<[1], [0], [0], [1], [0, 0, 1, 1], [], []>} : vector<128x32xf32>, vector<32x256xf32>, vector<128x256xf32> -> vector<128x256xf32>
    %116 = arith.addf %110, %115 : vector<128x256xf32>
    %c0_132 = arith.constant 0 : index
    %c0_133 = arith.constant 0 : index
    %117 = vector.load %arg3[%c0_132, %c0_133] : memref<2x256xf32, #tpu.memory_space<vmem>>, vector<1x256xf32>
    %118 = vector.broadcast %117 : vector<1x256xf32> to vector<128x256xf32>
    %119 = arith.mulf %116, %118 : vector<128x256xf32>
    %c1_134 = arith.constant 1 : index
    %c0_135 = arith.constant 0 : index
    %120 = vector.load %arg3[%c1_134, %c0_135] : memref<2x256xf32, #tpu.memory_space<vmem>>, vector<1x256xf32>
    %121 = vector.broadcast %120 : vector<1x256xf32> to vector<128x256xf32>
    %122 = arith.addf %119, %121 : vector<128x256xf32>
    %cst_136 = arith.constant 0.000000e+00 : f32
    %123 = vector.broadcast %cst_136 : f32 to vector<128x256xf32>
    %124 = arith.maximumf %122, %123 : vector<128x256xf32>
    %125 = vector.shape_cast %124 : vector<128x256xf32> to vector<8x16x256xf32>
    %126 = vector.extract_strided_slice %125 {offsets = [0, 0, 0], sizes = [8, 14, 256], strides = [1, 1, 1]} : vector<8x16x256xf32> to vector<8x14x256xf32>
    %c0_137 = arith.constant 0 : index
    %c1_138 = arith.constant 1 : index
    %c0_139 = arith.constant 0 : index
    %127 = vector.load %arg10[%c0_137, %c1_138, %c0_139] : memref<8x18x256xf32, #tpu.memory_space<vmem>>, vector<8x14x256xf32>
    %128 = arith.maximumf %127, %126 : vector<8x14x256xf32>
    %c0_140 = arith.constant 0 : index
    %c1_141 = arith.constant 1 : index
    %c0_142 = arith.constant 0 : index
    %129 = vector.load %arg10[%c0_140, %c1_141, %c0_142] : memref<8x18x256xf32, #tpu.memory_space<vmem>>, vector<8x14x256xf32>
    tpu.vector_store %arg10[%c0_140, %c1_141, %c0_142], %128 {strides = array<i32>} : memref<8x18x256xf32, #tpu.memory_space<vmem>>, vector<8x14x256xf32>,
    %cst_143 = arith.constant 0.000000e+00 : f32
    %130 = vector.broadcast %cst_143 : f32 to vector<128x224xf32>
    %c0_144 = arith.constant 0 : index
    %c0_145 = arith.constant 0 : index
    %c0_146 = arith.constant 0 : index
    %131 = vector.load %arg10[%c0_144, %c0_145, %c0_146] : memref<8x18x256xf32, #tpu.memory_space<vmem>>, vector<8x16x256xf32>
    %132 = vector.shape_cast %131 : vector<8x16x256xf32> to vector<128x256xf32>
    %c0_147 = arith.constant 0 : index
    %c0_148 = arith.constant 0 : index
    %c0_149 = arith.constant 0 : index
    %133 = vector.load %arg4[%c0_147, %c0_148, %c0_149] : memref<3x256x224xf32, #tpu.memory_space<vmem>>, vector<1x256x224xf32>
    %134 = vector.shape_cast %133 : vector<1x256x224xf32> to vector<256x224xf32>
    %cst_150 = arith.constant dense<0.000000e+00> : vector<128x224xf32>
    %135 = tpu.matmul %132, %134, %cst_150 {dimension_numbers = #tpu.dot_dimension_numbers<[1], [0], [0], [1], [0, 0, 1, 1], [], []>} : vector<128x256xf32>, vector<256x224xf32>, vector<128x224xf32> -> vector<128x224xf32>
    %136 = arith.addf %130, %135 : vector<128x224xf32>
    %c0_151 = arith.constant 0 : index
    %c1_152 = arith.constant 1 : index
    %c0_153 = arith.constant 0 : index
    %137 = vector.load %arg10[%c0_151, %c1_152, %c0_153] : memref<8x18x256xf32, #tpu.memory_space<vmem>>, vector<8x16x256xf32>
    %138 = vector.shape_cast %137 : vector<8x16x256xf32> to vector<128x256xf32>
    %c1_154 = arith.constant 1 : index
    %c0_155 = arith.constant 0 : index
    %c0_156 = arith.constant 0 : index
    %139 = vector.load %arg4[%c1_154, %c0_155, %c0_156] : memref<3x256x224xf32, #tpu.memory_space<vmem>>, vector<1x256x224xf32>
    %140 = vector.shape_cast %139 : vector<1x256x224xf32> to vector<256x224xf32>
    %cst_157 = arith.constant dense<0.000000e+00> : vector<128x224xf32>
    %141 = tpu.matmul %138, %140, %cst_157 {dimension_numbers = #tpu.dot_dimension_numbers<[1], [0], [0], [1], [0, 0, 1, 1], [], []>} : vector<128x256xf32>, vector<256x224xf32>, vector<128x224xf32> -> vector<128x224xf32>
    %142 = arith.addf %136, %141 : vector<128x224xf32>
    %c0_158 = arith.constant 0 : index
    %c2_159 = arith.constant 2 : index
    %c0_160 = arith.constant 0 : index
    %143 = vector.load %arg10[%c0_158, %c2_159, %c0_160] : memref<8x18x256xf32, #tpu.memory_space<vmem>>, vector<8x16x256xf32>
    %144 = vector.shape_cast %143 : vector<8x16x256xf32> to vector<128x256xf32>
    %c2_161 = arith.constant 2 : index
    %c0_162 = arith.constant 0 : index
    %c0_163 = arith.constant 0 : index
    %145 = vector.load %arg4[%c2_161, %c0_162, %c0_163] : memref<3x256x224xf32, #tpu.memory_space<vmem>>, vector<1x256x224xf32>
    %146 = vector.shape_cast %145 : vector<1x256x224xf32> to vector<256x224xf32>
    %cst_164 = arith.constant dense<0.000000e+00> : vector<128x224xf32>
    %147 = tpu.matmul %144, %146, %cst_164 {dimension_numbers = #tpu.dot_dimension_numbers<[1], [0], [0], [1], [0, 0, 1, 1], [], []>} : vector<128x256xf32>, vector<256x224xf32>, vector<128x224xf32> -> vector<128x224xf32>
    %148 = arith.addf %142, %147 : vector<128x224xf32>
    %c0_165 = arith.constant 0 : index
    %c0_166 = arith.constant 0 : index
    %149 = vector.load %arg5[%c0_165, %c0_166] : memref<2x224xf32, #tpu.memory_space<vmem>>, vector<1x224xf32>
    %150 = vector.broadcast %149 : vector<1x224xf32> to vector<128x224xf32>
    %151 = arith.mulf %148, %150 : vector<128x224xf32>
    %c1_167 = arith.constant 1 : index
    %c0_168 = arith.constant 0 : index
    %152 = vector.load %arg5[%c1_167, %c0_168] : memref<2x224xf32, #tpu.memory_space<vmem>>, vector<1x224xf32>
    %153 = vector.broadcast %152 : vector<1x224xf32> to vector<128x224xf32>
    %154 = arith.addf %151, %153 : vector<128x224xf32>
    %cst_169 = arith.constant 0.000000e+00 : f32
    %155 = vector.broadcast %cst_169 : f32 to vector<128x224xf32>
    %156 = arith.maximumf %154, %155 : vector<128x224xf32>
    %157 = vector.shape_cast %156 : vector<128x224xf32> to vector<8x16x224xf32>
    %158 = vector.extract_strided_slice %157 {offsets = [0, 0, 0], sizes = [8, 14, 224], strides = [1, 1, 1]} : vector<8x16x224xf32> to vector<8x14x224xf32>
    %c0_170 = arith.constant 0 : index
    %c0_171 = arith.constant 0 : index
    %c0_172 = arith.constant 0 : index
    %159 = vector.load %arg8[%c0_170, %c0_171, %c0_172] : memref<8x14x224xf32, #tpu.memory_space<vmem>>, vector<8x14x224xf32>
    tpu.vector_store %arg8[%c0_170, %c0_171, %c0_172], %158 {strides = array<i32>} : memref<8x14x224xf32, #tpu.memory_space<vmem>>, vector<8x14x224xf32>,
    %cst_173 = arith.constant 0.000000e+00 : f32
    %160 = vector.broadcast %cst_173 : f32 to vector<8x128xf32>
    %c0_174 = arith.constant 0 : index
    %c0_175 = arith.constant 0 : index
    %c0_176 = arith.constant 0 : index
    %161 = vector.load %arg8[%c0_174, %c0_175, %c0_176] : memref<8x14x224xf32, #tpu.memory_space<vmem>>, vector<8x1x224xf32>
    %162 = vector.shape_cast %161 : vector<8x1x224xf32> to vector<8x224xf32>
    %c0_177 = arith.constant 0 : index
    %c0_178 = arith.constant 0 : index
    %c0_179 = arith.constant 0 : index
    %163 = vector.load %arg6[%c0_177, %c0_178, %c0_179] : memref<14x224x128xf32, #tpu.memory_space<vmem>>, vector<1x224x128xf32>
    %164 = vector.shape_cast %163 : vector<1x224x128xf32> to vector<224x128xf32>
    %cst_180 = arith.constant dense<0.000000e+00> : vector<8x128xf32>
    %165 = tpu.matmul %162, %164, %cst_180 {dimension_numbers = #tpu.dot_dimension_numbers<[1], [0], [0], [1], [0, 0, 1, 1], [], []>} : vector<8x224xf32>, vector<224x128xf32>, vector<8x128xf32> -> vector<8x128xf32>
    %166 = arith.addf %160, %165 : vector<8x128xf32>
    %c0_181 = arith.constant 0 : index
    %c1_182 = arith.constant 1 : index
    %c0_183 = arith.constant 0 : index
    %167 = vector.load %arg8[%c0_181, %c1_182, %c0_183] : memref<8x14x224xf32, #tpu.memory_space<vmem>>, vector<8x1x224xf32>
    %168 = vector.shape_cast %167 : vector<8x1x224xf32> to vector<8x224xf32>
    %c1_184 = arith.constant 1 : index
    %c0_185 = arith.constant 0 : index
    %c0_186 = arith.constant 0 : index
    %169 = vector.load %arg6[%c1_184, %c0_185, %c0_186] : memref<14x224x128xf32, #tpu.memory_space<vmem>>, vector<1x224x128xf32>
    %170 = vector.shape_cast %169 : vector<1x224x128xf32> to vector<224x128xf32>
    %cst_187 = arith.constant dense<0.000000e+00> : vector<8x128xf32>
    %171 = tpu.matmul %168, %170, %cst_187 {dimension_numbers = #tpu.dot_dimension_numbers<[1], [0], [0], [1], [0, 0, 1, 1], [], []>} : vector<8x224xf32>, vector<224x128xf32>, vector<8x128xf32> -> vector<8x128xf32>
    %172 = arith.addf %166, %171 : vector<8x128xf32>
    %c0_188 = arith.constant 0 : index
    %c2_189 = arith.constant 2 : index
    %c0_190 = arith.constant 0 : index
    %173 = vector.load %arg8[%c0_188, %c2_189, %c0_190] : memref<8x14x224xf32, #tpu.memory_space<vmem>>, vector<8x1x224xf32>
    %174 = vector.shape_cast %173 : vector<8x1x224xf32> to vector<8x224xf32>
    %c2_191 = arith.constant 2 : index
    %c0_192 = arith.constant 0 : index
    %c0_193 = arith.constant 0 : index
    %175 = vector.load %arg6[%c2_191, %c0_192, %c0_193] : memref<14x224x128xf32, #tpu.memory_space<vmem>>, vector<1x224x128xf32>
    %176 = vector.shape_cast %175 : vector<1x224x128xf32> to vector<224x128xf32>
    %cst_194 = arith.constant dense<0.000000e+00> : vector<8x128xf32>
    %177 = tpu.matmul %174, %176, %cst_194 {dimension_numbers = #tpu.dot_dimension_numbers<[1], [0], [0], [1], [0, 0, 1, 1], [], []>} : vector<8x224xf32>, vector<224x128xf32>, vector<8x128xf32> -> vector<8x128xf32>
    %178 = arith.addf %172, %177 : vector<8x128xf32>
    %c0_195 = arith.constant 0 : index
    %c3_196 = arith.constant 3 : index
    %c0_197 = arith.constant 0 : index
    %179 = vector.load %arg8[%c0_195, %c3_196, %c0_197] : memref<8x14x224xf32, #tpu.memory_space<vmem>>, vector<8x1x224xf32>
    %180 = vector.shape_cast %179 : vector<8x1x224xf32> to vector<8x224xf32>
    %c3_198 = arith.constant 3 : index
    %c0_199 = arith.constant 0 : index
    %c0_200 = arith.constant 0 : index
    %181 = vector.load %arg6[%c3_198, %c0_199, %c0_200] : memref<14x224x128xf32, #tpu.memory_space<vmem>>, vector<1x224x128xf32>
    %182 = vector.shape_cast %181 : vector<1x224x128xf32> to vector<224x128xf32>
    %cst_201 = arith.constant dense<0.000000e+00> : vector<8x128xf32>
    %183 = tpu.matmul %180, %182, %cst_201 {dimension_numbers = #tpu.dot_dimension_numbers<[1], [0], [0], [1], [0, 0, 1, 1], [], []>} : vector<8x224xf32>, vector<224x128xf32>, vector<8x128xf32> -> vector<8x128xf32>
    %184 = arith.addf %178, %183 : vector<8x128xf32>
    %c0_202 = arith.constant 0 : index
    %c4 = arith.constant 4 : index
    %c0_203 = arith.constant 0 : index
    %185 = vector.load %arg8[%c0_202, %c4, %c0_203] : memref<8x14x224xf32, #tpu.memory_space<vmem>>, vector<8x1x224xf32>
    %186 = vector.shape_cast %185 : vector<8x1x224xf32> to vector<8x224xf32>
    %c4_204 = arith.constant 4 : index
    %c0_205 = arith.constant 0 : index
    %c0_206 = arith.constant 0 : index
    %187 = vector.load %arg6[%c4_204, %c0_205, %c0_206] : memref<14x224x128xf32, #tpu.memory_space<vmem>>, vector<1x224x128xf32>
    %188 = vector.shape_cast %187 : vector<1x224x128xf32> to vector<224x128xf32>
    %cst_207 = arith.constant dense<0.000000e+00> : vector<8x128xf32>
    %189 = tpu.matmul %186, %188, %cst_207 {dimension_numbers = #tpu.dot_dimension_numbers<[1], [0], [0], [1], [0, 0, 1, 1], [], []>} : vector<8x224xf32>, vector<224x128xf32>, vector<8x128xf32> -> vector<8x128xf32>
    %190 = arith.addf %184, %189 : vector<8x128xf32>
    %c0_208 = arith.constant 0 : index
    %c5 = arith.constant 5 : index
    %c0_209 = arith.constant 0 : index
    %191 = vector.load %arg8[%c0_208, %c5, %c0_209] : memref<8x14x224xf32, #tpu.memory_space<vmem>>, vector<8x1x224xf32>
    %192 = vector.shape_cast %191 : vector<8x1x224xf32> to vector<8x224xf32>
    %c5_210 = arith.constant 5 : index
    %c0_211 = arith.constant 0 : index
    %c0_212 = arith.constant 0 : index
    %193 = vector.load %arg6[%c5_210, %c0_211, %c0_212] : memref<14x224x128xf32, #tpu.memory_space<vmem>>, vector<1x224x128xf32>
    %194 = vector.shape_cast %193 : vector<1x224x128xf32> to vector<224x128xf32>
    %cst_213 = arith.constant dense<0.000000e+00> : vector<8x128xf32>
    %195 = tpu.matmul %192, %194, %cst_213 {dimension_numbers = #tpu.dot_dimension_numbers<[1], [0], [0], [1], [0, 0, 1, 1], [], []>} : vector<8x224xf32>, vector<224x128xf32>, vector<8x128xf32> -> vector<8x128xf32>
    %196 = arith.addf %190, %195 : vector<8x128xf32>
    %c0_214 = arith.constant 0 : index
    %c6 = arith.constant 6 : index
    %c0_215 = arith.constant 0 : index
    %197 = vector.load %arg8[%c0_214, %c6, %c0_215] : memref<8x14x224xf32, #tpu.memory_space<vmem>>, vector<8x1x224xf32>
    %198 = vector.shape_cast %197 : vector<8x1x224xf32> to vector<8x224xf32>
    %c6_216 = arith.constant 6 : index
    %c0_217 = arith.constant 0 : index
    %c0_218 = arith.constant 0 : index
    %199 = vector.load %arg6[%c6_216, %c0_217, %c0_218] : memref<14x224x128xf32, #tpu.memory_space<vmem>>, vector<1x224x128xf32>
    %200 = vector.shape_cast %199 : vector<1x224x128xf32> to vector<224x128xf32>
    %cst_219 = arith.constant dense<0.000000e+00> : vector<8x128xf32>
    %201 = tpu.matmul %198, %200, %cst_219 {dimension_numbers = #tpu.dot_dimension_numbers<[1], [0], [0], [1], [0, 0, 1, 1], [], []>} : vector<8x224xf32>, vector<224x128xf32>, vector<8x128xf32> -> vector<8x128xf32>
    %202 = arith.addf %196, %201 : vector<8x128xf32>
    %c0_220 = arith.constant 0 : index
    %c7 = arith.constant 7 : index
    %c0_221 = arith.constant 0 : index
    %203 = vector.load %arg8[%c0_220, %c7, %c0_221] : memref<8x14x224xf32, #tpu.memory_space<vmem>>, vector<8x1x224xf32>
    %204 = vector.shape_cast %203 : vector<8x1x224xf32> to vector<8x224xf32>
    %c7_222 = arith.constant 7 : index
    %c0_223 = arith.constant 0 : index
    %c0_224 = arith.constant 0 : index
    %205 = vector.load %arg6[%c7_222, %c0_223, %c0_224] : memref<14x224x128xf32, #tpu.memory_space<vmem>>, vector<1x224x128xf32>
    %206 = vector.shape_cast %205 : vector<1x224x128xf32> to vector<224x128xf32>
    %cst_225 = arith.constant dense<0.000000e+00> : vector<8x128xf32>
    %207 = tpu.matmul %204, %206, %cst_225 {dimension_numbers = #tpu.dot_dimension_numbers<[1], [0], [0], [1], [0, 0, 1, 1], [], []>} : vector<8x224xf32>, vector<224x128xf32>, vector<8x128xf32> -> vector<8x128xf32>
    %208 = arith.addf %202, %207 : vector<8x128xf32>
    %c0_226 = arith.constant 0 : index
    %c8 = arith.constant 8 : index
    %c0_227 = arith.constant 0 : index
    %209 = vector.load %arg8[%c0_226, %c8, %c0_227] : memref<8x14x224xf32, #tpu.memory_space<vmem>>, vector<8x1x224xf32>
    %210 = vector.shape_cast %209 : vector<8x1x224xf32> to vector<8x224xf32>
    %c8_228 = arith.constant 8 : index
    %c0_229 = arith.constant 0 : index
    %c0_230 = arith.constant 0 : index
    %211 = vector.load %arg6[%c8_228, %c0_229, %c0_230] : memref<14x224x128xf32, #tpu.memory_space<vmem>>, vector<1x224x128xf32>
    %212 = vector.shape_cast %211 : vector<1x224x128xf32> to vector<224x128xf32>
    %cst_231 = arith.constant dense<0.000000e+00> : vector<8x128xf32>
    %213 = tpu.matmul %210, %212, %cst_231 {dimension_numbers = #tpu.dot_dimension_numbers<[1], [0], [0], [1], [0, 0, 1, 1], [], []>} : vector<8x224xf32>, vector<224x128xf32>, vector<8x128xf32> -> vector<8x128xf32>
    %214 = arith.addf %208, %213 : vector<8x128xf32>
    %c0_232 = arith.constant 0 : index
    %c9 = arith.constant 9 : index
    %c0_233 = arith.constant 0 : index
    %215 = vector.load %arg8[%c0_232, %c9, %c0_233] : memref<8x14x224xf32, #tpu.memory_space<vmem>>, vector<8x1x224xf32>
    %216 = vector.shape_cast %215 : vector<8x1x224xf32> to vector<8x224xf32>
    %c9_234 = arith.constant 9 : index
    %c0_235 = arith.constant 0 : index
    %c0_236 = arith.constant 0 : index
    %217 = vector.load %arg6[%c9_234, %c0_235, %c0_236] : memref<14x224x128xf32, #tpu.memory_space<vmem>>, vector<1x224x128xf32>
    %218 = vector.shape_cast %217 : vector<1x224x128xf32> to vector<224x128xf32>
    %cst_237 = arith.constant dense<0.000000e+00> : vector<8x128xf32>
    %219 = tpu.matmul %216, %218, %cst_237 {dimension_numbers = #tpu.dot_dimension_numbers<[1], [0], [0], [1], [0, 0, 1, 1], [], []>} : vector<8x224xf32>, vector<224x128xf32>, vector<8x128xf32> -> vector<8x128xf32>
    %220 = arith.addf %214, %219 : vector<8x128xf32>
    %c0_238 = arith.constant 0 : index
    %c10 = arith.constant 10 : index
    %c0_239 = arith.constant 0 : index
    %221 = vector.load %arg8[%c0_238, %c10, %c0_239] : memref<8x14x224xf32, #tpu.memory_space<vmem>>, vector<8x1x224xf32>
    %222 = vector.shape_cast %221 : vector<8x1x224xf32> to vector<8x224xf32>
    %c10_240 = arith.constant 10 : index
    %c0_241 = arith.constant 0 : index
    %c0_242 = arith.constant 0 : index
    %223 = vector.load %arg6[%c10_240, %c0_241, %c0_242] : memref<14x224x128xf32, #tpu.memory_space<vmem>>, vector<1x224x128xf32>
    %224 = vector.shape_cast %223 : vector<1x224x128xf32> to vector<224x128xf32>
    %cst_243 = arith.constant dense<0.000000e+00> : vector<8x128xf32>
    %225 = tpu.matmul %222, %224, %cst_243 {dimension_numbers = #tpu.dot_dimension_numbers<[1], [0], [0], [1], [0, 0, 1, 1], [], []>} : vector<8x224xf32>, vector<224x128xf32>, vector<8x128xf32> -> vector<8x128xf32>
    %226 = arith.addf %220, %225 : vector<8x128xf32>
    %c0_244 = arith.constant 0 : index
    %c11 = arith.constant 11 : index
    %c0_245 = arith.constant 0 : index
    %227 = vector.load %arg8[%c0_244, %c11, %c0_245] : memref<8x14x224xf32, #tpu.memory_space<vmem>>, vector<8x1x224xf32>
    %228 = vector.shape_cast %227 : vector<8x1x224xf32> to vector<8x224xf32>
    %c11_246 = arith.constant 11 : index
    %c0_247 = arith.constant 0 : index
    %c0_248 = arith.constant 0 : index
    %229 = vector.load %arg6[%c11_246, %c0_247, %c0_248] : memref<14x224x128xf32, #tpu.memory_space<vmem>>, vector<1x224x128xf32>
    %230 = vector.shape_cast %229 : vector<1x224x128xf32> to vector<224x128xf32>
    %cst_249 = arith.constant dense<0.000000e+00> : vector<8x128xf32>
    %231 = tpu.matmul %228, %230, %cst_249 {dimension_numbers = #tpu.dot_dimension_numbers<[1], [0], [0], [1], [0, 0, 1, 1], [], []>} : vector<8x224xf32>, vector<224x128xf32>, vector<8x128xf32> -> vector<8x128xf32>
    %232 = arith.addf %226, %231 : vector<8x128xf32>
    %c0_250 = arith.constant 0 : index
    %c12 = arith.constant 12 : index
    %c0_251 = arith.constant 0 : index
    %233 = vector.load %arg8[%c0_250, %c12, %c0_251] : memref<8x14x224xf32, #tpu.memory_space<vmem>>, vector<8x1x224xf32>
    %234 = vector.shape_cast %233 : vector<8x1x224xf32> to vector<8x224xf32>
    %c12_252 = arith.constant 12 : index
    %c0_253 = arith.constant 0 : index
    %c0_254 = arith.constant 0 : index
    %235 = vector.load %arg6[%c12_252, %c0_253, %c0_254] : memref<14x224x128xf32, #tpu.memory_space<vmem>>, vector<1x224x128xf32>
    %236 = vector.shape_cast %235 : vector<1x224x128xf32> to vector<224x128xf32>
    %cst_255 = arith.constant dense<0.000000e+00> : vector<8x128xf32>
    %237 = tpu.matmul %234, %236, %cst_255 {dimension_numbers = #tpu.dot_dimension_numbers<[1], [0], [0], [1], [0, 0, 1, 1], [], []>} : vector<8x224xf32>, vector<224x128xf32>, vector<8x128xf32> -> vector<8x128xf32>
    %238 = arith.addf %232, %237 : vector<8x128xf32>
    %c0_256 = arith.constant 0 : index
    %c13 = arith.constant 13 : index
    %c0_257 = arith.constant 0 : index
    %239 = vector.load %arg8[%c0_256, %c13, %c0_257] : memref<8x14x224xf32, #tpu.memory_space<vmem>>, vector<8x1x224xf32>
    %240 = vector.shape_cast %239 : vector<8x1x224xf32> to vector<8x224xf32>
    %c13_258 = arith.constant 13 : index
    %c0_259 = arith.constant 0 : index
    %c0_260 = arith.constant 0 : index
    %241 = vector.load %arg6[%c13_258, %c0_259, %c0_260] : memref<14x224x128xf32, #tpu.memory_space<vmem>>, vector<1x224x128xf32>
    %242 = vector.shape_cast %241 : vector<1x224x128xf32> to vector<224x128xf32>
    %cst_261 = arith.constant dense<0.000000e+00> : vector<8x128xf32>
    %243 = tpu.matmul %240, %242, %cst_261 {dimension_numbers = #tpu.dot_dimension_numbers<[1], [0], [0], [1], [0, 0, 1, 1], [], []>} : vector<8x224xf32>, vector<224x128xf32>, vector<8x128xf32> -> vector<8x128xf32>
    %244 = arith.addf %238, %243 : vector<8x128xf32>
    %c0_262 = arith.constant 0 : index
    %c0_263 = arith.constant 0 : index
    %245 = vector.load %arg7[%c0_262, %c0_263] : memref<1x128xf32, #tpu.memory_space<vmem>>, vector<1x128xf32>
    %246 = vector.broadcast %245 : vector<1x128xf32> to vector<8x128xf32>
    %247 = arith.addf %244, %246 : vector<8x128xf32>
    %c0_264 = arith.constant 0 : index
    %c0_265 = arith.constant 0 : index
    %248 = vector.load %arg9[%c0_264, %c0_265] : memref<8x128xf32, #tpu.memory_space<vmem>>, vector<8x128xf32>
    tpu.vector_store %arg9[%c0_264, %c0_265], %247 {strides = array<i32>} : memref<8x128xf32, #tpu.memory_space<vmem>>, vector<8x128xf32>,
    return
  }
  func.func @transform_0(%arg0: i32) -> (i32, i32, i32) {
    %c0_i32 = arith.constant 0 : i32
    %c0_i32_0 = arith.constant 0 : i32
    %c0_i32_1 = arith.constant 0 : i32
    return %arg0, %c0_i32, %c0_i32_0 : i32, i32, i32
  }
  func.func @transform_1(%arg0: i32) -> (i32, i32, i32, i32) {
    %c0_i32 = arith.constant 0 : i32
    %c0_i32_0 = arith.constant 0 : i32
    %c0_i32_1 = arith.constant 0 : i32
    %c0_i32_2 = arith.constant 0 : i32
    %c0_i32_3 = arith.constant 0 : i32
    return %c0_i32, %c0_i32_0, %c0_i32_1, %c0_i32_2 : i32, i32, i32, i32
  }
  func.func @transform_2(%arg0: i32) -> (i32, i32) {
    %c0_i32 = arith.constant 0 : i32
    %c0_i32_0 = arith.constant 0 : i32
    %c0_i32_1 = arith.constant 0 : i32
    return %c0_i32, %c0_i32_0 : i32, i32
  }
  func.func @transform_3(%arg0: i32) -> (i32, i32, i32) {
    %c0_i32 = arith.constant 0 : i32
    %c0_i32_0 = arith.constant 0 : i32
    %c0_i32_1 = arith.constant 0 : i32
    %c0_i32_2 = arith.constant 0 : i32
    return %c0_i32, %c0_i32_0, %c0_i32_1 : i32, i32, i32
  }
  func.func @transform_4(%arg0: i32) -> (i32, i32) {
    %c0_i32 = arith.constant 0 : i32
    %c0_i32_0 = arith.constant 0 : i32
    %c0_i32_1 = arith.constant 0 : i32
    return %c0_i32, %c0_i32_0 : i32, i32
  }
  func.func @transform_5(%arg0: i32) -> (i32, i32, i32) {
    %c0_i32 = arith.constant 0 : i32
    %c0_i32_0 = arith.constant 0 : i32
    %c0_i32_1 = arith.constant 0 : i32
    %c0_i32_2 = arith.constant 0 : i32
    return %c0_i32, %c0_i32_0, %c0_i32_1 : i32, i32, i32
  }
  func.func @transform_6(%arg0: i32) -> (i32, i32) {
    %c0_i32 = arith.constant 0 : i32
    %c0_i32_0 = arith.constant 0 : i32
    %c0_i32_1 = arith.constant 0 : i32
    return %c0_i32, %c0_i32_0 : i32, i32
  }
  func.func @transform_7(%arg0: i32) -> (i32, i32, i32) {
    %c0_i32 = arith.constant 0 : i32
    %c0_i32_0 = arith.constant 0 : i32
    %c0_i32_1 = arith.constant 0 : i32
    return %arg0, %c0_i32, %c0_i32_0 : i32, i32, i32
  }
  func.func @transform_8(%arg0: i32) -> (i32, i32) {
    %c0_i32 = arith.constant 0 : i32
    %c0_i32_0 = arith.constant 0 : i32
    return %arg0, %c0_i32 : i32, i32
  }
}

</mosaic_0001>

<llo_original>
// kernel: tile.23
$region0: #{tile.23}
  #allocation0 [shape = 's32[1]{0}', space=sflag, size = 0x4, scoped, tag = 'scoped memory for tile.23']
  %s0 = inlined_call_operand.vmem [shape: f32[16], index: 0, kind: input, shape index: {}]
  %s1 = inlined_call_operand.vmem [shape: f32[14,16], index: 1, kind: output, shape index: {}]
  // Predicated region
  $region2: #{tile.23} parent=0 // pred_check
    _
  $region3: #{tile.23} parent=0 // pred_check_branch
    %3 = sbr.rel (0) target = $region5
  $region4: #{tile.23} parent=0 // pred_region
    _
  $region5: #{tile.23} parent=0 // pred_fallthru
    _
  %v4 = vld [vmem:[%s0] ss:$0 sm:$0xff]
  %5 = vst [vmem:[%s1] sm:$0xff] %v4
  %s6 = scalar_lea.vmem %s1, 8
  %7 = vst [vmem:[%s6] sm:$0xff] %v4

// kernel: tile.24
$region0: #{tile.24}
  %s0 = inlined_call_operand.vmem [shape: f32[14,16], index: 0, kind: input, shape index: {}]
  %s1 = inlined_call_operand.vmem [shape: f32[224], index: 1, kind: output, shape index: {}]
  $region1: #{tile.24} parent=0
    #allocation0 [shape = 'u8[4096]{0}', space=vmem, size = 0x1000, scoped, tag = 'scoped mem for output reshape']
    %s2 = smov 3
    %v3 = vld [vmem:[%s0] ss:$8 sm:%s2]
    %vm4 = vcmask 130048
    %5 = vst.msk [vmem:[#allocation0] sm:$0x3] %vm4, %v3
    %s6 = scalar_lea.vmem %s0, 7
    %v7 = vld [vmem:[%s6] sm:$0x1]
    %8 = vrot.lane.b32.xlu0 %v7, 112
    %v9 = vpop.permute.xlu0 %8
    %vm10 = vcmask 1048448
    %11 = vst.msk [vmem:[#allocation0] sm:$0x1] %vm10, %v9
    %s12 = scalar_lea.vmem %s0, 6
    %v13 = vld [vmem:[%s12] sm:$0x1]
    %14 = vrot.lane.b32.xlu0 %v13, 96
    %v15 = vpop.permute.xlu0 %14
    %vm16 = vcmask 917248
    %17 = vst.msk [vmem:[#allocation0] sm:$0x1] %vm16, %v15
    %s18 = scalar_lea.vmem %s0, 5
    %s19 = smov 3
    %v20 = vld [vmem:[%s18] ss:$8 sm:%s19]
    %21 = vrot.lane.b32.xlu0 %v20, 80
    %v22 = vpop.permute.xlu0 %21
    %vm23 = vcmask 786048
    %24 = vst.msk [vmem:[#allocation0] sm:$0x3] %vm23, %v22
    %s25 = scalar_lea.vmem %s0, 4
    %s26 = smov 3
    %v27 = vld [vmem:[%s25] ss:$8 sm:%s26]
    %28 = vrot.lane.b32.xlu0 %v27, 64
    %v29 = vpop.permute.xlu0 %28
    %vm30 = vcmask 654848
    %31 = vst.msk [vmem:[#allocation0] sm:$0x3] %vm30, %v29
    %s32 = scalar_lea.vmem %s0, 3
    %s33 = smov 3
    %v34 = vld [vmem:[%s32] ss:$8 sm:%s33]
    %35 = vrot.lane.b32.xlu0 %v34, 48
    %v36 = vpop.permute.xlu0 %35
    %vm37 = vcmask 523648
    %38 = vst.msk [vmem:[#allocation0] sm:$0x3] %vm37, %v36
    %s39 = scalar_lea.vmem %s0, 2
    %s40 = smov 3
    %v41 = vld [vmem:[%s39] ss:$8 sm:%s40]
    %42 = vrot.lane.b32.xlu0 %v41, 32
    %v43 = vpop.permute.xlu0 %42
    %vm44 = vcmask 392448
    %45 = vst.msk [vmem:[#allocation0] sm:$0x3] %vm44, %v43
    %s46 = scalar_lea.vmem %s0, 1
    %s47 = smov 3
    %v48 = vld [vmem:[%s46] ss:$8 sm:%s47]
    %49 = vrot.lane.b32.xlu0 %v48, 16
    %v50 = vpop.permute.xlu0 %49
    %vm51 = vcmask 261248
    %52 = vst.msk [vmem:[#allocation0] sm:$0x3] %vm51, %v50
    %s54 = sshllo.u32 0, 2
    %v56 = vld [vmem:[#allocation0] sm:%s54]
    %s57 = sshllo.u32 0, 2
    %58 = vst [vmem:[%s1] sm:%s57] %v56

// kernel: tile.38
$region0: #{tile.38}
  %s0 = inlined_call_operand.vmem [shape: f32[14,16], index: 0, kind: input, shape index: {}]
  %s1 = inlined_call_operand.vmem [shape: f32[1,224], index: 1, kind: output, shape index: {}]
  $region1: #{tile.38} parent=0
    #allocation0 [shape = 'u8[8192]{0}', space=vmem, size = 0x2000, scoped, tag = 'scoped mem for output reshape']
    %s2 = smov 3
    %v3 = vld [vmem:[%s0] ss:$8 sm:%s2]
    %vm4 = vcmask 130048
    %5 = vst.msk [vmem:[#allocation0] ss:$8 sm:$0x3] %vm4, %v3
    %s6 = scalar_lea.vmem %s0, 7
    %v7 = vld [vmem:[%s6] sm:$0x1]
    %8 = vrot.lane.b32.xlu0 %v7, 112
    %v9 = vpop.permute.xlu0 %8
    %vm10 = vcmask 1048448
    %11 = vst.msk [vmem:[#allocation0] sm:$0x1] %vm10, %v9
    %s12 = scalar_lea.vmem %s0, 6
    %v13 = vld [vmem:[%s12] sm:$0x1]
    %14 = vrot.lane.b32.xlu0 %v13, 96
    %v15 = vpop.permute.xlu0 %14
    %vm16 = vcmask 917248
    %17 = vst.msk [vmem:[#allocation0] sm:$0x1] %vm16, %v15
    %s18 = scalar_lea.vmem %s0, 5
    %s19 = smov 3
    %v20 = vld [vmem:[%s18] ss:$8 sm:%s19]
    %21 = vrot.lane.b32.xlu0 %v20, 80
    %v22 = vpop.permute.xlu0 %21
    %vm23 = vcmask 786048
    %24 = vst.msk [vmem:[#allocation0] ss:$8 sm:$0x3] %vm23, %v22
    %s25 = scalar_lea.vmem %s0, 4
    %s26 = smov 3
    %v27 = vld [vmem:[%s25] ss:$8 sm:%s26]
    %28 = vrot.lane.b32.xlu0 %v27, 64
    %v29 = vpop.permute.xlu0 %28
    %vm30 = vcmask 654848
    %31 = vst.msk [vmem:[#allocation0] ss:$8 sm:$0x3] %vm30, %v29
    %s32 = scalar_lea.vmem %s0, 3
    %s33 = smov 3
    %v34 = vld [vmem:[%s32] ss:$8 sm:%s33]
    %35 = vrot.lane.b32.xlu0 %v34, 48
    %v36 = vpop.permute.xlu0 %35
    %vm37 = vcmask 523648
    %38 = vst.msk [vmem:[#allocation0] ss:$8 sm:$0x3] %vm37, %v36
    %s39 = scalar_lea.vmem %s0, 2
    %s40 = smov 3
    %v41 = vld [vmem:[%s39] ss:$8 sm:%s40]
    %42 = vrot.lane.b32.xlu0 %v41, 32
    %v43 = vpop.permute.xlu0 %42
    %vm44 = vcmask 392448
    %45 = vst.msk [vmem:[#allocation0] ss:$8 sm:$0x3] %vm44, %v43
    %s46 = scalar_lea.vmem %s0, 1
    %s47 = smov 3
    %v48 = vld [vmem:[%s46] ss:$8 sm:%s47]
    %49 = vrot.lane.b32.xlu0 %v48, 16
    %v50 = vpop.permute.xlu0 %49
    %vm51 = vcmask 261248
    %52 = vst.msk [vmem:[#allocation0] ss:$8 sm:$0x3] %vm51, %v50
    %s54 = sshllo.u32 0, 1
    %v56 = vld [vmem:[#allocation0] sm:%s54]
    %s57 = sshllo.u32 0, 1
    %58 = vst [vmem:[%s1] sm:%s57] %v56
    %s59 = scalar_lea.vmem [#allocation0], 8
    %v60 = vld [vmem:[%s59] sm:%s54]
    %s61 = sshllo.u32 0, 1
    %s62 = scalar_lea.vmem %s1, 1
    %63 = vst [vmem:[%s62] sm:%s61] %v60

// kernel: forward_pallas.1
$region0: #{forward_pallas.1}
  #allocation0 [shape = 'u32[]', space=smem, size = 0x4, offset = 0x4, fixed_abs, tag = 'smem constant byte address 0x4 - core index']
  #allocation1 [shape = 'u32[144,128]{1,0:T(1,128)}', space=vmem, size = 0x12000, scoped, tag = 'internal scratch']
  #allocation2 [shape = 'f32[8,18,256]{2,1,0:T(8,128)}', space=vmem, size = 0x30000, scoped, tag = 'scratch operand']
  %s0 = inlined_call_operand.vmem [shape: f32[16,34,32], index: 0, kind: input, shape index: {}]
  %s1 = inlined_call_operand.vmem [shape: f32[3,2,32,256], index: 1, kind: input, shape index: {}]
  %s2 = inlined_call_operand.vmem [shape: f32[2,256], index: 2, kind: input, shape index: {}]
  %s3 = inlined_call_operand.vmem [shape: f32[3,256,224], index: 3, kind: input, shape index: {}]
  %s4 = inlined_call_operand.vmem [shape: f32[2,224], index: 4, kind: input, shape index: {}]
  %s5 = inlined_call_operand.vmem [shape: f32[14,224,128], index: 5, kind: input, shape index: {}]
  %s6 = inlined_call_operand.vmem [shape: f32[1,128], index: 6, kind: input, shape index: {}]
  %s7 = inlined_call_operand.vmem [shape: f32[16,14,224], index: 7, kind: output, shape index: {0}]
  %s8 = inlined_call_operand.hbm [shape: f32[16,128], index: 8, kind: output, shape index: {1}]
  %9 = xla_tuple %s7, %s8
  %s10 = sld [smem:[#allocation0]]
  $region69: #{forward_pallas.1} parent=0
    _
  %s12 = ssub.s32 1, %s10
  %s13 = scalar_select 0, %s12, %s10
  $region1: #{forward_pallas.1} parent=0
    #allocation3 [shape = 'u8[8192]{0}', space=vmem, size = 0x2000, scoped, tag = 'output window, operand 1']
    #allocation4 [shape = 's32[2]{0}', space=sflag, size = 0x8, scoped, tag = 'scoped memory for forward_pallas.1']
    %14 = vsyncpa [#allocation4], 0
    %s15 = scalar_lea.sflag [#allocation4], 1
    %16 = vsyncpa %s15, 0
    loop: start=0, step=1, limit=4
    $region2: #{forward_pallas.1} parent=1 // loop_pre_header
      _
    $region3: #{forward_pallas.1} parent=1 // loop_header
      %s18 = sphi 0, %s22
      %p19 = scmp.ge.s32.totalorder %s18, 4
      %s28 = sphi 0, %s30
      %s31 = sphi 0, %s28
      %s32 = sphi 0, %s31
      %s48 = sphi 0, %s32
      %s52 = sphi 0, %s52
      %s54 = sphi 0, %s52
      %s55 = sphi 0, %s54
      %s69 = sphi 0, %s55
      %s73 = sphi 0, %s73
      %s75 = sphi 0, %s73
      %s76 = sphi 0, %s75
      %s90 = sphi 0, %s76
      %s94 = sphi 0, %s94
      %s96 = sphi 0, %s94
      %s97 = sphi 0, %s96
      %s111 = sphi 0, %s97
      %s115 = sphi 0, %s115
      %s117 = sphi 0, %s115
      %s118 = sphi 0, %s117
      %s132 = sphi 0, %s118
      %s136 = sphi 0, %s136
      %s138 = sphi 0, %s136
      %s139 = sphi 0, %s138
      %s153 = sphi 0, %s139
      %s157 = sphi 0, %s157
      %s159 = sphi 0, %s157
      %s160 = sphi 0, %s159
      %s174 = sphi 0, %s160
      %s180 = sphi 0, %s182
      %s183 = sphi 0, %s180
      %s184 = sphi 0, %s183
      %s200 = sphi 0, %s184
      %s206 = sphi 0, %s208
      %s209 = sphi 0, %s206
      %s210 = sphi 0, %s209
      %s226 = sphi 0, %s210
    $region4: #{forward_pallas.1} parent=1 // loop_header_branch
      %21 = sbr.rel (%p19) target = $region8
    $region5: #{forward_pallas.1} parent=1 // loop_body
      %s23 = ssub.s32 %s18, 1
      %s24 = ssub.s32 %s18, 2
      %s25 = sadd.s32 %s18, 1
      %s26 = ssub.s32 %s18, %s25
      %p27 = scmp.eq.s32.totalorder %s26, 0
      %s29 = sadd.s32 %s28, 1
      %s30 = scalar_select %p27, %s28, %s29
      %p33 = pneg %p27
      %p34 = scmp.eq.s32.totalorder %s18, 1
      %p35 = por %p33, %p34
      %p36 = scmp.ne.s32.totalorder %s28, %s31
      %p37 = scmp.eq.s32.totalorder %s18, 0
      %p38 = por %p36, %p37
      %p39 = scmp.ne.s32.totalorder %s28, %s31
      %p40 = scmp.eq.s32.totalorder %s23, 1
      %p41 = por %p39, %p40
      %p42 = scmp.ne.s32.totalorder %s31, %s32
      %p43 = scmp.eq.s32.totalorder %s23, 0
      %p44 = por %p42, %p43
      %p45 = scmp.ne.s32.totalorder %s31, %s32
      %p46 = scmp.eq.s32.totalorder %s24, 1
      %p47 = por %p45, %p46
      %p49 = scmp.ne.s32.totalorder %s32, %s48
      %p50 = scmp.eq.s32.totalorder %s24, 0
      %p51 = por %p49, %p50
      %s53 = sadd.s32 %s52, 1
      %p56 = scmp.eq.s32.totalorder %s18, 1
      %p57 = scmp.ne.s32.totalorder %s52, %s54
      %p58 = scmp.eq.s32.totalorder %s18, 0
      %p59 = por %p57, %p58
      %p60 = scmp.ne.s32.totalorder %s52, %s54
      %p61 = scmp.eq.s32.totalorder %s23, 1
      %p62 = por %p60, %p61
      %p63 = scmp.ne.s32.totalorder %s54, %s55
      %p64 = scmp.eq.s32.totalorder %s23, 0
      %p65 = por %p63, %p64
      %p66 = scmp.ne.s32.totalorder %s54, %s55
      %p67 = scmp.eq.s32.totalorder %s24, 1
      %p68 = por %p66, %p67
      %p70 = scmp.ne.s32.totalorder %s55, %s69
      %p71 = scmp.eq.s32.totalorder %s24, 0
      %p72 = por %p70, %p71
      %s74 = sadd.s32 %s73, 1
      %p77 = scmp.eq.s32.totalorder %s18, 1
      %p78 = scmp.ne.s32.totalorder %s73, %s75
      %p79 = scmp.eq.s32.totalorder %s18, 0
      %p80 = por %p78, %p79
      %p81 = scmp.ne.s32.totalorder %s73, %s75
      %p82 = scmp.eq.s32.totalorder %s23, 1
      %p83 = por %p81, %p82
      %p84 = scmp.ne.s32.totalorder %s75, %s76
      %p85 = scmp.eq.s32.totalorder %s23, 0
      %p86 = por %p84, %p85
      %p87 = scmp.ne.s32.totalorder %s75, %s76
      %p88 = scmp.eq.s32.totalorder %s24, 1
      %p89 = por %p87, %p88
      %p91 = scmp.ne.s32.totalorder %s76, %s90
      %p92 = scmp.eq.s32.totalorder %s24, 0
      %p93 = por %p91, %p92
      %s95 = sadd.s32 %s94, 1
      %p98 = scmp.eq.s32.totalorder %s18, 1
      %p99 = scmp.ne.s32.totalorder %s94, %s96
      %p100 = scmp.eq.s32.totalorder %s18, 0
      %p101 = por %p99, %p100
      %p102 = scmp.ne.s32.totalorder %s94, %s96
      %p103 = scmp.eq.s32.totalorder %s23, 1
      %p104 = por %p102, %p103
      %p105 = scmp.ne.s32.totalorder %s96, %s97
      %p106 = scmp.eq.s32.totalorder %s23, 0
      %p107 = por %p105, %p106
      %p108 = scmp.ne.s32.totalorder %s96, %s97
      %p109 = scmp.eq.s32.totalorder %s24, 1
      %p110 = por %p108, %p109
      %p112 = scmp.ne.s32.totalorder %s97, %s111
      %p113 = scmp.eq.s32.totalorder %s24, 0
      %p114 = por %p112, %p113
      %s116 = sadd.s32 %s115, 1
      %p119 = scmp.eq.s32.totalorder %s18, 1
      %p120 = scmp.ne.s32.totalorder %s115, %s117
      %p121 = scmp.eq.s32.totalorder %s18, 0
      %p122 = por %p120, %p121
      %p123 = scmp.ne.s32.totalorder %s115, %s117
      %p124 = scmp.eq.s32.totalorder %s23, 1
      %p125 = por %p123, %p124
      %p126 = scmp.ne.s32.totalorder %s117, %s118
      %p127 = scmp.eq.s32.totalorder %s23, 0
      %p128 = por %p126, %p127
      %p129 = scmp.ne.s32.totalorder %s117, %s118
      %p130 = scmp.eq.s32.totalorder %s24, 1
      %p131 = por %p129, %p130
      %p133 = scmp.ne.s32.totalorder %s118, %s132
      %p134 = scmp.eq.s32.totalorder %s24, 0
      %p135 = por %p133, %p134
      %s137 = sadd.s32 %s136, 1
      %p140 = scmp.eq.s32.totalorder %s18, 1
      %p141 = scmp.ne.s32.totalorder %s136, %s138
      %p142 = scmp.eq.s32.totalorder %s18, 0
      %p143 = por %p141, %p142
      %p144 = scmp.ne.s32.totalorder %s136, %s138
      %p145 = scmp.eq.s32.totalorder %s23, 1
      %p146 = por %p144, %p145
      %p147 = scmp.ne.s32.totalorder %s138, %s139
      %p148 = scmp.eq.s32.totalorder %s23, 0
      %p149 = por %p147, %p148
      %p150 = scmp.ne.s32.totalorder %s138, %s139
      %p151 = scmp.eq.s32.totalorder %s24, 1
      %p152 = por %p150, %p151
      %p154 = scmp.ne.s32.totalorder %s139, %s153
      %p155 = scmp.eq.s32.totalorder %s24, 0
      %p156 = por %p154, %p155
      %s158 = sadd.s32 %s157, 1
      %p161 = scmp.eq.s32.totalorder %s18, 1
      %p162 = scmp.ne.s32.totalorder %s157, %s159
      %p163 = scmp.eq.s32.totalorder %s18, 0
      %p164 = por %p162, %p163
      %p165 = scmp.ne.s32.totalorder %s157, %s159
      %p166 = scmp.eq.s32.totalorder %s23, 1
      %p167 = por %p165, %p166
      %p168 = scmp.ne.s32.totalorder %s159, %s160
      %p169 = scmp.eq.s32.totalorder %s23, 0
      %p170 = por %p168, %p169
      %p171 = scmp.ne.s32.totalorder %s159, %s160
      %p172 = scmp.eq.s32.totalorder %s24, 1
      %p173 = por %p171, %p172
      %p175 = scmp.ne.s32.totalorder %s160, %s174
      %p176 = scmp.eq.s32.totalorder %s24, 0
      %p177 = por %p175, %p176
      %s178 = ssub.s32 %s18, %s25
      %p179 = scmp.eq.s32.totalorder %s178, 0
      %s181 = sadd.s32 %s180, 1
      %s182 = scalar_select %p179, %s180, %s181
      %p185 = pneg %p179
      %p186 = scmp.eq.s32.totalorder %s18, 1
      %p187 = por %p185, %p186
      %p188 = scmp.ne.s32.totalorder %s180, %s183
      %p189 = scmp.eq.s32.totalorder %s18, 0
      %p190 = por %p188, %p189
      %p191 = scmp.ne.s32.totalorder %s180, %s183
      %p192 = scmp.eq.s32.totalorder %s23, 1
      %p193 = por %p191, %p192
      %p194 = scmp.ne.s32.totalorder %s183, %s184
      %p195 = scmp.eq.s32.totalorder %s23, 0
      %p196 = por %p194, %p195
      %p197 = scmp.ne.s32.totalorder %s183, %s184
      %p198 = scmp.eq.s32.totalorder %s24, 1
      %p199 = por %p197, %p198
      %p201 = scmp.ne.s32.totalorder %s184, %s200
      %p202 = scmp.eq.s32.totalorder %s24, 0
      %p203 = por %p201, %p202
      %s204 = ssub.s32 %s18, %s25
      %p205 = scmp.eq.s32.totalorder %s204, 0
      %s207 = sadd.s32 %s206, 1
      %s208 = scalar_select %p205, %s206, %s207
      %p211 = pneg %p205
      %p212 = scmp.eq.s32.totalorder %s18, 1
      %p213 = por %p211, %p212
      %p214 = scmp.ne.s32.totalorder %s206, %s209
      %p215 = scmp.eq.s32.totalorder %s18, 0
      %p216 = por %p214, %p215
      %p217 = scmp.ne.s32.totalorder %s206, %s209
      %p218 = scmp.eq.s32.totalorder %s23, 1
      %p219 = por %p217, %p218
      %p220 = scmp.ne.s32.totalorder %s209, %s210
      %p221 = scmp.eq.s32.totalorder %s23, 0
      %p222 = por %p220, %p221
      %p223 = scmp.ne.s32.totalorder %s209, %s210
      %p224 = scmp.eq.s32.totalorder %s24, 1
      %p225 = por %p223, %p224
      %p227 = scmp.ne.s32.totalorder %s210, %s226
      %p228 = scmp.eq.s32.totalorder %s24, 0
      %p229 = por %p227, %p228
      %p230 = scmp.le.s32.totalorder 1, %s18
      %p231 = scmp.lt.s32.totalorder %s18, 3
      %p232 = pnand %p230, %p231
      %p233 = pneg %p232
      // Predicated region
      $region9: #{forward_pallas.1} parent=5 // pred_check
        _
      $region10: #{forward_pallas.1} parent=5 // pred_check_branch
        %235 = sbr.rel (%p232) target = $region12
      $region11: #{forward_pallas.1} parent=5 // pred_region
        %s236 = ssub.s32 %s18, 1
        // Predicated region
        $region13: #{forward_pallas.1} parent=11 // pred_check
          %p237 = pneg %p65
        $region14: #{forward_pallas.1} parent=11 // pred_check_branch
          %239 = sbr.rel (%p237) target = $region16
        $region15: #{forward_pallas.1} parent=11 // pred_region
          _
        $region16: #{forward_pallas.1} parent=11 // pred_fallthru
          _
        // Predicated region
        $region17: #{forward_pallas.1} parent=11 // pred_check
          %p240 = pneg %p86
        $region18: #{forward_pallas.1} parent=11 // pred_check_branch
          %242 = sbr.rel (%p240) target = $region20
        $region19: #{forward_pallas.1} parent=11 // pred_region
          _
        $region20: #{forward_pallas.1} parent=11 // pred_fallthru
          _
        // Predicated region
        $region21: #{forward_pallas.1} parent=11 // pred_check
          %p243 = pneg %p107
        $region22: #{forward_pallas.1} parent=11 // pred_check_branch
          %245 = sbr.rel (%p243) target = $region24
        $region23: #{forward_pallas.1} parent=11 // pred_region
          _
        $region24: #{forward_pallas.1} parent=11 // pred_fallthru
          _
        // Predicated region
        $region25: #{forward_pallas.1} parent=11 // pred_check
          %p246 = pneg %p128
        $region26: #{forward_pallas.1} parent=11 // pred_check_branch
          %248 = sbr.rel (%p246) target = $region28
        $region27: #{forward_pallas.1} parent=11 // pred_region
          _
        $region28: #{forward_pallas.1} parent=11 // pred_fallthru
          _
        // Predicated region
        $region29: #{forward_pallas.1} parent=11 // pred_check
          %p249 = pneg %p149
        $region30: #{forward_pallas.1} parent=11 // pred_check_branch
          %251 = sbr.rel (%p249) target = $region32
        $region31: #{forward_pallas.1} parent=11 // pred_region
          _
        $region32: #{forward_pallas.1} parent=11 // pred_fallthru
          _
        // Predicated region
        $region33: #{forward_pallas.1} parent=11 // pred_check
          %p252 = pneg %p170
        $region34: #{forward_pallas.1} parent=11 // pred_check_branch
          %254 = sbr.rel (%p252) target = $region36
        $region35: #{forward_pallas.1} parent=11 // pred_region
          _
        $region36: #{forward_pallas.1} parent=11 // pred_fallthru
          _
      $region12: #{forward_pallas.1} parent=5 // pred_fallthru
        _
      %p255 = scmp.lt.s32.totalorder %s18, 2
      // Predicated region
      $region37: #{forward_pallas.1} parent=5 // pred_check
        %p256 = pneg %p255
      $region38: #{forward_pallas.1} parent=5 // pred_check_branch
        %258 = sbr.rel (%p256) target = $region40
      $region39: #{forward_pallas.1} parent=5 // pred_region
        // Predicated region
        $region41: #{forward_pallas.1} parent=39 // pred_check
          %p259 = pneg %p38
        $region42: #{forward_pallas.1} parent=39 // pred_check_branch
          %261 = sbr.rel (%p259) target = $region44
        $region43: #{forward_pallas.1} parent=39 // pred_region
          %s262 = smul.u32 8, %s18
          %p263 = scmp.lt.s32.totalorder %s262, 15
          %s264 = scalar_select %p263, %s262, 15
          %s265 = smul.addr %s264, 5
          %s266 = smul.addr %s265, 8
          %s267 = scalar_lea.vmem %s0, %s266
          %s268 = smul.u32 8, %s18
        $region44: #{forward_pallas.1} parent=39 // pred_fallthru
          _
      $region40: #{forward_pallas.1} parent=5 // pred_fallthru
        _
      %p269 = scmp.le.s32.totalorder 1, %s18
      %p270 = scmp.lt.s32.totalorder %s18, 3
      %p271 = pnand %p269, %p270
      %p272 = pneg %p271
      // Predicated region
      $region45: #{forward_pallas.1} parent=5 // pred_check
        _
      $region46: #{forward_pallas.1} parent=5 // pred_check_branch
        %274 = sbr.rel (%p271) target = $region48
      $region47: #{forward_pallas.1} parent=5 // pred_region
        %s275 = ssub.s32 %s18, 1
        %s276 = smul.u32 8, %s23
        %p277 = scmp.lt.s32.totalorder %s276, 15
        %s278 = scalar_select %p277, %s276, 15
        %s279 = smul.addr %s278, 5
        %s280 = smul.addr %s279, 8
        %s281 = scalar_lea.vmem %s0, %s280
        %p282 = pneg %p44
        %p283 = pneg %p41
        %p284 = pneg %p65
        %p285 = pneg %p62
        %p286 = pneg %p86
        %p287 = pneg %p83
        %p288 = pneg %p107
        %p289 = pneg %p104
        %p290 = pneg %p128
        %p291 = pneg %p125
        %p292 = pneg %p149
        %p293 = pneg %p146
        %p294 = pneg %p170
        %p295 = pneg %p167
        %p296 = pneg %p196
        %p297 = pneg %p193
        %s298 = smul.u32 8, %s23
        %p299 = scmp.lt.s32.totalorder %s298, 15
        %s300 = scalar_select %p299, %s298, 15
        %s301 = smul.addr %s300, 4
        %s302 = smul.addr %s301, 8
        %s303 = scalar_lea.vmem %s7, %s302
        %p304 = pneg %p222
        %p305 = pneg %p219
        %s306 = sand.u32 %s209, 1
        %s307 = scalar_lea.sflag [#allocation4], %s306
        %s308 = sand.u32 %s209, 1
        %s309 = smul.addr %s308, 8
        %s310 = scalar_lea.vmem [#allocation3], %s309
        %s311 = smul.u32 8, %s23
        %p312 = scmp.lt.s32.totalorder %s311, 15
        %s313 = scalar_select %p312, %s311, 15
        %s314 = smul.addr %s313, 5
        %s315 = smul.addr %s314, 8
        %s316 = scalar_lea.vmem %s0, %s315
        %s317 = smul.u32 8, %s23
        %s318 = smul.u32 8, %s23
        %p319 = scmp.lt.s32.totalorder %s318, 15
        %s320 = scalar_select %p319, %s318, 15
        %s321 = smul.addr %s320, 4
        %s322 = smul.addr %s321, 8
        %s323 = scalar_lea.vmem %s7, %s322
        %s324 = smul.u32 8, %s23
        %325 = vst [vmem:[#allocation2] sm:$0xff] 0.0
        %326 = vst [vmem:[#allocation2 + $0x8] sm:$0xff] 0.0
        %327 = vst [vmem:[#allocation2 + $0x10] sm:$0xff] 0.0
        %328 = vst [vmem:[#allocation2 + $0x18] sm:$0xff] 0.0
        %329 = vst [vmem:[#allocation2 + $0x20] sm:$0x3] 0.0
        %330 = vst [vmem:[#allocation2 + $0x28] sm:$0x3] 0.0
        %331 = vst [vmem:[#allocation2 + $0x30] sm:$0xff] 0.0
        %332 = vst [vmem:[#allocation2 + $0x38] sm:$0xff] 0.0
        %333 = vst [vmem:[#allocation2 + $0x40] sm:$0xff] 0.0
        %334 = vst [vmem:[#allocation2 + $0x48] sm:$0xff] 0.0
        %335 = vst [vmem:[#allocation2 + $0x50] sm:$0x3] 0.0
        %336 = vst [vmem:[#allocation2 + $0x58] sm:$0x3] 0.0
        %337 = vst [vmem:[#allocation2 + $0x60] sm:$0xff] 0.0
        %338 = vst [vmem:[#allocation2 + $0x68] sm:$0xff] 0.0
        %339 = vst [vmem:[#allocation2 + $0x70] sm:$0xff] 0.0
        %340 = vst [vmem:[#allocation2 + $0x78] sm:$0xff] 0.0
        %341 = vst [vmem:[#allocation2 + $0x80] sm:$0x3] 0.0
        %342 = vst [vmem:[#allocation2 + $0x88] sm:$0x3] 0.0
        %343 = vst [vmem:[#allocation2 + $0x90] sm:$0xff] 0.0
        %344 = vst [vmem:[#allocation2 + $0x98] sm:$0xff] 0.0
        %345 = vst [vmem:[#allocation2 + $0xa0] sm:$0xff] 0.0
        %346 = vst [vmem:[#allocation2 + $0xa8] sm:$0xff] 0.0
        %347 = vst [vmem:[#allocation2 + $0xb0] sm:$0x3] 0.0
        %348 = vst [vmem:[#allocation2 + $0xb8] sm:$0x3] 0.0
        %349 = vst [vmem:[#allocation2 + $0xc0] sm:$0xff] 0.0
        %350 = vst [vmem:[#allocation2 + $0xc8] sm:$0xff] 0.0
        %351 = vst [vmem:[#allocation2 + $0xd0] sm:$0xff] 0.0
        %352 = vst [vmem:[#allocation2 + $0xd8] sm:$0xff] 0.0
        %353 = vst [vmem:[#allocation2 + $0xe0] sm:$0x3] 0.0
        %354 = vst [vmem:[#allocation2 + $0xe8] sm:$0x3] 0.0
        %355 = vst [vmem:[#allocation2 + $0xf0] sm:$0xff] 0.0
        %356 = vst [vmem:[#allocation2 + $0xf8] sm:$0xff] 0.0
        %357 = vst [vmem:[#allocation2 + $0x100] sm:$0xff] 0.0
        %358 = vst [vmem:[#allocation2 + $0x108] sm:$0xff] 0.0
        %359 = vst [vmem:[#allocation2 + $0x110] sm:$0x3] 0.0
        %360 = vst [vmem:[#allocation2 + $0x118] sm:$0x3] 0.0
        %361 = vst [vmem:[#allocation2 + $0x120] sm:$0xff] 0.0
        %362 = vst [vmem:[#allocation2 + $0x128] sm:$0xff] 0.0
        %363 = vst [vmem:[#allocation2 + $0x130] sm:$0xff] 0.0
        %364 = vst [vmem:[#allocation2 + $0x138] sm:$0xff] 0.0
        %365 = vst [vmem:[#allocation2 + $0x140] sm:$0x3] 0.0
        %366 = vst [vmem:[#allocation2 + $0x148] sm:$0x3] 0.0
        %367 = vst [vmem:[#allocation2 + $0x150] sm:$0xff] 0.0
        %368 = vst [vmem:[#allocation2 + $0x158] sm:$0xff] 0.0
        %369 = vst [vmem:[#allocation2 + $0x160] sm:$0xff] 0.0
        %370 = vst [vmem:[#allocation2 + $0x168] sm:$0xff] 0.0
        %371 = vst [vmem:[#allocation2 + $0x170] sm:$0x3] 0.0
        %372 = vst [vmem:[#allocation2 + $0x178] sm:$0x3] 0.0
        %v373 = vld [vmem:[%s316] ss:$2 sm:$0xff]
        %s374 = scalar_lea.vmem %s316, 16
        %v375 = vld [vmem:[%s374] ss:$2 sm:$0xff]
        %s376 = scalar_lea.vmem %s316, 40
        %v377 = vld [vmem:[%s376] ss:$2 sm:$0xff]
        %s378 = scalar_lea.vmem %s316, 56
        %v379 = vld [vmem:[%s378] ss:$2 sm:$0xff]
        %s380 = scalar_lea.vmem %s316, 80
        %v381 = vld [vmem:[%s380] ss:$2 sm:$0xff]
        %s382 = scalar_lea.vmem %s316, 96
        %v383 = vld [vmem:[%s382] ss:$2 sm:$0xff]
        %s384 = scalar_lea.vmem %s316, 120
        %v385 = vld [vmem:[%s384] ss:$2 sm:$0xff]
        %s386 = scalar_lea.vmem %s316, 136
        %v387 = vld [vmem:[%s386] ss:$2 sm:$0xff]
        %s388 = scalar_lea.vmem %s316, 160
        %v389 = vld [vmem:[%s388] ss:$2 sm:$0xff]
        %s390 = scalar_lea.vmem %s316, 176
        %v391 = vld [vmem:[%s390] ss:$2 sm:$0xff]
        %s392 = scalar_lea.vmem %s316, 200
        %v393 = vld [vmem:[%s392] ss:$2 sm:$0xff]
        %s394 = scalar_lea.vmem %s316, 216
        %v395 = vld [vmem:[%s394] ss:$2 sm:$0xff]
        %s396 = scalar_lea.vmem %s316, 240
        %v397 = vld [vmem:[%s396] ss:$2 sm:$0xff]
        %s398 = scalar_lea.vmem %s316, 256
        %v399 = vld [vmem:[%s398] ss:$2 sm:$0xff]
        %s400 = scalar_lea.vmem %s316, 280
        %v401 = vld [vmem:[%s400] ss:$2 sm:$0xff]
        %s402 = scalar_lea.vmem %s316, 296
        %v403 = vld [vmem:[%s402] ss:$2 sm:$0xff]
        %v404 = vld [vmem:[%s1] sm:$0xff]
        %v405 = vld [vmem:[%s1 + $0x8] sm:$0xff]
        %v406 = vld [vmem:[%s1 + $0x10] sm:$0xff]
        %v407 = vld [vmem:[%s1 + $0x18] sm:$0xff]
        %v408 = vld [vmem:[%s1 + $0x20] sm:$0xff]
        %v409 = vld [vmem:[%s1 + $0x28] sm:$0xff]
        %v410 = vld [vmem:[%s1 + $0x30] sm:$0xff]
        %v411 = vld [vmem:[%s1 + $0x38] sm:$0xff]
        %s412 = scalar_lea.vmem %s316, 1
        %v413 = vld [vmem:[%s412] ss:$2 sm:$0xff]
        %s414 = scalar_lea.vmem %s316, 17
        %v415 = vld [vmem:[%s414] ss:$2 sm:$0xff]
        %s416 = scalar_lea.vmem %s316, 41
        %v417 = vld [vmem:[%s416] ss:$2 sm:$0xff]
        %s418 = scalar_lea.vmem %s316, 57
        %v419 = vld [vmem:[%s418] ss:$2 sm:$0xff]
        %s420 = scalar_lea.vmem %s316, 81
        %v421 = vld [vmem:[%s420] ss:$2 sm:$0xff]
        %s422 = scalar_lea.vmem %s316, 97
        %v423 = vld [vmem:[%s422] ss:$2 sm:$0xff]
        %s424 = scalar_lea.vmem %s316, 121
        %v425 = vld [vmem:[%s424] ss:$2 sm:$0xff]
        %s426 = scalar_lea.vmem %s316, 137
        %v427 = vld [vmem:[%s426] ss:$2 sm:$0xff]
        %s428 = scalar_lea.vmem %s316, 161
        %v429 = vld [vmem:[%s428] ss:$2 sm:$0xff]
        %s430 = scalar_lea.vmem %s316, 177
        %v431 = vld [vmem:[%s430] ss:$2 sm:$0xff]
        %s432 = scalar_lea.vmem %s316, 201
        %v433 = vld [vmem:[%s432] ss:$2 sm:$0xff]
        %s434 = scalar_lea.vmem %s316, 217
        %v435 = vld [vmem:[%s434] ss:$2 sm:$0xff]
        %s436 = scalar_lea.vmem %s316, 241
        %v437 = vld [vmem:[%s436] ss:$2 sm:$0xff]
        %s438 = scalar_lea.vmem %s316, 257
        %v439 = vld [vmem:[%s438] ss:$2 sm:$0xff]
        %s440 = scalar_lea.vmem %s316, 281
        %v441 = vld [vmem:[%s440] ss:$2 sm:$0xff]
        %s442 = scalar_lea.vmem %s316, 297
        %v443 = vld [vmem:[%s442] ss:$2 sm:$0xff]
        %s444 = scalar_lea.vmem %s1, 128
        %v445 = vld [vmem:[%s444] sm:$0xff]
        %v446 = vld [vmem:[%s444 + $0x8] sm:$0xff]
        %v447 = vld [vmem:[%s444 + $0x10] sm:$0xff]
        %v448 = vld [vmem:[%s444 + $0x18] sm:$0xff]
        %v449 = vld [vmem:[%s444 + $0x20] sm:$0xff]
        %v450 = vld [vmem:[%s444 + $0x28] sm:$0xff]
        %v451 = vld [vmem:[%s444 + $0x30] sm:$0xff]
        %v452 = vld [vmem:[%s444 + $0x38] sm:$0xff]
        %vm453 = vcmask 261120
        %v455 = vsel %vm453, %v413, 0
        %v458 = vsel %vm453, %v415, 0
        %v461 = vsel %vm453, %v417, 0
        %v464 = vsel %vm453, %v419, 0
        %v467 = vsel %vm453, %v421, 0
        %v470 = vsel %vm453, %v423, 0
        %v473 = vsel %vm453, %v425, 0
        %v476 = vsel %vm453, %v427, 0
        %v479 = vsel %vm453, %v429, 0
        %v482 = vsel %vm453, %v431, 0
        %v485 = vsel %vm453, %v433, 0
        %v488 = vsel %vm453, %v435, 0
        %v491 = vsel %vm453, %v437, 0
        %v494 = vsel %vm453, %v439, 0
        %v497 = vsel %vm453, %v441, 0
        %v500 = vsel %vm453, %v443, 0
        %502 = vmatprep.subr.mxu0 %v446
        %503 = vmatpush1.msra.mxu0 %v445
        %504 = vmatprep.subr.mxu0 %v448
        %505 = vmatpush1.msra.mxu0 %v447
        %506 = vmatprep.subr.mxu0 %v450
        %507 = vmatpush1.msra.mxu0 %v449
        %508 = vmatprep.subr.mxu0 %v452
        %509 = vmatpush1.msra.mxu0 %v451
        %510 = vmatprep.subr.mxu0 0.0
        %511 = vmatpush1.msra.mxu0 0.0
        %512 = vmatprep.subr.mxu0 0.0
        %513 = vmatpush1.msra.mxu0 0.0
        %514 = vmatprep.subr.mxu0 0.0
        %515 = vmatpush1.msra.mxu0 0.0
        %516 = vmatprep.subr.mxu0 0.0
        %517 = vmatpush1.msra.mxu0 0.0
        %518 = vmatprep.subr.mxu0 0.0
        %519 = vmatpush1.msra.mxu0 0.0
        %520 = vmatprep.subr.mxu0 0.0
        %521 = vmatpush1.msra.mxu0 0.0
        %522 = vmatprep.subr.mxu0 0.0
        %523 = vmatpush1.msra.mxu0 0.0
        %524 = vmatprep.subr.mxu0 0.0
        %525 = vmatpush1.msra.mxu0 0.0
        %526 = vmatprep.subr.mxu0 0.0
        %527 = vmatpush1.msra.mxu0 0.0
        %528 = vmatprep.subr.mxu0 0.0
        %529 = vmatpush1.msra.mxu0 0.0
        %530 = vmatprep.subr.mxu0 0.0
        %531 = vmatpush1.msra.mxu0 0.0
        %532 = vmatprep.subr.mxu0 0.0
        %533 = vmatpush1.msra.mxu0 0.0
        %534 = vmatprep.subr.mxu0 0.0
        %535 = vmatpush1.msra.mxu0 0.0
        %536 = vmatprep.subr.mxu0 0.0
        %537 = vmatpush1.msra.mxu0 0.0
        %538 = vmatprep.subr.mxu0 0.0
        %539 = vmatpush1.msra.mxu0 0.0
        %540 = vmatprep.subr.mxu0 0.0
        %541 = vmatpush1.msra.mxu0 0.0
        %542 = vmatprep.subr.mxu0 0.0
        %543 = vmatpush1.msra.mxu0 0.0
        %544 = vmatprep.subr.mxu0 0.0
        %545 = vmatpush1.msra.mxu0 0.0
        %546 = vmatprep.subr.mxu0 0.0
        %547 = vmatpush1.msra.mxu0 0.0
        %548 = vmatprep.subr.mxu0 0.0
        %549 = vmatpush1.msra.mxu0 0.0
        %550 = vmatprep.subr.mxu0 0.0
        %551 = vmatpush1.msra.mxu0 0.0
        %552 = vmatprep.subr.mxu0 0.0
        %553 = vmatpush1.msra.mxu0 0.0
        %554 = vmatprep.subr.mxu0 0.0
        %555 = vmatpush1.msra.mxu0 0.0
        %556 = vmatprep.subr.mxu0 0.0
        %557 = vmatpush1.msra.mxu0 0.0
        %558 = vmatprep.subr.mxu0 0.0
        %559 = vmatpush1.msra.mxu0 0.0
        %560 = vmatprep.subr.mxu0 0.0
        %561 = vmatpush1.msra.mxu0 0.0
        %562 = vmatprep.subr.mxu0 0.0
        %563 = vmatpush1.msra.mxu0 0.0
        %564 = vmatprep.subr.mxu0 0.0
        %565 = vmatpush1.msra.mxu0 0.0
        %566 = vmatprep.mubr.f32.mxu0 0.0
        %567 = vmatmul.mubr.f32.gmra.mrb[0].mxu0 %v455
        %v568 = vpop.f32.mrb[0].mxu0
        %v569 = vadd.f32 0.0, %v568
        %v570 = vpop.f32.mrb[0].mxu0
        %v571 = vadd.f32 0.0, %v570
        %572 = vmatprep.mubr.f32.mxu0 0.0
        %573 = vmatmul.mubr.f32.gmra.mrb[0].mxu0 %v458
        %v574 = vpop.f32.mrb[0].mxu0
        %v575 = vadd.f32 0.0, %v574
        %v576 = vpop.f32.mrb[0].mxu0
        %v577 = vadd.f32 0.0, %v576
        %578 = vmatprep.mubr.f32.mxu0 0.0
        %579 = vmatmul.mubr.f32.gmra.mrb[0].mxu0 %v461
        %v580 = vpop.f32.mrb[0].mxu0
        %v581 = vadd.f32 0.0, %v580
        %v582 = vpop.f32.mrb[0].mxu0
        %v583 = vadd.f32 0.0, %v582
        %584 = vmatprep.mubr.f32.mxu0 0.0
        %585 = vmatmul.mubr.f32.gmra.mrb[0].mxu0 %v464
        %v586 = vpop.f32.mrb[0].mxu0
        %v587 = vadd.f32 0.0, %v586
        %v588 = vpop.f32.mrb[0].mxu0
        %v589 = vadd.f32 0.0, %v588
        %590 = vmatprep.mubr.f32.mxu0 0.0
        %591 = vmatmul.mubr.f32.gmra.mrb[0].mxu0 %v467
        %v592 = vpop.f32.mrb[0].mxu0
        %v593 = vadd.f32 0.0, %v592
        %v594 = vpop.f32.mrb[0].mxu0
        %v595 = vadd.f32 0.0, %v594
        %596 = vmatprep.mubr.f32.mxu0 0.0
        %597 = vmatmul.mubr.f32.gmra.mrb[0].mxu0 %v470
        %v598 = vpop.f32.mrb[0].mxu0
        %v599 = vadd.f32 0.0, %v598
        %v600 = vpop.f32.mrb[0].mxu0
        %v601 = vadd.f32 0.0, %v600
        %602 = vmatprep.mubr.f32.mxu0 0.0
        %603 = vmatmul.mubr.f32.gmra.mrb[0].mxu0 %v473
        %v604 = vpop.f32.mrb[0].mxu0
        %v605 = vadd.f32 0.0, %v604
        %v606 = vpop.f32.mrb[0].mxu0
        %v607 = vadd.f32 0.0, %v606
        %608 = vmatprep.mubr.f32.mxu0 0.0
        %609 = vmatmul.mubr.f32.gmra.mrb[0].mxu0 %v476
        %v610 = vpop.f32.mrb[0].mxu0
        %v611 = vadd.f32 0.0, %v610
        %v612 = vpop.f32.mrb[0].mxu0
        %v613 = vadd.f32 0.0, %v612
        %614 = vmatprep.mubr.f32.mxu0 0.0
        %615 = vmatmul.mubr.f32.gmra.mrb[0].mxu0 %v479
        %v616 = vpop.f32.mrb[0].mxu0
        %v617 = vadd.f32 0.0, %v616
        %v618 = vpop.f32.mrb[0].mxu0
        %v619 = vadd.f32 0.0, %v618
        %620 = vmatprep.mubr.f32.mxu0 0.0
        %621 = vmatmul.mubr.f32.gmra.mrb[0].mxu0 %v482
        %v622 = vpop.f32.mrb[0].mxu0
        %v623 = vadd.f32 0.0, %v622
        %v624 = vpop.f32.mrb[0].mxu0
        %v625 = vadd.f32 0.0, %v624
        %626 = vmatprep.mubr.f32.mxu0 0.0
        %627 = vmatmul.mubr.f32.gmra.mrb[0].mxu0 %v485
        %v628 = vpop.f32.mrb[0].mxu0
        %v629 = vadd.f32 0.0, %v628
        %v630 = vpop.f32.mrb[0].mxu0
        %v631 = vadd.f32 0.0, %v630
        %632 = vmatprep.mubr.f32.mxu0 0.0
        %633 = vmatmul.mubr.f32.gmra.mrb[0].mxu0 %v488
        %v634 = vpop.f32.mrb[0].mxu0
        %v635 = vadd.f32 0.0, %v634
        %v636 = vpop.f32.mrb[0].mxu0
        %v637 = vadd.f32 0.0, %v636
        %638 = vmatprep.mubr.f32.mxu0 0.0
        %639 = vmatmul.mubr.f32.gmra.mrb[0].mxu0 %v491
        %v640 = vpop.f32.mrb[0].mxu0
        %v641 = vadd.f32 0.0, %v640
        %v642 = vpop.f32.mrb[0].mxu0
        %v643 = vadd.f32 0.0, %v642
        %644 = vmatprep.mubr.f32.mxu0 0.0
        %645 = vmatmul.mubr.f32.gmra.mrb[0].mxu0 %v494
        %v646 = vpop.f32.mrb[0].mxu0
        %v647 = vadd.f32 0.0, %v646
        %v648 = vpop.f32.mrb[0].mxu0
        %v649 = vadd.f32 0.0, %v648
        %650 = vmatprep.mubr.f32.mxu0 0.0
        %651 = vmatmul.mubr.f32.gmra.mrb[0].mxu0 %v497
        %v652 = vpop.f32.mrb[0].mxu0
        %v653 = vadd.f32 0.0, %v652
        %v654 = vpop.f32.mrb[0].mxu0
        %v655 = vadd.f32 0.0, %v654
        %656 = vmatprep.mubr.f32.mxu0 0.0
        %657 = vmatmul.mubr.f32.gmra.mrb[0].mxu0 %v500
        %v658 = vpop.f32.mrb[0].mxu0
        %v659 = vadd.f32 0.0, %v658
        %v660 = vpop.f32.mrb[0].mxu0
        %v661 = vadd.f32 0.0, %v660
        %662 = vdwg.mxu0
        %v664 = vsel %vm453, %v373, 0
        %v667 = vsel %vm453, %v375, 0
        %v670 = vsel %vm453, %v377, 0
        %v673 = vsel %vm453, %v379, 0
        %v676 = vsel %vm453, %v381, 0
        %v679 = vsel %vm453, %v383, 0
        %v682 = vsel %vm453, %v385, 0
        %v685 = vsel %vm453, %v387, 0
        %v688 = vsel %vm453, %v389, 0
        %v691 = vsel %vm453, %v391, 0
        %v694 = vsel %vm453, %v393, 0
        %v697 = vsel %vm453, %v395, 0
        %v700 = vsel %vm453, %v397, 0
        %v703 = vsel %vm453, %v399, 0
        %v706 = vsel %vm453, %v401, 0
        %v709 = vsel %vm453, %v403, 0
        %711 = vmatprep.subr.mxu0 %v405
        %712 = vmatpush1.msra.mxu0 %v404
        %713 = vmatprep.subr.mxu0 %v407
        %714 = vmatpush1.msra.mxu0 %v406
        %715 = vmatprep.subr.mxu0 %v409
        %716 = vmatpush1.msra.mxu0 %v408
        %717 = vmatprep.subr.mxu0 %v411
        %718 = vmatpush1.msra.mxu0 %v410
        %719 = vmatprep.subr.mxu0 0.0
        %720 = vmatpush1.msra.mxu0 0.0
        %721 = vmatprep.subr.mxu0 0.0
        %722 = vmatpush1.msra.mxu0 0.0
        %723 = vmatprep.subr.mxu0 0.0
        %724 = vmatpush1.msra.mxu0 0.0
        %725 = vmatprep.subr.mxu0 0.0
        %726 = vmatpush1.msra.mxu0 0.0
        %727 = vmatprep.subr.mxu0 0.0
        %728 = vmatpush1.msra.mxu0 0.0
        %729 = vmatprep.subr.mxu0 0.0
        %730 = vmatpush1.msra.mxu0 0.0
        %731 = vmatprep.subr.mxu0 0.0
        %732 = vmatpush1.msra.mxu0 0.0
        %733 = vmatprep.subr.mxu0 0.0
        %734 = vmatpush1.msra.mxu0 0.0
        %735 = vmatprep.subr.mxu0 0.0
        %736 = vmatpush1.msra.mxu0 0.0
        %737 = vmatprep.subr.mxu0 0.0
        %738 = vmatpush1.msra.mxu0 0.0
        %739 = vmatprep.subr.mxu0 0.0
        %740 = vmatpush1.msra.mxu0 0.0
        %741 = vmatprep.subr.mxu0 0.0
        %742 = vmatpush1.msra.mxu0 0.0
        %743 = vmatprep.subr.mxu0 0.0
        %744 = vmatpush1.msra.mxu0 0.0
        %745 = vmatprep.subr.mxu0 0.0
        %746 = vmatpush1.msra.mxu0 0.0
        %747 = vmatprep.subr.mxu0 0.0
        %748 = vmatpush1.msra.mxu0 0.0
        %749 = vmatprep.subr.mxu0 0.0
        %750 = vmatpush1.msra.mxu0 0.0
        %751 = vmatprep.subr.mxu0 0.0
        %752 = vmatpush1.msra.mxu0 0.0
        %753 = vmatprep.subr.mxu0 0.0
        %754 = vmatpush1.msra.mxu0 0.0
        %755 = vmatprep.subr.mxu0 0.0
        %756 = vmatpush1.msra.mxu0 0.0
        %757 = vmatprep.subr.mxu0 0.0
        %758 = vmatpush1.msra.mxu0 0.0
        %759 = vmatprep.subr.mxu0 0.0
        %760 = vmatpush1.msra.mxu0 0.0
        %761 = vmatprep.subr.mxu0 0.0
        %762 = vmatpush1.msra.mxu0 0.0
        %763 = vmatprep.subr.mxu0 0.0
        %764 = vmatpush1.msra.mxu0 0.0
        %765 = vmatprep.subr.mxu0 0.0
        %766 = vmatpush1.msra.mxu0 0.0
        %767 = vmatprep.subr.mxu0 0.0
        %768 = vmatpush1.msra.mxu0 0.0
        %769 = vmatprep.subr.mxu0 0.0
        %770 = vmatpush1.msra.mxu0 0.0
        %771 = vmatprep.subr.mxu0 0.0
        %772 = vmatpush1.msra.mxu0 0.0
        %773 = vmatprep.subr.mxu0 0.0
        %774 = vmatpush1.msra.mxu0 0.0
        %775 = vmatprep.mubr.f32.mxu0 0.0
        %776 = vmatmul.mubr.f32.gmra.mrb[0].mxu0 %v664
        %v777 = vpop.f32.mrb[0].mxu0
        %v778 = vadd.f32 %v569, %v777
        %v779 = vpop.f32.mrb[0].mxu0
        %v780 = vadd.f32 %v571, %v779
        %781 = vmatprep.mubr.f32.mxu0 0.0
        %782 = vmatmul.mubr.f32.gmra.mrb[0].mxu0 %v667
        %v783 = vpop.f32.mrb[0].mxu0
        %v784 = vadd.f32 %v575, %v783
        %v785 = vpop.f32.mrb[0].mxu0
        %v786 = vadd.f32 %v577, %v785
        %787 = vmatprep.mubr.f32.mxu0 0.0
        %788 = vmatmul.mubr.f32.gmra.mrb[0].mxu0 %v670
        %v789 = vpop.f32.mrb[0].mxu0
        %v790 = vadd.f32 %v581, %v789
        %v791 = vpop.f32.mrb[0].mxu0
        %v792 = vadd.f32 %v583, %v791
        %793 = vmatprep.mubr.f32.mxu0 0.0
        %794 = vmatmul.mubr.f32.gmra.mrb[0].mxu0 %v673
        %v795 = vpop.f32.mrb[0].mxu0
        %v796 = vadd.f32 %v587, %v795
        %v797 = vpop.f32.mrb[0].mxu0
        %v798 = vadd.f32 %v589, %v797
        %799 = vmatprep.mubr.f32.mxu0 0.0
        %800 = vmatmul.mubr.f32.gmra.mrb[0].mxu0 %v676
        %v801 = vpop.f32.mrb[0].mxu0
        %v802 = vadd.f32 %v593, %v801
        %v803 = vpop.f32.mrb[0].mxu0
        %v804 = vadd.f32 %v595, %v803
        %805 = vmatprep.mubr.f32.mxu0 0.0
        %806 = vmatmul.mubr.f32.gmra.mrb[0].mxu0 %v679
        %v807 = vpop.f32.mrb[0].mxu0
        %v808 = vadd.f32 %v599, %v807
        %v809 = vpop.f32.mrb[0].mxu0
        %v810 = vadd.f32 %v601, %v809
        %811 = vmatprep.mubr.f32.mxu0 0.0
        %812 = vmatmul.mubr.f32.gmra.mrb[0].mxu0 %v682
        %v813 = vpop.f32.mrb[0].mxu0
        %v814 = vadd.f32 %v605, %v813
        %v815 = vpop.f32.mrb[0].mxu0
        %v816 = vadd.f32 %v607, %v815
        %817 = vmatprep.mubr.f32.mxu0 0.0
        %818 = vmatmul.mubr.f32.gmra.mrb[0].mxu0 %v685
        %v819 = vpop.f32.mrb[0].mxu0
        %v820 = vadd.f32 %v611, %v819
        %v821 = vpop.f32.mrb[0].mxu0
        %v822 = vadd.f32 %v613, %v821
        %823 = vmatprep.mubr.f32.mxu0 0.0
        %824 = vmatmul.mubr.f32.gmra.mrb[0].mxu0 %v688
        %v825 = vpop.f32.mrb[0].mxu0
        %v826 = vadd.f32 %v617, %v825
        %v827 = vpop.f32.mrb[0].mxu0
        %v828 = vadd.f32 %v619, %v827
        %829 = vmatprep.mubr.f32.mxu0 0.0
        %830 = vmatmul.mubr.f32.gmra.mrb[0].mxu0 %v691
        %v831 = vpop.f32.mrb[0].mxu0
        %v832 = vadd.f32 %v623, %v831
        %v833 = vpop.f32.mrb[0].mxu0
        %v834 = vadd.f32 %v625, %v833
        %835 = vmatprep.mubr.f32.mxu0 0.0
        %836 = vmatmul.mubr.f32.gmra.mrb[0].mxu0 %v694
        %v837 = vpop.f32.mrb[0].mxu0
        %v838 = vadd.f32 %v629, %v837
        %v839 = vpop.f32.mrb[0].mxu0
        %v840 = vadd.f32 %v631, %v839
        %841 = vmatprep.mubr.f32.mxu0 0.0
        %842 = vmatmul.mubr.f32.gmra.mrb[0].mxu0 %v697
        %v843 = vpop.f32.mrb[0].mxu0
        %v844 = vadd.f32 %v635, %v843
        %v845 = vpop.f32.mrb[0].mxu0
        %v846 = vadd.f32 %v637, %v845
        %847 = vmatprep.mubr.f32.mxu0 0.0
        %848 = vmatmul.mubr.f32.gmra.mrb[0].mxu0 %v700
        %v849 = vpop.f32.mrb[0].mxu0
        %v850 = vadd.f32 %v641, %v849
        %v851 = vpop.f32.mrb[0].mxu0
        %v852 = vadd.f32 %v643, %v851
        %853 = vmatprep.mubr.f32.mxu0 0.0
        %854 = vmatmul.mubr.f32.gmra.mrb[0].mxu0 %v703
        %v855 = vpop.f32.mrb[0].mxu0
        %v856 = vadd.f32 %v647, %v855
        %v857 = vpop.f32.mrb[0].mxu0
        %v858 = vadd.f32 %v649, %v857
        %859 = vmatprep.mubr.f32.mxu0 0.0
        %860 = vmatmul.mubr.f32.gmra.mrb[0].mxu0 %v706
        %v861 = vpop.f32.mrb[0].mxu0
        %v862 = vadd.f32 %v653, %v861
        %v863 = vpop.f32.mrb[0].mxu0
        %v864 = vadd.f32 %v655, %v863
        %865 = vmatprep.mubr.f32.mxu0 0.0
        %866 = vmatmul.mubr.f32.gmra.mrb[0].mxu0 %v709
        %v867 = vpop.f32.mrb[0].mxu0
        %v868 = vadd.f32 %v659, %v867
        %v869 = vpop.f32.mrb[0].mxu0
        %v870 = vadd.f32 %v661, %v869
        %871 = vdwg.mxu0
        %s872 = scalar_lea.vmem %s316, 2
        %v873 = vld [vmem:[%s872] ss:$2 sm:$0xff]
        %s874 = scalar_lea.vmem %s316, 18
        %v875 = vld [vmem:[%s874] ss:$2 sm:$0xff]
        %s876 = scalar_lea.vmem %s316, 42
        %v877 = vld [vmem:[%s876] ss:$2 sm:$0xff]
        %s878 = scalar_lea.vmem %s316, 58
        %v879 = vld [vmem:[%s878] ss:$2 sm:$0xff]
        %s880 = scalar_lea.vmem %s316, 82
        %v881 = vld [vmem:[%s880] ss:$2 sm:$0xff]
        %s882 = scalar_lea.vmem %s316, 98
        %v883 = vld [vmem:[%s882] ss:$2 sm:$0xff]
        %s884 = scalar_lea.vmem %s316, 122
        %v885 = vld [vmem:[%s884] ss:$2 sm:$0xff]
        %s886 = scalar_lea.vmem %s316, 138
        %v887 = vld [vmem:[%s886] ss:$2 sm:$0xff]
        %s888 = scalar_lea.vmem %s316, 162
        %v889 = vld [vmem:[%s888] ss:$2 sm:$0xff]
        %s890 = scalar_lea.vmem %s316, 178
        %v891 = vld [vmem:[%s890] ss:$2 sm:$0xff]
        %s892 = scalar_lea.vmem %s316, 202
        %v893 = vld [vmem:[%s892] ss:$2 sm:$0xff]
        %s894 = scalar_lea.vmem %s316, 218
        %v895 = vld [vmem:[%s894] ss:$2 sm:$0xff]
        %s896 = scalar_lea.vmem %s316, 242
        %v897 = vld [vmem:[%s896] ss:$2 sm:$0xff]
        %s898 = scalar_lea.vmem %s316, 258
        %v899 = vld [vmem:[%s898] ss:$2 sm:$0xff]
        %s900 = scalar_lea.vmem %s316, 282
        %v901 = vld [vmem:[%s900] ss:$2 sm:$0xff]
        %s902 = scalar_lea.vmem %s316, 298
        %v903 = vld [vmem:[%s902] ss:$2 sm:$0xff]
        %s904 = scalar_lea.vmem %s1, 256
        %v905 = vld [vmem:[%s904] sm:$0xff]
        %v906 = vld [vmem:[%s904 + $0x8] sm:$0xff]
        %v907 = vld [vmem:[%s904 + $0x10] sm:$0xff]
        %v908 = vld [vmem:[%s904 + $0x18] sm:$0xff]
        %v909 = vld [vmem:[%s904 + $0x20] sm:$0xff]
        %v910 = vld [vmem:[%s904 + $0x28] sm:$0xff]
        %v911 = vld [vmem:[%s904 + $0x30] sm:$0xff]
        %v912 = vld [vmem:[%s904 + $0x38] sm:$0xff]
        %v914 = vsel %vm453, %v873, 0
        %v917 = vsel %vm453, %v875, 0
        %v920 = vsel %vm453, %v877, 0
        %v923 = vsel %vm453, %v879, 0
        %v926 = vsel %vm453, %v881, 0
        %v929 = vsel %vm453, %v883, 0
        %v932 = vsel %vm453, %v885, 0
        %v935 = vsel %vm453, %v887, 0
        %v938 = vsel %vm453, %v889, 0
        %v941 = vsel %vm453, %v891, 0
        %v944 = vsel %vm453, %v893, 0
        %v947 = vsel %vm453, %v895, 0
        %v950 = vsel %vm453, %v897, 0
        %v953 = vsel %vm453, %v899, 0
        %v956 = vsel %vm453, %v901, 0
        %v959 = vsel %vm453, %v903, 0
        %961 = vmatprep.subr.mxu0 %v906
        %962 = vmatpush1.msra.mxu0 %v905
        %963 = vmatprep.subr.mxu0 %v908
        %964 = vmatpush1.msra.mxu0 %v907
        %965 = vmatprep.subr.mxu0 %v910
        %966 = vmatpush1.msra.mxu0 %v909
        %967 = vmatprep.subr.mxu0 %v912
        %968 = vmatpush1.msra.mxu0 %v911
        %969 = vmatprep.subr.mxu0 0.0
        %970 = vmatpush1.msra.mxu0 0.0
        %971 = vmatprep.subr.mxu0 0.0
        %972 = vmatpush1.msra.mxu0 0.0
        %973 = vmatprep.subr.mxu0 0.0
        %974 = vmatpush1.msra.mxu0 0.0
        %975 = vmatprep.subr.mxu0 0.0
        %976 = vmatpush1.msra.mxu0 0.0
        %977 = vmatprep.subr.mxu0 0.0
        %978 = vmatpush1.msra.mxu0 0.0
        %979 = vmatprep.subr.mxu0 0.0
        %980 = vmatpush1.msra.mxu0 0.0
        %981 = vmatprep.subr.mxu0 0.0
        %982 = vmatpush1.msra.mxu0 0.0
        %983 = vmatprep.subr.mxu0 0.0
        %984 = vmatpush1.msra.mxu0 0.0
        %985 = vmatprep.subr.mxu0 0.0
        %986 = vmatpush1.msra.mxu0 0.0
        %987 = vmatprep.subr.mxu0 0.0
        %988 = vmatpush1.msra.mxu0 0.0
        %989 = vmatprep.subr.mxu0 0.0
        %990 = vmatpush1.msra.mxu0 0.0
        %991 = vmatprep.subr.mxu0 0.0
        %992 = vmatpush1.msra.mxu0 0.0
        %993 = vmatprep.subr.mxu0 0.0
        %994 = vmatpush1.msra.mxu0 0.0
        %995 = vmatprep.subr.mxu0 0.0
        %996 = vmatpush1.msra.mxu0 0.0
        %997 = vmatprep.subr.mxu0 0.0
        %998 = vmatpush1.msra.mxu0 0.0
        %999 = vmatprep.subr.mxu0 0.0
        %1000 = vmatpush1.msra.mxu0 0.0
        %1001 = vmatprep.subr.mxu0 0.0
        %1002 = vmatpush1.msra.mxu0 0.0
        %1003 = vmatprep.subr.mxu0 0.0
        %1004 = vmatpush1.msra.mxu0 0.0
        %1005 = vmatprep.subr.mxu0 0.0
        %1006 = vmatpush1.msra.mxu0 0.0
        %1007 = vmatprep.subr.mxu0 0.0
        %1008 = vmatpush1.msra.mxu0 0.0
        %1009 = vmatprep.subr.mxu0 0.0
        %1010 = vmatpush1.msra.mxu0 0.0
        %1011 = vmatprep.subr.mxu0 0.0
        %1012 = vmatpush1.msra.mxu0 0.0
        %1013 = vmatprep.subr.mxu0 0.0
        %1014 = vmatpush1.msra.mxu0 0.0
        %1015 = vmatprep.subr.mxu0 0.0
        %1016 = vmatpush1.msra.mxu0 0.0
        %1017 = vmatprep.subr.mxu0 0.0
        %1018 = vmatpush1.msra.mxu0 0.0
        %1019 = vmatprep.subr.mxu0 0.0
        %1020 = vmatpush1.msra.mxu0 0.0
        %1021 = vmatprep.subr.mxu0 0.0
        %1022 = vmatpush1.msra.mxu0 0.0
        %1023 = vmatprep.subr.mxu0 0.0
        %1024 = vmatpush1.msra.mxu0 0.0
        %1025 = vmatprep.mubr.f32.mxu0 0.0
        %1026 = vmatmul.mubr.f32.gmra.mrb[0].mxu0 %v914
        %v1027 = vpop.f32.mrb[0].mxu0
        %v1028 = vadd.f32 0.0, %v1027
        %v1029 = vpop.f32.mrb[0].mxu0
        %v1030 = vadd.f32 0.0, %v1029
        %1031 = vmatprep.mubr.f32.mxu0 0.0
        %1032 = vmatmul.mubr.f32.gmra.mrb[0].mxu0 %v917
        %v1033 = vpop.f32.mrb[0].mxu0
        %v1034 = vadd.f32 0.0, %v1033
        %v1035 = vpop.f32.mrb[0].mxu0
        %v1036 = vadd.f32 0.0, %v1035
        %1037 = vmatprep.mubr.f32.mxu0 0.0
        %1038 = vmatmul.mubr.f32.gmra.mrb[0].mxu0 %v920
        %v1039 = vpop.f32.mrb[0].mxu0
        %v1040 = vadd.f32 0.0, %v1039
        %v1041 = vpop.f32.mrb[0].mxu0
        %v1042 = vadd.f32 0.0, %v1041
        %1043 = vmatprep.mubr.f32.mxu0 0.0
        %1044 = vmatmul.mubr.f32.gmra.mrb[0].mxu0 %v923
        %v1045 = vpop.f32.mrb[0].mxu0
        %v1046 = vadd.f32 0.0, %v1045
        %v1047 = vpop.f32.mrb[0].mxu0
        %v1048 = vadd.f32 0.0, %v1047
        %1049 = vmatprep.mubr.f32.mxu0 0.0
        %1050 = vmatmul.mubr.f32.gmra.mrb[0].mxu0 %v926
        %v1051 = vpop.f32.mrb[0].mxu0
        %v1052 = vadd.f32 0.0, %v1051
        %v1053 = vpop.f32.mrb[0].mxu0
        %v1054 = vadd.f32 0.0, %v1053
        %1055 = vmatprep.mubr.f32.mxu0 0.0
        %1056 = vmatmul.mubr.f32.gmra.mrb[0].mxu0 %v929
        %v1057 = vpop.f32.mrb[0].mxu0
        %v1058 = vadd.f32 0.0, %v1057
        %v1059 = vpop.f32.mrb[0].mxu0
        %v1060 = vadd.f32 0.0, %v1059
        %1061 = vmatprep.mubr.f32.mxu0 0.0
        %1062 = vmatmul.mubr.f32.gmra.mrb[0].mxu0 %v932
        %v1063 = vpop.f32.mrb[0].mxu0
        %v1064 = vadd.f32 0.0, %v1063
        %v1065 = vpop.f32.mrb[0].mxu0
        %v1066 = vadd.f32 0.0, %v1065
        %1067 = vmatprep.mubr.f32.mxu0 0.0
        %1068 = vmatmul.mubr.f32.gmra.mrb[0].mxu0 %v935
        %v1069 = vpop.f32.mrb[0].mxu0
        %v1070 = vadd.f32 0.0, %v1069
        %v1071 = vpop.f32.mrb[0].mxu0
        %v1072 = vadd.f32 0.0, %v1071
        %1073 = vmatprep.mubr.f32.mxu0 0.0
        %1074 = vmatmul.mubr.f32.gmra.mrb[0].mxu0 %v938
        %v1075 = vpop.f32.mrb[0].mxu0
        %v1076 = vadd.f32 0.0, %v1075
        %v1077 = vpop.f32.mrb[0].mxu0
        %v1078 = vadd.f32 0.0, %v1077
        %1079 = vmatprep.mubr.f32.mxu0 0.0
        %1080 = vmatmul.mubr.f32.gmra.mrb[0].mxu0 %v941
        %v1081 = vpop.f32.mrb[0].mxu0
        %v1082 = vadd.f32 0.0, %v1081
        %v1083 = vpop.f32.mrb[0].mxu0
        %v1084 = vadd.f32 0.0, %v1083
        %1085 = vmatprep.mubr.f32.mxu0 0.0
        %1086 = vmatmul.mubr.f32.gmra.mrb[0].mxu0 %v944
        %v1087 = vpop.f32.mrb[0].mxu0
        %v1088 = vadd.f32 0.0, %v1087
        %v1089 = vpop.f32.mrb[0].mxu0
        %v1090 = vadd.f32 0.0, %v1089
        %1091 = vmatprep.mubr.f32.mxu0 0.0
        %1092 = vmatmul.mubr.f32.gmra.mrb[0].mxu0 %v947
        %v1093 = vpop.f32.mrb[0].mxu0
        %v1094 = vadd.f32 0.0, %v1093
        %v1095 = vpop.f32.mrb[0].mxu0
        %v1096 = vadd.f32 0.0, %v1095
        %1097 = vmatprep.mubr.f32.mxu0 0.0
        %1098 = vmatmul.mubr.f32.gmra.mrb[0].mxu0 %v950
        %v1099 = vpop.f32.mrb[0].mxu0
        %v1100 = vadd.f32 0.0, %v1099
        %v1101 = vpop.f32.mrb[0].mxu0
        %v1102 = vadd.f32 0.0, %v1101
        %1103 = vmatprep.mubr.f32.mxu0 0.0
        %1104 = vmatmul.mubr.f32.gmra.mrb[0].mxu0 %v953
        %v1105 = vpop.f32.mrb[0].mxu0
        %v1106 = vadd.f32 0.0, %v1105
        %v1107 = vpop.f32.mrb[0].mxu0
        %v1108 = vadd.f32 0.0, %v1107
        %1109 = vmatprep.mubr.f32.mxu0 0.0
        %1110 = vmatmul.mubr.f32.gmra.mrb[0].mxu0 %v956
        %v1111 = vpop.f32.mrb[0].mxu0
        %v1112 = vadd.f32 0.0, %v1111
        %v1113 = vpop.f32.mrb[0].mxu0
        %v1114 = vadd.f32 0.0, %v1113
        %1115 = vmatprep.mubr.f32.mxu0 0.0
        %1116 = vmatmul.mubr.f32.gmra.mrb[0].mxu0 %v959
        %v1117 = vpop.f32.mrb[0].mxu0
        %v1118 = vadd.f32 0.0, %v1117
        %v1119 = vpop.f32.mrb[0].mxu0
        %v1120 = vadd.f32 0.0, %v1119
        %1121 = vdwg.mxu0
        %v1122 = vadd.f32 %v778, %v1028
        %v1123 = vadd.f32 %v780, %v1030
        %v1124 = vadd.f32 %v784, %v1034
        %v1125 = vadd.f32 %v786, %v1036
        %v1126 = vadd.f32 %v790, %v1040
        %v1127 = vadd.f32 %v792, %v1042
        %v1128 = vadd.f32 %v796, %v1046
        %v1129 = vadd.f32 %v798, %v1048
        %v1130 = vadd.f32 %v802, %v1052
        %v1131 = vadd.f32 %v804, %v1054
        %v1132 = vadd.f32 %v808, %v1058
        %v1133 = vadd.f32 %v810, %v1060
        %v1134 = vadd.f32 %v814, %v1064
        %v1135 = vadd.f32 %v816, %v1066
        %v1136 = vadd.f32 %v820, %v1070
        %v1137 = vadd.f32 %v822, %v1072
        %v1138 = vadd.f32 %v826, %v1076
        %v1139 = vadd.f32 %v828, %v1078
        %v1140 = vadd.f32 %v832, %v1082
        %v1141 = vadd.f32 %v834, %v1084
        %v1142 = vadd.f32 %v838, %v1088
        %v1143 = vadd.f32 %v840, %v1090
        %v1144 = vadd.f32 %v844, %v1094
        %v1145 = vadd.f32 %v846, %v1096
        %v1146 = vadd.f32 %v850, %v1100
        %v1147 = vadd.f32 %v852, %v1102
        %v1148 = vadd.f32 %v856, %v1106
        %v1149 = vadd.f32 %v858, %v1108
        %v1150 = vadd.f32 %v862, %v1112
        %v1151 = vadd.f32 %v864, %v1114
        %v1152 = vadd.f32 %v868, %v1118
        %v1153 = vadd.f32 %v870, %v1120
        %v1154 = vld [vmem:[%s2] ss:$2 sm:$0x3]
        %v1156 = vlaneseq
        %v1157 = vshrl.u32 %v1156, 7
        %v1158 = vsub.s32 0, %v1157
        %v1159 = vrot.slane %v1154, %v1158
        %v1160 = vlaneseq
        %v1161 = vshrl.u32 %v1160, 7
        %v1162 = vsub.s32 1, %v1161
        %v1163 = vrot.slane %v1154, %v1162
        %v1166 = vmul.f32 %v1122, %v1159
        %v1167 = vmul.f32 %v1123, %v1163
        %v1168 = vmul.f32 %v1124, %v1159
        %v1169 = vmul.f32 %v1125, %v1163
        %v1170 = vmul.f32 %v1126, %v1159
        %v1171 = vmul.f32 %v1127, %v1163
        %v1172 = vmul.f32 %v1128, %v1159
        %v1173 = vmul.f32 %v1129, %v1163
        %v1174 = vmul.f32 %v1130, %v1159
        %v1175 = vmul.f32 %v1131, %v1163
        %v1176 = vmul.f32 %v1132, %v1159
        %v1177 = vmul.f32 %v1133, %v1163
        %v1178 = vmul.f32 %v1134, %v1159
        %v1179 = vmul.f32 %v1135, %v1163
        %v1180 = vmul.f32 %v1136, %v1159
        %v1181 = vmul.f32 %v1137, %v1163
        %v1182 = vmul.f32 %v1138, %v1159
        %v1183 = vmul.f32 %v1139, %v1163
        %v1184 = vmul.f32 %v1140, %v1159
        %v1185 = vmul.f32 %v1141, %v1163
        %v1186 = vmul.f32 %v1142, %v1159
        %v1187 = vmul.f32 %v1143, %v1163
        %v1188 = vmul.f32 %v1144, %v1159
        %v1189 = vmul.f32 %v1145, %v1163
        %v1190 = vmul.f32 %v1146, %v1159
        %v1191 = vmul.f32 %v1147, %v1163
        %v1192 = vmul.f32 %v1148, %v1159
        %v1193 = vmul.f32 %v1149, %v1163
        %v1194 = vmul.f32 %v1150, %v1159
        %v1195 = vmul.f32 %v1151, %v1163
        %v1196 = vmul.f32 %v1152, %v1159
        %v1197 = vmul.f32 %v1153, %v1163
        %s1198 = scalar_lea.vmem %s2, 1
        %v1199 = vld [vmem:[%s1198] ss:$2 sm:$0x3]
        %v1201 = vlaneseq
        %v1202 = vshrl.u32 %v1201, 7
        %v1203 = vsub.s32 0, %v1202
        %v1204 = vrot.slane %v1199, %v1203
        %v1205 = vlaneseq
        %v1206 = vshrl.u32 %v1205, 7
        %v1207 = vsub.s32 1, %v1206
        %v1208 = vrot.slane %v1199, %v1207
        %v1211 = vadd.f32 %v1166, %v1204
        %v1212 = vadd.f32 %v1167, %v1208
        %v1213 = vadd.f32 %v1168, %v1204
        %v1214 = vadd.f32 %v1169, %v1208
        %v1215 = vadd.f32 %v1170, %v1204
        %v1216 = vadd.f32 %v1171, %v1208
        %v1217 = vadd.f32 %v1172, %v1204
        %v1218 = vadd.f32 %v1173, %v1208
        %v1219 = vadd.f32 %v1174, %v1204
        %v1220 = vadd.f32 %v1175, %v1208
        %v1221 = vadd.f32 %v1176, %v1204
        %v1222 = vadd.f32 %v1177, %v1208
        %v1223 = vadd.f32 %v1178, %v1204
        %v1224 = vadd.f32 %v1179, %v1208
        %v1225 = vadd.f32 %v1180, %v1204
        %v1226 = vadd.f32 %v1181, %v1208
        %v1227 = vadd.f32 %v1182, %v1204
        %v1228 = vadd.f32 %v1183, %v1208
        %v1229 = vadd.f32 %v1184, %v1204
        %v1230 = vadd.f32 %v1185, %v1208
        %v1231 = vadd.f32 %v1186, %v1204
        %v1232 = vadd.f32 %v1187, %v1208
        %v1233 = vadd.f32 %v1188, %v1204
        %v1234 = vadd.f32 %v1189, %v1208
        %v1235 = vadd.f32 %v1190, %v1204
        %v1236 = vadd.f32 %v1191, %v1208
        %v1237 = vadd.f32 %v1192, %v1204
        %v1238 = vadd.f32 %v1193, %v1208
        %v1239 = vadd.f32 %v1194, %v1204
        %v1240 = vadd.f32 %v1195, %v1208
        %v1241 = vadd.f32 %v1196, %v1204
        %v1242 = vadd.f32 %v1197, %v1208
        %v1243 = vmax.f32 %v1211, 0.0
        %v1244 = vmax.f32 %v1212, 0.0
        %v1245 = vmax.f32 %v1213, 0.0
        %v1246 = vmax.f32 %v1214, 0.0
        %v1247 = vmax.f32 %v1215, 0.0
        %v1248 = vmax.f32 %v1216, 0.0
        %v1249 = vmax.f32 %v1217, 0.0
        %v1250 = vmax.f32 %v1218, 0.0
        %v1251 = vmax.f32 %v1219, 0.0
        %v1252 = vmax.f32 %v1220, 0.0
        %v1253 = vmax.f32 %v1221, 0.0
        %v1254 = vmax.f32 %v1222, 0.0
        %v1255 = vmax.f32 %v1223, 0.0
        %v1256 = vmax.f32 %v1224, 0.0
        %v1257 = vmax.f32 %v1225, 0.0
        %v1258 = vmax.f32 %v1226, 0.0
        %v1259 = vmax.f32 %v1227, 0.0
        %v1260 = vmax.f32 %v1228, 0.0
        %v1261 = vmax.f32 %v1229, 0.0
        %v1262 = vmax.f32 %v1230, 0.0
        %v1263 = vmax.f32 %v1231, 0.0
        %v1264 = vmax.f32 %v1232, 0.0
        %v1265 = vmax.f32 %v1233, 0.0
        %v1266 = vmax.f32 %v1234, 0.0
        %v1267 = vmax.f32 %v1235, 0.0
        %v1268 = vmax.f32 %v1236, 0.0
        %v1269 = vmax.f32 %v1237, 0.0
        %v1270 = vmax.f32 %v1238, 0.0
        %v1271 = vmax.f32 %v1239, 0.0
        %v1272 = vmax.f32 %v1240, 0.0
        %v1273 = vmax.f32 %v1241, 0.0
        %v1274 = vmax.f32 %v1242, 0.0
        %v1275 = vld [vmem:[#allocation2] sm:$0xfe]
        %v1276 = vld [vmem:[#allocation2 + $0x8] sm:$0xfe]
        %v1277 = vld [vmem:[#allocation2 + $0x10] sm:$0x7f]
        %v1278 = vld [vmem:[#allocation2 + $0x18] sm:$0x7f]
        %v1279 = vld [vmem:[#allocation2 + $0x30] sm:$0xfe]
        %v1280 = vld [vmem:[#allocation2 + $0x38] sm:$0xfe]
        %v1281 = vld [vmem:[#allocation2 + $0x40] sm:$0x7f]
        %v1282 = vld [vmem:[#allocation2 + $0x48] sm:$0x7f]
        %v1283 = vld [vmem:[#allocation2 + $0x60] sm:$0xfe]
        %v1284 = vld [vmem:[#allocation2 + $0x68] sm:$0xfe]
        %v1285 = vld [vmem:[#allocation2 + $0x70] sm:$0x7f]
        %v1286 = vld [vmem:[#allocation2 + $0x78] sm:$0x7f]
        %v1287 = vld [vmem:[#allocation2 + $0x90] sm:$0xfe]
        %v1288 = vld [vmem:[#allocation2 + $0x98] sm:$0xfe]
        %v1289 = vld [vmem:[#allocation2 + $0xa0] sm:$0x7f]
        %v1290 = vld [vmem:[#allocation2 + $0xa8] sm:$0x7f]
        %v1291 = vld [vmem:[#allocation2 + $0xc0] sm:$0xfe]
        %v1292 = vld [vmem:[#allocation2 + $0xc8] sm:$0xfe]
        %v1293 = vld [vmem:[#allocation2 + $0xd0] sm:$0x7f]
        %v1294 = vld [vmem:[#allocation2 + $0xd8] sm:$0x7f]
        %v1295 = vld [vmem:[#allocation2 + $0xf0] sm:$0xfe]
        %v1296 = vld [vmem:[#allocation2 + $0xf8] sm:$0xfe]
        %v1297 = vld [vmem:[#allocation2 + $0x100] sm:$0x7f]
        %v1298 = vld [vmem:[#allocation2 + $0x108] sm:$0x7f]
        %v1299 = vld [vmem:[#allocation2 + $0x120] sm:$0xfe]
        %v1300 = vld [vmem:[#allocation2 + $0x128] sm:$0xfe]
        %v1301 = vld [vmem:[#allocation2 + $0x130] sm:$0x7f]
        %v1302 = vld [vmem:[#allocation2 + $0x138] sm:$0x7f]
        %v1303 = vld [vmem:[#allocation2 + $0x150] sm:$0xfe]
        %v1304 = vld [vmem:[#allocation2 + $0x158] sm:$0xfe]
        %v1305 = vld [vmem:[#allocation2 + $0x160] sm:$0x7f]
        %v1306 = vld [vmem:[#allocation2 + $0x168] sm:$0x7f]
        %vm1339 = vcmask 1040384
        %v1340 = vrot.slane %v1243, 7
        %v1341 = vrot.slane %v1244, 7
        %v1342 = vrot.slane %v1245, 7
        %v1343 = vsel %vm1339, %v1340, %v1342
        %v1344 = vrot.slane %v1246, 7
        %v1345 = vsel %vm1339, %v1341, %v1344
        %v1346 = vrot.slane %v1247, 7
        %v1347 = vrot.slane %v1248, 7
        %v1348 = vrot.slane %v1249, 7
        %v1349 = vsel %vm1339, %v1346, %v1348
        %v1350 = vrot.slane %v1250, 7
        %v1351 = vsel %vm1339, %v1347, %v1350
        %v1352 = vrot.slane %v1251, 7
        %v1353 = vrot.slane %v1252, 7
        %v1354 = vrot.slane %v1253, 7
        %v1355 = vsel %vm1339, %v1352, %v1354
        %v1356 = vrot.slane %v1254, 7
        %v1357 = vsel %vm1339, %v1353, %v1356
        %v1358 = vrot.slane %v1255, 7
        %v1359 = vrot.slane %v1256, 7
        %v1360 = vrot.slane %v1257, 7
        %v1361 = vsel %vm1339, %v1358, %v1360
        %v1362 = vrot.slane %v1258, 7
        %v1363 = vsel %vm1339, %v1359, %v1362
        %v1364 = vrot.slane %v1259, 7
        %v1365 = vrot.slane %v1260, 7
        %v1366 = vrot.slane %v1261, 7
        %v1367 = vsel %vm1339, %v1364, %v1366
        %v1368 = vrot.slane %v1262, 7
        %v1369 = vsel %vm1339, %v1365, %v1368
        %v1370 = vrot.slane %v1263, 7
        %v1371 = vrot.slane %v1264, 7
        %v1372 = vrot.slane %v1265, 7
        %v1373 = vsel %vm1339, %v1370, %v1372
        %v1374 = vrot.slane %v1266, 7
        %v1375 = vsel %vm1339, %v1371, %v1374
        %v1376 = vrot.slane %v1267, 7
        %v1377 = vrot.slane %v1268, 7
        %v1378 = vrot.slane %v1269, 7
        %v1379 = vsel %vm1339, %v1376, %v1378
        %v1380 = vrot.slane %v1270, 7
        %v1381 = vsel %vm1339, %v1377, %v1380
        %v1382 = vrot.slane %v1271, 7
        %v1383 = vrot.slane %v1272, 7
        %v1384 = vrot.slane %v1273, 7
        %v1385 = vsel %vm1339, %v1382, %v1384
        %v1386 = vrot.slane %v1274, 7
        %v1387 = vsel %vm1339, %v1383, %v1386
        %v1420 = vmax.f32 %v1275, %v1340
        %v1421 = vmax.f32 %v1276, %v1341
        %v1422 = vmax.f32 %v1277, %v1343
        %v1423 = vmax.f32 %v1278, %v1345
        %v1424 = vmax.f32 %v1279, %v1346
        %v1425 = vmax.f32 %v1280, %v1347
        %v1426 = vmax.f32 %v1281, %v1349
        %v1427 = vmax.f32 %v1282, %v1351
        %v1428 = vmax.f32 %v1283, %v1352
        %v1429 = vmax.f32 %v1284, %v1353
        %v1430 = vmax.f32 %v1285, %v1355
        %v1431 = vmax.f32 %v1286, %v1357
        %v1432 = vmax.f32 %v1287, %v1358
        %v1433 = vmax.f32 %v1288, %v1359
        %v1434 = vmax.f32 %v1289, %v1361
        %v1435 = vmax.f32 %v1290, %v1363
        %v1436 = vmax.f32 %v1291, %v1364
        %v1437 = vmax.f32 %v1292, %v1365
        %v1438 = vmax.f32 %v1293, %v1367
        %v1439 = vmax.f32 %v1294, %v1369
        %v1440 = vmax.f32 %v1295, %v1370
        %v1441 = vmax.f32 %v1296, %v1371
        %v1442 = vmax.f32 %v1297, %v1373
        %v1443 = vmax.f32 %v1298, %v1375
        %v1444 = vmax.f32 %v1299, %v1376
        %v1445 = vmax.f32 %v1300, %v1377
        %v1446 = vmax.f32 %v1301, %v1379
        %v1447 = vmax.f32 %v1302, %v1381
        %v1448 = vmax.f32 %v1303, %v1382
        %v1449 = vmax.f32 %v1304, %v1383
        %v1450 = vmax.f32 %v1305, %v1385
        %v1451 = vmax.f32 %v1306, %v1387
        %1452 = vst [vmem:[#allocation2] sm:$0xfe] %v1420
        %1453 = vst [vmem:[#allocation2 + $0x8] sm:$0xfe] %v1421
        %1454 = vst [vmem:[#allocation2 + $0x10] sm:$0x7f] %v1422
        %1455 = vst [vmem:[#allocation2 + $0x18] sm:$0x7f] %v1423
        %1456 = vst [vmem:[#allocation2 + $0x30] sm:$0xfe] %v1424
        %1457 = vst [vmem:[#allocation2 + $0x38] sm:$0xfe] %v1425
        %1458 = vst [vmem:[#allocation2 + $0x40] sm:$0x7f] %v1426
        %1459 = vst [vmem:[#allocation2 + $0x48] sm:$0x7f] %v1427
        %1460 = vst [vmem:[#allocation2 + $0x60] sm:$0xfe] %v1428
        %1461 = vst [vmem:[#allocation2 + $0x68] sm:$0xfe] %v1429
        %1462 = vst [vmem:[#allocation2 + $0x70] sm:$0x7f] %v1430
        %1463 = vst [vmem:[#allocation2 + $0x78] sm:$0x7f] %v1431
        %1464 = vst [vmem:[#allocation2 + $0x90] sm:$0xfe] %v1432
        %1465 = vst [vmem:[#allocation2 + $0x98] sm:$0xfe] %v1433
        %1466 = vst [vmem:[#allocation2 + $0xa0] sm:$0x7f] %v1434
        %1467 = vst [vmem:[#allocation2 + $0xa8] sm:$0x7f] %v1435
        %1468 = vst [vmem:[#allocation2 + $0xc0] sm:$0xfe] %v1436
        %1469 = vst [vmem:[#allocation2 + $0xc8] sm:$0xfe] %v1437
        %1470 = vst [vmem:[#allocation2 + $0xd0] sm:$0x7f] %v1438
        %1471 = vst [vmem:[#allocation2 + $0xd8] sm:$0x7f] %v1439
        %1472 = vst [vmem:[#allocation2 + $0xf0] sm:$0xfe] %v1440
        %1473 = vst [vmem:[#allocation2 + $0xf8] sm:$0xfe] %v1441
        %1474 = vst [vmem:[#allocation2 + $0x100] sm:$0x7f] %v1442
        %1475 = vst [vmem:[#allocation2 + $0x108] sm:$0x7f] %v1443
        %1476 = vst [vmem:[#allocation2 + $0x120] sm:$0xfe] %v1444
        %1477 = vst [vmem:[#allocation2 + $0x128] sm:$0xfe] %v1445
        %1478 = vst [vmem:[#allocation2 + $0x130] sm:$0x7f] %v1446
        %1479 = vst [vmem:[#allocation2 + $0x138] sm:$0x7f] %v1447
        %1480 = vst [vmem:[#allocation2 + $0x150] sm:$0xfe] %v1448
        %1481 = vst [vmem:[#allocation2 + $0x158] sm:$0xfe] %v1449
        %1482 = vst [vmem:[#allocation2 + $0x160] sm:$0x7f] %v1450
        %1483 = vst [vmem:[#allocation2 + $0x168] sm:$0x7f] %v1451
        %v1484 = vld [vmem:[%s316] ss:$2 sm:$0xff]
        %v1485 = vld [vmem:[%s374] ss:$2 sm:$0xff]
        %v1486 = vld [vmem:[%s376] ss:$2 sm:$0xff]
        %v1487 = vld [vmem:[%s378] ss:$2 sm:$0xff]
        %v1488 = vld [vmem:[%s380] ss:$2 sm:$0xff]
        %v1489 = vld [vmem:[%s382] ss:$2 sm:$0xff]
        %v1490 = vld [vmem:[%s384] ss:$2 sm:$0xff]
        %v1491 = vld [vmem:[%s386] ss:$2 sm:$0xff]
        %v1492 = vld [vmem:[%s388] ss:$2 sm:$0xff]
        %v1493 = vld [vmem:[%s390] ss:$2 sm:$0xff]
        %v1494 = vld [vmem:[%s392] ss:$2 sm:$0xff]
        %v1495 = vld [vmem:[%s394] ss:$2 sm:$0xff]
        %v1496 = vld [vmem:[%s396] ss:$2 sm:$0xff]
        %v1497 = vld [vmem:[%s398] ss:$2 sm:$0xff]
        %v1498 = vld [vmem:[%s400] ss:$2 sm:$0xff]
        %v1499 = vld [vmem:[%s402] ss:$2 sm:$0xff]
        %s1500 = scalar_lea.vmem %s1, 64
        %v1501 = vld [vmem:[%s1500] sm:$0xff]
        %v1502 = vld [vmem:[%s1500 + $0x8] sm:$0xff]
        %v1503 = vld [vmem:[%s1500 + $0x10] sm:$0xff]
        %v1504 = vld [vmem:[%s1500 + $0x18] sm:$0xff]
        %v1505 = vld [vmem:[%s1500 + $0x20] sm:$0xff]
        %v1506 = vld [vmem:[%s1500 + $0x28] sm:$0xff]
        %v1507 = vld [vmem:[%s1500 + $0x30] sm:$0xff]
        %v1508 = vld [vmem:[%s1500 + $0x38] sm:$0xff]
        %v1509 = vld [vmem:[%s412] ss:$2 sm:$0xff]
        %v1510 = vld [vmem:[%s414] ss:$2 sm:$0xff]
        %v1511 = vld [vmem:[%s416] ss:$2 sm:$0xff]
        %v1512 = vld [vmem:[%s418] ss:$2 sm:$0xff]
        %v1513 = vld [vmem:[%s420] ss:$2 sm:$0xff]
        %v1514 = vld [vmem:[%s422] ss:$2 sm:$0xff]
        %v1515 = vld [vmem:[%s424] ss:$2 sm:$0xff]
        %v1516 = vld [vmem:[%s426] ss:$2 sm:$0xff]
        %v1517 = vld [vmem:[%s428] ss:$2 sm:$0xff]
        %v1518 = vld [vmem:[%s430] ss:$2 sm:$0xff]
        %v1519 = vld [vmem:[%s432] ss:$2 sm:$0xff]
        %v1520 = vld [vmem:[%s434] ss:$2 sm:$0xff]
        %v1521 = vld [vmem:[%s436] ss:$2 sm:$0xff]
        %v1522 = vld [vmem:[%s438] ss:$2 sm:$0xff]
        %v1523 = vld [vmem:[%s440] ss:$2 sm:$0xff]
        %v1524 = vld [vmem:[%s442] ss:$2 sm:$0xff]
        %s1525 = scalar_lea.vmem %s1, 192
        %v1526 = vld [vmem:[%s1525] sm:$0xff]
        %v1527 = vld [vmem:[%s1525 + $0x8] sm:$0xff]
        %v1528 = vld [vmem:[%s1525 + $0x10] sm:$0xff]
        %v1529 = vld [vmem:[%s1525 + $0x18] sm:$0xff]
        %v1530 = vld [vmem:[%s1525 + $0x20] sm:$0xff]
        %v1531 = vld [vmem:[%s1525 + $0x28] sm:$0xff]
        %v1532 = vld [vmem:[%s1525 + $0x30] sm:$0xff]
        %v1533 = vld [vmem:[%s1525 + $0x38] sm:$0xff]
        %v1535 = vsel %vm453, %v1509, 0
        %v1538 = vsel %vm453, %v1510, 0
        %v1541 = vsel %vm453, %v1511, 0
        %v1544 = vsel %vm453, %v1512, 0
        %v1547 = vsel %vm453, %v1513, 0
        %v1550 = vsel %vm453, %v1514, 0
        %v1553 = vsel %vm453, %v1515, 0
        %v1556 = vsel %vm453, %v1516, 0
        %v1559 = vsel %vm453, %v1517, 0
        %v1562 = vsel %vm453, %v1518, 0
        %v1565 = vsel %vm453, %v1519, 0
        %v1568 = vsel %vm453, %v1520, 0
        %v1571 = vsel %vm453, %v1521, 0
        %v1574 = vsel %vm453, %v1522, 0
        %v1577 = vsel %vm453, %v1523, 0
        %v1580 = vsel %vm453, %v1524, 0
        %1582 = vmatprep.subr.mxu0 %v1527
        %1583 = vmatpush1.msra.mxu0 %v1526
        %1584 = vmatprep.subr.mxu0 %v1529
        %1585 = vmatpush1.msra.mxu0 %v1528
        %1586 = vmatprep.subr.mxu0 %v1531
        %1587 = vmatpush1.msra.mxu0 %v1530
        %1588 = vmatprep.subr.mxu0 %v1533
        %1589 = vmatpush1.msra.mxu0 %v1532
        %1590 = vmatprep.subr.mxu0 0.0
        %1591 = vmatpush1.msra.mxu0 0.0
        %1592 = vmatprep.subr.mxu0 0.0
        %1593 = vmatpush1.msra.mxu0 0.0
        %1594 = vmatprep.subr.mxu0 0.0
        %1595 = vmatpush1.msra.mxu0 0.0
        %1596 = vmatprep.subr.mxu0 0.0
        %1597 = vmatpush1.msra.mxu0 0.0
        %1598 = vmatprep.subr.mxu0 0.0
        %1599 = vmatpush1.msra.mxu0 0.0
        %1600 = vmatprep.subr.mxu0 0.0
        %1601 = vmatpush1.msra.mxu0 0.0
        %1602 = vmatprep.subr.mxu0 0.0
        %1603 = vmatpush1.msra.mxu0 0.0
        %1604 = vmatprep.subr.mxu0 0.0
        %1605 = vmatpush1.msra.mxu0 0.0
        %1606 = vmatprep.subr.mxu0 0.0
        %1607 = vmatpush1.msra.mxu0 0.0
        %1608 = vmatprep.subr.mxu0 0.0
        %1609 = vmatpush1.msra.mxu0 0.0
        %1610 = vmatprep.subr.mxu0 0.0
        %1611 = vmatpush1.msra.mxu0 0.0
        %1612 = vmatprep.subr.mxu0 0.0
        %1613 = vmatpush1.msra.mxu0 0.0
        %1614 = vmatprep.subr.mxu0 0.0
        %1615 = vmatpush1.msra.mxu0 0.0
        %1616 = vmatprep.subr.mxu0 0.0
        %1617 = vmatpush1.msra.mxu0 0.0
        %1618 = vmatprep.subr.mxu0 0.0
        %1619 = vmatpush1.msra.mxu0 0.0
        %1620 = vmatprep.subr.mxu0 0.0
        %1621 = vmatpush1.msra.mxu0 0.0
        %1622 = vmatprep.subr.mxu0 0.0
        %1623 = vmatpush1.msra.mxu0 0.0
        %1624 = vmatprep.subr.mxu0 0.0
        %1625 = vmatpush1.msra.mxu0 0.0
        %1626 = vmatprep.subr.mxu0 0.0
        %1627 = vmatpush1.msra.mxu0 0.0
        %1628 = vmatprep.subr.mxu0 0.0
        %1629 = vmatpush1.msra.mxu0 0.0
        %1630 = vmatprep.subr.mxu0 0.0
        %1631 = vmatpush1.msra.mxu0 0.0
        %1632 = vmatprep.subr.mxu0 0.0
        %1633 = vmatpush1.msra.mxu0 0.0
        %1634 = vmatprep.subr.mxu0 0.0
        %1635 = vmatpush1.msra.mxu0 0.0
        %1636 = vmatprep.subr.mxu0 0.0
        %1637 = vmatpush1.msra.mxu0 0.0
        %1638 = vmatprep.subr.mxu0 0.0
        %1639 = vmatpush1.msra.mxu0 0.0
        %1640 = vmatprep.subr.mxu0 0.0
        %1641 = vmatpush1.msra.mxu0 0.0
        %1642 = vmatprep.subr.mxu0 0.0
        %1643 = vmatpush1.msra.mxu0 0.0
        %1644 = vmatprep.subr.mxu0 0.0
        %1645 = vmatpush1.msra.mxu0 0.0
        %1646 = vmatprep.mubr.f32.mxu0 0.0
        %1647 = vmatmul.mubr.f32.gmra.mrb[0].mxu0 %v1535
        %v1648 = vpop.f32.mrb[0].mxu0
        %v1649 = vadd.f32 0.0, %v1648
        %v1650 = vpop.f32.mrb[0].mxu0
        %v1651 = vadd.f32 0.0, %v1650
        %1652 = vmatprep.mubr.f32.mxu0 0.0
        %1653 = vmatmul.mubr.f32.gmra.mrb[0].mxu0 %v1538
        %v1654 = vpop.f32.mrb[0].mxu0
        %v1655 = vadd.f32 0.0, %v1654
        %v1656 = vpop.f32.mrb[0].mxu0
        %v1657 = vadd.f32 0.0, %v1656
        %1658 = vmatprep.mubr.f32.mxu0 0.0
        %1659 = vmatmul.mubr.f32.gmra.mrb[0].mxu0 %v1541
        %v1660 = vpop.f32.mrb[0].mxu0
        %v1661 = vadd.f32 0.0, %v1660
        %v1662 = vpop.f32.mrb[0].mxu0
        %v1663 = vadd.f32 0.0, %v1662
        %1664 = vmatprep.mubr.f32.mxu0 0.0
        %1665 = vmatmul.mubr.f32.gmra.mrb[0].mxu0 %v1544
        %v1666 = vpop.f32.mrb[0].mxu0
        %v1667 = vadd.f32 0.0, %v1666
        %v1668 = vpop.f32.mrb[0].mxu0
        %v1669 = vadd.f32 0.0, %v1668
        %1670 = vmatprep.mubr.f32.mxu0 0.0
        %1671 = vmatmul.mubr.f32.gmra.mrb[0].mxu0 %v1547
        %v1672 = vpop.f32.mrb[0].mxu0
        %v1673 = vadd.f32 0.0, %v1672
        %v1674 = vpop.f32.mrb[0].mxu0
        %v1675 = vadd.f32 0.0, %v1674
        %1676 = vmatprep.mubr.f32.mxu0 0.0
        %1677 = vmatmul.mubr.f32.gmra.mrb[0].mxu0 %v1550
        %v1678 = vpop.f32.mrb[0].mxu0
        %v1679 = vadd.f32 0.0, %v1678
        %v1680 = vpop.f32.mrb[0].mxu0
        %v1681 = vadd.f32 0.0, %v1680
        %1682 = vmatprep.mubr.f32.mxu0 0.0
        %1683 = vmatmul.mubr.f32.gmra.mrb[0].mxu0 %v1553
        %v1684 = vpop.f32.mrb[0].mxu0
        %v1685 = vadd.f32 0.0, %v1684
        %v1686 = vpop.f32.mrb[0].mxu0
        %v1687 = vadd.f32 0.0, %v1686
        %1688 = vmatprep.mubr.f32.mxu0 0.0
        %1689 = vmatmul.mubr.f32.gmra.mrb[0].mxu0 %v1556
        %v1690 = vpop.f32.mrb[0].mxu0
        %v1691 = vadd.f32 0.0, %v1690
        %v1692 = vpop.f32.mrb[0].mxu0
        %v1693 = vadd.f32 0.0, %v1692
        %1694 = vmatprep.mubr.f32.mxu0 0.0
        %1695 = vmatmul.mubr.f32.gmra.mrb[0].mxu0 %v1559
        %v1696 = vpop.f32.mrb[0].mxu0
        %v1697 = vadd.f32 0.0, %v1696
        %v1698 = vpop.f32.mrb[0].mxu0
        %v1699 = vadd.f32 0.0, %v1698
        %1700 = vmatprep.mubr.f32.mxu0 0.0
        %1701 = vmatmul.mubr.f32.gmra.mrb[0].mxu0 %v1562
        %v1702 = vpop.f32.mrb[0].mxu0
        %v1703 = vadd.f32 0.0, %v1702
        %v1704 = vpop.f32.mrb[0].mxu0
        %v1705 = vadd.f32 0.0, %v1704
        %1706 = vmatprep.mubr.f32.mxu0 0.0
        %1707 = vmatmul.mubr.f32.gmra.mrb[0].mxu0 %v1565
        %v1708 = vpop.f32.mrb[0].mxu0
        %v1709 = vadd.f32 0.0, %v1708
        %v1710 = vpop.f32.mrb[0].mxu0
        %v1711 = vadd.f32 0.0, %v1710
        %1712 = vmatprep.mubr.f32.mxu0 0.0
        %1713 = vmatmul.mubr.f32.gmra.mrb[0].mxu0 %v1568
        %v1714 = vpop.f32.mrb[0].mxu0
        %v1715 = vadd.f32 0.0, %v1714
        %v1716 = vpop.f32.mrb[0].mxu0
        %v1717 = vadd.f32 0.0, %v1716
        %1718 = vmatprep.mubr.f32.mxu0 0.0
        %1719 = vmatmul.mubr.f32.gmra.mrb[0].mxu0 %v1571
        %v1720 = vpop.f32.mrb[0].mxu0
        %v1721 = vadd.f32 0.0, %v1720
        %v1722 = vpop.f32.mrb[0].mxu0
        %v1723 = vadd.f32 0.0, %v1722
        %1724 = vmatprep.mubr.f32.mxu0 0.0
        %1725 = vmatmul.mubr.f32.gmra.mrb[0].mxu0 %v1574
        %v1726 = vpop.f32.mrb[0].mxu0
        %v1727 = vadd.f32 0.0, %v1726
        %v1728 = vpop.f32.mrb[0].mxu0
        %v1729 = vadd.f32 0.0, %v1728
        %1730 = vmatprep.mubr.f32.mxu0 0.0
        %1731 = vmatmul.mubr.f32.gmra.mrb[0].mxu0 %v1577
        %v1732 = vpop.f32.mrb[0].mxu0
        %v1733 = vadd.f32 0.0, %v1732
        %v1734 = vpop.f32.mrb[0].mxu0
        %v1735 = vadd.f32 0.0, %v1734
        %1736 = vmatprep.mubr.f32.mxu0 0.0
        %1737 = vmatmul.mubr.f32.gmra.mrb[0].mxu0 %v1580
        %v1738 = vpop.f32.mrb[0].mxu0
        %v1739 = vadd.f32 0.0, %v1738
        %v1740 = vpop.f32.mrb[0].mxu0
        %v1741 = vadd.f32 0.0, %v1740
        %1742 = vdwg.mxu0
        %v1744 = vsel %vm453, %v1484, 0
        %v1747 = vsel %vm453, %v1485, 0
        %v1750 = vsel %vm453, %v1486, 0
        %v1753 = vsel %vm453, %v1487, 0
        %v1756 = vsel %vm453, %v1488, 0
        %v1759 = vsel %vm453, %v1489, 0
        %v1762 = vsel %vm453, %v1490, 0
        %v1765 = vsel %vm453, %v1491, 0
        %v1768 = vsel %vm453, %v1492, 0
        %v1771 = vsel %vm453, %v1493, 0
        %v1774 = vsel %vm453, %v1494, 0
        %v1777 = vsel %vm453, %v1495, 0
        %v1780 = vsel %vm453, %v1496, 0
        %v1783 = vsel %vm453, %v1497, 0
        %v1786 = vsel %vm453, %v1498, 0
        %v1789 = vsel %vm453, %v1499, 0
        %1791 = vmatprep.subr.mxu0 %v1502
        %1792 = vmatpush1.msra.mxu0 %v1501
        %1793 = vmatprep.subr.mxu0 %v1504
        %1794 = vmatpush1.msra.mxu0 %v1503
        %1795 = vmatprep.subr.mxu0 %v1506
        %1796 = vmatpush1.msra.mxu0 %v1505
        %1797 = vmatprep.subr.mxu0 %v1508
        %1798 = vmatpush1.msra.mxu0 %v1507
        %1799 = vmatprep.subr.mxu0 0.0
        %1800 = vmatpush1.msra.mxu0 0.0
        %1801 = vmatprep.subr.mxu0 0.0
        %1802 = vmatpush1.msra.mxu0 0.0
        %1803 = vmatprep.subr.mxu0 0.0
        %1804 = vmatpush1.msra.mxu0 0.0
        %1805 = vmatprep.subr.mxu0 0.0
        %1806 = vmatpush1.msra.mxu0 0.0
        %1807 = vmatprep.subr.mxu0 0.0
        %1808 = vmatpush1.msra.mxu0 0.0
        %1809 = vmatprep.subr.mxu0 0.0
        %1810 = vmatpush1.msra.mxu0 0.0
        %1811 = vmatprep.subr.mxu0 0.0
        %1812 = vmatpush1.msra.mxu0 0.0
        %1813 = vmatprep.subr.mxu0 0.0
        %1814 = vmatpush1.msra.mxu0 0.0
        %1815 = vmatprep.subr.mxu0 0.0
        %1816 = vmatpush1.msra.mxu0 0.0
        %1817 = vmatprep.subr.mxu0 0.0
        %1818 = vmatpush1.msra.mxu0 0.0
        %1819 = vmatprep.subr.mxu0 0.0
        %1820 = vmatpush1.msra.mxu0 0.0
        %1821 = vmatprep.subr.mxu0 0.0
        %1822 = vmatpush1.msra.mxu0 0.0
        %1823 = vmatprep.subr.mxu0 0.0
        %1824 = vmatpush1.msra.mxu0 0.0
        %1825 = vmatprep.subr.mxu0 0.0
        %1826 = vmatpush1.msra.mxu0 0.0
        %1827 = vmatprep.subr.mxu0 0.0
        %1828 = vmatpush1.msra.mxu0 0.0
        %1829 = vmatprep.subr.mxu0 0.0
        %1830 = vmatpush1.msra.mxu0 0.0
        %1831 = vmatprep.subr.mxu0 0.0
        %1832 = vmatpush1.msra.mxu0 0.0
        %1833 = vmatprep.subr.mxu0 0.0
        %1834 = vmatpush1.msra.mxu0 0.0
        %1835 = vmatprep.subr.mxu0 0.0
        %1836 = vmatpush1.msra.mxu0 0.0
        %1837 = vmatprep.subr.mxu0 0.0
        %1838 = vmatpush1.msra.mxu0 0.0
        %1839 = vmatprep.subr.mxu0 0.0
        %1840 = vmatpush1.msra.mxu0 0.0
        %1841 = vmatprep.subr.mxu0 0.0
        %1842 = vmatpush1.msra.mxu0 0.0
        %1843 = vmatprep.subr.mxu0 0.0
        %1844 = vmatpush1.msra.mxu0 0.0
        %1845 = vmatprep.subr.mxu0 0.0
        %1846 = vmatpush1.msra.mxu0 0.0
        %1847 = vmatprep.subr.mxu0 0.0
        %1848 = vmatpush1.msra.mxu0 0.0
        %1849 = vmatprep.subr.mxu0 0.0
        %1850 = vmatpush1.msra.mxu0 0.0
        %1851 = vmatprep.subr.mxu0 0.0
        %1852 = vmatpush1.msra.mxu0 0.0
        %1853 = vmatprep.subr.mxu0 0.0
        %1854 = vmatpush1.msra.mxu0 0.0
        %1855 = vmatprep.mubr.f32.mxu0 0.0
        %1856 = vmatmul.mubr.f32.gmra.mrb[0].mxu0 %v1744
        %v1857 = vpop.f32.mrb[0].mxu0
        %v1858 = vadd.f32 %v1649, %v1857
        %v1859 = vpop.f32.mrb[0].mxu0
        %v1860 = vadd.f32 %v1651, %v1859
        %1861 = vmatprep.mubr.f32.mxu0 0.0
        %1862 = vmatmul.mubr.f32.gmra.mrb[0].mxu0 %v1747
        %v1863 = vpop.f32.mrb[0].mxu0
        %v1864 = vadd.f32 %v1655, %v1863
        %v1865 = vpop.f32.mrb[0].mxu0
        %v1866 = vadd.f32 %v1657, %v1865
        %1867 = vmatprep.mubr.f32.mxu0 0.0
        %1868 = vmatmul.mubr.f32.gmra.mrb[0].mxu0 %v1750
        %v1869 = vpop.f32.mrb[0].mxu0
        %v1870 = vadd.f32 %v1661, %v1869
        %v1871 = vpop.f32.mrb[0].mxu0
        %v1872 = vadd.f32 %v1663, %v1871
        %1873 = vmatprep.mubr.f32.mxu0 0.0
        %1874 = vmatmul.mubr.f32.gmra.mrb[0].mxu0 %v1753
        %v1875 = vpop.f32.mrb[0].mxu0
        %v1876 = vadd.f32 %v1667, %v1875
        %v1877 = vpop.f32.mrb[0].mxu0
        %v1878 = vadd.f32 %v1669, %v1877
        %1879 = vmatprep.mubr.f32.mxu0 0.0
        %1880 = vmatmul.mubr.f32.gmra.mrb[0].mxu0 %v1756
        %v1881 = vpop.f32.mrb[0].mxu0
        %v1882 = vadd.f32 %v1673, %v1881
        %v1883 = vpop.f32.mrb[0].mxu0
        %v1884 = vadd.f32 %v1675, %v1883
        %1885 = vmatprep.mubr.f32.mxu0 0.0
        %1886 = vmatmul.mubr.f32.gmra.mrb[0].mxu0 %v1759
        %v1887 = vpop.f32.mrb[0].mxu0
        %v1888 = vadd.f32 %v1679, %v1887
        %v1889 = vpop.f32.mrb[0].mxu0
        %v1890 = vadd.f32 %v1681, %v1889
        %1891 = vmatprep.mubr.f32.mxu0 0.0
        %1892 = vmatmul.mubr.f32.gmra.mrb[0].mxu0 %v1762
        %v1893 = vpop.f32.mrb[0].mxu0
        %v1894 = vadd.f32 %v1685, %v1893
        %v1895 = vpop.f32.mrb[0].mxu0
        %v1896 = vadd.f32 %v1687, %v1895
        %1897 = vmatprep.mubr.f32.mxu0 0.0
        %1898 = vmatmul.mubr.f32.gmra.mrb[0].mxu0 %v1765
        %v1899 = vpop.f32.mrb[0].mxu0
        %v1900 = vadd.f32 %v1691, %v1899
        %v1901 = vpop.f32.mrb[0].mxu0
        %v1902 = vadd.f32 %v1693, %v1901
        %1903 = vmatprep.mubr.f32.mxu0 0.0
        %1904 = vmatmul.mubr.f32.gmra.mrb[0].mxu0 %v1768
        %v1905 = vpop.f32.mrb[0].mxu0
        %v1906 = vadd.f32 %v1697, %v1905
        %v1907 = vpop.f32.mrb[0].mxu0
        %v1908 = vadd.f32 %v1699, %v1907
        %1909 = vmatprep.mubr.f32.mxu0 0.0
        %1910 = vmatmul.mubr.f32.gmra.mrb[0].mxu0 %v1771
        %v1911 = vpop.f32.mrb[0].mxu0
        %v1912 = vadd.f32 %v1703, %v1911
        %v1913 = vpop.f32.mrb[0].mxu0
        %v1914 = vadd.f32 %v1705, %v1913
        %1915 = vmatprep.mubr.f32.mxu0 0.0
        %1916 = vmatmul.mubr.f32.gmra.mrb[0].mxu0 %v1774
        %v1917 = vpop.f32.mrb[0].mxu0
        %v1918 = vadd.f32 %v1709, %v1917
        %v1919 = vpop.f32.mrb[0].mxu0
        %v1920 = vadd.f32 %v1711, %v1919
        %1921 = vmatprep.mubr.f32.mxu0 0.0
        %1922 = vmatmul.mubr.f32.gmra.mrb[0].mxu0 %v1777
        %v1923 = vpop.f32.mrb[0].mxu0
        %v1924 = vadd.f32 %v1715, %v1923
        %v1925 = vpop.f32.mrb[0].mxu0
        %v1926 = vadd.f32 %v1717, %v1925
        %1927 = vmatprep.mubr.f32.mxu0 0.0
        %1928 = vmatmul.mubr.f32.gmra.mrb[0].mxu0 %v1780
        %v1929 = vpop.f32.mrb[0].mxu0
        %v1930 = vadd.f32 %v1721, %v1929
        %v1931 = vpop.f32.mrb[0].mxu0
        %v1932 = vadd.f32 %v1723, %v1931
        %1933 = vmatprep.mubr.f32.mxu0 0.0
        %1934 = vmatmul.mubr.f32.gmra.mrb[0].mxu0 %v1783
        %v1935 = vpop.f32.mrb[0].mxu0
        %v1936 = vadd.f32 %v1727, %v1935
        %v1937 = vpop.f32.mrb[0].mxu0
        %v1938 = vadd.f32 %v1729, %v1937
        %1939 = vmatprep.mubr.f32.mxu0 0.0
        %1940 = vmatmul.mubr.f32.gmra.mrb[0].mxu0 %v1786
        %v1941 = vpop.f32.mrb[0].mxu0
        %v1942 = vadd.f32 %v1733, %v1941
        %v1943 = vpop.f32.mrb[0].mxu0
        %v1944 = vadd.f32 %v1735, %v1943
        %1945 = vmatprep.mubr.f32.mxu0 0.0
        %1946 = vmatmul.mubr.f32.gmra.mrb[0].mxu0 %v1789
        %v1947 = vpop.f32.mrb[0].mxu0
        %v1948 = vadd.f32 %v1739, %v1947
        %v1949 = vpop.f32.mrb[0].mxu0
        %v1950 = vadd.f32 %v1741, %v1949
        %1951 = vdwg.mxu0
        %v1952 = vld [vmem:[%s872] ss:$2 sm:$0xff]
        %v1953 = vld [vmem:[%s874] ss:$2 sm:$0xff]
        %v1954 = vld [vmem:[%s876] ss:$2 sm:$0xff]
        %v1955 = vld [vmem:[%s878] ss:$2 sm:$0xff]
        %v1956 = vld [vmem:[%s880] ss:$2 sm:$0xff]
        %v1957 = vld [vmem:[%s882] ss:$2 sm:$0xff]
        %v1958 = vld [vmem:[%s884] ss:$2 sm:$0xff]
        %v1959 = vld [vmem:[%s886] ss:$2 sm:$0xff]
        %v1960 = vld [vmem:[%s888] ss:$2 sm:$0xff]
        %v1961 = vld [vmem:[%s890] ss:$2 sm:$0xff]
        %v1962 = vld [vmem:[%s892] ss:$2 sm:$0xff]
        %v1963 = vld [vmem:[%s894] ss:$2 sm:$0xff]
        %v1964 = vld [vmem:[%s896] ss:$2 sm:$0xff]
        %v1965 = vld [vmem:[%s898] ss:$2 sm:$0xff]
        %v1966 = vld [vmem:[%s900] ss:$2 sm:$0xff]
        %v1967 = vld [vmem:[%s902] ss:$2 sm:$0xff]
        %s1968 = scalar_lea.vmem %s1, 320
        %v1969 = vld [vmem:[%s1968] sm:$0xff]
        %v1970 = vld [vmem:[%s1968 + $0x8] sm:$0xff]
        %v1971 = vld [vmem:[%s1968 + $0x10] sm:$0xff]
        %v1972 = vld [vmem:[%s1968 + $0x18] sm:$0xff]
        %v1973 = vld [vmem:[%s1968 + $0x20] sm:$0xff]
        %v1974 = vld [vmem:[%s1968 + $0x28] sm:$0xff]
        %v1975 = vld [vmem:[%s1968 + $0x30] sm:$0xff]
        %v1976 = vld [vmem:[%s1968 + $0x38] sm:$0xff]
        %v1978 = vsel %vm453, %v1952, 0
        %v1981 = vsel %vm453, %v1953, 0
        %v1984 = vsel %vm453, %v1954, 0
        %v1987 = vsel %vm453, %v1955, 0
        %v1990 = vsel %vm453, %v1956, 0
        %v1993 = vsel %vm453, %v1957, 0
        %v1996 = vsel %vm453, %v1958, 0
        %v1999 = vsel %vm453, %v1959, 0
        %v2002 = vsel %vm453, %v1960, 0
        %v2005 = vsel %vm453, %v1961, 0
        %v2008 = vsel %vm453, %v1962, 0
        %v2011 = vsel %vm453, %v1963, 0
        %v2014 = vsel %vm453, %v1964, 0
        %v2017 = vsel %vm453, %v1965, 0
        %v2020 = vsel %vm453, %v1966, 0
        %v2023 = vsel %vm453, %v1967, 0
        %2025 = vmatprep.subr.mxu0 %v1970
        %2026 = vmatpush1.msra.mxu0 %v1969
        %2027 = vmatprep.subr.mxu0 %v1972
        %2028 = vmatpush1.msra.mxu0 %v1971
        %2029 = vmatprep.subr.mxu0 %v1974
        %2030 = vmatpush1.msra.mxu0 %v1973
        %2031 = vmatprep.subr.mxu0 %v1976
        %2032 = vmatpush1.msra.mxu0 %v1975
        %2033 = vmatprep.subr.mxu0 0.0
        %2034 = vmatpush1.msra.mxu0 0.0
        %2035 = vmatprep.subr.mxu0 0.0
        %2036 = vmatpush1.msra.mxu0 0.0
        %2037 = vmatprep.subr.mxu0 0.0
        %2038 = vmatpush1.msra.mxu0 0.0
        %2039 = vmatprep.subr.mxu0 0.0
        %2040 = vmatpush1.msra.mxu0 0.0
        %2041 = vmatprep.subr.mxu0 0.0
        %2042 = vmatpush1.msra.mxu0 0.0
        %2043 = vmatprep.subr.mxu0 0.0
        %2044 = vmatpush1.msra.mxu0 0.0
        %2045 = vmatprep.subr.mxu0 0.0
        %2046 = vmatpush1.msra.mxu0 0.0
        %2047 = vmatprep.subr.mxu0 0.0
        %2048 = vmatpush1.msra.mxu0 0.0
        %2049 = vmatprep.subr.mxu0 0.0
        %2050 = vmatpush1.msra.mxu0 0.0
        %2051 = vmatprep.subr.mxu0 0.0
        %2052 = vmatpush1.msra.mxu0 0.0
        %2053 = vmatprep.subr.mxu0 0.0
        %2054 = vmatpush1.msra.mxu0 0.0
        %2055 = vmatprep.subr.mxu0 0.0
        %2056 = vmatpush1.msra.mxu0 0.0
        %2057 = vmatprep.subr.mxu0 0.0
        %2058 = vmatpush1.msra.mxu0 0.0
        %2059 = vmatprep.subr.mxu0 0.0
        %2060 = vmatpush1.msra.mxu0 0.0
        %2061 = vmatprep.subr.mxu0 0.0
        %2062 = vmatpush1.msra.mxu0 0.0
        %2063 = vmatprep.subr.mxu0 0.0
        %2064 = vmatpush1.msra.mxu0 0.0
        %2065 = vmatprep.subr.mxu0 0.0
        %2066 = vmatpush1.msra.mxu0 0.0
        %2067 = vmatprep.subr.mxu0 0.0
        %2068 = vmatpush1.msra.mxu0 0.0
        %2069 = vmatprep.subr.mxu0 0.0
        %2070 = vmatpush1.msra.mxu0 0.0
        %2071 = vmatprep.subr.mxu0 0.0
        %2072 = vmatpush1.msra.mxu0 0.0
        %2073 = vmatprep.subr.mxu0 0.0
        %2074 = vmatpush1.msra.mxu0 0.0
        %2075 = vmatprep.subr.mxu0 0.0
        %2076 = vmatpush1.msra.mxu0 0.0
        %2077 = vmatprep.subr.mxu0 0.0
        %2078 = vmatpush1.msra.mxu0 0.0
        %2079 = vmatprep.subr.mxu0 0.0
        %2080 = vmatpush1.msra.mxu0 0.0
        %2081 = vmatprep.subr.mxu0 0.0
        %2082 = vmatpush1.msra.mxu0 0.0
        %2083 = vmatprep.subr.mxu0 0.0
        %2084 = vmatpush1.msra.mxu0 0.0
        %2085 = vmatprep.subr.mxu0 0.0
        %2086 = vmatpush1.msra.mxu0 0.0
        %2087 = vmatprep.subr.mxu0 0.0
        %2088 = vmatpush1.msra.mxu0 0.0
        %2089 = vmatprep.mubr.f32.mxu0 0.0
        %2090 = vmatmul.mubr.f32.gmra.mrb[0].mxu0 %v1978
        %v2091 = vpop.f32.mrb[0].mxu0
        %v2092 = vadd.f32 0.0, %v2091
        %v2093 = vpop.f32.mrb[0].mxu0
        %v2094 = vadd.f32 0.0, %v2093
        %2095 = vmatprep.mubr.f32.mxu0 0.0
        %2096 = vmatmul.mubr.f32.gmra.mrb[0].mxu0 %v1981
        %v2097 = vpop.f32.mrb[0].mxu0
        %v2098 = vadd.f32 0.0, %v2097
        %v2099 = vpop.f32.mrb[0].mxu0
        %v2100 = vadd.f32 0.0, %v2099
        %2101 = vmatprep.mubr.f32.mxu0 0.0
        %2102 = vmatmul.mubr.f32.gmra.mrb[0].mxu0 %v1984
        %v2103 = vpop.f32.mrb[0].mxu0
        %v2104 = vadd.f32 0.0, %v2103
        %v2105 = vpop.f32.mrb[0].mxu0
        %v2106 = vadd.f32 0.0, %v2105
        %2107 = vmatprep.mubr.f32.mxu0 0.0
        %2108 = vmatmul.mubr.f32.gmra.mrb[0].mxu0 %v1987
        %v2109 = vpop.f32.mrb[0].mxu0
        %v2110 = vadd.f32 0.0, %v2109
        %v2111 = vpop.f32.mrb[0].mxu0
        %v2112 = vadd.f32 0.0, %v2111
        %2113 = vmatprep.mubr.f32.mxu0 0.0
        %2114 = vmatmul.mubr.f32.gmra.mrb[0].mxu0 %v1990
        %v2115 = vpop.f32.mrb[0].mxu0
        %v2116 = vadd.f32 0.0, %v2115
        %v2117 = vpop.f32.mrb[0].mxu0
        %v2118 = vadd.f32 0.0, %v2117
        %2119 = vmatprep.mubr.f32.mxu0 0.0
        %2120 = vmatmul.mubr.f32.gmra.mrb[0].mxu0 %v1993
        %v2121 = vpop.f32.mrb[0].mxu0
        %v2122 = vadd.f32 0.0, %v2121
        %v2123 = vpop.f32.mrb[0].mxu0
        %v2124 = vadd.f32 0.0, %v2123
        %2125 = vmatprep.mubr.f32.mxu0 0.0
        %2126 = vmatmul.mubr.f32.gmra.mrb[0].mxu0 %v1996
        %v2127 = vpop.f32.mrb[0].mxu0
        %v2128 = vadd.f32 0.0, %v2127
        %v2129 = vpop.f32.mrb[0].mxu0
        %v2130 = vadd.f32 0.0, %v2129
        %2131 = vmatprep.mubr.f32.mxu0 0.0
        %2132 = vmatmul.mubr.f32.gmra.mrb[0].mxu0 %v1999
        %v2133 = vpop.f32.mrb[0].mxu0
        %v2134 = vadd.f32 0.0, %v2133
        %v2135 = vpop.f32.mrb[0].mxu0
        %v2136 = vadd.f32 0.0, %v2135
        %2137 = vmatprep.mubr.f32.mxu0 0.0
        %2138 = vmatmul.mubr.f32.gmra.mrb[0].mxu0 %v2002
        %v2139 = vpop.f32.mrb[0].mxu0
        %v2140 = vadd.f32 0.0, %v2139
        %v2141 = vpop.f32.mrb[0].mxu0
        %v2142 = vadd.f32 0.0, %v2141
        %2143 = vmatprep.mubr.f32.mxu0 0.0
        %2144 = vmatmul.mubr.f32.gmra.mrb[0].mxu0 %v2005
        %v2145 = vpop.f32.mrb[0].mxu0
        %v2146 = vadd.f32 0.0, %v2145
        %v2147 = vpop.f32.mrb[0].mxu0
        %v2148 = vadd.f32 0.0, %v2147
        %2149 = vmatprep.mubr.f32.mxu0 0.0
        %2150 = vmatmul.mubr.f32.gmra.mrb[0].mxu0 %v2008
        %v2151 = vpop.f32.mrb[0].mxu0
        %v2152 = vadd.f32 0.0, %v2151
        %v2153 = vpop.f32.mrb[0].mxu0
        %v2154 = vadd.f32 0.0, %v2153
        %2155 = vmatprep.mubr.f32.mxu0 0.0
        %2156 = vmatmul.mubr.f32.gmra.mrb[0].mxu0 %v2011
        %v2157 = vpop.f32.mrb[0].mxu0
        %v2158 = vadd.f32 0.0, %v2157
        %v2159 = vpop.f32.mrb[0].mxu0
        %v2160 = vadd.f32 0.0, %v2159
        %2161 = vmatprep.mubr.f32.mxu0 0.0
        %2162 = vmatmul.mubr.f32.gmra.mrb[0].mxu0 %v2014
        %v2163 = vpop.f32.mrb[0].mxu0
        %v2164 = vadd.f32 0.0, %v2163
        %v2165 = vpop.f32.mrb[0].mxu0
        %v2166 = vadd.f32 0.0, %v2165
        %2167 = vmatprep.mubr.f32.mxu0 0.0
        %2168 = vmatmul.mubr.f32.gmra.mrb[0].mxu0 %v2017
        %v2169 = vpop.f32.mrb[0].mxu0
        %v2170 = vadd.f32 0.0, %v2169
        %v2171 = vpop.f32.mrb[0].mxu0
        %v2172 = vadd.f32 0.0, %v2171
        %2173 = vmatprep.mubr.f32.mxu0 0.0
        %2174 = vmatmul.mubr.f32.gmra.mrb[0].mxu0 %v2020
        %v2175 = vpop.f32.mrb[0].mxu0
        %v2176 = vadd.f32 0.0, %v2175
        %v2177 = vpop.f32.mrb[0].mxu0
        %v2178 = vadd.f32 0.0, %v2177
        %2179 = vmatprep.mubr.f32.mxu0 0.0
        %2180 = vmatmul.mubr.f32.gmra.mrb[0].mxu0 %v2023
        %v2181 = vpop.f32.mrb[0].mxu0
        %v2182 = vadd.f32 0.0, %v2181
        %v2183 = vpop.f32.mrb[0].mxu0
        %v2184 = vadd.f32 0.0, %v2183
        %2185 = vdwg.mxu0
        %v2186 = vadd.f32 %v1858, %v2092
        %v2187 = vadd.f32 %v1860, %v2094
        %v2188 = vadd.f32 %v1864, %v2098
        %v2189 = vadd.f32 %v1866, %v2100
        %v2190 = vadd.f32 %v1870, %v2104
        %v2191 = vadd.f32 %v1872, %v2106
        %v2192 = vadd.f32 %v1876, %v2110
        %v2193 = vadd.f32 %v1878, %v2112
        %v2194 = vadd.f32 %v1882, %v2116
        %v2195 = vadd.f32 %v1884, %v2118
        %v2196 = vadd.f32 %v1888, %v2122
        %v2197 = vadd.f32 %v1890, %v2124
        %v2198 = vadd.f32 %v1894, %v2128
        %v2199 = vadd.f32 %v1896, %v2130
        %v2200 = vadd.f32 %v1900, %v2134
        %v2201 = vadd.f32 %v1902, %v2136
        %v2202 = vadd.f32 %v1906, %v2140
        %v2203 = vadd.f32 %v1908, %v2142
        %v2204 = vadd.f32 %v1912, %v2146
        %v2205 = vadd.f32 %v1914, %v2148
        %v2206 = vadd.f32 %v1918, %v2152
        %v2207 = vadd.f32 %v1920, %v2154
        %v2208 = vadd.f32 %v1924, %v2158
        %v2209 = vadd.f32 %v1926, %v2160
        %v2210 = vadd.f32 %v1930, %v2164
        %v2211 = vadd.f32 %v1932, %v2166
        %v2212 = vadd.f32 %v1936, %v2170
        %v2213 = vadd.f32 %v1938, %v2172
        %v2214 = vadd.f32 %v1942, %v2176
        %v2215 = vadd.f32 %v1944, %v2178
        %v2216 = vadd.f32 %v1948, %v2182
        %v2217 = vadd.f32 %v1950, %v2184
        %v2218 = vld [vmem:[%s2] ss:$2 sm:$0x3]
        %v2220 = vlaneseq
        %v2221 = vshrl.u32 %v2220, 7
        %v2222 = vsub.s32 0, %v2221
        %v2223 = vrot.slane %v2218, %v2222
        %v2224 = vlaneseq
        %v2225 = vshrl.u32 %v2224, 7
        %v2226 = vsub.s32 1, %v2225
        %v2227 = vrot.slane %v2218, %v2226
        %v2230 = vmul.f32 %v2186, %v2223
        %v2231 = vmul.f32 %v2187, %v2227
        %v2232 = vmul.f32 %v2188, %v2223
        %v2233 = vmul.f32 %v2189, %v2227
        %v2234 = vmul.f32 %v2190, %v2223
        %v2235 = vmul.f32 %v2191, %v2227
        %v2236 = vmul.f32 %v2192, %v2223
        %v2237 = vmul.f32 %v2193, %v2227
        %v2238 = vmul.f32 %v2194, %v2223
        %v2239 = vmul.f32 %v2195, %v2227
        %v2240 = vmul.f32 %v2196, %v2223
        %v2241 = vmul.f32 %v2197, %v2227
        %v2242 = vmul.f32 %v2198, %v2223
        %v2243 = vmul.f32 %v2199, %v2227
        %v2244 = vmul.f32 %v2200, %v2223
        %v2245 = vmul.f32 %v2201, %v2227
        %v2246 = vmul.f32 %v2202, %v2223
        %v2247 = vmul.f32 %v2203, %v2227
        %v2248 = vmul.f32 %v2204, %v2223
        %v2249 = vmul.f32 %v2205, %v2227
        %v2250 = vmul.f32 %v2206, %v2223
        %v2251 = vmul.f32 %v2207, %v2227
        %v2252 = vmul.f32 %v2208, %v2223
        %v2253 = vmul.f32 %v2209, %v2227
        %v2254 = vmul.f32 %v2210, %v2223
        %v2255 = vmul.f32 %v2211, %v2227
        %v2256 = vmul.f32 %v2212, %v2223
        %v2257 = vmul.f32 %v2213, %v2227
        %v2258 = vmul.f32 %v2214, %v2223
        %v2259 = vmul.f32 %v2215, %v2227
        %v2260 = vmul.f32 %v2216, %v2223
        %v2261 = vmul.f32 %v2217, %v2227
        %v2262 = vld [vmem:[%s1198] ss:$2 sm:$0x3]
        %v2264 = vlaneseq
        %v2265 = vshrl.u32 %v2264, 7
        %v2266 = vsub.s32 0, %v2265
        %v2267 = vrot.slane %v2262, %v2266
        %v2268 = vlaneseq
        %v2269 = vshrl.u32 %v2268, 7
        %v2270 = vsub.s32 1, %v2269
        %v2271 = vrot.slane %v2262, %v2270
        %v2274 = vadd.f32 %v2230, %v2267
        %v2275 = vadd.f32 %v2231, %v2271
        %v2276 = vadd.f32 %v2232, %v2267
        %v2277 = vadd.f32 %v2233, %v2271
        %v2278 = vadd.f32 %v2234, %v2267
        %v2279 = vadd.f32 %v2235, %v2271
        %v2280 = vadd.f32 %v2236, %v2267
        %v2281 = vadd.f32 %v2237, %v2271
        %v2282 = vadd.f32 %v2238, %v2267
        %v2283 = vadd.f32 %v2239, %v2271
        %v2284 = vadd.f32 %v2240, %v2267
        %v2285 = vadd.f32 %v2241, %v2271
        %v2286 = vadd.f32 %v2242, %v2267
        %v2287 = vadd.f32 %v2243, %v2271
        %v2288 = vadd.f32 %v2244, %v2267
        %v2289 = vadd.f32 %v2245, %v2271
        %v2290 = vadd.f32 %v2246, %v2267
        %v2291 = vadd.f32 %v2247, %v2271
        %v2292 = vadd.f32 %v2248, %v2267
        %v2293 = vadd.f32 %v2249, %v2271
        %v2294 = vadd.f32 %v2250, %v2267
        %v2295 = vadd.f32 %v2251, %v2271
        %v2296 = vadd.f32 %v2252, %v2267
        %v2297 = vadd.f32 %v2253, %v2271
        %v2298 = vadd.f32 %v2254, %v2267
        %v2299 = vadd.f32 %v2255, %v2271
        %v2300 = vadd.f32 %v2256, %v2267
        %v2301 = vadd.f32 %v2257, %v2271
        %v2302 = vadd.f32 %v2258, %v2267
        %v2303 = vadd.f32 %v2259, %v2271
        %v2304 = vadd.f32 %v2260, %v2267
        %v2305 = vadd.f32 %v2261, %v2271
        %v2306 = vmax.f32 %v2274, 0.0
        %v2307 = vmax.f32 %v2275, 0.0
        %v2308 = vmax.f32 %v2276, 0.0
        %v2309 = vmax.f32 %v2277, 0.0
        %v2310 = vmax.f32 %v2278, 0.0
        %v2311 = vmax.f32 %v2279, 0.0
        %v2312 = vmax.f32 %v2280, 0.0
        %v2313 = vmax.f32 %v2281, 0.0
        %v2314 = vmax.f32 %v2282, 0.0
        %v2315 = vmax.f32 %v2283, 0.0
        %v2316 = vmax.f32 %v2284, 0.0
        %v2317 = vmax.f32 %v2285, 0.0
        %v2318 = vmax.f32 %v2286, 0.0
        %v2319 = vmax.f32 %v2287, 0.0
        %v2320 = vmax.f32 %v2288, 0.0
        %v2321 = vmax.f32 %v2289, 0.0
        %v2322 = vmax.f32 %v2290, 0.0
        %v2323 = vmax.f32 %v2291, 0.0
        %v2324 = vmax.f32 %v2292, 0.0
        %v2325 = vmax.f32 %v2293, 0.0
        %v2326 = vmax.f32 %v2294, 0.0
        %v2327 = vmax.f32 %v2295, 0.0
        %v2328 = vmax.f32 %v2296, 0.0
        %v2329 = vmax.f32 %v2297, 0.0
        %v2330 = vmax.f32 %v2298, 0.0
        %v2331 = vmax.f32 %v2299, 0.0
        %v2332 = vmax.f32 %v2300, 0.0
        %v2333 = vmax.f32 %v2301, 0.0
        %v2334 = vmax.f32 %v2302, 0.0
        %v2335 = vmax.f32 %v2303, 0.0
        %v2336 = vmax.f32 %v2304, 0.0
        %v2337 = vmax.f32 %v2305, 0.0
        %v2338 = vld [vmem:[#allocation2] sm:$0xfe]
        %v2339 = vld [vmem:[#allocation2 + $0x8] sm:$0xfe]
        %v2340 = vld [vmem:[#allocation2 + $0x10] sm:$0x7f]
        %v2341 = vld [vmem:[#allocation2 + $0x18] sm:$0x7f]
        %v2342 = vld [vmem:[#allocation2 + $0x30] sm:$0xfe]
        %v2343 = vld [vmem:[#allocation2 + $0x38] sm:$0xfe]
        %v2344 = vld [vmem:[#allocation2 + $0x40] sm:$0x7f]
        %v2345 = vld [vmem:[#allocation2 + $0x48] sm:$0x7f]
        %v2346 = vld [vmem:[#allocation2 + $0x60] sm:$0xfe]
        %v2347 = vld [vmem:[#allocation2 + $0x68] sm:$0xfe]
        %v2348 = vld [vmem:[#allocation2 + $0x70] sm:$0x7f]
        %v2349 = vld [vmem:[#allocation2 + $0x78] sm:$0x7f]
        %v2350 = vld [vmem:[#allocation2 + $0x90] sm:$0xfe]
        %v2351 = vld [vmem:[#allocation2 + $0x98] sm:$0xfe]
        %v2352 = vld [vmem:[#allocation2 + $0xa0] sm:$0x7f]
        %v2353 = vld [vmem:[#allocation2 + $0xa8] sm:$0x7f]
        %v2354 = vld [vmem:[#allocation2 + $0xc0] sm:$0xfe]
        %v2355 = vld [vmem:[#allocation2 + $0xc8] sm:$0xfe]
        %v2356 = vld [vmem:[#allocation2 + $0xd0] sm:$0x7f]
        %v2357 = vld [vmem:[#allocation2 + $0xd8] sm:$0x7f]
        %v2358 = vld [vmem:[#allocation2 + $0xf0] sm:$0xfe]
        %v2359 = vld [vmem:[#allocation2 + $0xf8] sm:$0xfe]
        %v2360 = vld [vmem:[#allocation2 + $0x100] sm:$0x7f]
        %v2361 = vld [vmem:[#allocation2 + $0x108] sm:$0x7f]
        %v2362 = vld [vmem:[#allocation2 + $0x120] sm:$0xfe]
        %v2363 = vld [vmem:[#allocation2 + $0x128] sm:$0xfe]
        %v2364 = vld [vmem:[#allocation2 + $0x130] sm:$0x7f]
        %v2365 = vld [vmem:[#allocation2 + $0x138] sm:$0x7f]
        %v2366 = vld [vmem:[#allocation2 + $0x150] sm:$0xfe]
        %v2367 = vld [vmem:[#allocation2 + $0x158] sm:$0xfe]
        %v2368 = vld [vmem:[#allocation2 + $0x160] sm:$0x7f]
        %v2369 = vld [vmem:[#allocation2 + $0x168] sm:$0x7f]
        %v2402 = vrot.slane %v2306, 7
        %v2403 = vrot.slane %v2307, 7
        %v2404 = vrot.slane %v2308, 7
        %v2405 = vsel %vm1339, %v2402, %v2404
        %v2406 = vrot.slane %v2309, 7
        %v2407 = vsel %vm1339, %v2403, %v2406
        %v2408 = vrot.slane %v2310, 7
        %v2409 = vrot.slane %v2311, 7
        %v2410 = vrot.slane %v2312, 7
        %v2411 = vsel %vm1339, %v2408, %v2410
        %v2412 = vrot.slane %v2313, 7
        %v2413 = vsel %vm1339, %v2409, %v2412
        %v2414 = vrot.slane %v2314, 7
        %v2415 = vrot.slane %v2315, 7
        %v2416 = vrot.slane %v2316, 7
        %v2417 = vsel %vm1339, %v2414, %v2416
        %v2418 = vrot.slane %v2317, 7
        %v2419 = vsel %vm1339, %v2415, %v2418
        %v2420 = vrot.slane %v2318, 7
        %v2421 = vrot.slane %v2319, 7
        %v2422 = vrot.slane %v2320, 7
        %v2423 = vsel %vm1339, %v2420, %v2422
        %v2424 = vrot.slane %v2321, 7
        %v2425 = vsel %vm1339, %v2421, %v2424
        %v2426 = vrot.slane %v2322, 7
        %v2427 = vrot.slane %v2323, 7
        %v2428 = vrot.slane %v2324, 7
        %v2429 = vsel %vm1339, %v2426, %v2428
        %v2430 = vrot.slane %v2325, 7
        %v2431 = vsel %vm1339, %v2427, %v2430
        %v2432 = vrot.slane %v2326, 7
        %v2433 = vrot.slane %v2327, 7
        %v2434 = vrot.slane %v2328, 7
        %v2435 = vsel %vm1339, %v2432, %v2434
        %v2436 = vrot.slane %v2329, 7
        %v2437 = vsel %vm1339, %v2433, %v2436
        %v2438 = vrot.slane %v2330, 7
        %v2439 = vrot.slane %v2331, 7
        %v2440 = vrot.slane %v2332, 7
        %v2441 = vsel %vm1339, %v2438, %v2440
        %v2442 = vrot.slane %v2333, 7
        %v2443 = vsel %vm1339, %v2439, %v2442
        %v2444 = vrot.slane %v2334, 7
        %v2445 = vrot.slane %v2335, 7
        %v2446 = vrot.slane %v2336, 7
        %v2447 = vsel %vm1339, %v2444, %v2446
        %v2448 = vrot.slane %v2337, 7
        %v2449 = vsel %vm1339, %v2445, %v2448
        %v2482 = vmax.f32 %v2338, %v2402
        %v2483 = vmax.f32 %v2339, %v2403
        %v2484 = vmax.f32 %v2340, %v2405
        %v2485 = vmax.f32 %v2341, %v2407
        %v2486 = vmax.f32 %v2342, %v2408
        %v2487 = vmax.f32 %v2343, %v2409
        %v2488 = vmax.f32 %v2344, %v2411
        %v2489 = vmax.f32 %v2345, %v2413
        %v2490 = vmax.f32 %v2346, %v2414
        %v2491 = vmax.f32 %v2347, %v2415
        %v2492 = vmax.f32 %v2348, %v2417
        %v2493 = vmax.f32 %v2349, %v2419
        %v2494 = vmax.f32 %v2350, %v2420
        %v2495 = vmax.f32 %v2351, %v2421
        %v2496 = vmax.f32 %v2352, %v2423
        %v2497 = vmax.f32 %v2353, %v2425
        %v2498 = vmax.f32 %v2354, %v2426
        %v2499 = vmax.f32 %v2355, %v2427
        %v2500 = vmax.f32 %v2356, %v2429
        %v2501 = vmax.f32 %v2357, %v2431
        %v2502 = vmax.f32 %v2358, %v2432
        %v2503 = vmax.f32 %v2359, %v2433
        %v2504 = vmax.f32 %v2360, %v2435
        %v2505 = vmax.f32 %v2361, %v2437
        %v2506 = vmax.f32 %v2362, %v2438
        %v2507 = vmax.f32 %v2363, %v2439
        %v2508 = vmax.f32 %v2364, %v2441
        %v2509 = vmax.f32 %v2365, %v2443
        %v2510 = vmax.f32 %v2366, %v2444
        %v2511 = vmax.f32 %v2367, %v2445
        %v2512 = vmax.f32 %v2368, %v2447
        %v2513 = vmax.f32 %v2369, %v2449
        %2514 = vst [vmem:[#allocation2] sm:$0xfe] %v2482
        %2515 = vst [vmem:[#allocation2 + $0x8] sm:$0xfe] %v2483
        %2516 = vst [vmem:[#allocation2 + $0x10] sm:$0x7f] %v2484
        %2517 = vst [vmem:[#allocation2 + $0x18] sm:$0x7f] %v2485
        %2518 = vst [vmem:[#allocation2 + $0x30] sm:$0xfe] %v2486
        %2519 = vst [vmem:[#allocation2 + $0x38] sm:$0xfe] %v2487
        %2520 = vst [vmem:[#allocation2 + $0x40] sm:$0x7f] %v2488
        %2521 = vst [vmem:[#allocation2 + $0x48] sm:$0x7f] %v2489
        %2522 = vst [vmem:[#allocation2 + $0x60] sm:$0xfe] %v2490
        %2523 = vst [vmem:[#allocation2 + $0x68] sm:$0xfe] %v2491
        %2524 = vst [vmem:[#allocation2 + $0x70] sm:$0x7f] %v2492
        %2525 = vst [vmem:[#allocation2 + $0x78] sm:$0x7f] %v2493
        %2526 = vst [vmem:[#allocation2 + $0x90] sm:$0xfe] %v2494
        %2527 = vst [vmem:[#allocation2 + $0x98] sm:$0xfe] %v2495
        %2528 = vst [vmem:[#allocation2 + $0xa0] sm:$0x7f] %v2496
        %2529 = vst [vmem:[#allocation2 + $0xa8] sm:$0x7f] %v2497
        %2530 = vst [vmem:[#allocation2 + $0xc0] sm:$0xfe] %v2498
        %2531 = vst [vmem:[#allocation2 + $0xc8] sm:$0xfe] %v2499
        %2532 = vst [vmem:[#allocation2 + $0xd0] sm:$0x7f] %v2500
        %2533 = vst [vmem:[#allocation2 + $0xd8] sm:$0x7f] %v2501
        %2534 = vst [vmem:[#allocation2 + $0xf0] sm:$0xfe] %v2502
        %2535 = vst [vmem:[#allocation2 + $0xf8] sm:$0xfe] %v2503
        %2536 = vst [vmem:[#allocation2 + $0x100] sm:$0x7f] %v2504
        %2537 = vst [vmem:[#allocation2 + $0x108] sm:$0x7f] %v2505
        %2538 = vst [vmem:[#allocation2 + $0x120] sm:$0xfe] %v2506
        %2539 = vst [vmem:[#allocation2 + $0x128] sm:$0xfe] %v2507
        %2540 = vst [vmem:[#allocation2 + $0x130] sm:$0x7f] %v2508
        %2541 = vst [vmem:[#allocation2 + $0x138] sm:$0x7f] %v2509
        %2542 = vst [vmem:[#allocation2 + $0x150] sm:$0xfe] %v2510
        %2543 = vst [vmem:[#allocation2 + $0x158] sm:$0xfe] %v2511
        %2544 = vst [vmem:[#allocation2 + $0x160] sm:$0x7f] %v2512
        %2545 = vst [vmem:[#allocation2 + $0x168] sm:$0x7f] %v2513
        %v2546 = vld [vmem:[%s412] ss:$2 sm:$0xff]
        %v2547 = vld [vmem:[%s414] ss:$2 sm:$0xff]
        %v2548 = vld [vmem:[%s416] ss:$2 sm:$0xff]
        %v2549 = vld [vmem:[%s418] ss:$2 sm:$0xff]
        %v2550 = vld [vmem:[%s420] ss:$2 sm:$0xff]
        %v2551 = vld [vmem:[%s422] ss:$2 sm:$0xff]
        %v2552 = vld [vmem:[%s424] ss:$2 sm:$0xff]
        %v2553 = vld [vmem:[%s426] ss:$2 sm:$0xff]
        %v2554 = vld [vmem:[%s428] ss:$2 sm:$0xff]
        %v2555 = vld [vmem:[%s430] ss:$2 sm:$0xff]
        %v2556 = vld [vmem:[%s432] ss:$2 sm:$0xff]
        %v2557 = vld [vmem:[%s434] ss:$2 sm:$0xff]
        %v2558 = vld [vmem:[%s436] ss:$2 sm:$0xff]
        %v2559 = vld [vmem:[%s438] ss:$2 sm:$0xff]
        %v2560 = vld [vmem:[%s440] ss:$2 sm:$0xff]
        %v2561 = vld [vmem:[%s442] ss:$2 sm:$0xff]
        %v2562 = vld [vmem:[%s1] sm:$0xff]
        %v2563 = vld [vmem:[%s1 + $0x8] sm:$0xff]
        %v2564 = vld [vmem:[%s1 + $0x10] sm:$0xff]
        %v2565 = vld [vmem:[%s1 + $0x18] sm:$0xff]
        %v2566 = vld [vmem:[%s1 + $0x20] sm:$0xff]
        %v2567 = vld [vmem:[%s1 + $0x28] sm:$0xff]
        %v2568 = vld [vmem:[%s1 + $0x30] sm:$0xff]
        %v2569 = vld [vmem:[%s1 + $0x38] sm:$0xff]
        %v2570 = vld [vmem:[%s872] ss:$2 sm:$0xff]
        %v2571 = vld [vmem:[%s874] ss:$2 sm:$0xff]
        %v2572 = vld [vmem:[%s876] ss:$2 sm:$0xff]
        %v2573 = vld [vmem:[%s878] ss:$2 sm:$0xff]
        %v2574 = vld [vmem:[%s880] ss:$2 sm:$0xff]
        %v2575 = vld [vmem:[%s882] ss:$2 sm:$0xff]
        %v2576 = vld [vmem:[%s884] ss:$2 sm:$0xff]
        %v2577 = vld [vmem:[%s886] ss:$2 sm:$0xff]
        %v2578 = vld [vmem:[%s888] ss:$2 sm:$0xff]
        %v2579 = vld [vmem:[%s890] ss:$2 sm:$0xff]
        %v2580 = vld [vmem:[%s892] ss:$2 sm:$0xff]
        %v2581 = vld [vmem:[%s894] ss:$2 sm:$0xff]
        %v2582 = vld [vmem:[%s896] ss:$2 sm:$0xff]
        %v2583 = vld [vmem:[%s898] ss:$2 sm:$0xff]
        %v2584 = vld [vmem:[%s900] ss:$2 sm:$0xff]
        %v2585 = vld [vmem:[%s902] ss:$2 sm:$0xff]
        %v2586 = vld [vmem:[%s444] sm:$0xff]
        %v2587 = vld [vmem:[%s444 + $0x8] sm:$0xff]
        %v2588 = vld [vmem:[%s444 + $0x10] sm:$0xff]
        %v2589 = vld [vmem:[%s444 + $0x18] sm:$0xff]
        %v2590 = vld [vmem:[%s444 + $0x20] sm:$0xff]
        %v2591 = vld [vmem:[%s444 + $0x28] sm:$0xff]
        %v2592 = vld [vmem:[%s444 + $0x30] sm:$0xff]
        %v2593 = vld [vmem:[%s444 + $0x38] sm:$0xff]
        %v2595 = vsel %vm453, %v2570, 0
        %v2598 = vsel %vm453, %v2571, 0
        %v2601 = vsel %vm453, %v2572, 0
        %v2604 = vsel %vm453, %v2573, 0
        %v2607 = vsel %vm453, %v2574, 0
        %v2610 = vsel %vm453, %v2575, 0
        %v2613 = vsel %vm453, %v2576, 0
        %v2616 = vsel %vm453, %v2577, 0
        %v2619 = vsel %vm453, %v2578, 0
        %v2622 = vsel %vm453, %v2579, 0
        %v2625 = vsel %vm453, %v2580, 0
        %v2628 = vsel %vm453, %v2581, 0
        %v2631 = vsel %vm453, %v2582, 0
        %v2634 = vsel %vm453, %v2583, 0
        %v2637 = vsel %vm453, %v2584, 0
        %v2640 = vsel %vm453, %v2585, 0
        %2642 = vmatprep.subr.mxu0 %v2587
        %2643 = vmatpush1.msra.mxu0 %v2586
        %2644 = vmatprep.subr.mxu0 %v2589
        %2645 = vmatpush1.msra.mxu0 %v2588
        %2646 = vmatprep.subr.mxu0 %v2591
        %2647 = vmatpush1.msra.mxu0 %v2590
        %2648 = vmatprep.subr.mxu0 %v2593
        %2649 = vmatpush1.msra.mxu0 %v2592
        %2650 = vmatprep.subr.mxu0 0.0
        %2651 = vmatpush1.msra.mxu0 0.0
        %2652 = vmatprep.subr.mxu0 0.0
        %2653 = vmatpush1.msra.mxu0 0.0
        %2654 = vmatprep.subr.mxu0 0.0
        %2655 = vmatpush1.msra.mxu0 0.0
        %2656 = vmatprep.subr.mxu0 0.0
        %2657 = vmatpush1.msra.mxu0 0.0
        %2658 = vmatprep.subr.mxu0 0.0
        %2659 = vmatpush1.msra.mxu0 0.0
        %2660 = vmatprep.subr.mxu0 0.0
        %2661 = vmatpush1.msra.mxu0 0.0
        %2662 = vmatprep.subr.mxu0 0.0
        %2663 = vmatpush1.msra.mxu0 0.0
        %2664 = vmatprep.subr.mxu0 0.0
        %2665 = vmatpush1.msra.mxu0 0.0
        %2666 = vmatprep.subr.mxu0 0.0
        %2667 = vmatpush1.msra.mxu0 0.0
        %2668 = vmatprep.subr.mxu0 0.0
        %2669 = vmatpush1.msra.mxu0 0.0
        %2670 = vmatprep.subr.mxu0 0.0
        %2671 = vmatpush1.msra.mxu0 0.0
        %2672 = vmatprep.subr.mxu0 0.0
        %2673 = vmatpush1.msra.mxu0 0.0
        %2674 = vmatprep.subr.mxu0 0.0
        %2675 = vmatpush1.msra.mxu0 0.0
        %2676 = vmatprep.subr.mxu0 0.0
        %2677 = vmatpush1.msra.mxu0 0.0
        %2678 = vmatprep.subr.mxu0 0.0
        %2679 = vmatpush1.msra.mxu0 0.0
        %2680 = vmatprep.subr.mxu0 0.0
        %2681 = vmatpush1.msra.mxu0 0.0
        %2682 = vmatprep.subr.mxu0 0.0
        %2683 = vmatpush1.msra.mxu0 0.0
        %2684 = vmatprep.subr.mxu0 0.0
        %2685 = vmatpush1.msra.mxu0 0.0
        %2686 = vmatprep.subr.mxu0 0.0
        %2687 = vmatpush1.msra.mxu0 0.0
        %2688 = vmatprep.subr.mxu0 0.0
        %2689 = vmatpush1.msra.mxu0 0.0
        %2690 = vmatprep.subr.mxu0 0.0
        %2691 = vmatpush1.msra.mxu0 0.0
        %2692 = vmatprep.subr.mxu0 0.0
        %2693 = vmatpush1.msra.mxu0 0.0
        %2694 = vmatprep.subr.mxu0 0.0
        %2695 = vmatpush1.msra.mxu0 0.0
        %2696 = vmatprep.subr.mxu0 0.0
        %2697 = vmatpush1.msra.mxu0 0.0
        %2698 = vmatprep.subr.mxu0 0.0
        %2699 = vmatpush1.msra.mxu0 0.0
        %2700 = vmatprep.subr.mxu0 0.0
        %2701 = vmatpush1.msra.mxu0 0.0
        %2702 = vmatprep.subr.mxu0 0.0
        %2703 = vmatpush1.msra.mxu0 0.0
        %2704 = vmatprep.subr.mxu0 0.0
        %2705 = vmatpush1.msra.mxu0 0.0
        %2706 = vmatprep.mubr.f32.mxu0 0.0
        %2707 = vmatmul.mubr.f32.gmra.mrb[0].mxu0 %v2595
        %v2708 = vpop.f32.mrb[0].mxu0
        %v2709 = vadd.f32 0.0, %v2708
        %v2710 = vpop.f32.mrb[0].mxu0
        %v2711 = vadd.f32 0.0, %v2710
        %2712 = vmatprep.mubr.f32.mxu0 0.0
        %2713 = vmatmul.mubr.f32.gmra.mrb[0].mxu0 %v2598
        %v2714 = vpop.f32.mrb[0].mxu0
        %v2715 = vadd.f32 0.0, %v2714
        %v2716 = vpop.f32.mrb[0].mxu0
        %v2717 = vadd.f32 0.0, %v2716
        %2718 = vmatprep.mubr.f32.mxu0 0.0
        %2719 = vmatmul.mubr.f32.gmra.mrb[0].mxu0 %v2601
        %v2720 = vpop.f32.mrb[0].mxu0
        %v2721 = vadd.f32 0.0, %v2720
        %v2722 = vpop.f32.mrb[0].mxu0
        %v2723 = vadd.f32 0.0, %v2722
        %2724 = vmatprep.mubr.f32.mxu0 0.0
        %2725 = vmatmul.mubr.f32.gmra.mrb[0].mxu0 %v2604
        %v2726 = vpop.f32.mrb[0].mxu0
        %v2727 = vadd.f32 0.0, %v2726
        %v2728 = vpop.f32.mrb[0].mxu0
        %v2729 = vadd.f32 0.0, %v2728
        %2730 = vmatprep.mubr.f32.mxu0 0.0
        %2731 = vmatmul.mubr.f32.gmra.mrb[0].mxu0 %v2607
        %v2732 = vpop.f32.mrb[0].mxu0
        %v2733 = vadd.f32 0.0, %v2732
        %v2734 = vpop.f32.mrb[0].mxu0
        %v2735 = vadd.f32 0.0, %v2734
        %2736 = vmatprep.mubr.f32.mxu0 0.0
        %2737 = vmatmul.mubr.f32.gmra.mrb[0].mxu0 %v2610
        %v2738 = vpop.f32.mrb[0].mxu0
        %v2739 = vadd.f32 0.0, %v2738
        %v2740 = vpop.f32.mrb[0].mxu0
        %v2741 = vadd.f32 0.0, %v2740
        %2742 = vmatprep.mubr.f32.mxu0 0.0
        %2743 = vmatmul.mubr.f32.gmra.mrb[0].mxu0 %v2613
        %v2744 = vpop.f32.mrb[0].mxu0
        %v2745 = vadd.f32 0.0, %v2744
        %v2746 = vpop.f32.mrb[0].mxu0
        %v2747 = vadd.f32 0.0, %v2746
        %2748 = vmatprep.mubr.f32.mxu0 0.0
        %2749 = vmatmul.mubr.f32.gmra.mrb[0].mxu0 %v2616
        %v2750 = vpop.f32.mrb[0].mxu0
        %v2751 = vadd.f32 0.0, %v2750
        %v2752 = vpop.f32.mrb[0].mxu0
        %v2753 = vadd.f32 0.0, %v2752
        %2754 = vmatprep.mubr.f32.mxu0 0.0
        %2755 = vmatmul.mubr.f32.gmra.mrb[0].mxu0 %v2619
        %v2756 = vpop.f32.mrb[0].mxu0
        %v2757 = vadd.f32 0.0, %v2756
        %v2758 = vpop.f32.mrb[0].mxu0
        %v2759 = vadd.f32 0.0, %v2758
        %2760 = vmatprep.mubr.f32.mxu0 0.0
        %2761 = vmatmul.mubr.f32.gmra.mrb[0].mxu0 %v2622
        %v2762 = vpop.f32.mrb[0].mxu0
        %v2763 = vadd.f32 0.0, %v2762
        %v2764 = vpop.f32.mrb[0].mxu0
        %v2765 = vadd.f32 0.0, %v2764
        %2766 = vmatprep.mubr.f32.mxu0 0.0
        %2767 = vmatmul.mubr.f32.gmra.mrb[0].mxu0 %v2625
        %v2768 = vpop.f32.mrb[0].mxu0
        %v2769 = vadd.f32 0.0, %v2768
        %v2770 = vpop.f32.mrb[0].mxu0
        %v2771 = vadd.f32 0.0, %v2770
        %2772 = vmatprep.mubr.f32.mxu0 0.0
        %2773 = vmatmul.mubr.f32.gmra.mrb[0].mxu0 %v2628
        %v2774 = vpop.f32.mrb[0].mxu0
        %v2775 = vadd.f32 0.0, %v2774
        %v2776 = vpop.f32.mrb[0].mxu0
        %v2777 = vadd.f32 0.0, %v2776
        %2778 = vmatprep.mubr.f32.mxu0 0.0
        %2779 = vmatmul.mubr.f32.gmra.mrb[0].mxu0 %v2631
        %v2780 = vpop.f32.mrb[0].mxu0
        %v2781 = vadd.f32 0.0, %v2780
        %v2782 = vpop.f32.mrb[0].mxu0
        %v2783 = vadd.f32 0.0, %v2782
        %2784 = vmatprep.mubr.f32.mxu0 0.0
        %2785 = vmatmul.mubr.f32.gmra.mrb[0].mxu0 %v2634
        %v2786 = vpop.f32.mrb[0].mxu0
        %v2787 = vadd.f32 0.0, %v2786
        %v2788 = vpop.f32.mrb[0].mxu0
        %v2789 = vadd.f32 0.0, %v2788
        %2790 = vmatprep.mubr.f32.mxu0 0.0
        %2791 = vmatmul.mubr.f32.gmra.mrb[0].mxu0 %v2637
        %v2792 = vpop.f32.mrb[0].mxu0
        %v2793 = vadd.f32 0.0, %v2792
        %v2794 = vpop.f32.mrb[0].mxu0
        %v2795 = vadd.f32 0.0, %v2794
        %2796 = vmatprep.mubr.f32.mxu0 0.0
        %2797 = vmatmul.mubr.f32.gmra.mrb[0].mxu0 %v2640
        %v2798 = vpop.f32.mrb[0].mxu0
        %v2799 = vadd.f32 0.0, %v2798
        %v2800 = vpop.f32.mrb[0].mxu0
        %v2801 = vadd.f32 0.0, %v2800
        %2802 = vdwg.mxu0
        %v2804 = vsel %vm453, %v2546, 0
        %v2807 = vsel %vm453, %v2547, 0
        %v2810 = vsel %vm453, %v2548, 0
        %v2813 = vsel %vm453, %v2549, 0
        %v2816 = vsel %vm453, %v2550, 0
        %v2819 = vsel %vm453, %v2551, 0
        %v2822 = vsel %vm453, %v2552, 0
        %v2825 = vsel %vm453, %v2553, 0
        %v2828 = vsel %vm453, %v2554, 0
        %v2831 = vsel %vm453, %v2555, 0
        %v2834 = vsel %vm453, %v2556, 0
        %v2837 = vsel %vm453, %v2557, 0
        %v2840 = vsel %vm453, %v2558, 0
        %v2843 = vsel %vm453, %v2559, 0
        %v2846 = vsel %vm453, %v2560, 0
        %v2849 = vsel %vm453, %v2561, 0
        %2851 = vmatprep.subr.mxu0 %v2563
        %2852 = vmatpush1.msra.mxu0 %v2562
        %2853 = vmatprep.subr.mxu0 %v2565
        %2854 = vmatpush1.msra.mxu0 %v2564
        %2855 = vmatprep.subr.mxu0 %v2567
        %2856 = vmatpush1.msra.mxu0 %v2566
        %2857 = vmatprep.subr.mxu0 %v2569
        %2858 = vmatpush1.msra.mxu0 %v2568
        %2859 = vmatprep.subr.mxu0 0.0
        %2860 = vmatpush1.msra.mxu0 0.0
        %2861 = vmatprep.subr.mxu0 0.0
        %2862 = vmatpush1.msra.mxu0 0.0
        %2863 = vmatprep.subr.mxu0 0.0
        %2864 = vmatpush1.msra.mxu0 0.0
        %2865 = vmatprep.subr.mxu0 0.0
        %2866 = vmatpush1.msra.mxu0 0.0
        %2867 = vmatprep.subr.mxu0 0.0
        %2868 = vmatpush1.msra.mxu0 0.0
        %2869 = vmatprep.subr.mxu0 0.0
        %2870 = vmatpush1.msra.mxu0 0.0
        %2871 = vmatprep.subr.mxu0 0.0
        %2872 = vmatpush1.msra.mxu0 0.0
        %2873 = vmatprep.subr.mxu0 0.0
        %2874 = vmatpush1.msra.mxu0 0.0
        %2875 = vmatprep.subr.mxu0 0.0
        %2876 = vmatpush1.msra.mxu0 0.0
        %2877 = vmatprep.subr.mxu0 0.0
        %2878 = vmatpush1.msra.mxu0 0.0
        %2879 = vmatprep.subr.mxu0 0.0
        %2880 = vmatpush1.msra.mxu0 0.0
        %2881 = vmatprep.subr.mxu0 0.0
        %2882 = vmatpush1.msra.mxu0 0.0
        %2883 = vmatprep.subr.mxu0 0.0
        %2884 = vmatpush1.msra.mxu0 0.0
        %2885 = vmatprep.subr.mxu0 0.0
        %2886 = vmatpush1.msra.mxu0 0.0
        %2887 = vmatprep.subr.mxu0 0.0
        %2888 = vmatpush1.msra.mxu0 0.0
        %2889 = vmatprep.subr.mxu0 0.0
        %2890 = vmatpush1.msra.mxu0 0.0
        %2891 = vmatprep.subr.mxu0 0.0
        %2892 = vmatpush1.msra.mxu0 0.0
        %2893 = vmatprep.subr.mxu0 0.0
        %2894 = vmatpush1.msra.mxu0 0.0
        %2895 = vmatprep.subr.mxu0 0.0
        %2896 = vmatpush1.msra.mxu0 0.0
        %2897 = vmatprep.subr.mxu0 0.0
        %2898 = vmatpush1.msra.mxu0 0.0
        %2899 = vmatprep.subr.mxu0 0.0
        %2900 = vmatpush1.msra.mxu0 0.0
        %2901 = vmatprep.subr.mxu0 0.0
        %2902 = vmatpush1.msra.mxu0 0.0
        %2903 = vmatprep.subr.mxu0 0.0
        %2904 = vmatpush1.msra.mxu0 0.0
        %2905 = vmatprep.subr.mxu0 0.0
        %2906 = vmatpush1.msra.mxu0 0.0
        %2907 = vmatprep.subr.mxu0 0.0
        %2908 = vmatpush1.msra.mxu0 0.0
        %2909 = vmatprep.subr.mxu0 0.0
        %2910 = vmatpush1.msra.mxu0 0.0
        %2911 = vmatprep.subr.mxu0 0.0
        %2912 = vmatpush1.msra.mxu0 0.0
        %2913 = vmatprep.subr.mxu0 0.0
        %2914 = vmatpush1.msra.mxu0 0.0
        %2915 = vmatprep.mubr.f32.mxu0 0.0
        %2916 = vmatmul.mubr.f32.gmra.mrb[0].mxu0 %v2804
        %v2917 = vpop.f32.mrb[0].mxu0
        %v2918 = vadd.f32 %v2709, %v2917
        %v2919 = vpop.f32.mrb[0].mxu0
        %v2920 = vadd.f32 %v2711, %v2919
        %2921 = vmatprep.mubr.f32.mxu0 0.0
        %2922 = vmatmul.mubr.f32.gmra.mrb[0].mxu0 %v2807
        %v2923 = vpop.f32.mrb[0].mxu0
        %v2924 = vadd.f32 %v2715, %v2923
        %v2925 = vpop.f32.mrb[0].mxu0
        %v2926 = vadd.f32 %v2717, %v2925
        %2927 = vmatprep.mubr.f32.mxu0 0.0
        %2928 = vmatmul.mubr.f32.gmra.mrb[0].mxu0 %v2810
        %v2929 = vpop.f32.mrb[0].mxu0
        %v2930 = vadd.f32 %v2721, %v2929
        %v2931 = vpop.f32.mrb[0].mxu0
        %v2932 = vadd.f32 %v2723, %v2931
        %2933 = vmatprep.mubr.f32.mxu0 0.0
        %2934 = vmatmul.mubr.f32.gmra.mrb[0].mxu0 %v2813
        %v2935 = vpop.f32.mrb[0].mxu0
        %v2936 = vadd.f32 %v2727, %v2935
        %v2937 = vpop.f32.mrb[0].mxu0
        %v2938 = vadd.f32 %v2729, %v2937
        %2939 = vmatprep.mubr.f32.mxu0 0.0
        %2940 = vmatmul.mubr.f32.gmra.mrb[0].mxu0 %v2816
        %v2941 = vpop.f32.mrb[0].mxu0
        %v2942 = vadd.f32 %v2733, %v2941
        %v2943 = vpop.f32.mrb[0].mxu0
        %v2944 = vadd.f32 %v2735, %v2943
        %2945 = vmatprep.mubr.f32.mxu0 0.0
        %2946 = vmatmul.mubr.f32.gmra.mrb[0].mxu0 %v2819
        %v2947 = vpop.f32.mrb[0].mxu0
        %v2948 = vadd.f32 %v2739, %v2947
        %v2949 = vpop.f32.mrb[0].mxu0
        %v2950 = vadd.f32 %v2741, %v2949
        %2951 = vmatprep.mubr.f32.mxu0 0.0
        %2952 = vmatmul.mubr.f32.gmra.mrb[0].mxu0 %v2822
        %v2953 = vpop.f32.mrb[0].mxu0
        %v2954 = vadd.f32 %v2745, %v2953
        %v2955 = vpop.f32.mrb[0].mxu0
        %v2956 = vadd.f32 %v2747, %v2955
        %2957 = vmatprep.mubr.f32.mxu0 0.0
        %2958 = vmatmul.mubr.f32.gmra.mrb[0].mxu0 %v2825
        %v2959 = vpop.f32.mrb[0].mxu0
        %v2960 = vadd.f32 %v2751, %v2959
        %v2961 = vpop.f32.mrb[0].mxu0
        %v2962 = vadd.f32 %v2753, %v2961
        %2963 = vmatprep.mubr.f32.mxu0 0.0
        %2964 = vmatmul.mubr.f32.gmra.mrb[0].mxu0 %v2828
        %v2965 = vpop.f32.mrb[0].mxu0
        %v2966 = vadd.f32 %v2757, %v2965
        %v2967 = vpop.f32.mrb[0].mxu0
        %v2968 = vadd.f32 %v2759, %v2967
        %2969 = vmatprep.mubr.f32.mxu0 0.0
        %2970 = vmatmul.mubr.f32.gmra.mrb[0].mxu0 %v2831
        %v2971 = vpop.f32.mrb[0].mxu0
        %v2972 = vadd.f32 %v2763, %v2971
        %v2973 = vpop.f32.mrb[0].mxu0
        %v2974 = vadd.f32 %v2765, %v2973
        %2975 = vmatprep.mubr.f32.mxu0 0.0
        %2976 = vmatmul.mubr.f32.gmra.mrb[0].mxu0 %v2834
        %v2977 = vpop.f32.mrb[0].mxu0
        %v2978 = vadd.f32 %v2769, %v2977
        %v2979 = vpop.f32.mrb[0].mxu0
        %v2980 = vadd.f32 %v2771, %v2979
        %2981 = vmatprep.mubr.f32.mxu0 0.0
        %2982 = vmatmul.mubr.f32.gmra.mrb[0].mxu0 %v2837
        %v2983 = vpop.f32.mrb[0].mxu0
        %v2984 = vadd.f32 %v2775, %v2983
        %v2985 = vpop.f32.mrb[0].mxu0
        %v2986 = vadd.f32 %v2777, %v2985
        %2987 = vmatprep.mubr.f32.mxu0 0.0
        %2988 = vmatmul.mubr.f32.gmra.mrb[0].mxu0 %v2840
        %v2989 = vpop.f32.mrb[0].mxu0
        %v2990 = vadd.f32 %v2781, %v2989
        %v2991 = vpop.f32.mrb[0].mxu0
        %v2992 = vadd.f32 %v2783, %v2991
        %2993 = vmatprep.mubr.f32.mxu0 0.0
        %2994 = vmatmul.mubr.f32.gmra.mrb[0].mxu0 %v2843
        %v2995 = vpop.f32.mrb[0].mxu0
        %v2996 = vadd.f32 %v2787, %v2995
        %v2997 = vpop.f32.mrb[0].mxu0
        %v2998 = vadd.f32 %v2789, %v2997
        %2999 = vmatprep.mubr.f32.mxu0 0.0
        %3000 = vmatmul.mubr.f32.gmra.mrb[0].mxu0 %v2846
        %v3001 = vpop.f32.mrb[0].mxu0
        %v3002 = vadd.f32 %v2793, %v3001
        %v3003 = vpop.f32.mrb[0].mxu0
        %v3004 = vadd.f32 %v2795, %v3003
        %3005 = vmatprep.mubr.f32.mxu0 0.0
        %3006 = vmatmul.mubr.f32.gmra.mrb[0].mxu0 %v2849
        %v3007 = vpop.f32.mrb[0].mxu0
        %v3008 = vadd.f32 %v2799, %v3007
        %v3009 = vpop.f32.mrb[0].mxu0
        %v3010 = vadd.f32 %v2801, %v3009
        %3011 = vdwg.mxu0
        %s3012 = scalar_lea.vmem %s316, 3
        %v3013 = vld [vmem:[%s3012] ss:$2 sm:$0xff]
        %s3014 = scalar_lea.vmem %s316, 19
        %v3015 = vld [vmem:[%s3014] ss:$2 sm:$0xff]
        %s3016 = scalar_lea.vmem %s316, 43
        %v3017 = vld [vmem:[%s3016] ss:$2 sm:$0xff]
        %s3018 = scalar_lea.vmem %s316, 59
        %v3019 = vld [vmem:[%s3018] ss:$2 sm:$0xff]
        %s3020 = scalar_lea.vmem %s316, 83
        %v3021 = vld [vmem:[%s3020] ss:$2 sm:$0xff]
        %s3022 = scalar_lea.vmem %s316, 99
        %v3023 = vld [vmem:[%s3022] ss:$2 sm:$0xff]
        %s3024 = scalar_lea.vmem %s316, 123
        %v3025 = vld [vmem:[%s3024] ss:$2 sm:$0xff]
        %s3026 = scalar_lea.vmem %s316, 139
        %v3027 = vld [vmem:[%s3026] ss:$2 sm:$0xff]
        %s3028 = scalar_lea.vmem %s316, 163
        %v3029 = vld [vmem:[%s3028] ss:$2 sm:$0xff]
        %s3030 = scalar_lea.vmem %s316, 179
        %v3031 = vld [vmem:[%s3030] ss:$2 sm:$0xff]
        %s3032 = scalar_lea.vmem %s316, 203
        %v3033 = vld [vmem:[%s3032] ss:$2 sm:$0xff]
        %s3034 = scalar_lea.vmem %s316, 219
        %v3035 = vld [vmem:[%s3034] ss:$2 sm:$0xff]
        %s3036 = scalar_lea.vmem %s316, 243
        %v3037 = vld [vmem:[%s3036] ss:$2 sm:$0xff]
        %s3038 = scalar_lea.vmem %s316, 259
        %v3039 = vld [vmem:[%s3038] ss:$2 sm:$0xff]
        %s3040 = scalar_lea.vmem %s316, 283
        %v3041 = vld [vmem:[%s3040] ss:$2 sm:$0xff]
        %s3042 = scalar_lea.vmem %s316, 299
        %v3043 = vld [vmem:[%s3042] ss:$2 sm:$0xff]
        %v3044 = vld [vmem:[%s904] sm:$0xff]
        %v3045 = vld [vmem:[%s904 + $0x8] sm:$0xff]
        %v3046 = vld [vmem:[%s904 + $0x10] sm:$0xff]
        %v3047 = vld [vmem:[%s904 + $0x18] sm:$0xff]
        %v3048 = vld [vmem:[%s904 + $0x20] sm:$0xff]
        %v3049 = vld [vmem:[%s904 + $0x28] sm:$0xff]
        %v3050 = vld [vmem:[%s904 + $0x30] sm:$0xff]
        %v3051 = vld [vmem:[%s904 + $0x38] sm:$0xff]
        %v3053 = vsel %vm453, %v3013, 0
        %v3056 = vsel %vm453, %v3015, 0
        %v3059 = vsel %vm453, %v3017, 0
        %v3062 = vsel %vm453, %v3019, 0
        %v3065 = vsel %vm453, %v3021, 0
        %v3068 = vsel %vm453, %v3023, 0
        %v3071 = vsel %vm453, %v3025, 0
        %v3074 = vsel %vm453, %v3027, 0
        %v3077 = vsel %vm453, %v3029, 0
        %v3080 = vsel %vm453, %v3031, 0
        %v3083 = vsel %vm453, %v3033, 0
        %v3086 = vsel %vm453, %v3035, 0
        %v3089 = vsel %vm453, %v3037, 0
        %v3092 = vsel %vm453, %v3039, 0
        %v3095 = vsel %vm453, %v3041, 0
        %v3098 = vsel %vm453, %v3043, 0
        %3100 = vmatprep.subr.mxu0 %v3045
        %3101 = vmatpush1.msra.mxu0 %v3044
        %3102 = vmatprep.subr.mxu0 %v3047
        %3103 = vmatpush1.msra.mxu0 %v3046
        %3104 = vmatprep.subr.mxu0 %v3049
        %3105 = vmatpush1.msra.mxu0 %v3048
        %3106 = vmatprep.subr.mxu0 %v3051
        %3107 = vmatpush1.msra.mxu0 %v3050
        %3108 = vmatprep.subr.mxu0 0.0
        %3109 = vmatpush1.msra.mxu0 0.0
        %3110 = vmatprep.subr.mxu0 0.0
        %3111 = vmatpush1.msra.mxu0 0.0
        %3112 = vmatprep.subr.mxu0 0.0
        %3113 = vmatpush1.msra.mxu0 0.0
        %3114 = vmatprep.subr.mxu0 0.0
        %3115 = vmatpush1.msra.mxu0 0.0
        %3116 = vmatprep.subr.mxu0 0.0
        %3117 = vmatpush1.msra.mxu0 0.0
        %3118 = vmatprep.subr.mxu0 0.0
        %3119 = vmatpush1.msra.mxu0 0.0
        %3120 = vmatprep.subr.mxu0 0.0
        %3121 = vmatpush1.msra.mxu0 0.0
        %3122 = vmatprep.subr.mxu0 0.0
        %3123 = vmatpush1.msra.mxu0 0.0
        %3124 = vmatprep.subr.mxu0 0.0
        %3125 = vmatpush1.msra.mxu0 0.0
        %3126 = vmatprep.subr.mxu0 0.0
        %3127 = vmatpush1.msra.mxu0 0.0
        %3128 = vmatprep.subr.mxu0 0.0
        %3129 = vmatpush1.msra.mxu0 0.0
        %3130 = vmatprep.subr.mxu0 0.0
        %3131 = vmatpush1.msra.mxu0 0.0
        %3132 = vmatprep.subr.mxu0 0.0
        %3133 = vmatpush1.msra.mxu0 0.0
        %3134 = vmatprep.subr.mxu0 0.0
        %3135 = vmatpush1.msra.mxu0 0.0
        %3136 = vmatprep.subr.mxu0 0.0
        %3137 = vmatpush1.msra.mxu0 0.0
        %3138 = vmatprep.subr.mxu0 0.0
        %3139 = vmatpush1.msra.mxu0 0.0
        %3140 = vmatprep.subr.mxu0 0.0
        %3141 = vmatpush1.msra.mxu0 0.0
        %3142 = vmatprep.subr.mxu0 0.0
        %3143 = vmatpush1.msra.mxu0 0.0
        %3144 = vmatprep.subr.mxu0 0.0
        %3145 = vmatpush1.msra.mxu0 0.0
        %3146 = vmatprep.subr.mxu0 0.0
        %3147 = vmatpush1.msra.mxu0 0.0
        %3148 = vmatprep.subr.mxu0 0.0
        %3149 = vmatpush1.msra.mxu0 0.0
        %3150 = vmatprep.subr.mxu0 0.0
        %3151 = vmatpush1.msra.mxu0 0.0
        %3152 = vmatprep.subr.mxu0 0.0
        %3153 = vmatpush1.msra.mxu0 0.0
        %3154 = vmatprep.subr.mxu0 0.0
        %3155 = vmatpush1.msra.mxu0 0.0
        %3156 = vmatprep.subr.mxu0 0.0
        %3157 = vmatpush1.msra.mxu0 0.0
        %3158 = vmatprep.subr.mxu0 0.0
        %3159 = vmatpush1.msra.mxu0 0.0
        %3160 = vmatprep.subr.mxu0 0.0
        %3161 = vmatpush1.msra.mxu0 0.0
        %3162 = vmatprep.subr.mxu0 0.0
        %3163 = vmatpush1.msra.mxu0 0.0
        %3164 = vmatprep.mubr.f32.mxu0 0.0
        %3165 = vmatmul.mubr.f32.gmra.mrb[0].mxu0 %v3053
        %v3166 = vpop.f32.mrb[0].mxu0
        %v3167 = vadd.f32 0.0, %v3166
        %v3168 = vpop.f32.mrb[0].mxu0
        %v3169 = vadd.f32 0.0, %v3168
        %3170 = vmatprep.mubr.f32.mxu0 0.0
        %3171 = vmatmul.mubr.f32.gmra.mrb[0].mxu0 %v3056
        %v3172 = vpop.f32.mrb[0].mxu0
        %v3173 = vadd.f32 0.0, %v3172
        %v3174 = vpop.f32.mrb[0].mxu0
        %v3175 = vadd.f32 0.0, %v3174
        %3176 = vmatprep.mubr.f32.mxu0 0.0
        %3177 = vmatmul.mubr.f32.gmra.mrb[0].mxu0 %v3059
        %v3178 = vpop.f32.mrb[0].mxu0
        %v3179 = vadd.f32 0.0, %v3178
        %v3180 = vpop.f32.mrb[0].mxu0
        %v3181 = vadd.f32 0.0, %v3180
        %3182 = vmatprep.mubr.f32.mxu0 0.0
        %3183 = vmatmul.mubr.f32.gmra.mrb[0].mxu0 %v3062
        %v3184 = vpop.f32.mrb[0].mxu0
        %v3185 = vadd.f32 0.0, %v3184
        %v3186 = vpop.f32.mrb[0].mxu0
        %v3187 = vadd.f32 0.0, %v3186
        %3188 = vmatprep.mubr.f32.mxu0 0.0
        %3189 = vmatmul.mubr.f32.gmra.mrb[0].mxu0 %v3065
        %v3190 = vpop.f32.mrb[0].mxu0
        %v3191 = vadd.f32 0.0, %v3190
        %v3192 = vpop.f32.mrb[0].mxu0
        %v3193 = vadd.f32 0.0, %v3192
        %3194 = vmatprep.mubr.f32.mxu0 0.0
        %3195 = vmatmul.mubr.f32.gmra.mrb[0].mxu0 %v3068
        %v3196 = vpop.f32.mrb[0].mxu0
        %v3197 = vadd.f32 0.0, %v3196
        %v3198 = vpop.f32.mrb[0].mxu0
        %v3199 = vadd.f32 0.0, %v3198
        %3200 = vmatprep.mubr.f32.mxu0 0.0
        %3201 = vmatmul.mubr.f32.gmra.mrb[0].mxu0 %v3071
        %v3202 = vpop.f32.mrb[0].mxu0
        %v3203 = vadd.f32 0.0, %v3202
        %v3204 = vpop.f32.mrb[0].mxu0
        %v3205 = vadd.f32 0.0, %v3204
        %3206 = vmatprep.mubr.f32.mxu0 0.0
        %3207 = vmatmul.mubr.f32.gmra.mrb[0].mxu0 %v3074
        %v3208 = vpop.f32.mrb[0].mxu0
        %v3209 = vadd.f32 0.0, %v3208
        %v3210 = vpop.f32.mrb[0].mxu0
        %v3211 = vadd.f32 0.0, %v3210
        %3212 = vmatprep.mubr.f32.mxu0 0.0
        %3213 = vmatmul.mubr.f32.gmra.mrb[0].mxu0 %v3077
        %v3214 = vpop.f32.mrb[0].mxu0
        %v3215 = vadd.f32 0.0, %v3214
        %v3216 = vpop.f32.mrb[0].mxu0
        %v3217 = vadd.f32 0.0, %v3216
        %3218 = vmatprep.mubr.f32.mxu0 0.0
        %3219 = vmatmul.mubr.f32.gmra.mrb[0].mxu0 %v3080
        %v3220 = vpop.f32.mrb[0].mxu0
        %v3221 = vadd.f32 0.0, %v3220
        %v3222 = vpop.f32.mrb[0].mxu0
        %v3223 = vadd.f32 0.0, %v3222
        %3224 = vmatprep.mubr.f32.mxu0 0.0
        %3225 = vmatmul.mubr.f32.gmra.mrb[0].mxu0 %v3083
        %v3226 = vpop.f32.mrb[0].mxu0
        %v3227 = vadd.f32 0.0, %v3226
        %v3228 = vpop.f32.mrb[0].mxu0
        %v3229 = vadd.f32 0.0, %v3228
        %3230 = vmatprep.mubr.f32.mxu0 0.0
        %3231 = vmatmul.mubr.f32.gmra.mrb[0].mxu0 %v3086
        %v3232 = vpop.f32.mrb[0].mxu0
        %v3233 = vadd.f32 0.0, %v3232
        %v3234 = vpop.f32.mrb[0].mxu0
        %v3235 = vadd.f32 0.0, %v3234
        %3236 = vmatprep.mubr.f32.mxu0 0.0
        %3237 = vmatmul.mubr.f32.gmra.mrb[0].mxu0 %v3089
        %v3238 = vpop.f32.mrb[0].mxu0
        %v3239 = vadd.f32 0.0, %v3238
        %v3240 = vpop.f32.mrb[0].mxu0
        %v3241 = vadd.f32 0.0, %v3240
        %3242 = vmatprep.mubr.f32.mxu0 0.0
        %3243 = vmatmul.mubr.f32.gmra.mrb[0].mxu0 %v3092
        %v3244 = vpop.f32.mrb[0].mxu0
        %v3245 = vadd.f32 0.0, %v3244
        %v3246 = vpop.f32.mrb[0].mxu0
        %v3247 = vadd.f32 0.0, %v3246
        %3248 = vmatprep.mubr.f32.mxu0 0.0
        %3249 = vmatmul.mubr.f32.gmra.mrb[0].mxu0 %v3095
        %v3250 = vpop.f32.mrb[0].mxu0
        %v3251 = vadd.f32 0.0, %v3250
        %v3252 = vpop.f32.mrb[0].mxu0
        %v3253 = vadd.f32 0.0, %v3252
        %3254 = vmatprep.mubr.f32.mxu0 0.0
        %3255 = vmatmul.mubr.f32.gmra.mrb[0].mxu0 %v3098
        %v3256 = vpop.f32.mrb[0].mxu0
        %v3257 = vadd.f32 0.0, %v3256
        %v3258 = vpop.f32.mrb[0].mxu0
        %v3259 = vadd.f32 0.0, %v3258
        %3260 = vdwg.mxu0
        %v3261 = vadd.f32 %v2918, %v3167
        %v3262 = vadd.f32 %v2920, %v3169
        %v3263 = vadd.f32 %v2924, %v3173
        %v3264 = vadd.f32 %v2926, %v3175
        %v3265 = vadd.f32 %v2930, %v3179
        %v3266 = vadd.f32 %v2932, %v3181
        %v3267 = vadd.f32 %v2936, %v3185
        %v3268 = vadd.f32 %v2938, %v3187
        %v3269 = vadd.f32 %v2942, %v3191
        %v3270 = vadd.f32 %v2944, %v3193
        %v3271 = vadd.f32 %v2948, %v3197
        %v3272 = vadd.f32 %v2950, %v3199
        %v3273 = vadd.f32 %v2954, %v3203
        %v3274 = vadd.f32 %v2956, %v3205
        %v3275 = vadd.f32 %v2960, %v3209
        %v3276 = vadd.f32 %v2962, %v3211
        %v3277 = vadd.f32 %v2966, %v3215
        %v3278 = vadd.f32 %v2968, %v3217
        %v3279 = vadd.f32 %v2972, %v3221
        %v3280 = vadd.f32 %v2974, %v3223
        %v3281 = vadd.f32 %v2978, %v3227
        %v3282 = vadd.f32 %v2980, %v3229
        %v3283 = vadd.f32 %v2984, %v3233
        %v3284 = vadd.f32 %v2986, %v3235
        %v3285 = vadd.f32 %v2990, %v3239
        %v3286 = vadd.f32 %v2992, %v3241
        %v3287 = vadd.f32 %v2996, %v3245
        %v3288 = vadd.f32 %v2998, %v3247
        %v3289 = vadd.f32 %v3002, %v3251
        %v3290 = vadd.f32 %v3004, %v3253
        %v3291 = vadd.f32 %v3008, %v3257
        %v3292 = vadd.f32 %v3010, %v3259
        %v3293 = vld [vmem:[%s2] ss:$2 sm:$0x3]
        %v3295 = vlaneseq
        %v3296 = vshrl.u32 %v3295, 7
        %v3297 = vsub.s32 0, %v3296
        %v3298 = vrot.slane %v3293, %v3297
        %v3299 = vlaneseq
        %v3300 = vshrl.u32 %v3299, 7
        %v3301 = vsub.s32 1, %v3300
        %v3302 = vrot.slane %v3293, %v3301
        %v3305 = vmul.f32 %v3261, %v3298
        %v3306 = vmul.f32 %v3262, %v3302
        %v3307 = vmul.f32 %v3263, %v3298
        %v3308 = vmul.f32 %v3264, %v3302
        %v3309 = vmul.f32 %v3265, %v3298
        %v3310 = vmul.f32 %v3266, %v3302
        %v3311 = vmul.f32 %v3267, %v3298
        %v3312 = vmul.f32 %v3268, %v3302
        %v3313 = vmul.f32 %v3269, %v3298
        %v3314 = vmul.f32 %v3270, %v3302
        %v3315 = vmul.f32 %v3271, %v3298
        %v3316 = vmul.f32 %v3272, %v3302
        %v3317 = vmul.f32 %v3273, %v3298
        %v3318 = vmul.f32 %v3274, %v3302
        %v3319 = vmul.f32 %v3275, %v3298
        %v3320 = vmul.f32 %v3276, %v3302
        %v3321 = vmul.f32 %v3277, %v3298
        %v3322 = vmul.f32 %v3278, %v3302
        %v3323 = vmul.f32 %v3279, %v3298
        %v3324 = vmul.f32 %v3280, %v3302
        %v3325 = vmul.f32 %v3281, %v3298
        %v3326 = vmul.f32 %v3282, %v3302
        %v3327 = vmul.f32 %v3283, %v3298
        %v3328 = vmul.f32 %v3284, %v3302
        %v3329 = vmul.f32 %v3285, %v3298
        %v3330 = vmul.f32 %v3286, %v3302
        %v3331 = vmul.f32 %v3287, %v3298
        %v3332 = vmul.f32 %v3288, %v3302
        %v3333 = vmul.f32 %v3289, %v3298
        %v3334 = vmul.f32 %v3290, %v3302
        %v3335 = vmul.f32 %v3291, %v3298
        %v3336 = vmul.f32 %v3292, %v3302
        %v3337 = vld [vmem:[%s1198] ss:$2 sm:$0x3]
        %v3339 = vlaneseq
        %v3340 = vshrl.u32 %v3339, 7
        %v3341 = vsub.s32 0, %v3340
        %v3342 = vrot.slane %v3337, %v3341
        %v3343 = vlaneseq
        %v3344 = vshrl.u32 %v3343, 7
        %v3345 = vsub.s32 1, %v3344
        %v3346 = vrot.slane %v3337, %v3345
        %v3349 = vadd.f32 %v3305, %v3342
        %v3350 = vadd.f32 %v3306, %v3346
        %v3351 = vadd.f32 %v3307, %v3342
        %v3352 = vadd.f32 %v3308, %v3346
        %v3353 = vadd.f32 %v3309, %v3342
        %v3354 = vadd.f32 %v3310, %v3346
        %v3355 = vadd.f32 %v3311, %v3342
        %v3356 = vadd.f32 %v3312, %v3346
        %v3357 = vadd.f32 %v3313, %v3342
        %v3358 = vadd.f32 %v3314, %v3346
        %v3359 = vadd.f32 %v3315, %v3342
        %v3360 = vadd.f32 %v3316, %v3346
        %v3361 = vadd.f32 %v3317, %v3342
        %v3362 = vadd.f32 %v3318, %v3346
        %v3363 = vadd.f32 %v3319, %v3342
        %v3364 = vadd.f32 %v3320, %v3346
        %v3365 = vadd.f32 %v3321, %v3342
        %v3366 = vadd.f32 %v3322, %v3346
        %v3367 = vadd.f32 %v3323, %v3342
        %v3368 = vadd.f32 %v3324, %v3346
        %v3369 = vadd.f32 %v3325, %v3342
        %v3370 = vadd.f32 %v3326, %v3346
        %v3371 = vadd.f32 %v3327, %v3342
        %v3372 = vadd.f32 %v3328, %v3346
        %v3373 = vadd.f32 %v3329, %v3342
        %v3374 = vadd.f32 %v3330, %v3346
        %v3375 = vadd.f32 %v3331, %v3342
        %v3376 = vadd.f32 %v3332, %v3346
        %v3377 = vadd.f32 %v3333, %v3342
        %v3378 = vadd.f32 %v3334, %v3346
        %v3379 = vadd.f32 %v3335, %v3342
        %v3380 = vadd.f32 %v3336, %v3346
        %v3381 = vmax.f32 %v3349, 0.0
        %v3382 = vmax.f32 %v3350, 0.0
        %v3383 = vmax.f32 %v3351, 0.0
        %v3384 = vmax.f32 %v3352, 0.0
        %v3385 = vmax.f32 %v3353, 0.0
        %v3386 = vmax.f32 %v3354, 0.0
        %v3387 = vmax.f32 %v3355, 0.0
        %v3388 = vmax.f32 %v3356, 0.0
        %v3389 = vmax.f32 %v3357, 0.0
        %v3390 = vmax.f32 %v3358, 0.0
        %v3391 = vmax.f32 %v3359, 0.0
        %v3392 = vmax.f32 %v3360, 0.0
        %v3393 = vmax.f32 %v3361, 0.0
        %v3394 = vmax.f32 %v3362, 0.0
        %v3395 = vmax.f32 %v3363, 0.0
        %v3396 = vmax.f32 %v3364, 0.0
        %v3397 = vmax.f32 %v3365, 0.0
        %v3398 = vmax.f32 %v3366, 0.0
        %v3399 = vmax.f32 %v3367, 0.0
        %v3400 = vmax.f32 %v3368, 0.0
        %v3401 = vmax.f32 %v3369, 0.0
        %v3402 = vmax.f32 %v3370, 0.0
        %v3403 = vmax.f32 %v3371, 0.0
        %v3404 = vmax.f32 %v3372, 0.0
        %v3405 = vmax.f32 %v3373, 0.0
        %v3406 = vmax.f32 %v3374, 0.0
        %v3407 = vmax.f32 %v3375, 0.0
        %v3408 = vmax.f32 %v3376, 0.0
        %v3409 = vmax.f32 %v3377, 0.0
        %v3410 = vmax.f32 %v3378, 0.0
        %v3411 = vmax.f32 %v3379, 0.0
        %v3412 = vmax.f32 %v3380, 0.0
        %v3413 = vld [vmem:[#allocation2] sm:$0xfe]
        %v3414 = vld [vmem:[#allocation2 + $0x8] sm:$0xfe]
        %v3415 = vld [vmem:[#allocation2 + $0x10] sm:$0x7f]
        %v3416 = vld [vmem:[#allocation2 + $0x18] sm:$0x7f]
        %v3417 = vld [vmem:[#allocation2 + $0x30] sm:$0xfe]
        %v3418 = vld [vmem:[#allocation2 + $0x38] sm:$0xfe]
        %v3419 = vld [vmem:[#allocation2 + $0x40] sm:$0x7f]
        %v3420 = vld [vmem:[#allocation2 + $0x48] sm:$0x7f]
        %v3421 = vld [vmem:[#allocation2 + $0x60] sm:$0xfe]
        %v3422 = vld [vmem:[#allocation2 + $0x68] sm:$0xfe]
        %v3423 = vld [vmem:[#allocation2 + $0x70] sm:$0x7f]
        %v3424 = vld [vmem:[#allocation2 + $0x78] sm:$0x7f]
        %v3425 = vld [vmem:[#allocation2 + $0x90] sm:$0xfe]
        %v3426 = vld [vmem:[#allocation2 + $0x98] sm:$0xfe]
        %v3427 = vld [vmem:[#allocation2 + $0xa0] sm:$0x7f]
        %v3428 = vld [vmem:[#allocation2 + $0xa8] sm:$0x7f]
        %v3429 = vld [vmem:[#allocation2 + $0xc0] sm:$0xfe]
        %v3430 = vld [vmem:[#allocation2 + $0xc8] sm:$0xfe]
        %v3431 = vld [vmem:[#allocation2 + $0xd0] sm:$0x7f]
        %v3432 = vld [vmem:[#allocation2 + $0xd8] sm:$0x7f]
        %v3433 = vld [vmem:[#allocation2 + $0xf0] sm:$0xfe]
        %v3434 = vld [vmem:[#allocation2 + $0xf8] sm:$0xfe]
        %v3435 = vld [vmem:[#allocation2 + $0x100] sm:$0x7f]
        %v3436 = vld [vmem:[#allocation2 + $0x108] sm:$0x7f]
        %v3437 = vld [vmem:[#allocation2 + $0x120] sm:$0xfe]
        %v3438 = vld [vmem:[#allocation2 + $0x128] sm:$0xfe]
        %v3439 = vld [vmem:[#allocation2 + $0x130] sm:$0x7f]
        %v3440 = vld [vmem:[#allocation2 + $0x138] sm:$0x7f]
        %v3441 = vld [vmem:[#allocation2 + $0x150] sm:$0xfe]
        %v3442 = vld [vmem:[#allocation2 + $0x158] sm:$0xfe]
        %v3443 = vld [vmem:[#allocation2 + $0x160] sm:$0x7f]
        %v3444 = vld [vmem:[#allocation2 + $0x168] sm:$0x7f]
        %v3477 = vrot.slane %v3381, 7
        %v3478 = vrot.slane %v3382, 7
        %v3479 = vrot.slane %v3383, 7
        %v3480 = vsel %vm1339, %v3477, %v3479
        %v3481 = vrot.slane %v3384, 7
        %v3482 = vsel %vm1339, %v3478, %v3481
        %v3483 = vrot.slane %v3385, 7
        %v3484 = vrot.slane %v3386, 7
        %v3485 = vrot.slane %v3387, 7
        %v3486 = vsel %vm1339, %v3483, %v3485
        %v3487 = vrot.slane %v3388, 7
        %v3488 = vsel %vm1339, %v3484, %v3487
        %v3489 = vrot.slane %v3389, 7
        %v3490 = vrot.slane %v3390, 7
        %v3491 = vrot.slane %v3391, 7
        %v3492 = vsel %vm1339, %v3489, %v3491
        %v3493 = vrot.slane %v3392, 7
        %v3494 = vsel %vm1339, %v3490, %v3493
        %v3495 = vrot.slane %v3393, 7
        %v3496 = vrot.slane %v3394, 7
        %v3497 = vrot.slane %v3395, 7
        %v3498 = vsel %vm1339, %v3495, %v3497
        %v3499 = vrot.slane %v3396, 7
        %v3500 = vsel %vm1339, %v3496, %v3499
        %v3501 = vrot.slane %v3397, 7
        %v3502 = vrot.slane %v3398, 7
        %v3503 = vrot.slane %v3399, 7
        %v3504 = vsel %vm1339, %v3501, %v3503
        %v3505 = vrot.slane %v3400, 7
        %v3506 = vsel %vm1339, %v3502, %v3505
        %v3507 = vrot.slane %v3401, 7
        %v3508 = vrot.slane %v3402, 7
        %v3509 = vrot.slane %v3403, 7
        %v3510 = vsel %vm1339, %v3507, %v3509
        %v3511 = vrot.slane %v3404, 7
        %v3512 = vsel %vm1339, %v3508, %v3511
        %v3513 = vrot.slane %v3405, 7
        %v3514 = vrot.slane %v3406, 7
        %v3515 = vrot.slane %v3407, 7
        %v3516 = vsel %vm1339, %v3513, %v3515
        %v3517 = vrot.slane %v3408, 7
        %v3518 = vsel %vm1339, %v3514, %v3517
        %v3519 = vrot.slane %v3409, 7
        %v3520 = vrot.slane %v3410, 7
        %v3521 = vrot.slane %v3411, 7
        %v3522 = vsel %vm1339, %v3519, %v3521
        %v3523 = vrot.slane %v3412, 7
        %v3524 = vsel %vm1339, %v3520, %v3523
        %v3557 = vmax.f32 %v3413, %v3477
        %v3558 = vmax.f32 %v3414, %v3478
        %v3559 = vmax.f32 %v3415, %v3480
        %v3560 = vmax.f32 %v3416, %v3482
        %v3561 = vmax.f32 %v3417, %v3483
        %v3562 = vmax.f32 %v3418, %v3484
        %v3563 = vmax.f32 %v3419, %v3486
        %v3564 = vmax.f32 %v3420, %v3488
        %v3565 = vmax.f32 %v3421, %v3489
        %v3566 = vmax.f32 %v3422, %v3490
        %v3567 = vmax.f32 %v3423, %v3492
        %v3568 = vmax.f32 %v3424, %v3494
        %v3569 = vmax.f32 %v3425, %v3495
        %v3570 = vmax.f32 %v3426, %v3496
        %v3571 = vmax.f32 %v3427, %v3498
        %v3572 = vmax.f32 %v3428, %v3500
        %v3573 = vmax.f32 %v3429, %v3501
        %v3574 = vmax.f32 %v3430, %v3502
        %v3575 = vmax.f32 %v3431, %v3504
        %v3576 = vmax.f32 %v3432, %v3506
        %v3577 = vmax.f32 %v3433, %v3507
        %v3578 = vmax.f32 %v3434, %v3508
        %v3579 = vmax.f32 %v3435, %v3510
        %v3580 = vmax.f32 %v3436, %v3512
        %v3581 = vmax.f32 %v3437, %v3513
        %v3582 = vmax.f32 %v3438, %v3514
        %v3583 = vmax.f32 %v3439, %v3516
        %v3584 = vmax.f32 %v3440, %v3518
        %v3585 = vmax.f32 %v3441, %v3519
        %v3586 = vmax.f32 %v3442, %v3520
        %v3587 = vmax.f32 %v3443, %v3522
        %v3588 = vmax.f32 %v3444, %v3524
        %3589 = vst [vmem:[#allocation2] sm:$0xfe] %v3557
        %3590 = vst [vmem:[#allocation2 + $0x8] sm:$0xfe] %v3558
        %3591 = vst [vmem:[#allocation2 + $0x10] sm:$0x7f] %v3559
        %3592 = vst [vmem:[#allocation2 + $0x18] sm:$0x7f] %v3560
        %3593 = vst [vmem:[#allocation2 + $0x30] sm:$0xfe] %v3561
        %3594 = vst [vmem:[#allocation2 + $0x38] sm:$0xfe] %v3562
        %3595 = vst [vmem:[#allocation2 + $0x40] sm:$0x7f] %v3563
        %3596 = vst [vmem:[#allocation2 + $0x48] sm:$0x7f] %v3564
        %3597 = vst [vmem:[#allocation2 + $0x60] sm:$0xfe] %v3565
        %3598 = vst [vmem:[#allocation2 + $0x68] sm:$0xfe] %v3566
        %3599 = vst [vmem:[#allocation2 + $0x70] sm:$0x7f] %v3567
        %3600 = vst [vmem:[#allocation2 + $0x78] sm:$0x7f] %v3568
        %3601 = vst [vmem:[#allocation2 + $0x90] sm:$0xfe] %v3569
        %3602 = vst [vmem:[#allocation2 + $0x98] sm:$0xfe] %v3570
        %3603 = vst [vmem:[#allocation2 + $0xa0] sm:$0x7f] %v3571
        %3604 = vst [vmem:[#allocation2 + $0xa8] sm:$0x7f] %v3572
        %3605 = vst [vmem:[#allocation2 + $0xc0] sm:$0xfe] %v3573
        %3606 = vst [vmem:[#allocation2 + $0xc8] sm:$0xfe] %v3574
        %3607 = vst [vmem:[#allocation2 + $0xd0] sm:$0x7f] %v3575
        %3608 = vst [vmem:[#allocation2 + $0xd8] sm:$0x7f] %v3576
        %3609 = vst [vmem:[#allocation2 + $0xf0] sm:$0xfe] %v3577
        %3610 = vst [vmem:[#allocation2 + $0xf8] sm:$0xfe] %v3578
        %3611 = vst [vmem:[#allocation2 + $0x100] sm:$0x7f] %v3579
        %3612 = vst [vmem:[#allocation2 + $0x108] sm:$0x7f] %v3580
        %3613 = vst [vmem:[#allocation2 + $0x120] sm:$0xfe] %v3581
        %3614 = vst [vmem:[#allocation2 + $0x128] sm:$0xfe] %v3582
        %3615 = vst [vmem:[#allocation2 + $0x130] sm:$0x7f] %v3583
        %3616 = vst [vmem:[#allocation2 + $0x138] sm:$0x7f] %v3584
        %3617 = vst [vmem:[#allocation2 + $0x150] sm:$0xfe] %v3585
        %3618 = vst [vmem:[#allocation2 + $0x158] sm:$0xfe] %v3586
        %3619 = vst [vmem:[#allocation2 + $0x160] sm:$0x7f] %v3587
        %3620 = vst [vmem:[#allocation2 + $0x168] sm:$0x7f] %v3588
        %v3621 = vld [vmem:[%s412] ss:$2 sm:$0xff]
        %v3622 = vld [vmem:[%s414] ss:$2 sm:$0xff]
        %v3623 = vld [vmem:[%s416] ss:$2 sm:$0xff]
        %v3624 = vld [vmem:[%s418] ss:$2 sm:$0xff]
        %v3625 = vld [vmem:[%s420] ss:$2 sm:$0xff]
        %v3626 = vld [vmem:[%s422] ss:$2 sm:$0xff]
        %v3627 = vld [vmem:[%s424] ss:$2 sm:$0xff]
        %v3628 = vld [vmem:[%s426] ss:$2 sm:$0xff]
        %v3629 = vld [vmem:[%s428] ss:$2 sm:$0xff]
        %v3630 = vld [vmem:[%s430] ss:$2 sm:$0xff]
        %v3631 = vld [vmem:[%s432] ss:$2 sm:$0xff]
        %v3632 = vld [vmem:[%s434] ss:$2 sm:$0xff]
        %v3633 = vld [vmem:[%s436] ss:$2 sm:$0xff]
        %v3634 = vld [vmem:[%s438] ss:$2 sm:$0xff]
        %v3635 = vld [vmem:[%s440] ss:$2 sm:$0xff]
        %v3636 = vld [vmem:[%s442] ss:$2 sm:$0xff]
        %v3637 = vld [vmem:[%s1500] sm:$0xff]
        %v3638 = vld [vmem:[%s1500 + $0x8] sm:$0xff]
        %v3639 = vld [vmem:[%s1500 + $0x10] sm:$0xff]
        %v3640 = vld [vmem:[%s1500 + $0x18] sm:$0xff]
        %v3641 = vld [vmem:[%s1500 + $0x20] sm:$0xff]
        %v3642 = vld [vmem:[%s1500 + $0x28] sm:$0xff]
        %v3643 = vld [vmem:[%s1500 + $0x30] sm:$0xff]
        %v3644 = vld [vmem:[%s1500 + $0x38] sm:$0xff]
        %v3645 = vld [vmem:[%s872] ss:$2 sm:$0xff]
        %v3646 = vld [vmem:[%s874] ss:$2 sm:$0xff]
        %v3647 = vld [vmem:[%s876] ss:$2 sm:$0xff]
        %v3648 = vld [vmem:[%s878] ss:$2 sm:$0xff]
        %v3649 = vld [vmem:[%s880] ss:$2 sm:$0xff]
        %v3650 = vld [vmem:[%s882] ss:$2 sm:$0xff]
        %v3651 = vld [vmem:[%s884] ss:$2 sm:$0xff]
        %v3652 = vld [vmem:[%s886] ss:$2 sm:$0xff]
        %v3653 = vld [vmem:[%s888] ss:$2 sm:$0xff]
        %v3654 = vld [vmem:[%s890] ss:$2 sm:$0xff]
        %v3655 = vld [vmem:[%s892] ss:$2 sm:$0xff]
        %v3656 = vld [vmem:[%s894] ss:$2 sm:$0xff]
        %v3657 = vld [vmem:[%s896] ss:$2 sm:$0xff]
        %v3658 = vld [vmem:[%s898] ss:$2 sm:$0xff]
        %v3659 = vld [vmem:[%s900] ss:$2 sm:$0xff]
        %v3660 = vld [vmem:[%s902] ss:$2 sm:$0xff]
        %v3661 = vld [vmem:[%s1525] sm:$0xff]
        %v3662 = vld [vmem:[%s1525 + $0x8] sm:$0xff]
        %v3663 = vld [vmem:[%s1525 + $0x10] sm:$0xff]
        %v3664 = vld [vmem:[%s1525 + $0x18] sm:$0xff]
        %v3665 = vld [vmem:[%s1525 + $0x20] sm:$0xff]
        %v3666 = vld [vmem:[%s1525 + $0x28] sm:$0xff]
        %v3667 = vld [vmem:[%s1525 + $0x30] sm:$0xff]
        %v3668 = vld [vmem:[%s1525 + $0x38] sm:$0xff]
        %v3670 = vsel %vm453, %v3645, 0
        %v3673 = vsel %vm453, %v3646, 0
        %v3676 = vsel %vm453, %v3647, 0
        %v3679 = vsel %vm453, %v3648, 0
        %v3682 = vsel %vm453, %v3649, 0
        %v3685 = vsel %vm453, %v3650, 0
        %v3688 = vsel %vm453, %v3651, 0
        %v3691 = vsel %vm453, %v3652, 0
        %v3694 = vsel %vm453, %v3653, 0
        %v3697 = vsel %vm453, %v3654, 0
        %v3700 = vsel %vm453, %v3655, 0
        %v3703 = vsel %vm453, %v3656, 0
        %v3706 = vsel %vm453, %v3657, 0
        %v3709 = vsel %vm453, %v3658, 0
        %v3712 = vsel %vm453, %v3659, 0
        %v3715 = vsel %vm453, %v3660, 0
        %3717 = vmatprep.subr.mxu0 %v3662
        %3718 = vmatpush1.msra.mxu0 %v3661
        %3719 = vmatprep.subr.mxu0 %v3664
        %3720 = vmatpush1.msra.mxu0 %v3663
        %3721 = vmatprep.subr.mxu0 %v3666
        %3722 = vmatpush1.msra.mxu0 %v3665
        %3723 = vmatprep.subr.mxu0 %v3668
        %3724 = vmatpush1.msra.mxu0 %v3667
        %3725 = vmatprep.subr.mxu0 0.0
        %3726 = vmatpush1.msra.mxu0 0.0
        %3727 = vmatprep.subr.mxu0 0.0
        %3728 = vmatpush1.msra.mxu0 0.0
        %3729 = vmatprep.subr.mxu0 0.0
        %3730 = vmatpush1.msra.mxu0 0.0
        %3731 = vmatprep.subr.mxu0 0.0
        %3732 = vmatpush1.msra.mxu0 0.0
        %3733 = vmatprep.subr.mxu0 0.0
        %3734 = vmatpush1.msra.mxu0 0.0
        %3735 = vmatprep.subr.mxu0 0.0
        %3736 = vmatpush1.msra.mxu0 0.0
        %3737 = vmatprep.subr.mxu0 0.0
        %3738 = vmatpush1.msra.mxu0 0.0
        %3739 = vmatprep.subr.mxu0 0.0
        %3740 = vmatpush1.msra.mxu0 0.0
        %3741 = vmatprep.subr.mxu0 0.0
        %3742 = vmatpush1.msra.mxu0 0.0
        %3743 = vmatprep.subr.mxu0 0.0
        %3744 = vmatpush1.msra.mxu0 0.0
        %3745 = vmatprep.subr.mxu0 0.0
        %3746 = vmatpush1.msra.mxu0 0.0
        %3747 = vmatprep.subr.mxu0 0.0
        %3748 = vmatpush1.msra.mxu0 0.0
        %3749 = vmatprep.subr.mxu0 0.0
        %3750 = vmatpush1.msra.mxu0 0.0
        %3751 = vmatprep.subr.mxu0 0.0
        %3752 = vmatpush1.msra.mxu0 0.0
        %3753 = vmatprep.subr.mxu0 0.0
        %3754 = vmatpush1.msra.mxu0 0.0
        %3755 = vmatprep.subr.mxu0 0.0
        %3756 = vmatpush1.msra.mxu0 0.0
        %3757 = vmatprep.subr.mxu0 0.0
        %3758 = vmatpush1.msra.mxu0 0.0
        %3759 = vmatprep.subr.mxu0 0.0
        %3760 = vmatpush1.msra.mxu0 0.0
        %3761 = vmatprep.subr.mxu0 0.0
        %3762 = vmatpush1.msra.mxu0 0.0
        %3763 = vmatprep.subr.mxu0 0.0
        %3764 = vmatpush1.msra.mxu0 0.0
        %3765 = vmatprep.subr.mxu0 0.0
        %3766 = vmatpush1.msra.mxu0 0.0
        %3767 = vmatprep.subr.mxu0 0.0
        %3768 = vmatpush1.msra.mxu0 0.0
        %3769 = vmatprep.subr.mxu0 0.0
        %3770 = vmatpush1.msra.mxu0 0.0
        %3771 = vmatprep.subr.mxu0 0.0
        %3772 = vmatpush1.msra.mxu0 0.0
        %3773 = vmatprep.subr.mxu0 0.0
        %3774 = vmatpush1.msra.mxu0 0.0
        %3775 = vmatprep.subr.mxu0 0.0
        %3776 = vmatpush1.msra.mxu0 0.0
        %3777 = vmatprep.subr.mxu0 0.0
        %3778 = vmatpush1.msra.mxu0 0.0
        %3779 = vmatprep.subr.mxu0 0.0
        %3780 = vmatpush1.msra.mxu0 0.0
        %3781 = vmatprep.mubr.f32.mxu0 0.0
        %3782 = vmatmul.mubr.f32.gmra.mrb[0].mxu0 %v3670
        %v3783 = vpop.f32.mrb[0].mxu0
        %v3784 = vadd.f32 0.0, %v3783
        %v3785 = vpop.f32.mrb[0].mxu0
        %v3786 = vadd.f32 0.0, %v3785
        %3787 = vmatprep.mubr.f32.mxu0 0.0
        %3788 = vmatmul.mubr.f32.gmra.mrb[0].mxu0 %v3673
        %v3789 = vpop.f32.mrb[0].mxu0
        %v3790 = vadd.f32 0.0, %v3789
        %v3791 = vpop.f32.mrb[0].mxu0
        %v3792 = vadd.f32 0.0, %v3791
        %3793 = vmatprep.mubr.f32.mxu0 0.0
        %3794 = vmatmul.mubr.f32.gmra.mrb[0].mxu0 %v3676
        %v3795 = vpop.f32.mrb[0].mxu0
        %v3796 = vadd.f32 0.0, %v3795
        %v3797 = vpop.f32.mrb[0].mxu0
        %v3798 = vadd.f32 0.0, %v3797
        %3799 = vmatprep.mubr.f32.mxu0 0.0
        %3800 = vmatmul.mubr.f32.gmra.mrb[0].mxu0 %v3679
        %v3801 = vpop.f32.mrb[0].mxu0
        %v3802 = vadd.f32 0.0, %v3801
        %v3803 = vpop.f32.mrb[0].mxu0
        %v3804 = vadd.f32 0.0, %v3803
        %3805 = vmatprep.mubr.f32.mxu0 0.0
        %3806 = vmatmul.mubr.f32.gmra.mrb[0].mxu0 %v3682
        %v3807 = vpop.f32.mrb[0].mxu0
        %v3808 = vadd.f32 0.0, %v3807
        %v3809 = vpop.f32.mrb[0].mxu0
        %v3810 = vadd.f32 0.0, %v3809
        %3811 = vmatprep.mubr.f32.mxu0 0.0
        %3812 = vmatmul.mubr.f32.gmra.mrb[0].mxu0 %v3685
        %v3813 = vpop.f32.mrb[0].mxu0
        %v3814 = vadd.f32 0.0, %v3813
        %v3815 = vpop.f32.mrb[0].mxu0
        %v3816 = vadd.f32 0.0, %v3815
        %3817 = vmatprep.mubr.f32.mxu0 0.0
        %3818 = vmatmul.mubr.f32.gmra.mrb[0].mxu0 %v3688
        %v3819 = vpop.f32.mrb[0].mxu0
        %v3820 = vadd.f32 0.0, %v3819
        %v3821 = vpop.f32.mrb[0].mxu0
        %v3822 = vadd.f32 0.0, %v3821
        %3823 = vmatprep.mubr.f32.mxu0 0.0
        %3824 = vmatmul.mubr.f32.gmra.mrb[0].mxu0 %v3691
        %v3825 = vpop.f32.mrb[0].mxu0
        %v3826 = vadd.f32 0.0, %v3825
        %v3827 = vpop.f32.mrb[0].mxu0
        %v3828 = vadd.f32 0.0, %v3827
        %3829 = vmatprep.mubr.f32.mxu0 0.0
        %3830 = vmatmul.mubr.f32.gmra.mrb[0].mxu0 %v3694
        %v3831 = vpop.f32.mrb[0].mxu0
        %v3832 = vadd.f32 0.0, %v3831
        %v3833 = vpop.f32.mrb[0].mxu0
        %v3834 = vadd.f32 0.0, %v3833
        %3835 = vmatprep.mubr.f32.mxu0 0.0
        %3836 = vmatmul.mubr.f32.gmra.mrb[0].mxu0 %v3697
        %v3837 = vpop.f32.mrb[0].mxu0
        %v3838 = vadd.f32 0.0, %v3837
        %v3839 = vpop.f32.mrb[0].mxu0
        %v3840 = vadd.f32 0.0, %v3839
        %3841 = vmatprep.mubr.f32.mxu0 0.0
        %3842 = vmatmul.mubr.f32.gmra.mrb[0].mxu0 %v3700
        %v3843 = vpop.f32.mrb[0].mxu0
        %v3844 = vadd.f32 0.0, %v3843
        %v3845 = vpop.f32.mrb[0].mxu0
        %v3846 = vadd.f32 0.0, %v3845
        %3847 = vmatprep.mubr.f32.mxu0 0.0
        %3848 = vmatmul.mubr.f32.gmra.mrb[0].mxu0 %v3703
        %v3849 = vpop.f32.mrb[0].mxu0
        %v3850 = vadd.f32 0.0, %v3849
        %v3851 = vpop.f32.mrb[0].mxu0
        %v3852 = vadd.f32 0.0, %v3851
        %3853 = vmatprep.mubr.f32.mxu0 0.0
        %3854 = vmatmul.mubr.f32.gmra.mrb[0].mxu0 %v3706
        %v3855 = vpop.f32.mrb[0].mxu0
        %v3856 = vadd.f32 0.0, %v3855
        %v3857 = vpop.f32.mrb[0].mxu0
        %v3858 = vadd.f32 0.0, %v3857
        %3859 = vmatprep.mubr.f32.mxu0 0.0
        %3860 = vmatmul.mubr.f32.gmra.mrb[0].mxu0 %v3709
        %v3861 = vpop.f32.mrb[0].mxu0
        %v3862 = vadd.f32 0.0, %v3861
        %v3863 = vpop.f32.mrb[0].mxu0
        %v3864 = vadd.f32 0.0, %v3863
        %3865 = vmatprep.mubr.f32.mxu0 0.0
        %3866 = vmatmul.mubr.f32.gmra.mrb[0].mxu0 %v3712
        %v3867 = vpop.f32.mrb[0].mxu0
        %v3868 = vadd.f32 0.0, %v3867
        %v3869 = vpop.f32.mrb[0].mxu0
        %v3870 = vadd.f32 0.0, %v3869
        %3871 = vmatprep.mubr.f32.mxu0 0.0
        %3872 = vmatmul.mubr.f32.gmra.mrb[0].mxu0 %v3715
        %v3873 = vpop.f32.mrb[0].mxu0
        %v3874 = vadd.f32 0.0, %v3873
        %v3875 = vpop.f32.mrb[0].mxu0
        %v3876 = vadd.f32 0.0, %v3875
        %3877 = vdwg.mxu0
        %v3879 = vsel %vm453, %v3621, 0
        %v3882 = vsel %vm453, %v3622, 0
        %v3885 = vsel %vm453, %v3623, 0
        %v3888 = vsel %vm453, %v3624, 0
        %v3891 = vsel %vm453, %v3625, 0
        %v3894 = vsel %vm453, %v3626, 0
        %v3897 = vsel %vm453, %v3627, 0
        %v3900 = vsel %vm453, %v3628, 0
        %v3903 = vsel %vm453, %v3629, 0
        %v3906 = vsel %vm453, %v3630, 0
        %v3909 = vsel %vm453, %v3631, 0
        %v3912 = vsel %vm453, %v3632, 0
        %v3915 = vsel %vm453, %v3633, 0
        %v3918 = vsel %vm453, %v3634, 0
        %v3921 = vsel %vm453, %v3635, 0
        %v3924 = vsel %vm453, %v3636, 0
        %3926 = vmatprep.subr.mxu0 %v3638
        %3927 = vmatpush1.msra.mxu0 %v3637
        %3928 = vmatprep.subr.mxu0 %v3640
        %3929 = vmatpush1.msra.mxu0 %v3639
        %3930 = vmatprep.subr.mxu0 %v3642
        %3931 = vmatpush1.msra.mxu0 %v3641
        %3932 = vmatprep.subr.mxu0 %v3644
        %3933 = vmatpush1.msra.mxu0 %v3643
        %3934 = vmatprep.subr.mxu0 0.0
        %3935 = vmatpush1.msra.mxu0 0.0
        %3936 = vmatprep.subr.mxu0 0.0
        %3937 = vmatpush1.msra.mxu0 0.0
        %3938 = vmatprep.subr.mxu0 0.0
        %3939 = vmatpush1.msra.mxu0 0.0
        %3940 = vmatprep.subr.mxu0 0.0
        %3941 = vmatpush1.msra.mxu0 0.0
        %3942 = vmatprep.subr.mxu0 0.0
        %3943 = vmatpush1.msra.mxu0 0.0
        %3944 = vmatprep.subr.mxu0 0.0
        %3945 = vmatpush1.msra.mxu0 0.0
        %3946 = vmatprep.subr.mxu0 0.0
        %3947 = vmatpush1.msra.mxu0 0.0
        %3948 = vmatprep.subr.mxu0 0.0
        %3949 = vmatpush1.msra.mxu0 0.0
        %3950 = vmatprep.subr.mxu0 0.0
        %3951 = vmatpush1.msra.mxu0 0.0
        %3952 = vmatprep.subr.mxu0 0.0
        %3953 = vmatpush1.msra.mxu0 0.0
        %3954 = vmatprep.subr.mxu0 0.0
        %3955 = vmatpush1.msra.mxu0 0.0
        %3956 = vmatprep.subr.mxu0 0.0
        %3957 = vmatpush1.msra.mxu0 0.0
        %3958 = vmatprep.subr.mxu0 0.0
        %3959 = vmatpush1.msra.mxu0 0.0
        %3960 = vmatprep.subr.mxu0 0.0
        %3961 = vmatpush1.msra.mxu0 0.0
        %3962 = vmatprep.subr.mxu0 0.0
        %3963 = vmatpush1.msra.mxu0 0.0
        %3964 = vmatprep.subr.mxu0 0.0
        %3965 = vmatpush1.msra.mxu0 0.0
        %3966 = vmatprep.subr.mxu0 0.0
        %3967 = vmatpush1.msra.mxu0 0.0
        %3968 = vmatprep.subr.mxu0 0.0
        %3969 = vmatpush1.msra.mxu0 0.0
        %3970 = vmatprep.subr.mxu0 0.0
        %3971 = vmatpush1.msra.mxu0 0.0
        %3972 = vmatprep.subr.mxu0 0.0
        %3973 = vmatpush1.msra.mxu0 0.0
        %3974 = vmatprep.subr.mxu0 0.0
        %3975 = vmatpush1.msra.mxu0 0.0
        %3976 = vmatprep.subr.mxu0 0.0
        %3977 = vmatpush1.msra.mxu0 0.0
        %3978 = vmatprep.subr.mxu0 0.0
        %3979 = vmatpush1.msra.mxu0 0.0
        %3980 = vmatprep.subr.mxu0 0.0
        %3981 = vmatpush1.msra.mxu0 0.0
        %3982 = vmatprep.subr.mxu0 0.0
        %3983 = vmatpush1.msra.mxu0 0.0
        %3984 = vmatprep.subr.mxu0 0.0
        %3985 = vmatpush1.msra.mxu0 0.0
        %3986 = vmatprep.subr.mxu0 0.0
        %3987 = vmatpush1.msra.mxu0 0.0
        %3988 = vmatprep.subr.mxu0 0.0
        %3989 = vmatpush1.msra.mxu0 0.0
        %3990 = vmatprep.mubr.f32.mxu0 0.0
        %3991 = vmatmul.mubr.f32.gmra.mrb[0].mxu0 %v3879
        %v3992 = vpop.f32.mrb[0].mxu0
        %v3993 = vadd.f32 %v3784, %v3992
        %v3994 = vpop.f32.mrb[0].mxu0
        %v3995 = vadd.f32 %v3786, %v3994
        %3996 = vmatprep.mubr.f32.mxu0 0.0
        %3997 = vmatmul.mubr.f32.gmra.mrb[0].mxu0 %v3882
        %v3998 = vpop.f32.mrb[0].mxu0
        %v3999 = vadd.f32 %v3790, %v3998
        %v4000 = vpop.f32.mrb[0].mxu0
        %v4001 = vadd.f32 %v3792, %v4000
        %4002 = vmatprep.mubr.f32.mxu0 0.0
        %4003 = vmatmul.mubr.f32.gmra.mrb[0].mxu0 %v3885
        %v4004 = vpop.f32.mrb[0].mxu0
        %v4005 = vadd.f32 %v3796, %v4004
        %v4006 = vpop.f32.mrb[0].mxu0
        %v4007 = vadd.f32 %v3798, %v4006
        %4008 = vmatprep.mubr.f32.mxu0 0.0
        %4009 = vmatmul.mubr.f32.gmra.mrb[0].mxu0 %v3888
        %v4010 = vpop.f32.mrb[0].mxu0
        %v4011 = vadd.f32 %v3802, %v4010
        %v4012 = vpop.f32.mrb[0].mxu0
        %v4013 = vadd.f32 %v3804, %v4012
        %4014 = vmatprep.mubr.f32.mxu0 0.0
        %4015 = vmatmul.mubr.f32.gmra.mrb[0].mxu0 %v3891
        %v4016 = vpop.f32.mrb[0].mxu0
        %v4017 = vadd.f32 %v3808, %v4016
        %v4018 = vpop.f32.mrb[0].mxu0
        %v4019 = vadd.f32 %v3810, %v4018
        %4020 = vmatprep.mubr.f32.mxu0 0.0
        %4021 = vmatmul.mubr.f32.gmra.mrb[0].mxu0 %v3894
        %v4022 = vpop.f32.mrb[0].mxu0
        %v4023 = vadd.f32 %v3814, %v4022
        %v4024 = vpop.f32.mrb[0].mxu0
        %v4025 = vadd.f32 %v3816, %v4024
        %4026 = vmatprep.mubr.f32.mxu0 0.0
        %4027 = vmatmul.mubr.f32.gmra.mrb[0].mxu0 %v3897
        %v4028 = vpop.f32.mrb[0].mxu0
        %v4029 = vadd.f32 %v3820, %v4028
        %v4030 = vpop.f32.mrb[0].mxu0
        %v4031 = vadd.f32 %v3822, %v4030
        %4032 = vmatprep.mubr.f32.mxu0 0.0
        %4033 = vmatmul.mubr.f32.gmra.mrb[0].mxu0 %v3900
        %v4034 = vpop.f32.mrb[0].mxu0
        %v4035 = vadd.f32 %v3826, %v4034
        %v4036 = vpop.f32.mrb[0].mxu0
        %v4037 = vadd.f32 %v3828, %v4036
        %4038 = vmatprep.mubr.f32.mxu0 0.0
        %4039 = vmatmul.mubr.f32.gmra.mrb[0].mxu0 %v3903
        %v4040 = vpop.f32.mrb[0].mxu0
        %v4041 = vadd.f32 %v3832, %v4040
        %v4042 = vpop.f32.mrb[0].mxu0
        %v4043 = vadd.f32 %v3834, %v4042
        %4044 = vmatprep.mubr.f32.mxu0 0.0
        %4045 = vmatmul.mubr.f32.gmra.mrb[0].mxu0 %v3906
        %v4046 = vpop.f32.mrb[0].mxu0
        %v4047 = vadd.f32 %v3838, %v4046
        %v4048 = vpop.f32.mrb[0].mxu0
        %v4049 = vadd.f32 %v3840, %v4048
        %4050 = vmatprep.mubr.f32.mxu0 0.0
        %4051 = vmatmul.mubr.f32.gmra.mrb[0].mxu0 %v3909
        %v4052 = vpop.f32.mrb[0].mxu0
        %v4053 = vadd.f32 %v3844, %v4052
        %v4054 = vpop.f32.mrb[0].mxu0
        %v4055 = vadd.f32 %v3846, %v4054
        %4056 = vmatprep.mubr.f32.mxu0 0.0
        %4057 = vmatmul.mubr.f32.gmra.mrb[0].mxu0 %v3912
        %v4058 = vpop.f32.mrb[0].mxu0
        %v4059 = vadd.f32 %v3850, %v4058
        %v4060 = vpop.f32.mrb[0].mxu0
        %v4061 = vadd.f32 %v3852, %v4060
        %4062 = vmatprep.mubr.f32.mxu0 0.0
        %4063 = vmatmul.mubr.f32.gmra.mrb[0].mxu0 %v3915
        %v4064 = vpop.f32.mrb[0].mxu0
        %v4065 = vadd.f32 %v3856, %v4064
        %v4066 = vpop.f32.mrb[0].mxu0
        %v4067 = vadd.f32 %v3858, %v4066
        %4068 = vmatprep.mubr.f32.mxu0 0.0
        %4069 = vmatmul.mubr.f32.gmra.mrb[0].mxu0 %v3918
        %v4070 = vpop.f32.mrb[0].mxu0
        %v4071 = vadd.f32 %v3862, %v4070
        %v4072 = vpop.f32.mrb[0].mxu0
        %v4073 = vadd.f32 %v3864, %v4072
        %4074 = vmatprep.mubr.f32.mxu0 0.0
        %4075 = vmatmul.mubr.f32.gmra.mrb[0].mxu0 %v3921
        %v4076 = vpop.f32.mrb[0].mxu0
        %v4077 = vadd.f32 %v3868, %v4076
        %v4078 = vpop.f32.mrb[0].mxu0
        %v4079 = vadd.f32 %v3870, %v4078
        %4080 = vmatprep.mubr.f32.mxu0 0.0
        %4081 = vmatmul.mubr.f32.gmra.mrb[0].mxu0 %v3924
        %v4082 = vpop.f32.mrb[0].mxu0
        %v4083 = vadd.f32 %v3874, %v4082
        %v4084 = vpop.f32.mrb[0].mxu0
        %v4085 = vadd.f32 %v3876, %v4084
        %4086 = vdwg.mxu0
        %v4087 = vld [vmem:[%s3012] ss:$2 sm:$0xff]
        %v4088 = vld [vmem:[%s3014] ss:$2 sm:$0xff]
        %v4089 = vld [vmem:[%s3016] ss:$2 sm:$0xff]
        %v4090 = vld [vmem:[%s3018] ss:$2 sm:$0xff]
        %v4091 = vld [vmem:[%s3020] ss:$2 sm:$0xff]
        %v4092 = vld [vmem:[%s3022] ss:$2 sm:$0xff]
        %v4093 = vld [vmem:[%s3024] ss:$2 sm:$0xff]
        %v4094 = vld [vmem:[%s3026] ss:$2 sm:$0xff]
        %v4095 = vld [vmem:[%s3028] ss:$2 sm:$0xff]
        %v4096 = vld [vmem:[%s3030] ss:$2 sm:$0xff]
        %v4097 = vld [vmem:[%s3032] ss:$2 sm:$0xff]
        %v4098 = vld [vmem:[%s3034] ss:$2 sm:$0xff]
        %v4099 = vld [vmem:[%s3036] ss:$2 sm:$0xff]
        %v4100 = vld [vmem:[%s3038] ss:$2 sm:$0xff]
        %v4101 = vld [vmem:[%s3040] ss:$2 sm:$0xff]
        %v4102 = vld [vmem:[%s3042] ss:$2 sm:$0xff]
        %v4103 = vld [vmem:[%s1968] sm:$0xff]
        %v4104 = vld [vmem:[%s1968 + $0x8] sm:$0xff]
        %v4105 = vld [vmem:[%s1968 + $0x10] sm:$0xff]
        %v4106 = vld [vmem:[%s1968 + $0x18] sm:$0xff]
        %v4107 = vld [vmem:[%s1968 + $0x20] sm:$0xff]
        %v4108 = vld [vmem:[%s1968 + $0x28] sm:$0xff]
        %v4109 = vld [vmem:[%s1968 + $0x30] sm:$0xff]
        %v4110 = vld [vmem:[%s1968 + $0x38] sm:$0xff]
        %v4112 = vsel %vm453, %v4087, 0
        %v4115 = vsel %vm453, %v4088, 0
        %v4118 = vsel %vm453, %v4089, 0
        %v4121 = vsel %vm453, %v4090, 0
        %v4124 = vsel %vm453, %v4091, 0
        %v4127 = vsel %vm453, %v4092, 0
        %v4130 = vsel %vm453, %v4093, 0
        %v4133 = vsel %vm453, %v4094, 0
        %v4136 = vsel %vm453, %v4095, 0
        %v4139 = vsel %vm453, %v4096, 0
        %v4142 = vsel %vm453, %v4097, 0
        %v4145 = vsel %vm453, %v4098, 0
        %v4148 = vsel %vm453, %v4099, 0
        %v4151 = vsel %vm453, %v4100, 0
        %v4154 = vsel %vm453, %v4101, 0
        %v4157 = vsel %vm453, %v4102, 0
        %4159 = vmatprep.subr.mxu0 %v4104
        %4160 = vmatpush1.msra.mxu0 %v4103
        %4161 = vmatprep.subr.mxu0 %v4106
        %4162 = vmatpush1.msra.mxu0 %v4105
        %4163 = vmatprep.subr.mxu0 %v4108
        %4164 = vmatpush1.msra.mxu0 %v4107
        %4165 = vmatprep.subr.mxu0 %v4110
        %4166 = vmatpush1.msra.mxu0 %v4109
        %4167 = vmatprep.subr.mxu0 0.0
        %4168 = vmatpush1.msra.mxu0 0.0
        %4169 = vmatprep.subr.mxu0 0.0
        %4170 = vmatpush1.msra.mxu0 0.0
        %4171 = vmatprep.subr.mxu0 0.0
        %4172 = vmatpush1.msra.mxu0 0.0
        %4173 = vmatprep.subr.mxu0 0.0
        %4174 = vmatpush1.msra.mxu0 0.0
        %4175 = vmatprep.subr.mxu0 0.0
        %4176 = vmatpush1.msra.mxu0 0.0
        %4177 = vmatprep.subr.mxu0 0.0
        %4178 = vmatpush1.msra.mxu0 0.0
        %4179 = vmatprep.subr.mxu0 0.0
        %4180 = vmatpush1.msra.mxu0 0.0
        %4181 = vmatprep.subr.mxu0 0.0
        %4182 = vmatpush1.msra.mxu0 0.0
        %4183 = vmatprep.subr.mxu0 0.0
        %4184 = vmatpush1.msra.mxu0 0.0
        %4185 = vmatprep.subr.mxu0 0.0
        %4186 = vmatpush1.msra.mxu0 0.0
        %4187 = vmatprep.subr.mxu0 0.0
        %4188 = vmatpush1.msra.mxu0 0.0
        %4189 = vmatprep.subr.mxu0 0.0
        %4190 = vmatpush1.msra.mxu0 0.0
        %4191 = vmatprep.subr.mxu0 0.0
        %4192 = vmatpush1.msra.mxu0 0.0
        %4193 = vmatprep.subr.mxu0 0.0
        %4194 = vmatpush1.msra.mxu0 0.0
        %4195 = vmatprep.subr.mxu0 0.0
        %4196 = vmatpush1.msra.mxu0 0.0
        %4197 = vmatprep.subr.mxu0 0.0
        %4198 = vmatpush1.msra.mxu0 0.0
        %4199 = vmatprep.subr.mxu0 0.0
        %4200 = vmatpush1.msra.mxu0 0.0
        %4201 = vmatprep.subr.mxu0 0.0
        %4202 = vmatpush1.msra.mxu0 0.0
        %4203 = vmatprep.subr.mxu0 0.0
        %4204 = vmatpush1.msra.mxu0 0.0
        %4205 = vmatprep.subr.mxu0 0.0
        %4206 = vmatpush1.msra.mxu0 0.0
        %4207 = vmatprep.subr.mxu0 0.0
        %4208 = vmatpush1.msra.mxu0 0.0
        %4209 = vmatprep.subr.mxu0 0.0
        %4210 = vmatpush1.msra.mxu0 0.0
        %4211 = vmatprep.subr.mxu0 0.0
        %4212 = vmatpush1.msra.mxu0 0.0
        %4213 = vmatprep.subr.mxu0 0.0
        %4214 = vmatpush1.msra.mxu0 0.0
        %4215 = vmatprep.subr.mxu0 0.0
        %4216 = vmatpush1.msra.mxu0 0.0
        %4217 = vmatprep.subr.mxu0 0.0
        %4218 = vmatpush1.msra.mxu0 0.0
        %4219 = vmatprep.subr.mxu0 0.0
        %4220 = vmatpush1.msra.mxu0 0.0
        %4221 = vmatprep.subr.mxu0 0.0
        %4222 = vmatpush1.msra.mxu0 0.0
        %4223 = vmatprep.mubr.f32.mxu0 0.0
        %4224 = vmatmul.mubr.f32.gmra.mrb[0].mxu0 %v4112
        %v4225 = vpop.f32.mrb[0].mxu0
        %v4226 = vadd.f32 0.0, %v4225
        %v4227 = vpop.f32.mrb[0].mxu0
        %v4228 = vadd.f32 0.0, %v4227
        %4229 = vmatprep.mubr.f32.mxu0 0.0
        %4230 = vmatmul.mubr.f32.gmra.mrb[0].mxu0 %v4115
        %v4231 = vpop.f32.mrb[0].mxu0
        %v4232 = vadd.f32 0.0, %v4231
        %v4233 = vpop.f32.mrb[0].mxu0
        %v4234 = vadd.f32 0.0, %v4233
        %4235 = vmatprep.mubr.f32.mxu0 0.0
        %4236 = vmatmul.mubr.f32.gmra.mrb[0].mxu0 %v4118
        %v4237 = vpop.f32.mrb[0].mxu0
        %v4238 = vadd.f32 0.0, %v4237
        %v4239 = vpop.f32.mrb[0].mxu0
        %v4240 = vadd.f32 0.0, %v4239
        %4241 = vmatprep.mubr.f32.mxu0 0.0
        %4242 = vmatmul.mubr.f32.gmra.mrb[0].mxu0 %v4121
        %v4243 = vpop.f32.mrb[0].mxu0
        %v4244 = vadd.f32 0.0, %v4243
        %v4245 = vpop.f32.mrb[0].mxu0
        %v4246 = vadd.f32 0.0, %v4245
        %4247 = vmatprep.mubr.f32.mxu0 0.0
        %4248 = vmatmul.mubr.f32.gmra.mrb[0].mxu0 %v4124
        %v4249 = vpop.f32.mrb[0].mxu0
        %v4250 = vadd.f32 0.0, %v4249
        %v4251 = vpop.f32.mrb[0].mxu0
        %v4252 = vadd.f32 0.0, %v4251
        %4253 = vmatprep.mubr.f32.mxu0 0.0
        %4254 = vmatmul.mubr.f32.gmra.mrb[0].mxu0 %v4127
        %v4255 = vpop.f32.mrb[0].mxu0
        %v4256 = vadd.f32 0.0, %v4255
        %v4257 = vpop.f32.mrb[0].mxu0
        %v4258 = vadd.f32 0.0, %v4257
        %4259 = vmatprep.mubr.f32.mxu0 0.0
        %4260 = vmatmul.mubr.f32.gmra.mrb[0].mxu0 %v4130
        %v4261 = vpop.f32.mrb[0].mxu0
        %v4262 = vadd.f32 0.0, %v4261
        %v4263 = vpop.f32.mrb[0].mxu0
        %v4264 = vadd.f32 0.0, %v4263
        %4265 = vmatprep.mubr.f32.mxu0 0.0
        %4266 = vmatmul.mubr.f32.gmra.mrb[0].mxu0 %v4133
        %v4267 = vpop.f32.mrb[0].mxu0
        %v4268 = vadd.f32 0.0, %v4267
        %v4269 = vpop.f32.mrb[0].mxu0
        %v4270 = vadd.f32 0.0, %v4269
        %4271 = vmatprep.mubr.f32.mxu0 0.0
        %4272 = vmatmul.mubr.f32.gmra.mrb[0].mxu0 %v4136
        %v4273 = vpop.f32.mrb[0].mxu0
        %v4274 = vadd.f32 0.0, %v4273
        %v4275 = vpop.f32.mrb[0].mxu0
        %v4276 = vadd.f32 0.0, %v4275
        %4277 = vmatprep.mubr.f32.mxu0 0.0
        %4278 = vmatmul.mubr.f32.gmra.mrb[0].mxu0 %v4139
        %v4279 = vpop.f32.mrb[0].mxu0
        %v4280 = vadd.f32 0.0, %v4279
        %v4281 = vpop.f32.mrb[0].mxu0
        %v4282 = vadd.f32 0.0, %v4281
        %4283 = vmatprep.mubr.f32.mxu0 0.0
        %4284 = vmatmul.mubr.f32.gmra.mrb[0].mxu0 %v4142
        %v4285 = vpop.f32.mrb[0].mxu0
        %v4286 = vadd.f32 0.0, %v4285
        %v4287 = vpop.f32.mrb[0].mxu0
        %v4288 = vadd.f32 0.0, %v4287
        %4289 = vmatprep.mubr.f32.mxu0 0.0
        %4290 = vmatmul.mubr.f32.gmra.mrb[0].mxu0 %v4145
        %v4291 = vpop.f32.mrb[0].mxu0
        %v4292 = vadd.f32 0.0, %v4291
        %v4293 = vpop.f32.mrb[0].mxu0
        %v4294 = vadd.f32 0.0, %v4293
        %4295 = vmatprep.mubr.f32.mxu0 0.0
        %4296 = vmatmul.mubr.f32.gmra.mrb[0].mxu0 %v4148
        %v4297 = vpop.f32.mrb[0].mxu0
        %v4298 = vadd.f32 0.0, %v4297
        %v4299 = vpop.f32.mrb[0].mxu0
        %v4300 = vadd.f32 0.0, %v4299
        %4301 = vmatprep.mubr.f32.mxu0 0.0
        %4302 = vmatmul.mubr.f32.gmra.mrb[0].mxu0 %v4151
        %v4303 = vpop.f32.mrb[0].mxu0
        %v4304 = vadd.f32 0.0, %v4303
        %v4305 = vpop.f32.mrb[0].mxu0
        %v4306 = vadd.f32 0.0, %v4305
        %4307 = vmatprep.mubr.f32.mxu0 0.0
        %4308 = vmatmul.mubr.f32.gmra.mrb[0].mxu0 %v4154
        %v4309 = vpop.f32.mrb[0].mxu0
        %v4310 = vadd.f32 0.0, %v4309
        %v4311 = vpop.f32.mrb[0].mxu0
        %v4312 = vadd.f32 0.0, %v4311
        %4313 = vmatprep.mubr.f32.mxu0 0.0
        %4314 = vmatmul.mubr.f32.gmra.mrb[0].mxu0 %v4157
        %v4315 = vpop.f32.mrb[0].mxu0
        %v4316 = vadd.f32 0.0, %v4315
        %v4317 = vpop.f32.mrb[0].mxu0
        %v4318 = vadd.f32 0.0, %v4317
        %4319 = vdwg.mxu0
        %v4320 = vadd.f32 %v3993, %v4226
        %v4321 = vadd.f32 %v3995, %v4228
        %v4322 = vadd.f32 %v3999, %v4232
        %v4323 = vadd.f32 %v4001, %v4234
        %v4324 = vadd.f32 %v4005, %v4238
        %v4325 = vadd.f32 %v4007, %v4240
        %v4326 = vadd.f32 %v4011, %v4244
        %v4327 = vadd.f32 %v4013, %v4246
        %v4328 = vadd.f32 %v4017, %v4250
        %v4329 = vadd.f32 %v4019, %v4252
        %v4330 = vadd.f32 %v4023, %v4256
        %v4331 = vadd.f32 %v4025, %v4258
        %v4332 = vadd.f32 %v4029, %v4262
        %v4333 = vadd.f32 %v4031, %v4264
        %v4334 = vadd.f32 %v4035, %v4268
        %v4335 = vadd.f32 %v4037, %v4270
        %v4336 = vadd.f32 %v4041, %v4274
        %v4337 = vadd.f32 %v4043, %v4276
        %v4338 = vadd.f32 %v4047, %v4280
        %v4339 = vadd.f32 %v4049, %v4282
        %v4340 = vadd.f32 %v4053, %v4286
        %v4341 = vadd.f32 %v4055, %v4288
        %v4342 = vadd.f32 %v4059, %v4292
        %v4343 = vadd.f32 %v4061, %v4294
        %v4344 = vadd.f32 %v4065, %v4298
        %v4345 = vadd.f32 %v4067, %v4300
        %v4346 = vadd.f32 %v4071, %v4304
        %v4347 = vadd.f32 %v4073, %v4306
        %v4348 = vadd.f32 %v4077, %v4310
        %v4349 = vadd.f32 %v4079, %v4312
        %v4350 = vadd.f32 %v4083, %v4316
        %v4351 = vadd.f32 %v4085, %v4318
        %v4352 = vld [vmem:[%s2] ss:$2 sm:$0x3]
        %v4354 = vlaneseq
        %v4355 = vshrl.u32 %v4354, 7
        %v4356 = vsub.s32 0, %v4355
        %v4357 = vrot.slane %v4352, %v4356
        %v4358 = vlaneseq
        %v4359 = vshrl.u32 %v4358, 7
        %v4360 = vsub.s32 1, %v4359
        %v4361 = vrot.slane %v4352, %v4360
        %v4364 = vmul.f32 %v4320, %v4357
        %v4365 = vmul.f32 %v4321, %v4361
        %v4366 = vmul.f32 %v4322, %v4357
        %v4367 = vmul.f32 %v4323, %v4361
        %v4368 = vmul.f32 %v4324, %v4357
        %v4369 = vmul.f32 %v4325, %v4361
        %v4370 = vmul.f32 %v4326, %v4357
        %v4371 = vmul.f32 %v4327, %v4361
        %v4372 = vmul.f32 %v4328, %v4357
        %v4373 = vmul.f32 %v4329, %v4361
        %v4374 = vmul.f32 %v4330, %v4357
        %v4375 = vmul.f32 %v4331, %v4361
        %v4376 = vmul.f32 %v4332, %v4357
        %v4377 = vmul.f32 %v4333, %v4361
        %v4378 = vmul.f32 %v4334, %v4357
        %v4379 = vmul.f32 %v4335, %v4361
        %v4380 = vmul.f32 %v4336, %v4357
        %v4381 = vmul.f32 %v4337, %v4361
        %v4382 = vmul.f32 %v4338, %v4357
        %v4383 = vmul.f32 %v4339, %v4361
        %v4384 = vmul.f32 %v4340, %v4357
        %v4385 = vmul.f32 %v4341, %v4361
        %v4386 = vmul.f32 %v4342, %v4357
        %v4387 = vmul.f32 %v4343, %v4361
        %v4388 = vmul.f32 %v4344, %v4357
        %v4389 = vmul.f32 %v4345, %v4361
        %v4390 = vmul.f32 %v4346, %v4357
        %v4391 = vmul.f32 %v4347, %v4361
        %v4392 = vmul.f32 %v4348, %v4357
        %v4393 = vmul.f32 %v4349, %v4361
        %v4394 = vmul.f32 %v4350, %v4357
        %v4395 = vmul.f32 %v4351, %v4361
        %v4396 = vld [vmem:[%s1198] ss:$2 sm:$0x3]
        %v4398 = vlaneseq
        %v4399 = vshrl.u32 %v4398, 7
        %v4400 = vsub.s32 0, %v4399
        %v4401 = vrot.slane %v4396, %v4400
        %v4402 = vlaneseq
        %v4403 = vshrl.u32 %v4402, 7
        %v4404 = vsub.s32 1, %v4403
        %v4405 = vrot.slane %v4396, %v4404
        %v4408 = vadd.f32 %v4364, %v4401
        %v4409 = vadd.f32 %v4365, %v4405
        %v4410 = vadd.f32 %v4366, %v4401
        %v4411 = vadd.f32 %v4367, %v4405
        %v4412 = vadd.f32 %v4368, %v4401
        %v4413 = vadd.f32 %v4369, %v4405
        %v4414 = vadd.f32 %v4370, %v4401
        %v4415 = vadd.f32 %v4371, %v4405
        %v4416 = vadd.f32 %v4372, %v4401
        %v4417 = vadd.f32 %v4373, %v4405
        %v4418 = vadd.f32 %v4374, %v4401
        %v4419 = vadd.f32 %v4375, %v4405
        %v4420 = vadd.f32 %v4376, %v4401
        %v4421 = vadd.f32 %v4377, %v4405
        %v4422 = vadd.f32 %v4378, %v4401
        %v4423 = vadd.f32 %v4379, %v4405
        %v4424 = vadd.f32 %v4380, %v4401
        %v4425 = vadd.f32 %v4381, %v4405
        %v4426 = vadd.f32 %v4382, %v4401
        %v4427 = vadd.f32 %v4383, %v4405
        %v4428 = vadd.f32 %v4384, %v4401
        %v4429 = vadd.f32 %v4385, %v4405
        %v4430 = vadd.f32 %v4386, %v4401
        %v4431 = vadd.f32 %v4387, %v4405
        %v4432 = vadd.f32 %v4388, %v4401
        %v4433 = vadd.f32 %v4389, %v4405
        %v4434 = vadd.f32 %v4390, %v4401
        %v4435 = vadd.f32 %v4391, %v4405
        %v4436 = vadd.f32 %v4392, %v4401
        %v4437 = vadd.f32 %v4393, %v4405
        %v4438 = vadd.f32 %v4394, %v4401
        %v4439 = vadd.f32 %v4395, %v4405
        %v4440 = vmax.f32 %v4408, 0.0
        %v4441 = vmax.f32 %v4409, 0.0
        %v4442 = vmax.f32 %v4410, 0.0
        %v4443 = vmax.f32 %v4411, 0.0
        %v4444 = vmax.f32 %v4412, 0.0
        %v4445 = vmax.f32 %v4413, 0.0
        %v4446 = vmax.f32 %v4414, 0.0
        %v4447 = vmax.f32 %v4415, 0.0
        %v4448 = vmax.f32 %v4416, 0.0
        %v4449 = vmax.f32 %v4417, 0.0
        %v4450 = vmax.f32 %v4418, 0.0
        %v4451 = vmax.f32 %v4419, 0.0
        %v4452 = vmax.f32 %v4420, 0.0
        %v4453 = vmax.f32 %v4421, 0.0
        %v4454 = vmax.f32 %v4422, 0.0
        %v4455 = vmax.f32 %v4423, 0.0
        %v4456 = vmax.f32 %v4424, 0.0
        %v4457 = vmax.f32 %v4425, 0.0
        %v4458 = vmax.f32 %v4426, 0.0
        %v4459 = vmax.f32 %v4427, 0.0
        %v4460 = vmax.f32 %v4428, 0.0
        %v4461 = vmax.f32 %v4429, 0.0
        %v4462 = vmax.f32 %v4430, 0.0
        %v4463 = vmax.f32 %v4431, 0.0
        %v4464 = vmax.f32 %v4432, 0.0
        %v4465 = vmax.f32 %v4433, 0.0
        %v4466 = vmax.f32 %v4434, 0.0
        %v4467 = vmax.f32 %v4435, 0.0
        %v4468 = vmax.f32 %v4436, 0.0
        %v4469 = vmax.f32 %v4437, 0.0
        %v4470 = vmax.f32 %v4438, 0.0
        %v4471 = vmax.f32 %v4439, 0.0
        %v4472 = vld [vmem:[#allocation2] sm:$0xfe]
        %v4473 = vld [vmem:[#allocation2 + $0x8] sm:$0xfe]
        %v4474 = vld [vmem:[#allocation2 + $0x10] sm:$0x7f]
        %v4475 = vld [vmem:[#allocation2 + $0x18] sm:$0x7f]
        %v4476 = vld [vmem:[#allocation2 + $0x30] sm:$0xfe]
        %v4477 = vld [vmem:[#allocation2 + $0x38] sm:$0xfe]
        %v4478 = vld [vmem:[#allocation2 + $0x40] sm:$0x7f]
        %v4479 = vld [vmem:[#allocation2 + $0x48] sm:$0x7f]
        %v4480 = vld [vmem:[#allocation2 + $0x60] sm:$0xfe]
        %v4481 = vld [vmem:[#allocation2 + $0x68] sm:$0xfe]
        %v4482 = vld [vmem:[#allocation2 + $0x70] sm:$0x7f]
        %v4483 = vld [vmem:[#allocation2 + $0x78] sm:$0x7f]
        %v4484 = vld [vmem:[#allocation2 + $0x90] sm:$0xfe]
        %v4485 = vld [vmem:[#allocation2 + $0x98] sm:$0xfe]
        %v4486 = vld [vmem:[#allocation2 + $0xa0] sm:$0x7f]
        %v4487 = vld [vmem:[#allocation2 + $0xa8] sm:$0x7f]
        %v4488 = vld [vmem:[#allocation2 + $0xc0] sm:$0xfe]
        %v4489 = vld [vmem:[#allocation2 + $0xc8] sm:$0xfe]
        %v4490 = vld [vmem:[#allocation2 + $0xd0] sm:$0x7f]
        %v4491 = vld [vmem:[#allocation2 + $0xd8] sm:$0x7f]
        %v4492 = vld [vmem:[#allocation2 + $0xf0] sm:$0xfe]
        %v4493 = vld [vmem:[#allocation2 + $0xf8] sm:$0xfe]
        %v4494 = vld [vmem:[#allocation2 + $0x100] sm:$0x7f]
        %v4495 = vld [vmem:[#allocation2 + $0x108] sm:$0x7f]
        %v4496 = vld [vmem:[#allocation2 + $0x120] sm:$0xfe]
        %v4497 = vld [vmem:[#allocation2 + $0x128] sm:$0xfe]
        %v4498 = vld [vmem:[#allocation2 + $0x130] sm:$0x7f]
        %v4499 = vld [vmem:[#allocation2 + $0x138] sm:$0x7f]
        %v4500 = vld [vmem:[#allocation2 + $0x150] sm:$0xfe]
        %v4501 = vld [vmem:[#allocation2 + $0x158] sm:$0xfe]
        %v4502 = vld [vmem:[#allocation2 + $0x160] sm:$0x7f]
        %v4503 = vld [vmem:[#allocation2 + $0x168] sm:$0x7f]
        %v4536 = vrot.slane %v4440, 7
        %v4537 = vrot.slane %v4441, 7
        %v4538 = vrot.slane %v4442, 7
        %v4539 = vsel %vm1339, %v4536, %v4538
        %v4540 = vrot.slane %v4443, 7
        %v4541 = vsel %vm1339, %v4537, %v4540
        %v4542 = vrot.slane %v4444, 7
        %v4543 = vrot.slane %v4445, 7
        %v4544 = vrot.slane %v4446, 7
        %v4545 = vsel %vm1339, %v4542, %v4544
        %v4546 = vrot.slane %v4447, 7
        %v4547 = vsel %vm1339, %v4543, %v4546
        %v4548 = vrot.slane %v4448, 7
        %v4549 = vrot.slane %v4449, 7
        %v4550 = vrot.slane %v4450, 7
        %v4551 = vsel %vm1339, %v4548, %v4550
        %v4552 = vrot.slane %v4451, 7
        %v4553 = vsel %vm1339, %v4549, %v4552
        %v4554 = vrot.slane %v4452, 7
        %v4555 = vrot.slane %v4453, 7
        %v4556 = vrot.slane %v4454, 7
        %v4557 = vsel %vm1339, %v4554, %v4556
        %v4558 = vrot.slane %v4455, 7
        %v4559 = vsel %vm1339, %v4555, %v4558
        %v4560 = vrot.slane %v4456, 7
        %v4561 = vrot.slane %v4457, 7
        %v4562 = vrot.slane %v4458, 7
        %v4563 = vsel %vm1339, %v4560, %v4562
        %v4564 = vrot.slane %v4459, 7
        %v4565 = vsel %vm1339, %v4561, %v4564
        %v4566 = vrot.slane %v4460, 7
        %v4567 = vrot.slane %v4461, 7
        %v4568 = vrot.slane %v4462, 7
        %v4569 = vsel %vm1339, %v4566, %v4568
        %v4570 = vrot.slane %v4463, 7
        %v4571 = vsel %vm1339, %v4567, %v4570
        %v4572 = vrot.slane %v4464, 7
        %v4573 = vrot.slane %v4465, 7
        %v4574 = vrot.slane %v4466, 7
        %v4575 = vsel %vm1339, %v4572, %v4574
        %v4576 = vrot.slane %v4467, 7
        %v4577 = vsel %vm1339, %v4573, %v4576
        %v4578 = vrot.slane %v4468, 7
        %v4579 = vrot.slane %v4469, 7
        %v4580 = vrot.slane %v4470, 7
        %v4581 = vsel %vm1339, %v4578, %v4580
        %v4582 = vrot.slane %v4471, 7
        %v4583 = vsel %vm1339, %v4579, %v4582
        %v4616 = vmax.f32 %v4472, %v4536
        %v4617 = vmax.f32 %v4473, %v4537
        %v4618 = vmax.f32 %v4474, %v4539
        %v4619 = vmax.f32 %v4475, %v4541
        %v4620 = vmax.f32 %v4476, %v4542
        %v4621 = vmax.f32 %v4477, %v4543
        %v4622 = vmax.f32 %v4478, %v4545
        %v4623 = vmax.f32 %v4479, %v4547
        %v4624 = vmax.f32 %v4480, %v4548
        %v4625 = vmax.f32 %v4481, %v4549
        %v4626 = vmax.f32 %v4482, %v4551
        %v4627 = vmax.f32 %v4483, %v4553
        %v4628 = vmax.f32 %v4484, %v4554
        %v4629 = vmax.f32 %v4485, %v4555
        %v4630 = vmax.f32 %v4486, %v4557
        %v4631 = vmax.f32 %v4487, %v4559
        %v4632 = vmax.f32 %v4488, %v4560
        %v4633 = vmax.f32 %v4489, %v4561
        %v4634 = vmax.f32 %v4490, %v4563
        %v4635 = vmax.f32 %v4491, %v4565
        %v4636 = vmax.f32 %v4492, %v4566
        %v4637 = vmax.f32 %v4493, %v4567
        %v4638 = vmax.f32 %v4494, %v4569
        %v4639 = vmax.f32 %v4495, %v4571
        %v4640 = vmax.f32 %v4496, %v4572
        %v4641 = vmax.f32 %v4497, %v4573
        %v4642 = vmax.f32 %v4498, %v4575
        %v4643 = vmax.f32 %v4499, %v4577
        %v4644 = vmax.f32 %v4500, %v4578
        %v4645 = vmax.f32 %v4501, %v4579
        %v4646 = vmax.f32 %v4502, %v4581
        %v4647 = vmax.f32 %v4503, %v4583
        %4648 = vst [vmem:[#allocation2] sm:$0xfe] %v4616
        %4649 = vst [vmem:[#allocation2 + $0x8] sm:$0xfe] %v4617
        %4650 = vst [vmem:[#allocation2 + $0x10] sm:$0x7f] %v4618
        %4651 = vst [vmem:[#allocation2 + $0x18] sm:$0x7f] %v4619
        %4652 = vst [vmem:[#allocation2 + $0x30] sm:$0xfe] %v4620
        %4653 = vst [vmem:[#allocation2 + $0x38] sm:$0xfe] %v4621
        %4654 = vst [vmem:[#allocation2 + $0x40] sm:$0x7f] %v4622
        %4655 = vst [vmem:[#allocation2 + $0x48] sm:$0x7f] %v4623
        %4656 = vst [vmem:[#allocation2 + $0x60] sm:$0xfe] %v4624
        %4657 = vst [vmem:[#allocation2 + $0x68] sm:$0xfe] %v4625
        %4658 = vst [vmem:[#allocation2 + $0x70] sm:$0x7f] %v4626
        %4659 = vst [vmem:[#allocation2 + $0x78] sm:$0x7f] %v4627
        %4660 = vst [vmem:[#allocation2 + $0x90] sm:$0xfe] %v4628
        %4661 = vst [vmem:[#allocation2 + $0x98] sm:$0xfe] %v4629
        %4662 = vst [vmem:[#allocation2 + $0xa0] sm:$0x7f] %v4630
        %4663 = vst [vmem:[#allocation2 + $0xa8] sm:$0x7f] %v4631
        %4664 = vst [vmem:[#allocation2 + $0xc0] sm:$0xfe] %v4632
        %4665 = vst [vmem:[#allocation2 + $0xc8] sm:$0xfe] %v4633
        %4666 = vst [vmem:[#allocation2 + $0xd0] sm:$0x7f] %v4634
        %4667 = vst [vmem:[#allocation2 + $0xd8] sm:$0x7f] %v4635
        %4668 = vst [vmem:[#allocation2 + $0xf0] sm:$0xfe] %v4636
        %4669 = vst [vmem:[#allocation2 + $0xf8] sm:$0xfe] %v4637
        %4670 = vst [vmem:[#allocation2 + $0x100] sm:$0x7f] %v4638
        %4671 = vst [vmem:[#allocation2 + $0x108] sm:$0x7f] %v4639
        %4672 = vst [vmem:[#allocation2 + $0x120] sm:$0xfe] %v4640
        %4673 = vst [vmem:[#allocation2 + $0x128] sm:$0xfe] %v4641
        %4674 = vst [vmem:[#allocation2 + $0x130] sm:$0x7f] %v4642
        %4675 = vst [vmem:[#allocation2 + $0x138] sm:$0x7f] %v4643
        %4676 = vst [vmem:[#allocation2 + $0x150] sm:$0xfe] %v4644
        %4677 = vst [vmem:[#allocation2 + $0x158] sm:$0xfe] %v4645
        %4678 = vst [vmem:[#allocation2 + $0x160] sm:$0x7f] %v4646
        %4679 = vst [vmem:[#allocation2 + $0x168] sm:$0x7f] %v4647
        %v4680 = vld [vmem:[#allocation2] sm:$0xff]
        %v4681 = vld [vmem:[#allocation2 + $0x8] sm:$0xff]
        %v4682 = vld [vmem:[#allocation2 + $0x10] sm:$0xff]
        %v4683 = vld [vmem:[#allocation2 + $0x18] sm:$0xff]
        %v4684 = vld [vmem:[#allocation2 + $0x30] sm:$0xff]
        %v4685 = vld [vmem:[#allocation2 + $0x38] sm:$0xff]
        %v4686 = vld [vmem:[#allocation2 + $0x40] sm:$0xff]
        %v4687 = vld [vmem:[#allocation2 + $0x48] sm:$0xff]
        %v4688 = vld [vmem:[#allocation2 + $0x60] sm:$0xff]
        %v4689 = vld [vmem:[#allocation2 + $0x68] sm:$0xff]
        %v4690 = vld [vmem:[#allocation2 + $0x70] sm:$0xff]
        %v4691 = vld [vmem:[#allocation2 + $0x78] sm:$0xff]
        %v4692 = vld [vmem:[#allocation2 + $0x90] sm:$0xff]
        %v4693 = vld [vmem:[#allocation2 + $0x98] sm:$0xff]
        %v4694 = vld [vmem:[#allocation2 + $0xa0] sm:$0xff]
        %v4695 = vld [vmem:[#allocation2 + $0xa8] sm:$0xff]
        %v4696 = vld [vmem:[#allocation2 + $0xc0] sm:$0xff]
        %v4697 = vld [vmem:[#allocation2 + $0xc8] sm:$0xff]
        %v4698 = vld [vmem:[#allocation2 + $0xd0] sm:$0xff]
        %v4699 = vld [vmem:[#allocation2 + $0xd8] sm:$0xff]
        %v4700 = vld [vmem:[#allocation2 + $0xf0] sm:$0xff]
        %v4701 = vld [vmem:[#allocation2 + $0xf8] sm:$0xff]
        %v4702 = vld [vmem:[#allocation2 + $0x100] sm:$0xff]
        %v4703 = vld [vmem:[#allocation2 + $0x108] sm:$0xff]
        %v4704 = vld [vmem:[#allocation2 + $0x120] sm:$0xff]
        %v4705 = vld [vmem:[#allocation2 + $0x128] sm:$0xff]
        %v4706 = vld [vmem:[#allocation2 + $0x130] sm:$0xff]
        %v4707 = vld [vmem:[#allocation2 + $0x138] sm:$0xff]
        %v4708 = vld [vmem:[#allocation2 + $0x150] sm:$0xff]
        %v4709 = vld [vmem:[#allocation2 + $0x158] sm:$0xff]
        %v4710 = vld [vmem:[#allocation2 + $0x160] sm:$0xff]
        %v4711 = vld [vmem:[#allocation2 + $0x168] sm:$0xff]
        %v4712 = vld [vmem:[%s3] sm:$0xff]
        %v4713 = vld [vmem:[%s3 + $0x8] sm:$0xff]
        %v4714 = vld [vmem:[%s3 + $0x10] sm:$0xff]
        %v4715 = vld [vmem:[%s3 + $0x18] sm:$0xff]
        %v4716 = vld [vmem:[%s3 + $0x20] sm:$0xff]
        %v4717 = vld [vmem:[%s3 + $0x28] sm:$0xff]
        %v4718 = vld [vmem:[%s3 + $0x30] sm:$0xff]
        %v4719 = vld [vmem:[%s3 + $0x38] sm:$0xff]
        %v4720 = vld [vmem:[%s3 + $0x40] sm:$0xff]
        %v4721 = vld [vmem:[%s3 + $0x48] sm:$0xff]
        %v4722 = vld [vmem:[%s3 + $0x50] sm:$0xff]
        %v4723 = vld [vmem:[%s3 + $0x58] sm:$0xff]
        %v4724 = vld [vmem:[%s3 + $0x60] sm:$0xff]
        %v4725 = vld [vmem:[%s3 + $0x68] sm:$0xff]
        %v4726 = vld [vmem:[%s3 + $0x70] sm:$0xff]
        %v4727 = vld [vmem:[%s3 + $0x78] sm:$0xff]
        %v4728 = vld [vmem:[%s3 + $0x80] sm:$0xff]
        %v4729 = vld [vmem:[%s3 + $0x88] sm:$0xff]
        %v4730 = vld [vmem:[%s3 + $0x90] sm:$0xff]
        %v4731 = vld [vmem:[%s3 + $0x98] sm:$0xff]
        %v4732 = vld [vmem:[%s3 + $0xa0] sm:$0xff]
        %v4733 = vld [vmem:[%s3 + $0xa8] sm:$0xff]
        %v4734 = vld [vmem:[%s3 + $0xb0] sm:$0xff]
        %v4735 = vld [vmem:[%s3 + $0xb8] sm:$0xff]
        %v4736 = vld [vmem:[%s3 + $0xc0] sm:$0xff]
        %v4737 = vld [vmem:[%s3 + $0xc8] sm:$0xff]
        %v4738 = vld [vmem:[%s3 + $0xd0] sm:$0xff]
        %v4739 = vld [vmem:[%s3 + $0xd8] sm:$0xff]
        %v4740 = vld [vmem:[%s3 + $0xe0] sm:$0xff]
        %v4741 = vld [vmem:[%s3 + $0xe8] sm:$0xff]
        %v4742 = vld [vmem:[%s3 + $0xf0] sm:$0xff]
        %v4743 = vld [vmem:[%s3 + $0xf8] sm:$0xff]
        %v4744 = vld [vmem:[%s3 + $0x100] sm:$0xff]
        %v4745 = vld [vmem:[%s3 + $0x108] sm:$0xff]
        %v4746 = vld [vmem:[%s3 + $0x110] sm:$0xff]
        %v4747 = vld [vmem:[%s3 + $0x118] sm:$0xff]
        %v4748 = vld [vmem:[%s3 + $0x120] sm:$0xff]
        %v4749 = vld [vmem:[%s3 + $0x128] sm:$0xff]
        %v4750 = vld [vmem:[%s3 + $0x130] sm:$0xff]
        %v4751 = vld [vmem:[%s3 + $0x138] sm:$0xff]
        %v4752 = vld [vmem:[%s3 + $0x140] sm:$0xff]
        %v4753 = vld [vmem:[%s3 + $0x148] sm:$0xff]
        %v4754 = vld [vmem:[%s3 + $0x150] sm:$0xff]
        %v4755 = vld [vmem:[%s3 + $0x158] sm:$0xff]
        %v4756 = vld [vmem:[%s3 + $0x160] sm:$0xff]
        %v4757 = vld [vmem:[%s3 + $0x168] sm:$0xff]
        %v4758 = vld [vmem:[%s3 + $0x170] sm:$0xff]
        %v4759 = vld [vmem:[%s3 + $0x178] sm:$0xff]
        %v4760 = vld [vmem:[%s3 + $0x180] sm:$0xff]
        %v4761 = vld [vmem:[%s3 + $0x188] sm:$0xff]
        %v4762 = vld [vmem:[%s3 + $0x190] sm:$0xff]
        %v4763 = vld [vmem:[%s3 + $0x198] sm:$0xff]
        %v4764 = vld [vmem:[%s3 + $0x1a0] sm:$0xff]
        %v4765 = vld [vmem:[%s3 + $0x1a8] sm:$0xff]
        %v4766 = vld [vmem:[%s3 + $0x1b0] sm:$0xff]
        %v4767 = vld [vmem:[%s3 + $0x1b8] sm:$0xff]
        %v4768 = vld [vmem:[%s3 + $0x1c0] sm:$0xff]
        %v4769 = vld [vmem:[%s3 + $0x1c8] sm:$0xff]
        %v4770 = vld [vmem:[%s3 + $0x1d0] sm:$0xff]
        %v4771 = vld [vmem:[%s3 + $0x1d8] sm:$0xff]
        %v4772 = vld [vmem:[%s3 + $0x1e0] sm:$0xff]
        %v4773 = vld [vmem:[%s3 + $0x1e8] sm:$0xff]
        %v4774 = vld [vmem:[%s3 + $0x1f0] sm:$0xff]
        %v4775 = vld [vmem:[%s3 + $0x1f8] sm:$0xff]
        %v4776 = vld [vmem:[#allocation2] sm:$0xfe]
        %v4777 = vld [vmem:[#allocation2 + $0x8] sm:$0xfe]
        %v4778 = vld [vmem:[#allocation2 + $0x20] sm:$0x1]
        %v4779 = vld [vmem:[#allocation2 + $0x28] sm:$0x1]
        %v4780 = vld [vmem:[#allocation2 + $0x30] sm:$0xfe]
        %v4781 = vld [vmem:[#allocation2 + $0x38] sm:$0xfe]
        %v4782 = vld [vmem:[#allocation2 + $0x50] sm:$0x1]
        %v4783 = vld [vmem:[#allocation2 + $0x58] sm:$0x1]
        %v4784 = vld [vmem:[#allocation2 + $0x60] sm:$0xfe]
        %v4785 = vld [vmem:[#allocation2 + $0x68] sm:$0xfe]
        %v4786 = vld [vmem:[#allocation2 + $0x80] sm:$0x1]
        %v4787 = vld [vmem:[#allocation2 + $0x88] sm:$0x1]
        %v4788 = vld [vmem:[#allocation2 + $0x90] sm:$0xfe]
        %v4789 = vld [vmem:[#allocation2 + $0x98] sm:$0xfe]
        %v4790 = vld [vmem:[#allocation2 + $0xb0] sm:$0x1]
        %v4791 = vld [vmem:[#allocation2 + $0xb8] sm:$0x1]
        %v4792 = vld [vmem:[#allocation2 + $0xc0] sm:$0xfe]
        %v4793 = vld [vmem:[#allocation2 + $0xc8] sm:$0xfe]
        %v4794 = vld [vmem:[#allocation2 + $0xe0] sm:$0x1]
        %v4795 = vld [vmem:[#allocation2 + $0xe8] sm:$0x1]
        %v4796 = vld [vmem:[#allocation2 + $0xf0] sm:$0xfe]
        %v4797 = vld [vmem:[#allocation2 + $0xf8] sm:$0xfe]
        %v4798 = vld [vmem:[#allocation2 + $0x110] sm:$0x1]
        %v4799 = vld [vmem:[#allocation2 + $0x118] sm:$0x1]
        %v4800 = vld [vmem:[#allocation2 + $0x120] sm:$0xfe]
        %v4801 = vld [vmem:[#allocation2 + $0x128] sm:$0xfe]
        %v4802 = vld [vmem:[#allocation2 + $0x140] sm:$0x1]
        %v4803 = vld [vmem:[#allocation2 + $0x148] sm:$0x1]
        %v4804 = vld [vmem:[#allocation2 + $0x150] sm:$0xfe]
        %v4805 = vld [vmem:[#allocation2 + $0x158] sm:$0xfe]
        %v4806 = vld [vmem:[#allocation2 + $0x170] sm:$0x1]
        %v4807 = vld [vmem:[#allocation2 + $0x178] sm:$0x1]
        %vm4856 = vcmask 1046528
        %v4857 = vrot.slane %v4776, 1
        %v4858 = vrot.slane %v4682, 1
        %v4859 = vsel %vm4856, %v4857, %v4858
        %v4860 = vrot.slane %v4777, 1
        %v4861 = vrot.slane %v4683, 1
        %v4862 = vsel %vm4856, %v4860, %v4861
        %v4863 = vrot.slane %v4778, 1
        %v4864 = vsel %vm4856, %v4858, %v4863
        %v4865 = vrot.slane %v4779, 1
        %v4866 = vsel %vm4856, %v4861, %v4865
        %v4867 = vrot.slane %v4780, 1
        %v4868 = vrot.slane %v4686, 1
        %v4869 = vsel %vm4856, %v4867, %v4868
        %v4870 = vrot.slane %v4781, 1
        %v4871 = vrot.slane %v4687, 1
        %v4872 = vsel %vm4856, %v4870, %v4871
        %v4873 = vrot.slane %v4782, 1
        %v4874 = vsel %vm4856, %v4868, %v4873
        %v4875 = vrot.slane %v4783, 1
        %v4876 = vsel %vm4856, %v4871, %v4875
        %v4877 = vrot.slane %v4784, 1
        %v4878 = vrot.slane %v4690, 1
        %v4879 = vsel %vm4856, %v4877, %v4878
        %v4880 = vrot.slane %v4785, 1
        %v4881 = vrot.slane %v4691, 1
        %v4882 = vsel %vm4856, %v4880, %v4881
        %v4883 = vrot.slane %v4786, 1
        %v4884 = vsel %vm4856, %v4878, %v4883
        %v4885 = vrot.slane %v4787, 1
        %v4886 = vsel %vm4856, %v4881, %v4885
        %v4887 = vrot.slane %v4788, 1
        %v4888 = vrot.slane %v4694, 1
        %v4889 = vsel %vm4856, %v4887, %v4888
        %v4890 = vrot.slane %v4789, 1
        %v4891 = vrot.slane %v4695, 1
        %v4892 = vsel %vm4856, %v4890, %v4891
        %v4893 = vrot.slane %v4790, 1
        %v4894 = vsel %vm4856, %v4888, %v4893
        %v4895 = vrot.slane %v4791, 1
        %v4896 = vsel %vm4856, %v4891, %v4895
        %v4897 = vrot.slane %v4792, 1
        %v4898 = vrot.slane %v4698, 1
        %v4899 = vsel %vm4856, %v4897, %v4898
        %v4900 = vrot.slane %v4793, 1
        %v4901 = vrot.slane %v4699, 1
        %v4902 = vsel %vm4856, %v4900, %v4901
        %v4903 = vrot.slane %v4794, 1
        %v4904 = vsel %vm4856, %v4898, %v4903
        %v4905 = vrot.slane %v4795, 1
        %v4906 = vsel %vm4856, %v4901, %v4905
        %v4907 = vrot.slane %v4796, 1
        %v4908 = vrot.slane %v4702, 1
        %v4909 = vsel %vm4856, %v4907, %v4908
        %v4910 = vrot.slane %v4797, 1
        %v4911 = vrot.slane %v4703, 1
        %v4912 = vsel %vm4856, %v4910, %v4911
        %v4913 = vrot.slane %v4798, 1
        %v4914 = vsel %vm4856, %v4908, %v4913
        %v4915 = vrot.slane %v4799, 1
        %v4916 = vsel %vm4856, %v4911, %v4915
        %v4917 = vrot.slane %v4800, 1
        %v4918 = vrot.slane %v4706, 1
        %v4919 = vsel %vm4856, %v4917, %v4918
        %v4920 = vrot.slane %v4801, 1
        %v4921 = vrot.slane %v4707, 1
        %v4922 = vsel %vm4856, %v4920, %v4921
        %v4923 = vrot.slane %v4802, 1
        %v4924 = vsel %vm4856, %v4918, %v4923
        %v4925 = vrot.slane %v4803, 1
        %v4926 = vsel %vm4856, %v4921, %v4925
        %v4927 = vrot.slane %v4804, 1
        %v4928 = vrot.slane %v4710, 1
        %v4929 = vsel %vm4856, %v4927, %v4928
        %v4930 = vrot.slane %v4805, 1
        %v4931 = vrot.slane %v4711, 1
        %v4932 = vsel %vm4856, %v4930, %v4931
        %v4933 = vrot.slane %v4806, 1
        %v4934 = vsel %vm4856, %v4928, %v4933
        %v4935 = vrot.slane %v4807, 1
        %v4936 = vsel %vm4856, %v4931, %v4935
        %s4969 = scalar_lea.vmem %s3, 512
        %v4970 = vld [vmem:[%s4969] sm:$0xff]
        %v4971 = vld [vmem:[%s4969 + $0x8] sm:$0xff]
        %v4972 = vld [vmem:[%s4969 + $0x10] sm:$0xff]
        %v4973 = vld [vmem:[%s4969 + $0x18] sm:$0xff]
        %v4974 = vld [vmem:[%s4969 + $0x20] sm:$0xff]
        %v4975 = vld [vmem:[%s4969 + $0x28] sm:$0xff]
        %v4976 = vld [vmem:[%s4969 + $0x30] sm:$0xff]
        %v4977 = vld [vmem:[%s4969 + $0x38] sm:$0xff]
        %v4978 = vld [vmem:[%s4969 + $0x40] sm:$0xff]
        %v4979 = vld [vmem:[%s4969 + $0x48] sm:$0xff]
        %v4980 = vld [vmem:[%s4969 + $0x50] sm:$0xff]
        %v4981 = vld [vmem:[%s4969 + $0x58] sm:$0xff]
        %v4982 = vld [vmem:[%s4969 + $0x60] sm:$0xff]
        %v4983 = vld [vmem:[%s4969 + $0x68] sm:$0xff]
        %v4984 = vld [vmem:[%s4969 + $0x70] sm:$0xff]
        %v4985 = vld [vmem:[%s4969 + $0x78] sm:$0xff]
        %v4986 = vld [vmem:[%s4969 + $0x80] sm:$0xff]
        %v4987 = vld [vmem:[%s4969 + $0x88] sm:$0xff]
        %v4988 = vld [vmem:[%s4969 + $0x90] sm:$0xff]
        %v4989 = vld [vmem:[%s4969 + $0x98] sm:$0xff]
        %v4990 = vld [vmem:[%s4969 + $0xa0] sm:$0xff]
        %v4991 = vld [vmem:[%s4969 + $0xa8] sm:$0xff]
        %v4992 = vld [vmem:[%s4969 + $0xb0] sm:$0xff]
        %v4993 = vld [vmem:[%s4969 + $0xb8] sm:$0xff]
        %v4994 = vld [vmem:[%s4969 + $0xc0] sm:$0xff]
        %v4995 = vld [vmem:[%s4969 + $0xc8] sm:$0xff]
        %v4996 = vld [vmem:[%s4969 + $0xd0] sm:$0xff]
        %v4997 = vld [vmem:[%s4969 + $0xd8] sm:$0xff]
        %v4998 = vld [vmem:[%s4969 + $0xe0] sm:$0xff]
        %v4999 = vld [vmem:[%s4969 + $0xe8] sm:$0xff]
        %v5000 = vld [vmem:[%s4969 + $0xf0] sm:$0xff]
        %v5001 = vld [vmem:[%s4969 + $0xf8] sm:$0xff]
        %v5002 = vld [vmem:[%s4969 + $0x100] sm:$0xff]
        %v5003 = vld [vmem:[%s4969 + $0x108] sm:$0xff]
        %v5004 = vld [vmem:[%s4969 + $0x110] sm:$0xff]
        %v5005 = vld [vmem:[%s4969 + $0x118] sm:$0xff]
        %v5006 = vld [vmem:[%s4969 + $0x120] sm:$0xff]
        %v5007 = vld [vmem:[%s4969 + $0x128] sm:$0xff]
        %v5008 = vld [vmem:[%s4969 + $0x130] sm:$0xff]
        %v5009 = vld [vmem:[%s4969 + $0x138] sm:$0xff]
        %v5010 = vld [vmem:[%s4969 + $0x140] sm:$0xff]
        %v5011 = vld [vmem:[%s4969 + $0x148] sm:$0xff]
        %v5012 = vld [vmem:[%s4969 + $0x150] sm:$0xff]
        %v5013 = vld [vmem:[%s4969 + $0x158] sm:$0xff]
        %v5014 = vld [vmem:[%s4969 + $0x160] sm:$0xff]
        %v5015 = vld [vmem:[%s4969 + $0x168] sm:$0xff]
        %v5016 = vld [vmem:[%s4969 + $0x170] sm:$0xff]
        %v5017 = vld [vmem:[%s4969 + $0x178] sm:$0xff]
        %v5018 = vld [vmem:[%s4969 + $0x180] sm:$0xff]
        %v5019 = vld [vmem:[%s4969 + $0x188] sm:$0xff]
        %v5020 = vld [vmem:[%s4969 + $0x190] sm:$0xff]
        %v5021 = vld [vmem:[%s4969 + $0x198] sm:$0xff]
        %v5022 = vld [vmem:[%s4969 + $0x1a0] sm:$0xff]
        %v5023 = vld [vmem:[%s4969 + $0x1a8] sm:$0xff]
        %v5024 = vld [vmem:[%s4969 + $0x1b0] sm:$0xff]
        %v5025 = vld [vmem:[%s4969 + $0x1b8] sm:$0xff]
        %v5026 = vld [vmem:[%s4969 + $0x1c0] sm:$0xff]
        %v5027 = vld [vmem:[%s4969 + $0x1c8] sm:$0xff]
        %v5028 = vld [vmem:[%s4969 + $0x1d0] sm:$0xff]
        %v5029 = vld [vmem:[%s4969 + $0x1d8] sm:$0xff]
        %v5030 = vld [vmem:[%s4969 + $0x1e0] sm:$0xff]
        %v5031 = vld [vmem:[%s4969 + $0x1e8] sm:$0xff]
        %v5032 = vld [vmem:[%s4969 + $0x1f0] sm:$0xff]
        %v5033 = vld [vmem:[%s4969 + $0x1f8] sm:$0xff]
        %5034 = vmatprep.subr.mxu0 %v4971
        %5035 = vmatpush1.msra.mxu0 %v4970
        %5036 = vmatprep.subr.mxu0 %v4973
        %5037 = vmatpush1.msra.mxu0 %v4972
        %5038 = vmatprep.subr.mxu0 %v4975
        %5039 = vmatpush1.msra.mxu0 %v4974
        %5040 = vmatprep.subr.mxu0 %v4977
        %5041 = vmatpush1.msra.mxu0 %v4976
        %5042 = vmatprep.subr.mxu0 %v4979
        %5043 = vmatpush1.msra.mxu0 %v4978
        %5044 = vmatprep.subr.mxu0 %v4981
        %5045 = vmatpush1.msra.mxu0 %v4980
        %5046 = vmatprep.subr.mxu0 %v4983
        %5047 = vmatpush1.msra.mxu0 %v4982
        %5048 = vmatprep.subr.mxu0 %v4985
        %5049 = vmatpush1.msra.mxu0 %v4984
        %5050 = vmatprep.subr.mxu0 %v4987
        %5051 = vmatpush1.msra.mxu0 %v4986
        %5052 = vmatprep.subr.mxu0 %v4989
        %5053 = vmatpush1.msra.mxu0 %v4988
        %5054 = vmatprep.subr.mxu0 %v4991
        %5055 = vmatpush1.msra.mxu0 %v4990
        %5056 = vmatprep.subr.mxu0 %v4993
        %5057 = vmatpush1.msra.mxu0 %v4992
        %5058 = vmatprep.subr.mxu0 %v4995
        %5059 = vmatpush1.msra.mxu0 %v4994
        %5060 = vmatprep.subr.mxu0 %v4997
        %5061 = vmatpush1.msra.mxu0 %v4996
        %5062 = vmatprep.subr.mxu0 %v4999
        %5063 = vmatpush1.msra.mxu0 %v4998
        %5064 = vmatprep.subr.mxu0 %v5001
        %5065 = vmatpush1.msra.mxu0 %v5000
        %5066 = vmatprep.subr.mxu0 %v5003
        %5067 = vmatpush1.msra.mxu0 %v5002
        %5068 = vmatprep.subr.mxu0 %v5005
        %5069 = vmatpush1.msra.mxu0 %v5004
        %5070 = vmatprep.subr.mxu0 %v5007
        %5071 = vmatpush1.msra.mxu0 %v5006
        %5072 = vmatprep.subr.mxu0 %v5009
        %5073 = vmatpush1.msra.mxu0 %v5008
        %5074 = vmatprep.subr.mxu0 %v5011
        %5075 = vmatpush1.msra.mxu0 %v5010
        %5076 = vmatprep.subr.mxu0 %v5013
        %5077 = vmatpush1.msra.mxu0 %v5012
        %5078 = vmatprep.subr.mxu0 %v5015
        %5079 = vmatpush1.msra.mxu0 %v5014
        %5080 = vmatprep.subr.mxu0 %v5017
        %5081 = vmatpush1.msra.mxu0 %v5016
        %5082 = vmatprep.subr.mxu0 %v5019
        %5083 = vmatpush1.msra.mxu0 %v5018
        %5084 = vmatprep.subr.mxu0 %v5021
        %5085 = vmatpush1.msra.mxu0 %v5020
        %5086 = vmatprep.subr.mxu0 %v5023
        %5087 = vmatpush1.msra.mxu0 %v5022
        %5088 = vmatprep.subr.mxu0 %v5025
        %5089 = vmatpush1.msra.mxu0 %v5024
        %5090 = vmatprep.subr.mxu0 %v5027
        %5091 = vmatpush1.msra.mxu0 %v5026
        %5092 = vmatprep.subr.mxu0 %v5029
        %5093 = vmatpush1.msra.mxu0 %v5028
        %5094 = vmatprep.subr.mxu0 %v5031
        %5095 = vmatpush1.msra.mxu0 %v5030
        %5096 = vmatprep.subr.mxu0 %v5033
        %5097 = vmatpush1.msra.mxu0 %v5032
        %5098 = vmatprep.mubr.f32.mxu0 %v4862
        %5099 = vmatmul.mubr.f32.gmra.mrb[0].mxu0 %v4859
        %v5100 = vpop.f32.mrb[0].mxu0
        %v5101 = vadd.f32 0.0, %v5100
        %v5102 = vpop.f32.mrb[0].mxu0
        %v5103 = vadd.f32 0.0, %v5102
        %5104 = vmatprep.mubr.f32.mxu0 %v4866
        %5105 = vmatmul.mubr.f32.gmra.mrb[0].mxu0 %v4864
        %v5106 = vpop.f32.mrb[0].mxu0
        %v5107 = vadd.f32 0.0, %v5106
        %v5108 = vpop.f32.mrb[0].mxu0
        %v5109 = vadd.f32 0.0, %v5108
        %5110 = vmatprep.mubr.f32.mxu0 %v4872
        %5111 = vmatmul.mubr.f32.gmra.mrb[0].mxu0 %v4869
        %v5112 = vpop.f32.mrb[0].mxu0
        %v5113 = vadd.f32 0.0, %v5112
        %v5114 = vpop.f32.mrb[0].mxu0
        %v5115 = vadd.f32 0.0, %v5114
        %5116 = vmatprep.mubr.f32.mxu0 %v4876
        %5117 = vmatmul.mubr.f32.gmra.mrb[0].mxu0 %v4874
        %v5118 = vpop.f32.mrb[0].mxu0
        %v5119 = vadd.f32 0.0, %v5118
        %v5120 = vpop.f32.mrb[0].mxu0
        %v5121 = vadd.f32 0.0, %v5120
        %5122 = vmatprep.mubr.f32.mxu0 %v4882
        %5123 = vmatmul.mubr.f32.gmra.mrb[0].mxu0 %v4879
        %v5124 = vpop.f32.mrb[0].mxu0
        %v5125 = vadd.f32 0.0, %v5124
        %v5126 = vpop.f32.mrb[0].mxu0
        %v5127 = vadd.f32 0.0, %v5126
        %5128 = vmatprep.mubr.f32.mxu0 %v4886
        %5129 = vmatmul.mubr.f32.gmra.mrb[0].mxu0 %v4884
        %v5130 = vpop.f32.mrb[0].mxu0
        %v5131 = vadd.f32 0.0, %v5130
        %v5132 = vpop.f32.mrb[0].mxu0
        %v5133 = vadd.f32 0.0, %v5132
        %5134 = vmatprep.mubr.f32.mxu0 %v4892
        %5135 = vmatmul.mubr.f32.gmra.mrb[0].mxu0 %v4889
        %v5136 = vpop.f32.mrb[0].mxu0
        %v5137 = vadd.f32 0.0, %v5136
        %v5138 = vpop.f32.mrb[0].mxu0
        %v5139 = vadd.f32 0.0, %v5138
        %5140 = vmatprep.mubr.f32.mxu0 %v4896
        %5141 = vmatmul.mubr.f32.gmra.mrb[0].mxu0 %v4894
        %v5142 = vpop.f32.mrb[0].mxu0
        %v5143 = vadd.f32 0.0, %v5142
        %v5144 = vpop.f32.mrb[0].mxu0
        %v5145 = vadd.f32 0.0, %v5144
        %5146 = vmatprep.mubr.f32.mxu0 %v4902
        %5147 = vmatmul.mubr.f32.gmra.mrb[0].mxu0 %v4899
        %v5148 = vpop.f32.mrb[0].mxu0
        %v5149 = vadd.f32 0.0, %v5148
        %v5150 = vpop.f32.mrb[0].mxu0
        %v5151 = vadd.f32 0.0, %v5150
        %5152 = vmatprep.mubr.f32.mxu0 %v4906
        %5153 = vmatmul.mubr.f32.gmra.mrb[0].mxu0 %v4904
        %v5154 = vpop.f32.mrb[0].mxu0
        %v5155 = vadd.f32 0.0, %v5154
        %v5156 = vpop.f32.mrb[0].mxu0
        %v5157 = vadd.f32 0.0, %v5156
        %5158 = vmatprep.mubr.f32.mxu0 %v4912
        %5159 = vmatmul.mubr.f32.gmra.mrb[0].mxu0 %v4909
        %v5160 = vpop.f32.mrb[0].mxu0
        %v5161 = vadd.f32 0.0, %v5160
        %v5162 = vpop.f32.mrb[0].mxu0
        %v5163 = vadd.f32 0.0, %v5162
        %5164 = vmatprep.mubr.f32.mxu0 %v4916
        %5165 = vmatmul.mubr.f32.gmra.mrb[0].mxu0 %v4914
        %v5166 = vpop.f32.mrb[0].mxu0
        %v5167 = vadd.f32 0.0, %v5166
        %v5168 = vpop.f32.mrb[0].mxu0
        %v5169 = vadd.f32 0.0, %v5168
        %5170 = vmatprep.mubr.f32.mxu0 %v4922
        %5171 = vmatmul.mubr.f32.gmra.mrb[0].mxu0 %v4919
        %v5172 = vpop.f32.mrb[0].mxu0
        %v5173 = vadd.f32 0.0, %v5172
        %v5174 = vpop.f32.mrb[0].mxu0
        %v5175 = vadd.f32 0.0, %v5174
        %5176 = vmatprep.mubr.f32.mxu0 %v4926
        %5177 = vmatmul.mubr.f32.gmra.mrb[0].mxu0 %v4924
        %v5178 = vpop.f32.mrb[0].mxu0
        %v5179 = vadd.f32 0.0, %v5178
        %v5180 = vpop.f32.mrb[0].mxu0
        %v5181 = vadd.f32 0.0, %v5180
        %5182 = vmatprep.mubr.f32.mxu0 %v4932
        %5183 = vmatmul.mubr.f32.gmra.mrb[0].mxu0 %v4929
        %v5184 = vpop.f32.mrb[0].mxu0
        %v5185 = vadd.f32 0.0, %v5184
        %v5186 = vpop.f32.mrb[0].mxu0
        %v5187 = vadd.f32 0.0, %v5186
        %5188 = vmatprep.mubr.f32.mxu0 %v4936
        %5189 = vmatmul.mubr.f32.gmra.mrb[0].mxu0 %v4934
        %v5190 = vpop.f32.mrb[0].mxu0
        %v5191 = vadd.f32 0.0, %v5190
        %v5192 = vpop.f32.mrb[0].mxu0
        %v5193 = vadd.f32 0.0, %v5192
        %5194 = vdwg.mxu0
        %5195 = vmatprep.subr.mxu0 %v4713
        %5196 = vmatpush1.msra.mxu0 %v4712
        %5197 = vmatprep.subr.mxu0 %v4715
        %5198 = vmatpush1.msra.mxu0 %v4714
        %5199 = vmatprep.subr.mxu0 %v4717
        %5200 = vmatpush1.msra.mxu0 %v4716
        %5201 = vmatprep.subr.mxu0 %v4719
        %5202 = vmatpush1.msra.mxu0 %v4718
        %5203 = vmatprep.subr.mxu0 %v4721
        %5204 = vmatpush1.msra.mxu0 %v4720
        %5205 = vmatprep.subr.mxu0 %v4723
        %5206 = vmatpush1.msra.mxu0 %v4722
        %5207 = vmatprep.subr.mxu0 %v4725
        %5208 = vmatpush1.msra.mxu0 %v4724
        %5209 = vmatprep.subr.mxu0 %v4727
        %5210 = vmatpush1.msra.mxu0 %v4726
        %5211 = vmatprep.subr.mxu0 %v4729
        %5212 = vmatpush1.msra.mxu0 %v4728
        %5213 = vmatprep.subr.mxu0 %v4731
        %5214 = vmatpush1.msra.mxu0 %v4730
        %5215 = vmatprep.subr.mxu0 %v4733
        %5216 = vmatpush1.msra.mxu0 %v4732
        %5217 = vmatprep.subr.mxu0 %v4735
        %5218 = vmatpush1.msra.mxu0 %v4734
        %5219 = vmatprep.subr.mxu0 %v4737
        %5220 = vmatpush1.msra.mxu0 %v4736
        %5221 = vmatprep.subr.mxu0 %v4739
        %5222 = vmatpush1.msra.mxu0 %v4738
        %5223 = vmatprep.subr.mxu0 %v4741
        %5224 = vmatpush1.msra.mxu0 %v4740
        %5225 = vmatprep.subr.mxu0 %v4743
        %5226 = vmatpush1.msra.mxu0 %v4742
        %5227 = vmatprep.subr.mxu0 %v4745
        %5228 = vmatpush1.msra.mxu0 %v4744
        %5229 = vmatprep.subr.mxu0 %v4747
        %5230 = vmatpush1.msra.mxu0 %v4746
        %5231 = vmatprep.subr.mxu0 %v4749
        %5232 = vmatpush1.msra.mxu0 %v4748
        %5233 = vmatprep.subr.mxu0 %v4751
        %5234 = vmatpush1.msra.mxu0 %v4750
        %5235 = vmatprep.subr.mxu0 %v4753
        %5236 = vmatpush1.msra.mxu0 %v4752
        %5237 = vmatprep.subr.mxu0 %v4755
        %5238 = vmatpush1.msra.mxu0 %v4754
        %5239 = vmatprep.subr.mxu0 %v4757
        %5240 = vmatpush1.msra.mxu0 %v4756
        %5241 = vmatprep.subr.mxu0 %v4759
        %5242 = vmatpush1.msra.mxu0 %v4758
        %5243 = vmatprep.subr.mxu0 %v4761
        %5244 = vmatpush1.msra.mxu0 %v4760
        %5245 = vmatprep.subr.mxu0 %v4763
        %5246 = vmatpush1.msra.mxu0 %v4762
        %5247 = vmatprep.subr.mxu0 %v4765
        %5248 = vmatpush1.msra.mxu0 %v4764
        %5249 = vmatprep.subr.mxu0 %v4767
        %5250 = vmatpush1.msra.mxu0 %v4766
        %5251 = vmatprep.subr.mxu0 %v4769
        %5252 = vmatpush1.msra.mxu0 %v4768
        %5253 = vmatprep.subr.mxu0 %v4771
        %5254 = vmatpush1.msra.mxu0 %v4770
        %5255 = vmatprep.subr.mxu0 %v4773
        %5256 = vmatpush1.msra.mxu0 %v4772
        %5257 = vmatprep.subr.mxu0 %v4775
        %5258 = vmatpush1.msra.mxu0 %v4774
        %5259 = vmatprep.mubr.f32.mxu0 %v4681
        %5260 = vmatmul.mubr.f32.gmra.mrb[0].mxu0 %v4680
        %v5261 = vpop.f32.mrb[0].mxu0
        %v5262 = vadd.f32 %v5101, %v5261
        %v5263 = vpop.f32.mrb[0].mxu0
        %v5264 = vadd.f32 %v5103, %v5263
        %5265 = vmatprep.mubr.f32.mxu0 %v4683
        %5266 = vmatmul.mubr.f32.gmra.mrb[0].mxu0 %v4682
        %v5267 = vpop.f32.mrb[0].mxu0
        %v5268 = vadd.f32 %v5107, %v5267
        %v5269 = vpop.f32.mrb[0].mxu0
        %v5270 = vadd.f32 %v5109, %v5269
        %5271 = vmatprep.mubr.f32.mxu0 %v4685
        %5272 = vmatmul.mubr.f32.gmra.mrb[0].mxu0 %v4684
        %v5273 = vpop.f32.mrb[0].mxu0
        %v5274 = vadd.f32 %v5113, %v5273
        %v5275 = vpop.f32.mrb[0].mxu0
        %v5276 = vadd.f32 %v5115, %v5275
        %5277 = vmatprep.mubr.f32.mxu0 %v4687
        %5278 = vmatmul.mubr.f32.gmra.mrb[0].mxu0 %v4686
        %v5279 = vpop.f32.mrb[0].mxu0
        %v5280 = vadd.f32 %v5119, %v5279
        %v5281 = vpop.f32.mrb[0].mxu0
        %v5282 = vadd.f32 %v5121, %v5281
        %5283 = vmatprep.mubr.f32.mxu0 %v4689
        %5284 = vmatmul.mubr.f32.gmra.mrb[0].mxu0 %v4688
        %v5285 = vpop.f32.mrb[0].mxu0
        %v5286 = vadd.f32 %v5125, %v5285
        %v5287 = vpop.f32.mrb[0].mxu0
        %v5288 = vadd.f32 %v5127, %v5287
        %5289 = vmatprep.mubr.f32.mxu0 %v4691
        %5290 = vmatmul.mubr.f32.gmra.mrb[0].mxu0 %v4690
        %v5291 = vpop.f32.mrb[0].mxu0
        %v5292 = vadd.f32 %v5131, %v5291
        %v5293 = vpop.f32.mrb[0].mxu0
        %v5294 = vadd.f32 %v5133, %v5293
        %5295 = vmatprep.mubr.f32.mxu0 %v4693
        %5296 = vmatmul.mubr.f32.gmra.mrb[0].mxu0 %v4692
        %v5297 = vpop.f32.mrb[0].mxu0
        %v5298 = vadd.f32 %v5137, %v5297
        %v5299 = vpop.f32.mrb[0].mxu0
        %v5300 = vadd.f32 %v5139, %v5299
        %5301 = vmatprep.mubr.f32.mxu0 %v4695
        %5302 = vmatmul.mubr.f32.gmra.mrb[0].mxu0 %v4694
        %v5303 = vpop.f32.mrb[0].mxu0
        %v5304 = vadd.f32 %v5143, %v5303
        %v5305 = vpop.f32.mrb[0].mxu0
        %v5306 = vadd.f32 %v5145, %v5305
        %5307 = vmatprep.mubr.f32.mxu0 %v4697
        %5308 = vmatmul.mubr.f32.gmra.mrb[0].mxu0 %v4696
        %v5309 = vpop.f32.mrb[0].mxu0
        %v5310 = vadd.f32 %v5149, %v5309
        %v5311 = vpop.f32.mrb[0].mxu0
        %v5312 = vadd.f32 %v5151, %v5311
        %5313 = vmatprep.mubr.f32.mxu0 %v4699
        %5314 = vmatmul.mubr.f32.gmra.mrb[0].mxu0 %v4698
        %v5315 = vpop.f32.mrb[0].mxu0
        %v5316 = vadd.f32 %v5155, %v5315
        %v5317 = vpop.f32.mrb[0].mxu0
        %v5318 = vadd.f32 %v5157, %v5317
        %5319 = vmatprep.mubr.f32.mxu0 %v4701
        %5320 = vmatmul.mubr.f32.gmra.mrb[0].mxu0 %v4700
        %v5321 = vpop.f32.mrb[0].mxu0
        %v5322 = vadd.f32 %v5161, %v5321
        %v5323 = vpop.f32.mrb[0].mxu0
        %v5324 = vadd.f32 %v5163, %v5323
        %5325 = vmatprep.mubr.f32.mxu0 %v4703
        %5326 = vmatmul.mubr.f32.gmra.mrb[0].mxu0 %v4702
        %v5327 = vpop.f32.mrb[0].mxu0
        %v5328 = vadd.f32 %v5167, %v5327
        %v5329 = vpop.f32.mrb[0].mxu0
        %v5330 = vadd.f32 %v5169, %v5329
        %5331 = vmatprep.mubr.f32.mxu0 %v4705
        %5332 = vmatmul.mubr.f32.gmra.mrb[0].mxu0 %v4704
        %v5333 = vpop.f32.mrb[0].mxu0
        %v5334 = vadd.f32 %v5173, %v5333
        %v5335 = vpop.f32.mrb[0].mxu0
        %v5336 = vadd.f32 %v5175, %v5335
        %5337 = vmatprep.mubr.f32.mxu0 %v4707
        %5338 = vmatmul.mubr.f32.gmra.mrb[0].mxu0 %v4706
        %v5339 = vpop.f32.mrb[0].mxu0
        %v5340 = vadd.f32 %v5179, %v5339
        %v5341 = vpop.f32.mrb[0].mxu0
        %v5342 = vadd.f32 %v5181, %v5341
        %5343 = vmatprep.mubr.f32.mxu0 %v4709
        %5344 = vmatmul.mubr.f32.gmra.mrb[0].mxu0 %v4708
        %v5345 = vpop.f32.mrb[0].mxu0
        %v5346 = vadd.f32 %v5185, %v5345
        %v5347 = vpop.f32.mrb[0].mxu0
        %v5348 = vadd.f32 %v5187, %v5347
        %5349 = vmatprep.mubr.f32.mxu0 %v4711
        %5350 = vmatmul.mubr.f32.gmra.mrb[0].mxu0 %v4710
        %v5351 = vpop.f32.mrb[0].mxu0
        %v5352 = vadd.f32 %v5191, %v5351
        %v5353 = vpop.f32.mrb[0].mxu0
        %v5354 = vadd.f32 %v5193, %v5353
        %5355 = vdwg.mxu0
        %v5356 = vld [vmem:[#allocation2] sm:$0xfc]
        %v5357 = vld [vmem:[#allocation2 + $0x8] sm:$0xfc]
        %v5358 = vld [vmem:[#allocation2 + $0x20] sm:$0x3]
        %v5359 = vld [vmem:[#allocation2 + $0x28] sm:$0x3]
        %v5360 = vld [vmem:[#allocation2 + $0x30] sm:$0xfc]
        %v5361 = vld [vmem:[#allocation2 + $0x38] sm:$0xfc]
        %v5362 = vld [vmem:[#allocation2 + $0x50] sm:$0x3]
        %v5363 = vld [vmem:[#allocation2 + $0x58] sm:$0x3]
        %v5364 = vld [vmem:[#allocation2 + $0x60] sm:$0xfc]
        %v5365 = vld [vmem:[#allocation2 + $0x68] sm:$0xfc]
        %v5366 = vld [vmem:[#allocation2 + $0x80] sm:$0x3]
        %v5367 = vld [vmem:[#allocation2 + $0x88] sm:$0x3]
        %v5368 = vld [vmem:[#allocation2 + $0x90] sm:$0xfc]
        %v5369 = vld [vmem:[#allocation2 + $0x98] sm:$0xfc]
        %v5370 = vld [vmem:[#allocation2 + $0xb0] sm:$0x3]
        %v5371 = vld [vmem:[#allocation2 + $0xb8] sm:$0x3]
        %v5372 = vld [vmem:[#allocation2 + $0xc0] sm:$0xfc]
        %v5373 = vld [vmem:[#allocation2 + $0xc8] sm:$0xfc]
        %v5374 = vld [vmem:[#allocation2 + $0xe0] sm:$0x3]
        %v5375 = vld [vmem:[#allocation2 + $0xe8] sm:$0x3]
        %v5376 = vld [vmem:[#allocation2 + $0xf0] sm:$0xfc]
        %v5377 = vld [vmem:[#allocation2 + $0xf8] sm:$0xfc]
        %v5378 = vld [vmem:[#allocation2 + $0x110] sm:$0x3]
        %v5379 = vld [vmem:[#allocation2 + $0x118] sm:$0x3]
        %v5380 = vld [vmem:[#allocation2 + $0x120] sm:$0xfc]
        %v5381 = vld [vmem:[#allocation2 + $0x128] sm:$0xfc]
        %v5382 = vld [vmem:[#allocation2 + $0x140] sm:$0x3]
        %v5383 = vld [vmem:[#allocation2 + $0x148] sm:$0x3]
        %v5384 = vld [vmem:[#allocation2 + $0x150] sm:$0xfc]
        %v5385 = vld [vmem:[#allocation2 + $0x158] sm:$0xfc]
        %v5386 = vld [vmem:[#allocation2 + $0x170] sm:$0x3]
        %v5387 = vld [vmem:[#allocation2 + $0x178] sm:$0x3]
        %vm5420 = vcmask 1045504
        %v5421 = vrot.slane %v5356, 2
        %v5422 = vrot.slane %v4682, 2
        %v5423 = vsel %vm5420, %v5421, %v5422
        %v5424 = vrot.slane %v5357, 2
        %v5425 = vrot.slane %v4683, 2
        %v5426 = vsel %vm5420, %v5424, %v5425
        %v5427 = vrot.slane %v5358, 2
        %v5428 = vsel %vm5420, %v5422, %v5427
        %v5429 = vrot.slane %v5359, 2
        %v5430 = vsel %vm5420, %v5425, %v5429
        %v5431 = vrot.slane %v5360, 2
        %v5432 = vrot.slane %v4686, 2
        %v5433 = vsel %vm5420, %v5431, %v5432
        %v5434 = vrot.slane %v5361, 2
        %v5435 = vrot.slane %v4687, 2
        %v5436 = vsel %vm5420, %v5434, %v5435
        %v5437 = vrot.slane %v5362, 2
        %v5438 = vsel %vm5420, %v5432, %v5437
        %v5439 = vrot.slane %v5363, 2
        %v5440 = vsel %vm5420, %v5435, %v5439
        %v5441 = vrot.slane %v5364, 2
        %v5442 = vrot.slane %v4690, 2
        %v5443 = vsel %vm5420, %v5441, %v5442
        %v5444 = vrot.slane %v5365, 2
        %v5445 = vrot.slane %v4691, 2
        %v5446 = vsel %vm5420, %v5444, %v5445
        %v5447 = vrot.slane %v5366, 2
        %v5448 = vsel %vm5420, %v5442, %v5447
        %v5449 = vrot.slane %v5367, 2
        %v5450 = vsel %vm5420, %v5445, %v5449
        %v5451 = vrot.slane %v5368, 2
        %v5452 = vrot.slane %v4694, 2
        %v5453 = vsel %vm5420, %v5451, %v5452
        %v5454 = vrot.slane %v5369, 2
        %v5455 = vrot.slane %v4695, 2
        %v5456 = vsel %vm5420, %v5454, %v5455
        %v5457 = vrot.slane %v5370, 2
        %v5458 = vsel %vm5420, %v5452, %v5457
        %v5459 = vrot.slane %v5371, 2
        %v5460 = vsel %vm5420, %v5455, %v5459
        %v5461 = vrot.slane %v5372, 2
        %v5462 = vrot.slane %v4698, 2
        %v5463 = vsel %vm5420, %v5461, %v5462
        %v5464 = vrot.slane %v5373, 2
        %v5465 = vrot.slane %v4699, 2
        %v5466 = vsel %vm5420, %v5464, %v5465
        %v5467 = vrot.slane %v5374, 2
        %v5468 = vsel %vm5420, %v5462, %v5467
        %v5469 = vrot.slane %v5375, 2
        %v5470 = vsel %vm5420, %v5465, %v5469
        %v5471 = vrot.slane %v5376, 2
        %v5472 = vrot.slane %v4702, 2
        %v5473 = vsel %vm5420, %v5471, %v5472
        %v5474 = vrot.slane %v5377, 2
        %v5475 = vrot.slane %v4703, 2
        %v5476 = vsel %vm5420, %v5474, %v5475
        %v5477 = vrot.slane %v5378, 2
        %v5478 = vsel %vm5420, %v5472, %v5477
        %v5479 = vrot.slane %v5379, 2
        %v5480 = vsel %vm5420, %v5475, %v5479
        %v5481 = vrot.slane %v5380, 2
        %v5482 = vrot.slane %v4706, 2
        %v5483 = vsel %vm5420, %v5481, %v5482
        %v5484 = vrot.slane %v5381, 2
        %v5485 = vrot.slane %v4707, 2
        %v5486 = vsel %vm5420, %v5484, %v5485
        %v5487 = vrot.slane %v5382, 2
        %v5488 = vsel %vm5420, %v5482, %v5487
        %v5489 = vrot.slane %v5383, 2
        %v5490 = vsel %vm5420, %v5485, %v5489
        %v5491 = vrot.slane %v5384, 2
        %v5492 = vrot.slane %v4710, 2
        %v5493 = vsel %vm5420, %v5491, %v5492
        %v5494 = vrot.slane %v5385, 2
        %v5495 = vrot.slane %v4711, 2
        %v5496 = vsel %vm5420, %v5494, %v5495
        %v5497 = vrot.slane %v5386, 2
        %v5498 = vsel %vm5420, %v5492, %v5497
        %v5499 = vrot.slane %v5387, 2
        %v5500 = vsel %vm5420, %v5495, %v5499
        %s5533 = scalar_lea.vmem %s3, 1024
        %v5534 = vld [vmem:[%s5533] sm:$0xff]
        %v5535 = vld [vmem:[%s5533 + $0x8] sm:$0xff]
        %v5536 = vld [vmem:[%s5533 + $0x10] sm:$0xff]
        %v5537 = vld [vmem:[%s5533 + $0x18] sm:$0xff]
        %v5538 = vld [vmem:[%s5533 + $0x20] sm:$0xff]
        %v5539 = vld [vmem:[%s5533 + $0x28] sm:$0xff]
        %v5540 = vld [vmem:[%s5533 + $0x30] sm:$0xff]
        %v5541 = vld [vmem:[%s5533 + $0x38] sm:$0xff]
        %v5542 = vld [vmem:[%s5533 + $0x40] sm:$0xff]
        %v5543 = vld [vmem:[%s5533 + $0x48] sm:$0xff]
        %v5544 = vld [vmem:[%s5533 + $0x50] sm:$0xff]
        %v5545 = vld [vmem:[%s5533 + $0x58] sm:$0xff]
        %v5546 = vld [vmem:[%s5533 + $0x60] sm:$0xff]
        %v5547 = vld [vmem:[%s5533 + $0x68] sm:$0xff]
        %v5548 = vld [vmem:[%s5533 + $0x70] sm:$0xff]
        %v5549 = vld [vmem:[%s5533 + $0x78] sm:$0xff]
        %v5550 = vld [vmem:[%s5533 + $0x80] sm:$0xff]
        %v5551 = vld [vmem:[%s5533 + $0x88] sm:$0xff]
        %v5552 = vld [vmem:[%s5533 + $0x90] sm:$0xff]
        %v5553 = vld [vmem:[%s5533 + $0x98] sm:$0xff]
        %v5554 = vld [vmem:[%s5533 + $0xa0] sm:$0xff]
        %v5555 = vld [vmem:[%s5533 + $0xa8] sm:$0xff]
        %v5556 = vld [vmem:[%s5533 + $0xb0] sm:$0xff]
        %v5557 = vld [vmem:[%s5533 + $0xb8] sm:$0xff]
        %v5558 = vld [vmem:[%s5533 + $0xc0] sm:$0xff]
        %v5559 = vld [vmem:[%s5533 + $0xc8] sm:$0xff]
        %v5560 = vld [vmem:[%s5533 + $0xd0] sm:$0xff]
        %v5561 = vld [vmem:[%s5533 + $0xd8] sm:$0xff]
        %v5562 = vld [vmem:[%s5533 + $0xe0] sm:$0xff]
        %v5563 = vld [vmem:[%s5533 + $0xe8] sm:$0xff]
        %v5564 = vld [vmem:[%s5533 + $0xf0] sm:$0xff]
        %v5565 = vld [vmem:[%s5533 + $0xf8] sm:$0xff]
        %v5566 = vld [vmem:[%s5533 + $0x100] sm:$0xff]
        %v5567 = vld [vmem:[%s5533 + $0x108] sm:$0xff]
        %v5568 = vld [vmem:[%s5533 + $0x110] sm:$0xff]
        %v5569 = vld [vmem:[%s5533 + $0x118] sm:$0xff]
        %v5570 = vld [vmem:[%s5533 + $0x120] sm:$0xff]
        %v5571 = vld [vmem:[%s5533 + $0x128] sm:$0xff]
        %v5572 = vld [vmem:[%s5533 + $0x130] sm:$0xff]
        %v5573 = vld [vmem:[%s5533 + $0x138] sm:$0xff]
        %v5574 = vld [vmem:[%s5533 + $0x140] sm:$0xff]
        %v5575 = vld [vmem:[%s5533 + $0x148] sm:$0xff]
        %v5576 = vld [vmem:[%s5533 + $0x150] sm:$0xff]
        %v5577 = vld [vmem:[%s5533 + $0x158] sm:$0xff]
        %v5578 = vld [vmem:[%s5533 + $0x160] sm:$0xff]
        %v5579 = vld [vmem:[%s5533 + $0x168] sm:$0xff]
        %v5580 = vld [vmem:[%s5533 + $0x170] sm:$0xff]
        %v5581 = vld [vmem:[%s5533 + $0x178] sm:$0xff]
        %v5582 = vld [vmem:[%s5533 + $0x180] sm:$0xff]
        %v5583 = vld [vmem:[%s5533 + $0x188] sm:$0xff]
        %v5584 = vld [vmem:[%s5533 + $0x190] sm:$0xff]
        %v5585 = vld [vmem:[%s5533 + $0x198] sm:$0xff]
        %v5586 = vld [vmem:[%s5533 + $0x1a0] sm:$0xff]
        %v5587 = vld [vmem:[%s5533 + $0x1a8] sm:$0xff]
        %v5588 = vld [vmem:[%s5533 + $0x1b0] sm:$0xff]
        %v5589 = vld [vmem:[%s5533 + $0x1b8] sm:$0xff]
        %v5590 = vld [vmem:[%s5533 + $0x1c0] sm:$0xff]
        %v5591 = vld [vmem:[%s5533 + $0x1c8] sm:$0xff]
        %v5592 = vld [vmem:[%s5533 + $0x1d0] sm:$0xff]
        %v5593 = vld [vmem:[%s5533 + $0x1d8] sm:$0xff]
        %v5594 = vld [vmem:[%s5533 + $0x1e0] sm:$0xff]
        %v5595 = vld [vmem:[%s5533 + $0x1e8] sm:$0xff]
        %v5596 = vld [vmem:[%s5533 + $0x1f0] sm:$0xff]
        %v5597 = vld [vmem:[%s5533 + $0x1f8] sm:$0xff]
        %5598 = vmatprep.subr.mxu0 %v5535
        %5599 = vmatpush1.msra.mxu0 %v5534
        %5600 = vmatprep.subr.mxu0 %v5537
        %5601 = vmatpush1.msra.mxu0 %v5536
        %5602 = vmatprep.subr.mxu0 %v5539
        %5603 = vmatpush1.msra.mxu0 %v5538
        %5604 = vmatprep.subr.mxu0 %v5541
        %5605 = vmatpush1.msra.mxu0 %v5540
        %5606 = vmatprep.subr.mxu0 %v5543
        %5607 = vmatpush1.msra.mxu0 %v5542
        %5608 = vmatprep.subr.mxu0 %v5545
        %5609 = vmatpush1.msra.mxu0 %v5544
        %5610 = vmatprep.subr.mxu0 %v5547
        %5611 = vmatpush1.msra.mxu0 %v5546
        %5612 = vmatprep.subr.mxu0 %v5549
        %5613 = vmatpush1.msra.mxu0 %v5548
        %5614 = vmatprep.subr.mxu0 %v5551
        %5615 = vmatpush1.msra.mxu0 %v5550
        %5616 = vmatprep.subr.mxu0 %v5553
        %5617 = vmatpush1.msra.mxu0 %v5552
        %5618 = vmatprep.subr.mxu0 %v5555
        %5619 = vmatpush1.msra.mxu0 %v5554
        %5620 = vmatprep.subr.mxu0 %v5557
        %5621 = vmatpush1.msra.mxu0 %v5556
        %5622 = vmatprep.subr.mxu0 %v5559
        %5623 = vmatpush1.msra.mxu0 %v5558
        %5624 = vmatprep.subr.mxu0 %v5561
        %5625 = vmatpush1.msra.mxu0 %v5560
        %5626 = vmatprep.subr.mxu0 %v5563
        %5627 = vmatpush1.msra.mxu0 %v5562
        %5628 = vmatprep.subr.mxu0 %v5565
        %5629 = vmatpush1.msra.mxu0 %v5564
        %5630 = vmatprep.subr.mxu0 %v5567
        %5631 = vmatpush1.msra.mxu0 %v5566
        %5632 = vmatprep.subr.mxu0 %v5569
        %5633 = vmatpush1.msra.mxu0 %v5568
        %5634 = vmatprep.subr.mxu0 %v5571
        %5635 = vmatpush1.msra.mxu0 %v5570
        %5636 = vmatprep.subr.mxu0 %v5573
        %5637 = vmatpush1.msra.mxu0 %v5572
        %5638 = vmatprep.subr.mxu0 %v5575
        %5639 = vmatpush1.msra.mxu0 %v5574
        %5640 = vmatprep.subr.mxu0 %v5577
        %5641 = vmatpush1.msra.mxu0 %v5576
        %5642 = vmatprep.subr.mxu0 %v5579
        %5643 = vmatpush1.msra.mxu0 %v5578
        %5644 = vmatprep.subr.mxu0 %v5581
        %5645 = vmatpush1.msra.mxu0 %v5580
        %5646 = vmatprep.subr.mxu0 %v5583
        %5647 = vmatpush1.msra.mxu0 %v5582
        %5648 = vmatprep.subr.mxu0 %v5585
        %5649 = vmatpush1.msra.mxu0 %v5584
        %5650 = vmatprep.subr.mxu0 %v5587
        %5651 = vmatpush1.msra.mxu0 %v5586
        %5652 = vmatprep.subr.mxu0 %v5589
        %5653 = vmatpush1.msra.mxu0 %v5588
        %5654 = vmatprep.subr.mxu0 %v5591
        %5655 = vmatpush1.msra.mxu0 %v5590
        %5656 = vmatprep.subr.mxu0 %v5593
        %5657 = vmatpush1.msra.mxu0 %v5592
        %5658 = vmatprep.subr.mxu0 %v5595
        %5659 = vmatpush1.msra.mxu0 %v5594
        %5660 = vmatprep.subr.mxu0 %v5597
        %5661 = vmatpush1.msra.mxu0 %v5596
        %5662 = vmatprep.mubr.f32.mxu0 %v5426
        %5663 = vmatmul.mubr.f32.gmra.mrb[0].mxu0 %v5423
        %v5664 = vpop.f32.mrb[0].mxu0
        %v5665 = vadd.f32 0.0, %v5664
        %v5666 = vpop.f32.mrb[0].mxu0
        %v5667 = vadd.f32 0.0, %v5666
        %5668 = vmatprep.mubr.f32.mxu0 %v5430
        %5669 = vmatmul.mubr.f32.gmra.mrb[0].mxu0 %v5428
        %v5670 = vpop.f32.mrb[0].mxu0
        %v5671 = vadd.f32 0.0, %v5670
        %v5672 = vpop.f32.mrb[0].mxu0
        %v5673 = vadd.f32 0.0, %v5672
        %5674 = vmatprep.mubr.f32.mxu0 %v5436
        %5675 = vmatmul.mubr.f32.gmra.mrb[0].mxu0 %v5433
        %v5676 = vpop.f32.mrb[0].mxu0
        %v5677 = vadd.f32 0.0, %v5676
        %v5678 = vpop.f32.mrb[0].mxu0
        %v5679 = vadd.f32 0.0, %v5678
        %5680 = vmatprep.mubr.f32.mxu0 %v5440
        %5681 = vmatmul.mubr.f32.gmra.mrb[0].mxu0 %v5438
        %v5682 = vpop.f32.mrb[0].mxu0
        %v5683 = vadd.f32 0.0, %v5682
        %v5684 = vpop.f32.mrb[0].mxu0
        %v5685 = vadd.f32 0.0, %v5684
        %5686 = vmatprep.mubr.f32.mxu0 %v5446
        %5687 = vmatmul.mubr.f32.gmra.mrb[0].mxu0 %v5443
        %v5688 = vpop.f32.mrb[0].mxu0
        %v5689 = vadd.f32 0.0, %v5688
        %v5690 = vpop.f32.mrb[0].mxu0
        %v5691 = vadd.f32 0.0, %v5690
        %5692 = vmatprep.mubr.f32.mxu0 %v5450
        %5693 = vmatmul.mubr.f32.gmra.mrb[0].mxu0 %v5448
        %v5694 = vpop.f32.mrb[0].mxu0
        %v5695 = vadd.f32 0.0, %v5694
        %v5696 = vpop.f32.mrb[0].mxu0
        %v5697 = vadd.f32 0.0, %v5696
        %5698 = vmatprep.mubr.f32.mxu0 %v5456
        %5699 = vmatmul.mubr.f32.gmra.mrb[0].mxu0 %v5453
        %v5700 = vpop.f32.mrb[0].mxu0
        %v5701 = vadd.f32 0.0, %v5700
        %v5702 = vpop.f32.mrb[0].mxu0
        %v5703 = vadd.f32 0.0, %v5702
        %5704 = vmatprep.mubr.f32.mxu0 %v5460
        %5705 = vmatmul.mubr.f32.gmra.mrb[0].mxu0 %v5458
        %v5706 = vpop.f32.mrb[0].mxu0
        %v5707 = vadd.f32 0.0, %v5706
        %v5708 = vpop.f32.mrb[0].mxu0
        %v5709 = vadd.f32 0.0, %v5708
        %5710 = vmatprep.mubr.f32.mxu0 %v5466
        %5711 = vmatmul.mubr.f32.gmra.mrb[0].mxu0 %v5463
        %v5712 = vpop.f32.mrb[0].mxu0
        %v5713 = vadd.f32 0.0, %v5712
        %v5714 = vpop.f32.mrb[0].mxu0
        %v5715 = vadd.f32 0.0, %v5714
        %5716 = vmatprep.mubr.f32.mxu0 %v5470
        %5717 = vmatmul.mubr.f32.gmra.mrb[0].mxu0 %v5468
        %v5718 = vpop.f32.mrb[0].mxu0
        %v5719 = vadd.f32 0.0, %v5718
        %v5720 = vpop.f32.mrb[0].mxu0
        %v5721 = vadd.f32 0.0, %v5720
        %5722 = vmatprep.mubr.f32.mxu0 %v5476
        %5723 = vmatmul.mubr.f32.gmra.mrb[0].mxu0 %v5473
        %v5724 = vpop.f32.mrb[0].mxu0
        %v5725 = vadd.f32 0.0, %v5724
        %v5726 = vpop.f32.mrb[0].mxu0
        %v5727 = vadd.f32 0.0, %v5726
        %5728 = vmatprep.mubr.f32.mxu0 %v5480
        %5729 = vmatmul.mubr.f32.gmra.mrb[0].mxu0 %v5478
        %v5730 = vpop.f32.mrb[0].mxu0
        %v5731 = vadd.f32 0.0, %v5730
        %v5732 = vpop.f32.mrb[0].mxu0
        %v5733 = vadd.f32 0.0, %v5732
        %5734 = vmatprep.mubr.f32.mxu0 %v5486
        %5735 = vmatmul.mubr.f32.gmra.mrb[0].mxu0 %v5483
        %v5736 = vpop.f32.mrb[0].mxu0
        %v5737 = vadd.f32 0.0, %v5736
        %v5738 = vpop.f32.mrb[0].mxu0
        %v5739 = vadd.f32 0.0, %v5738
        %5740 = vmatprep.mubr.f32.mxu0 %v5490
        %5741 = vmatmul.mubr.f32.gmra.mrb[0].mxu0 %v5488
        %v5742 = vpop.f32.mrb[0].mxu0
        %v5743 = vadd.f32 0.0, %v5742
        %v5744 = vpop.f32.mrb[0].mxu0
        %v5745 = vadd.f32 0.0, %v5744
        %5746 = vmatprep.mubr.f32.mxu0 %v5496
        %5747 = vmatmul.mubr.f32.gmra.mrb[0].mxu0 %v5493
        %v5748 = vpop.f32.mrb[0].mxu0
        %v5749 = vadd.f32 0.0, %v5748
        %v5750 = vpop.f32.mrb[0].mxu0
        %v5751 = vadd.f32 0.0, %v5750
        %5752 = vmatprep.mubr.f32.mxu0 %v5500
        %5753 = vmatmul.mubr.f32.gmra.mrb[0].mxu0 %v5498
        %v5754 = vpop.f32.mrb[0].mxu0
        %v5755 = vadd.f32 0.0, %v5754
        %v5756 = vpop.f32.mrb[0].mxu0
        %v5757 = vadd.f32 0.0, %v5756
        %5758 = vdwg.mxu0
        %v5759 = vadd.f32 %v5262, %v5665
        %v5760 = vadd.f32 %v5264, %v5667
        %v5761 = vadd.f32 %v5268, %v5671
        %v5762 = vadd.f32 %v5270, %v5673
        %v5763 = vadd.f32 %v5274, %v5677
        %v5764 = vadd.f32 %v5276, %v5679
        %v5765 = vadd.f32 %v5280, %v5683
        %v5766 = vadd.f32 %v5282, %v5685
        %v5767 = vadd.f32 %v5286, %v5689
        %v5768 = vadd.f32 %v5288, %v5691
        %v5769 = vadd.f32 %v5292, %v5695
        %v5770 = vadd.f32 %v5294, %v5697
        %v5771 = vadd.f32 %v5298, %v5701
        %v5772 = vadd.f32 %v5300, %v5703
        %v5773 = vadd.f32 %v5304, %v5707
        %v5774 = vadd.f32 %v5306, %v5709
        %v5775 = vadd.f32 %v5310, %v5713
        %v5776 = vadd.f32 %v5312, %v5715
        %v5777 = vadd.f32 %v5316, %v5719
        %v5778 = vadd.f32 %v5318, %v5721
        %v5779 = vadd.f32 %v5322, %v5725
        %v5780 = vadd.f32 %v5324, %v5727
        %v5781 = vadd.f32 %v5328, %v5731
        %v5782 = vadd.f32 %v5330, %v5733
        %v5783 = vadd.f32 %v5334, %v5737
        %v5784 = vadd.f32 %v5336, %v5739
        %v5785 = vadd.f32 %v5340, %v5743
        %v5786 = vadd.f32 %v5342, %v5745
        %v5787 = vadd.f32 %v5346, %v5749
        %v5788 = vadd.f32 %v5348, %v5751
        %v5789 = vadd.f32 %v5352, %v5755
        %v5790 = vadd.f32 %v5354, %v5757
        %v5791 = vld [vmem:[%s4] ss:$2 sm:$0x3]
        %v5793 = vlaneseq
        %v5794 = vshrl.u32 %v5793, 7
        %v5795 = vsub.s32 0, %v5794
        %v5796 = vrot.slane %v5791, %v5795
        %v5797 = vlaneseq
        %v5798 = vshrl.u32 %v5797, 7
        %v5799 = vsub.s32 1, %v5798
        %v5800 = vrot.slane %v5791, %v5799
        %v5803 = vmul.f32 %v5759, %v5796
        %v5804 = vmul.f32 %v5760, %v5800
        %v5805 = vmul.f32 %v5761, %v5796
        %v5806 = vmul.f32 %v5762, %v5800
        %v5807 = vmul.f32 %v5763, %v5796
        %v5808 = vmul.f32 %v5764, %v5800
        %v5809 = vmul.f32 %v5765, %v5796
        %v5810 = vmul.f32 %v5766, %v5800
        %v5811 = vmul.f32 %v5767, %v5796
        %v5812 = vmul.f32 %v5768, %v5800
        %v5813 = vmul.f32 %v5769, %v5796
        %v5814 = vmul.f32 %v5770, %v5800
        %v5815 = vmul.f32 %v5771, %v5796
        %v5816 = vmul.f32 %v5772, %v5800
        %v5817 = vmul.f32 %v5773, %v5796
        %v5818 = vmul.f32 %v5774, %v5800
        %v5819 = vmul.f32 %v5775, %v5796
        %v5820 = vmul.f32 %v5776, %v5800
        %v5821 = vmul.f32 %v5777, %v5796
        %v5822 = vmul.f32 %v5778, %v5800
        %v5823 = vmul.f32 %v5779, %v5796
        %v5824 = vmul.f32 %v5780, %v5800
        %v5825 = vmul.f32 %v5781, %v5796
        %v5826 = vmul.f32 %v5782, %v5800
        %v5827 = vmul.f32 %v5783, %v5796
        %v5828 = vmul.f32 %v5784, %v5800
        %v5829 = vmul.f32 %v5785, %v5796
        %v5830 = vmul.f32 %v5786, %v5800
        %v5831 = vmul.f32 %v5787, %v5796
        %v5832 = vmul.f32 %v5788, %v5800
        %v5833 = vmul.f32 %v5789, %v5796
        %v5834 = vmul.f32 %v5790, %v5800
        %s5835 = scalar_lea.vmem %s4, 1
        %v5836 = vld [vmem:[%s5835] ss:$2 sm:$0x3]
        %v5838 = vlaneseq
        %v5839 = vshrl.u32 %v5838, 7
        %v5840 = vsub.s32 0, %v5839
        %v5841 = vrot.slane %v5836, %v5840
        %v5842 = vlaneseq
        %v5843 = vshrl.u32 %v5842, 7
        %v5844 = vsub.s32 1, %v5843
        %v5845 = vrot.slane %v5836, %v5844
        %v5848 = vadd.f32 %v5803, %v5841
        %v5849 = vadd.f32 %v5804, %v5845
        %v5850 = vadd.f32 %v5805, %v5841
        %v5851 = vadd.f32 %v5806, %v5845
        %v5852 = vadd.f32 %v5807, %v5841
        %v5853 = vadd.f32 %v5808, %v5845
        %v5854 = vadd.f32 %v5809, %v5841
        %v5855 = vadd.f32 %v5810, %v5845
        %v5856 = vadd.f32 %v5811, %v5841
        %v5857 = vadd.f32 %v5812, %v5845
        %v5858 = vadd.f32 %v5813, %v5841
        %v5859 = vadd.f32 %v5814, %v5845
        %v5860 = vadd.f32 %v5815, %v5841
        %v5861 = vadd.f32 %v5816, %v5845
        %v5862 = vadd.f32 %v5817, %v5841
        %v5863 = vadd.f32 %v5818, %v5845
        %v5864 = vadd.f32 %v5819, %v5841
        %v5865 = vadd.f32 %v5820, %v5845
        %v5866 = vadd.f32 %v5821, %v5841
        %v5867 = vadd.f32 %v5822, %v5845
        %v5868 = vadd.f32 %v5823, %v5841
        %v5869 = vadd.f32 %v5824, %v5845
        %v5870 = vadd.f32 %v5825, %v5841
        %v5871 = vadd.f32 %v5826, %v5845
        %v5872 = vadd.f32 %v5827, %v5841
        %v5873 = vadd.f32 %v5828, %v5845
        %v5874 = vadd.f32 %v5829, %v5841
        %v5875 = vadd.f32 %v5830, %v5845
        %v5876 = vadd.f32 %v5831, %v5841
        %v5877 = vadd.f32 %v5832, %v5845
        %v5878 = vadd.f32 %v5833, %v5841
        %v5879 = vadd.f32 %v5834, %v5845
        %v5880 = vmax.f32 %v5848, 0.0
        %v5881 = vmax.f32 %v5849, 0.0
        %v5882 = vmax.f32 %v5850, 0.0
        %v5883 = vmax.f32 %v5851, 0.0
        %v5884 = vmax.f32 %v5852, 0.0
        %v5885 = vmax.f32 %v5853, 0.0
        %v5886 = vmax.f32 %v5854, 0.0
        %v5887 = vmax.f32 %v5855, 0.0
        %v5888 = vmax.f32 %v5856, 0.0
        %v5889 = vmax.f32 %v5857, 0.0
        %v5890 = vmax.f32 %v5858, 0.0
        %v5891 = vmax.f32 %v5859, 0.0
        %v5892 = vmax.f32 %v5860, 0.0
        %v5893 = vmax.f32 %v5861, 0.0
        %v5894 = vmax.f32 %v5862, 0.0
        %v5895 = vmax.f32 %v5863, 0.0
        %v5896 = vmax.f32 %v5864, 0.0
        %v5897 = vmax.f32 %v5865, 0.0
        %v5898 = vmax.f32 %v5866, 0.0
        %v5899 = vmax.f32 %v5867, 0.0
        %v5900 = vmax.f32 %v5868, 0.0
        %v5901 = vmax.f32 %v5869, 0.0
        %v5902 = vmax.f32 %v5870, 0.0
        %v5903 = vmax.f32 %v5871, 0.0
        %v5904 = vmax.f32 %v5872, 0.0
        %v5905 = vmax.f32 %v5873, 0.0
        %v5906 = vmax.f32 %v5874, 0.0
        %v5907 = vmax.f32 %v5875, 0.0
        %v5908 = vmax.f32 %v5876, 0.0
        %v5909 = vmax.f32 %v5877, 0.0
        %v5910 = vmax.f32 %v5878, 0.0
        %v5911 = vmax.f32 %v5879, 0.0
        %5912 = vst [vmem:[%s323] sm:$0xff] %v5880
        %vm5913 = vcmask 785408
        %5914 = vst.msk [vmem:[%s323 + $0x8] sm:$0xff] %vm5913, %v5881
        %5915 = vst [vmem:[%s323 + $0x10] sm:$0x3f] %v5882
        %vm5916 = vcmask 783360
        %5917 = vst.msk [vmem:[%s323 + $0x18] sm:$0x3f] %vm5916, %v5883
        %5918 = vst [vmem:[%s323 + $0x20] sm:$0xff] %v5884
        %5919 = vst.msk [vmem:[%s323 + $0x28] sm:$0xff] %vm5913, %v5885
        %5920 = vst [vmem:[%s323 + $0x30] sm:$0x3f] %v5886
        %5921 = vst.msk [vmem:[%s323 + $0x38] sm:$0x3f] %vm5916, %v5887
        %5922 = vst [vmem:[%s323 + $0x40] sm:$0xff] %v5888
        %5923 = vst.msk [vmem:[%s323 + $0x48] sm:$0xff] %vm5913, %v5889
        %5924 = vst [vmem:[%s323 + $0x50] sm:$0x3f] %v5890
        %5925 = vst.msk [vmem:[%s323 + $0x58] sm:$0x3f] %vm5916, %v5891
        %5926 = vst [vmem:[%s323 + $0x60] sm:$0xff] %v5892
        %5927 = vst.msk [vmem:[%s323 + $0x68] sm:$0xff] %vm5913, %v5893
        %5928 = vst [vmem:[%s323 + $0x70] sm:$0x3f] %v5894
        %5929 = vst.msk [vmem:[%s323 + $0x78] sm:$0x3f] %vm5916, %v5895
        %5930 = vst [vmem:[%s323 + $0x80] sm:$0xff] %v5896
        %5931 = vst.msk [vmem:[%s323 + $0x88] sm:$0xff] %vm5913, %v5897
        %5932 = vst [vmem:[%s323 + $0x90] sm:$0x3f] %v5898
        %5933 = vst.msk [vmem:[%s323 + $0x98] sm:$0x3f] %vm5916, %v5899
        %5934 = vst [vmem:[%s323 + $0xa0] sm:$0xff] %v5900
        %5935 = vst.msk [vmem:[%s323 + $0xa8] sm:$0xff] %vm5913, %v5901
        %5936 = vst [vmem:[%s323 + $0xb0] sm:$0x3f] %v5902
        %5937 = vst.msk [vmem:[%s323 + $0xb8] sm:$0x3f] %vm5916, %v5903
        %5938 = vst [vmem:[%s323 + $0xc0] sm:$0xff] %v5904
        %5939 = vst.msk [vmem:[%s323 + $0xc8] sm:$0xff] %vm5913, %v5905
        %5940 = vst [vmem:[%s323 + $0xd0] sm:$0x3f] %v5906
        %5941 = vst.msk [vmem:[%s323 + $0xd8] sm:$0x3f] %vm5916, %v5907
        %5942 = vst [vmem:[%s323 + $0xe0] sm:$0xff] %v5908
        %5943 = vst.msk [vmem:[%s323 + $0xe8] sm:$0xff] %vm5913, %v5909
        %5944 = vst [vmem:[%s323 + $0xf0] sm:$0x3f] %v5910
        %5945 = vst.msk [vmem:[%s323 + $0xf8] sm:$0x3f] %vm5916, %v5911
        %v5946 = vld [vmem:[%s323] ss:$8 sm:$0x3]
        %s5947 = scalar_lea.vmem %s323, 32
        %v5948 = vld [vmem:[%s5947] ss:$8 sm:$0x3]
        %s5949 = scalar_lea.vmem %s323, 64
        %v5950 = vld [vmem:[%s5949] ss:$8 sm:$0x3]
        %s5951 = scalar_lea.vmem %s323, 96
        %v5952 = vld [vmem:[%s5951] ss:$8 sm:$0x3]
        %s5953 = scalar_lea.vmem %s323, 128
        %v5954 = vld [vmem:[%s5953] ss:$8 sm:$0x3]
        %s5955 = scalar_lea.vmem %s323, 160
        %v5956 = vld [vmem:[%s5955] ss:$8 sm:$0x3]
        %s5957 = scalar_lea.vmem %s323, 192
        %v5958 = vld [vmem:[%s5957] ss:$8 sm:$0x3]
        %s5959 = scalar_lea.vmem %s323, 224
        %v5960 = vld [vmem:[%s5959] ss:$8 sm:$0x3]
        %v5961 = vld [vmem:[%s5] sm:$0xff]
        %v5962 = vld [vmem:[%s5 + $0x8] sm:$0xff]
        %v5963 = vld [vmem:[%s5 + $0x10] sm:$0xff]
        %v5964 = vld [vmem:[%s5 + $0x18] sm:$0xff]
        %v5965 = vld [vmem:[%s5 + $0x20] sm:$0xff]
        %v5966 = vld [vmem:[%s5 + $0x28] sm:$0xff]
        %v5967 = vld [vmem:[%s5 + $0x30] sm:$0xff]
        %v5968 = vld [vmem:[%s5 + $0x38] sm:$0xff]
        %v5969 = vld [vmem:[%s5 + $0x40] sm:$0xff]
        %v5970 = vld [vmem:[%s5 + $0x48] sm:$0xff]
        %v5971 = vld [vmem:[%s5 + $0x50] sm:$0xff]
        %v5972 = vld [vmem:[%s5 + $0x58] sm:$0xff]
        %v5973 = vld [vmem:[%s5 + $0x60] sm:$0xff]
        %v5974 = vld [vmem:[%s5 + $0x68] sm:$0xff]
        %v5975 = vld [vmem:[%s5 + $0x70] sm:$0xff]
        %v5976 = vld [vmem:[%s5 + $0x78] sm:$0xff]
        %v5977 = vld [vmem:[%s5 + $0x80] sm:$0xff]
        %v5978 = vld [vmem:[%s5 + $0x88] sm:$0xff]
        %v5979 = vld [vmem:[%s5 + $0x90] sm:$0xff]
        %v5980 = vld [vmem:[%s5 + $0x98] sm:$0xff]
        %v5981 = vld [vmem:[%s5 + $0xa0] sm:$0xff]
        %v5982 = vld [vmem:[%s5 + $0xa8] sm:$0xff]
        %v5983 = vld [vmem:[%s5 + $0xb0] sm:$0xff]
        %v5984 = vld [vmem:[%s5 + $0xb8] sm:$0xff]
        %v5985 = vld [vmem:[%s5 + $0xc0] sm:$0xff]
        %v5986 = vld [vmem:[%s5 + $0xc8] sm:$0xff]
        %v5987 = vld [vmem:[%s5 + $0xd0] sm:$0xff]
        %v5988 = vld [vmem:[%s5 + $0xd8] sm:$0xff]
        %s5989 = scalar_lea.vmem %s323, 1
        %v5990 = vld [vmem:[%s5989] ss:$8 sm:$0x3]
        %s5991 = scalar_lea.vmem %s323, 33
        %v5992 = vld [vmem:[%s5991] ss:$8 sm:$0x3]
        %s5993 = scalar_lea.vmem %s323, 65
        %v5994 = vld [vmem:[%s5993] ss:$8 sm:$0x3]
        %s5995 = scalar_lea.vmem %s323, 97
        %v5996 = vld [vmem:[%s5995] ss:$8 sm:$0x3]
        %s5997 = scalar_lea.vmem %s323, 129
        %v5998 = vld [vmem:[%s5997] ss:$8 sm:$0x3]
        %s5999 = scalar_lea.vmem %s323, 161
        %v6000 = vld [vmem:[%s5999] ss:$8 sm:$0x3]
        %s6001 = scalar_lea.vmem %s323, 193
        %v6002 = vld [vmem:[%s6001] ss:$8 sm:$0x3]
        %s6003 = scalar_lea.vmem %s323, 225
        %v6004 = vld [vmem:[%s6003] ss:$8 sm:$0x3]
        %s6005 = scalar_lea.vmem %s5, 224
        %v6006 = vld [vmem:[%s6005] sm:$0xff]
        %v6007 = vld [vmem:[%s6005 + $0x8] sm:$0xff]
        %v6008 = vld [vmem:[%s6005 + $0x10] sm:$0xff]
        %v6009 = vld [vmem:[%s6005 + $0x18] sm:$0xff]
        %v6010 = vld [vmem:[%s6005 + $0x20] sm:$0xff]
        %v6011 = vld [vmem:[%s6005 + $0x28] sm:$0xff]
        %v6012 = vld [vmem:[%s6005 + $0x30] sm:$0xff]
        %v6013 = vld [vmem:[%s6005 + $0x38] sm:$0xff]
        %v6014 = vld [vmem:[%s6005 + $0x40] sm:$0xff]
        %v6015 = vld [vmem:[%s6005 + $0x48] sm:$0xff]
        %v6016 = vld [vmem:[%s6005 + $0x50] sm:$0xff]
        %v6017 = vld [vmem:[%s6005 + $0x58] sm:$0xff]
        %v6018 = vld [vmem:[%s6005 + $0x60] sm:$0xff]
        %v6019 = vld [vmem:[%s6005 + $0x68] sm:$0xff]
        %v6020 = vld [vmem:[%s6005 + $0x70] sm:$0xff]
        %v6021 = vld [vmem:[%s6005 + $0x78] sm:$0xff]
        %v6022 = vld [vmem:[%s6005 + $0x80] sm:$0xff]
        %v6023 = vld [vmem:[%s6005 + $0x88] sm:$0xff]
        %v6024 = vld [vmem:[%s6005 + $0x90] sm:$0xff]
        %v6025 = vld [vmem:[%s6005 + $0x98] sm:$0xff]
        %v6026 = vld [vmem:[%s6005 + $0xa0] sm:$0xff]
        %v6027 = vld [vmem:[%s6005 + $0xa8] sm:$0xff]
        %v6028 = vld [vmem:[%s6005 + $0xb0] sm:$0xff]
        %v6029 = vld [vmem:[%s6005 + $0xb8] sm:$0xff]
        %v6030 = vld [vmem:[%s6005 + $0xc0] sm:$0xff]
        %v6031 = vld [vmem:[%s6005 + $0xc8] sm:$0xff]
        %v6032 = vld [vmem:[%s6005 + $0xd0] sm:$0xff]
        %v6033 = vld [vmem:[%s6005 + $0xd8] sm:$0xff]
        %v6042 = vcombine.low %v5990, %v5992
        %v6043 = vcombine.low %v5994, %v5996
        %v6044 = vcombine.low %v5998, %v6000
        %v6045 = vcombine.low %v6002, %v6004
        %v6047 = vunpack.c.l.s4 1966171168
        %v6048 = vunpack.c.0.s8 %v6047
        %v6049 = vlaneseq
        %v6050 = vshrl.u32 %v6049, 7
        %v6051 = vsub.s32 %v6048, %v6050
        %v6052 = vrot.slane %v6042, %v6051
        %v6054 = vunpack.c.l.s4 1966171168
        %v6055 = vunpack.c.0.s8 %v6054
        %v6056 = vlaneseq
        %v6057 = vshrl.u32 %v6056, 7
        %v6058 = vsub.s32 %v6055, %v6057
        %v6059 = vrot.slane %v6043, %v6058
        %v6061 = vunpack.c.l.s4 1966171168
        %v6062 = vunpack.c.0.s8 %v6061
        %v6063 = vlaneseq
        %v6064 = vshrl.u32 %v6063, 7
        %v6065 = vsub.s32 %v6062, %v6064
        %v6066 = vrot.slane %v6044, %v6065
        %v6068 = vunpack.c.l.s4 1966171168
        %v6069 = vunpack.c.0.s8 %v6068
        %v6070 = vlaneseq
        %v6071 = vshrl.u32 %v6070, 7
        %v6072 = vsub.s32 %v6069, %v6071
        %v6073 = vrot.slane %v6045, %v6072
        %v6074 = vcombine.low %v6052, %v6059
        %v6075 = vcombine.high %v6052, %v6059
        %v6076 = vcombine.low %v6066, %v6073
        %v6077 = vcombine.high %v6066, %v6073
        %v6079 = vunpack.c.l.s4 1966171168
        %v6080 = vunpack.c.0.s8 %v6079
        %v6081 = vlaneseq
        %v6082 = vshrl.u32 %v6081, 7
        %v6083 = vsub.s32 %v6080, %v6082
        %v6084 = vrot.slane %v6074, %v6083
        %v6086 = vunpack.c.l.s4 1966171168
        %v6087 = vunpack.c.0.s8 %v6086
        %v6088 = vlaneseq
        %v6089 = vshrl.u32 %v6088, 7
        %v6090 = vsub.s32 %v6087, %v6089
        %v6091 = vrot.slane %v6075, %v6090
        %v6093 = vunpack.c.l.s4 1966171168
        %v6094 = vunpack.c.0.s8 %v6093
        %v6095 = vlaneseq
        %v6096 = vshrl.u32 %v6095, 7
        %v6097 = vsub.s32 %v6094, %v6096
        %v6098 = vrot.slane %v6076, %v6097
        %v6100 = vunpack.c.l.s4 1966171168
        %v6101 = vunpack.c.0.s8 %v6100
        %v6102 = vlaneseq
        %v6103 = vshrl.u32 %v6102, 7
        %v6104 = vsub.s32 %v6101, %v6103
        %v6105 = vrot.slane %v6077, %v6104
        %v6106 = vcombine.low %v6084, %v6098
        %v6107 = vcombine.low %v6091, %v6105
        %v6109 = vsel %vm5913, %v6107, 0
        %6111 = vmatprep.subr.mxu0 0.0
        %6112 = vmatpush1.msra.mxu0 %v6006
        %6113 = vmatprep.subr.mxu0 0.0
        %6114 = vmatpush1.msra.mxu0 %v6007
        %6115 = vmatprep.subr.mxu0 0.0
        %6116 = vmatpush1.msra.mxu0 %v6008
        %6117 = vmatprep.subr.mxu0 0.0
        %6118 = vmatpush1.msra.mxu0 %v6009
        %6119 = vmatprep.subr.mxu0 0.0
        %6120 = vmatpush1.msra.mxu0 %v6010
        %6121 = vmatprep.subr.mxu0 0.0
        %6122 = vmatpush1.msra.mxu0 %v6011
        %6123 = vmatprep.subr.mxu0 0.0
        %6124 = vmatpush1.msra.mxu0 %v6012
        %6125 = vmatprep.subr.mxu0 0.0
        %6126 = vmatpush1.msra.mxu0 %v6013
        %6127 = vmatprep.subr.mxu0 0.0
        %6128 = vmatpush1.msra.mxu0 %v6014
        %6129 = vmatprep.subr.mxu0 0.0
        %6130 = vmatpush1.msra.mxu0 %v6015
        %6131 = vmatprep.subr.mxu0 0.0
        %6132 = vmatpush1.msra.mxu0 %v6016
        %6133 = vmatprep.subr.mxu0 0.0
        %6134 = vmatpush1.msra.mxu0 %v6017
        %6135 = vmatprep.subr.mxu0 0.0
        %6136 = vmatpush1.msra.mxu0 %v6018
        %6137 = vmatprep.subr.mxu0 0.0
        %6138 = vmatpush1.msra.mxu0 %v6019
        %6139 = vmatprep.subr.mxu0 0.0
        %6140 = vmatpush1.msra.mxu0 %v6020
        %6141 = vmatprep.subr.mxu0 0.0
        %6142 = vmatpush1.msra.mxu0 %v6021
        %6143 = vmatprep.subr.mxu0 0.0
        %6144 = vmatpush1.msra.mxu0 %v6022
        %6145 = vmatprep.subr.mxu0 0.0
        %6146 = vmatpush1.msra.mxu0 %v6023
        %6147 = vmatprep.subr.mxu0 0.0
        %6148 = vmatpush1.msra.mxu0 %v6024
        %6149 = vmatprep.subr.mxu0 0.0
        %6150 = vmatpush1.msra.mxu0 %v6025
        %6151 = vmatprep.subr.mxu0 0.0
        %6152 = vmatpush1.msra.mxu0 %v6026
        %6153 = vmatprep.subr.mxu0 0.0
        %6154 = vmatpush1.msra.mxu0 %v6027
        %6155 = vmatprep.subr.mxu0 0.0
        %6156 = vmatpush1.msra.mxu0 %v6028
        %6157 = vmatprep.subr.mxu0 0.0
        %6158 = vmatpush1.msra.mxu0 %v6029
        %6159 = vmatprep.subr.mxu0 0.0
        %6160 = vmatpush1.msra.mxu0 %v6030
        %6161 = vmatprep.subr.mxu0 0.0
        %6162 = vmatpush1.msra.mxu0 %v6031
        %6163 = vmatprep.subr.mxu0 0.0
        %6164 = vmatpush1.msra.mxu0 %v6032
        %6165 = vmatprep.subr.mxu0 0.0
        %6166 = vmatpush1.msra.mxu0 %v6033
        %6167 = vmatprep.subr.mxu0 0.0
        %6168 = vmatpush1.msra.mxu0 0.0
        %6169 = vmatprep.subr.mxu0 0.0
        %6170 = vmatpush1.msra.mxu0 0.0
        %6171 = vmatprep.subr.mxu0 0.0
        %6172 = vmatpush1.msra.mxu0 0.0
        %6173 = vmatprep.subr.mxu0 0.0
        %6174 = vmatpush1.msra.mxu0 0.0
        %6175 = vmatprep.mubr.f32.mxu0 %v6109
        %6176 = vmatmul.mubr.f32.gmra.mrb[0].mxu0 %v6106
        %v6177 = vpop.f32.mrb[0].mxu0
        %v6178 = vadd.f32 0.0, %v6177
        %v6179 = vpop.f32.mrb[0].mxu0
        %6180 = vdwg.mxu0
        %v6189 = vcombine.low %v5946, %v5948
        %v6190 = vcombine.low %v5950, %v5952
        %v6191 = vcombine.low %v5954, %v5956
        %v6192 = vcombine.low %v5958, %v5960
        %v6194 = vunpack.c.l.s4 1966171168
        %v6195 = vunpack.c.0.s8 %v6194
        %v6196 = vlaneseq
        %v6197 = vshrl.u32 %v6196, 7
        %v6198 = vsub.s32 %v6195, %v6197
        %v6199 = vrot.slane %v6189, %v6198
        %v6201 = vunpack.c.l.s4 1966171168
        %v6202 = vunpack.c.0.s8 %v6201
        %v6203 = vlaneseq
        %v6204 = vshrl.u32 %v6203, 7
        %v6205 = vsub.s32 %v6202, %v6204
        %v6206 = vrot.slane %v6190, %v6205
        %v6208 = vunpack.c.l.s4 1966171168
        %v6209 = vunpack.c.0.s8 %v6208
        %v6210 = vlaneseq
        %v6211 = vshrl.u32 %v6210, 7
        %v6212 = vsub.s32 %v6209, %v6211
        %v6213 = vrot.slane %v6191, %v6212
        %v6215 = vunpack.c.l.s4 1966171168
        %v6216 = vunpack.c.0.s8 %v6215
        %v6217 = vlaneseq
        %v6218 = vshrl.u32 %v6217, 7
        %v6219 = vsub.s32 %v6216, %v6218
        %v6220 = vrot.slane %v6192, %v6219
        %v6221 = vcombine.low %v6199, %v6206
        %v6222 = vcombine.high %v6199, %v6206
        %v6223 = vcombine.low %v6213, %v6220
        %v6224 = vcombine.high %v6213, %v6220
        %v6226 = vunpack.c.l.s4 1966171168
        %v6227 = vunpack.c.0.s8 %v6226
        %v6228 = vlaneseq
        %v6229 = vshrl.u32 %v6228, 7
        %v6230 = vsub.s32 %v6227, %v6229
        %v6231 = vrot.slane %v6221, %v6230
        %v6233 = vunpack.c.l.s4 1966171168
        %v6234 = vunpack.c.0.s8 %v6233
        %v6235 = vlaneseq
        %v6236 = vshrl.u32 %v6235, 7
        %v6237 = vsub.s32 %v6234, %v6236
        %v6238 = vrot.slane %v6222, %v6237
        %v6240 = vunpack.c.l.s4 1966171168
        %v6241 = vunpack.c.0.s8 %v6240
        %v6242 = vlaneseq
        %v6243 = vshrl.u32 %v6242, 7
        %v6244 = vsub.s32 %v6241, %v6243
        %v6245 = vrot.slane %v6223, %v6244
        %v6247 = vunpack.c.l.s4 1966171168
        %v6248 = vunpack.c.0.s8 %v6247
        %v6249 = vlaneseq
        %v6250 = vshrl.u32 %v6249, 7
        %v6251 = vsub.s32 %v6248, %v6250
        %v6252 = vrot.slane %v6224, %v6251
        %v6253 = vcombine.low %v6231, %v6245
        %v6254 = vcombine.low %v6238, %v6252
        %v6256 = vsel %vm5913, %v6254, 0
        %6258 = vmatprep.subr.mxu0 0.0
        %6259 = vmatpush1.msra.mxu0 %v5961
        %6260 = vmatprep.subr.mxu0 0.0
        %6261 = vmatpush1.msra.mxu0 %v5962
        %6262 = vmatprep.subr.mxu0 0.0
        %6263 = vmatpush1.msra.mxu0 %v5963
        %6264 = vmatprep.subr.mxu0 0.0
        %6265 = vmatpush1.msra.mxu0 %v5964
        %6266 = vmatprep.subr.mxu0 0.0
        %6267 = vmatpush1.msra.mxu0 %v5965
        %6268 = vmatprep.subr.mxu0 0.0
        %6269 = vmatpush1.msra.mxu0 %v5966
        %6270 = vmatprep.subr.mxu0 0.0
        %6271 = vmatpush1.msra.mxu0 %v5967
        %6272 = vmatprep.subr.mxu0 0.0
        %6273 = vmatpush1.msra.mxu0 %v5968
        %6274 = vmatprep.subr.mxu0 0.0
        %6275 = vmatpush1.msra.mxu0 %v5969
        %6276 = vmatprep.subr.mxu0 0.0
        %6277 = vmatpush1.msra.mxu0 %v5970
        %6278 = vmatprep.subr.mxu0 0.0
        %6279 = vmatpush1.msra.mxu0 %v5971
        %6280 = vmatprep.subr.mxu0 0.0
        %6281 = vmatpush1.msra.mxu0 %v5972
        %6282 = vmatprep.subr.mxu0 0.0
        %6283 = vmatpush1.msra.mxu0 %v5973
        %6284 = vmatprep.subr.mxu0 0.0
        %6285 = vmatpush1.msra.mxu0 %v5974
        %6286 = vmatprep.subr.mxu0 0.0
        %6287 = vmatpush1.msra.mxu0 %v5975
        %6288 = vmatprep.subr.mxu0 0.0
        %6289 = vmatpush1.msra.mxu0 %v5976
        %6290 = vmatprep.subr.mxu0 0.0
        %6291 = vmatpush1.msra.mxu0 %v5977
        %6292 = vmatprep.subr.mxu0 0.0
        %6293 = vmatpush1.msra.mxu0 %v5978
        %6294 = vmatprep.subr.mxu0 0.0
        %6295 = vmatpush1.msra.mxu0 %v5979
        %6296 = vmatprep.subr.mxu0 0.0
        %6297 = vmatpush1.msra.mxu0 %v5980
        %6298 = vmatprep.subr.mxu0 0.0
        %6299 = vmatpush1.msra.mxu0 %v5981
        %6300 = vmatprep.subr.mxu0 0.0
        %6301 = vmatpush1.msra.mxu0 %v5982
        %6302 = vmatprep.subr.mxu0 0.0
        %6303 = vmatpush1.msra.mxu0 %v5983
        %6304 = vmatprep.subr.mxu0 0.0
        %6305 = vmatpush1.msra.mxu0 %v5984
        %6306 = vmatprep.subr.mxu0 0.0
        %6307 = vmatpush1.msra.mxu0 %v5985
        %6308 = vmatprep.subr.mxu0 0.0
        %6309 = vmatpush1.msra.mxu0 %v5986
        %6310 = vmatprep.subr.mxu0 0.0
        %6311 = vmatpush1.msra.mxu0 %v5987
        %6312 = vmatprep.subr.mxu0 0.0
        %6313 = vmatpush1.msra.mxu0 %v5988
        %6314 = vmatprep.subr.mxu0 0.0
        %6315 = vmatpush1.msra.mxu0 0.0
        %6316 = vmatprep.subr.mxu0 0.0
        %6317 = vmatpush1.msra.mxu0 0.0
        %6318 = vmatprep.subr.mxu0 0.0
        %6319 = vmatpush1.msra.mxu0 0.0
        %6320 = vmatprep.subr.mxu0 0.0
        %6321 = vmatpush1.msra.mxu0 0.0
        %6322 = vmatprep.mubr.f32.mxu0 %v6256
        %6323 = vmatmul.mubr.f32.gmra.mrb[0].mxu0 %v6253
        %v6324 = vpop.f32.mrb[0].mxu0
        %v6325 = vadd.f32 %v6178, %v6324
        %v6326 = vpop.f32.mrb[0].mxu0
        %6327 = vdwg.mxu0
        %s6328 = scalar_lea.vmem %s323, 2
        %v6329 = vld [vmem:[%s6328] ss:$8 sm:$0x3]
        %s6330 = scalar_lea.vmem %s323, 34
        %v6331 = vld [vmem:[%s6330] ss:$8 sm:$0x3]
        %s6332 = scalar_lea.vmem %s323, 66
        %v6333 = vld [vmem:[%s6332] ss:$8 sm:$0x3]
        %s6334 = scalar_lea.vmem %s323, 98
        %v6335 = vld [vmem:[%s6334] ss:$8 sm:$0x3]
        %s6336 = scalar_lea.vmem %s323, 130
        %v6337 = vld [vmem:[%s6336] ss:$8 sm:$0x3]
        %s6338 = scalar_lea.vmem %s323, 162
        %v6339 = vld [vmem:[%s6338] ss:$8 sm:$0x3]
        %s6340 = scalar_lea.vmem %s323, 194
        %v6341 = vld [vmem:[%s6340] ss:$8 sm:$0x3]
        %s6342 = scalar_lea.vmem %s323, 226
        %v6343 = vld [vmem:[%s6342] ss:$8 sm:$0x3]
        %s6344 = scalar_lea.vmem %s5, 448
        %v6345 = vld [vmem:[%s6344] sm:$0xff]
        %v6346 = vld [vmem:[%s6344 + $0x8] sm:$0xff]
        %v6347 = vld [vmem:[%s6344 + $0x10] sm:$0xff]
        %v6348 = vld [vmem:[%s6344 + $0x18] sm:$0xff]
        %v6349 = vld [vmem:[%s6344 + $0x20] sm:$0xff]
        %v6350 = vld [vmem:[%s6344 + $0x28] sm:$0xff]
        %v6351 = vld [vmem:[%s6344 + $0x30] sm:$0xff]
        %v6352 = vld [vmem:[%s6344 + $0x38] sm:$0xff]
        %v6353 = vld [vmem:[%s6344 + $0x40] sm:$0xff]
        %v6354 = vld [vmem:[%s6344 + $0x48] sm:$0xff]
        %v6355 = vld [vmem:[%s6344 + $0x50] sm:$0xff]
        %v6356 = vld [vmem:[%s6344 + $0x58] sm:$0xff]
        %v6357 = vld [vmem:[%s6344 + $0x60] sm:$0xff]
        %v6358 = vld [vmem:[%s6344 + $0x68] sm:$0xff]
        %v6359 = vld [vmem:[%s6344 + $0x70] sm:$0xff]
        %v6360 = vld [vmem:[%s6344 + $0x78] sm:$0xff]
        %v6361 = vld [vmem:[%s6344 + $0x80] sm:$0xff]
        %v6362 = vld [vmem:[%s6344 + $0x88] sm:$0xff]
        %v6363 = vld [vmem:[%s6344 + $0x90] sm:$0xff]
        %v6364 = vld [vmem:[%s6344 + $0x98] sm:$0xff]
        %v6365 = vld [vmem:[%s6344 + $0xa0] sm:$0xff]
        %v6366 = vld [vmem:[%s6344 + $0xa8] sm:$0xff]
        %v6367 = vld [vmem:[%s6344 + $0xb0] sm:$0xff]
        %v6368 = vld [vmem:[%s6344 + $0xb8] sm:$0xff]
        %v6369 = vld [vmem:[%s6344 + $0xc0] sm:$0xff]
        %v6370 = vld [vmem:[%s6344 + $0xc8] sm:$0xff]
        %v6371 = vld [vmem:[%s6344 + $0xd0] sm:$0xff]
        %v6372 = vld [vmem:[%s6344 + $0xd8] sm:$0xff]
        %v6381 = vcombine.low %v6329, %v6331
        %v6382 = vcombine.low %v6333, %v6335
        %v6383 = vcombine.low %v6337, %v6339
        %v6384 = vcombine.low %v6341, %v6343
        %v6386 = vunpack.c.l.s4 1966171168
        %v6387 = vunpack.c.0.s8 %v6386
        %v6388 = vlaneseq
        %v6389 = vshrl.u32 %v6388, 7
        %v6390 = vsub.s32 %v6387, %v6389
        %v6391 = vrot.slane %v6381, %v6390
        %v6393 = vunpack.c.l.s4 1966171168
        %v6394 = vunpack.c.0.s8 %v6393
        %v6395 = vlaneseq
        %v6396 = vshrl.u32 %v6395, 7
        %v6397 = vsub.s32 %v6394, %v6396
        %v6398 = vrot.slane %v6382, %v6397
        %v6400 = vunpack.c.l.s4 1966171168
        %v6401 = vunpack.c.0.s8 %v6400
        %v6402 = vlaneseq
        %v6403 = vshrl.u32 %v6402, 7
        %v6404 = vsub.s32 %v6401, %v6403
        %v6405 = vrot.slane %v6383, %v6404
        %v6407 = vunpack.c.l.s4 1966171168
        %v6408 = vunpack.c.0.s8 %v6407
        %v6409 = vlaneseq
        %v6410 = vshrl.u32 %v6409, 7
        %v6411 = vsub.s32 %v6408, %v6410
        %v6412 = vrot.slane %v6384, %v6411
        %v6413 = vcombine.low %v6391, %v6398
        %v6414 = vcombine.high %v6391, %v6398
        %v6415 = vcombine.low %v6405, %v6412
        %v6416 = vcombine.high %v6405, %v6412
        %v6418 = vunpack.c.l.s4 1966171168
        %v6419 = vunpack.c.0.s8 %v6418
        %v6420 = vlaneseq
        %v6421 = vshrl.u32 %v6420, 7
        %v6422 = vsub.s32 %v6419, %v6421
        %v6423 = vrot.slane %v6413, %v6422
        %v6425 = vunpack.c.l.s4 1966171168
        %v6426 = vunpack.c.0.s8 %v6425
        %v6427 = vlaneseq
        %v6428 = vshrl.u32 %v6427, 7
        %v6429 = vsub.s32 %v6426, %v6428
        %v6430 = vrot.slane %v6414, %v6429
        %v6432 = vunpack.c.l.s4 1966171168
        %v6433 = vunpack.c.0.s8 %v6432
        %v6434 = vlaneseq
        %v6435 = vshrl.u32 %v6434, 7
        %v6436 = vsub.s32 %v6433, %v6435
        %v6437 = vrot.slane %v6415, %v6436
        %v6439 = vunpack.c.l.s4 1966171168
        %v6440 = vunpack.c.0.s8 %v6439
        %v6441 = vlaneseq
        %v6442 = vshrl.u32 %v6441, 7
        %v6443 = vsub.s32 %v6440, %v6442
        %v6444 = vrot.slane %v6416, %v6443
        %v6445 = vcombine.low %v6423, %v6437
        %v6446 = vcombine.low %v6430, %v6444
        %v6448 = vsel %vm5913, %v6446, 0
        %6450 = vmatprep.subr.mxu0 0.0
        %6451 = vmatpush1.msra.mxu0 %v6345
        %6452 = vmatprep.subr.mxu0 0.0
        %6453 = vmatpush1.msra.mxu0 %v6346
        %6454 = vmatprep.subr.mxu0 0.0
        %6455 = vmatpush1.msra.mxu0 %v6347
        %6456 = vmatprep.subr.mxu0 0.0
        %6457 = vmatpush1.msra.mxu0 %v6348
        %6458 = vmatprep.subr.mxu0 0.0
        %6459 = vmatpush1.msra.mxu0 %v6349
        %6460 = vmatprep.subr.mxu0 0.0
        %6461 = vmatpush1.msra.mxu0 %v6350
        %6462 = vmatprep.subr.mxu0 0.0
        %6463 = vmatpush1.msra.mxu0 %v6351
        %6464 = vmatprep.subr.mxu0 0.0
        %6465 = vmatpush1.msra.mxu0 %v6352
        %6466 = vmatprep.subr.mxu0 0.0
        %6467 = vmatpush1.msra.mxu0 %v6353
        %6468 = vmatprep.subr.mxu0 0.0
        %6469 = vmatpush1.msra.mxu0 %v6354
        %6470 = vmatprep.subr.mxu0 0.0
        %6471 = vmatpush1.msra.mxu0 %v6355
        %6472 = vmatprep.subr.mxu0 0.0
        %6473 = vmatpush1.msra.mxu0 %v6356
        %6474 = vmatprep.subr.mxu0 0.0
        %6475 = vmatpush1.msra.mxu0 %v6357
        %6476 = vmatprep.subr.mxu0 0.0
        %6477 = vmatpush1.msra.mxu0 %v6358
        %6478 = vmatprep.subr.mxu0 0.0
        %6479 = vmatpush1.msra.mxu0 %v6359
        %6480 = vmatprep.subr.mxu0 0.0
        %6481 = vmatpush1.msra.mxu0 %v6360
        %6482 = vmatprep.subr.mxu0 0.0
        %6483 = vmatpush1.msra.mxu0 %v6361
        %6484 = vmatprep.subr.mxu0 0.0
        %6485 = vmatpush1.msra.mxu0 %v6362
        %6486 = vmatprep.subr.mxu0 0.0
        %6487 = vmatpush1.msra.mxu0 %v6363
        %6488 = vmatprep.subr.mxu0 0.0
        %6489 = vmatpush1.msra.mxu0 %v6364
        %6490 = vmatprep.subr.mxu0 0.0
        %6491 = vmatpush1.msra.mxu0 %v6365
        %6492 = vmatprep.subr.mxu0 0.0
        %6493 = vmatpush1.msra.mxu0 %v6366
        %6494 = vmatprep.subr.mxu0 0.0
        %6495 = vmatpush1.msra.mxu0 %v6367
        %6496 = vmatprep.subr.mxu0 0.0
        %6497 = vmatpush1.msra.mxu0 %v6368
        %6498 = vmatprep.subr.mxu0 0.0
        %6499 = vmatpush1.msra.mxu0 %v6369
        %6500 = vmatprep.subr.mxu0 0.0
        %6501 = vmatpush1.msra.mxu0 %v6370
        %6502 = vmatprep.subr.mxu0 0.0
        %6503 = vmatpush1.msra.mxu0 %v6371
        %6504 = vmatprep.subr.mxu0 0.0
        %6505 = vmatpush1.msra.mxu0 %v6372
        %6506 = vmatprep.subr.mxu0 0.0
        %6507 = vmatpush1.msra.mxu0 0.0
        %6508 = vmatprep.subr.mxu0 0.0
        %6509 = vmatpush1.msra.mxu0 0.0
        %6510 = vmatprep.subr.mxu0 0.0
        %6511 = vmatpush1.msra.mxu0 0.0
        %6512 = vmatprep.subr.mxu0 0.0
        %6513 = vmatpush1.msra.mxu0 0.0
        %6514 = vmatprep.mubr.f32.mxu0 %v6448
        %6515 = vmatmul.mubr.f32.gmra.mrb[0].mxu0 %v6445
        %v6516 = vpop.f32.mrb[0].mxu0
        %v6517 = vadd.f32 0.0, %v6516
        %v6518 = vpop.f32.mrb[0].mxu0
        %6519 = vdwg.mxu0
        %v6520 = vadd.f32 %v6325, %v6517
        %s6521 = scalar_lea.vmem %s323, 3
        %v6522 = vld [vmem:[%s6521] ss:$8 sm:$0x3]
        %s6523 = scalar_lea.vmem %s323, 35
        %v6524 = vld [vmem:[%s6523] ss:$8 sm:$0x3]
        %s6525 = scalar_lea.vmem %s323, 67
        %v6526 = vld [vmem:[%s6525] ss:$8 sm:$0x3]
        %s6527 = scalar_lea.vmem %s323, 99
        %v6528 = vld [vmem:[%s6527] ss:$8 sm:$0x3]
        %s6529 = scalar_lea.vmem %s323, 131
        %v6530 = vld [vmem:[%s6529] ss:$8 sm:$0x3]
        %s6531 = scalar_lea.vmem %s323, 163
        %v6532 = vld [vmem:[%s6531] ss:$8 sm:$0x3]
        %s6533 = scalar_lea.vmem %s323, 195
        %v6534 = vld [vmem:[%s6533] ss:$8 sm:$0x3]
        %s6535 = scalar_lea.vmem %s323, 227
        %v6536 = vld [vmem:[%s6535] ss:$8 sm:$0x3]
        %s6537 = scalar_lea.vmem %s5, 672
        %v6538 = vld [vmem:[%s6537] sm:$0xff]
        %v6539 = vld [vmem:[%s6537 + $0x8] sm:$0xff]
        %v6540 = vld [vmem:[%s6537 + $0x10] sm:$0xff]
        %v6541 = vld [vmem:[%s6537 + $0x18] sm:$0xff]
        %v6542 = vld [vmem:[%s6537 + $0x20] sm:$0xff]
        %v6543 = vld [vmem:[%s6537 + $0x28] sm:$0xff]
        %v6544 = vld [vmem:[%s6537 + $0x30] sm:$0xff]
        %v6545 = vld [vmem:[%s6537 + $0x38] sm:$0xff]
        %v6546 = vld [vmem:[%s6537 + $0x40] sm:$0xff]
        %v6547 = vld [vmem:[%s6537 + $0x48] sm:$0xff]
        %v6548 = vld [vmem:[%s6537 + $0x50] sm:$0xff]
        %v6549 = vld [vmem:[%s6537 + $0x58] sm:$0xff]
        %v6550 = vld [vmem:[%s6537 + $0x60] sm:$0xff]
        %v6551 = vld [vmem:[%s6537 + $0x68] sm:$0xff]
        %v6552 = vld [vmem:[%s6537 + $0x70] sm:$0xff]
        %v6553 = vld [vmem:[%s6537 + $0x78] sm:$0xff]
        %v6554 = vld [vmem:[%s6537 + $0x80] sm:$0xff]
        %v6555 = vld [vmem:[%s6537 + $0x88] sm:$0xff]
        %v6556 = vld [vmem:[%s6537 + $0x90] sm:$0xff]
        %v6557 = vld [vmem:[%s6537 + $0x98] sm:$0xff]
        %v6558 = vld [vmem:[%s6537 + $0xa0] sm:$0xff]
        %v6559 = vld [vmem:[%s6537 + $0xa8] sm:$0xff]
        %v6560 = vld [vmem:[%s6537 + $0xb0] sm:$0xff]
        %v6561 = vld [vmem:[%s6537 + $0xb8] sm:$0xff]
        %v6562 = vld [vmem:[%s6537 + $0xc0] sm:$0xff]
        %v6563 = vld [vmem:[%s6537 + $0xc8] sm:$0xff]
        %v6564 = vld [vmem:[%s6537 + $0xd0] sm:$0xff]
        %v6565 = vld [vmem:[%s6537 + $0xd8] sm:$0xff]
        %v6574 = vcombine.low %v6522, %v6524
        %v6575 = vcombine.low %v6526, %v6528
        %v6576 = vcombine.low %v6530, %v6532
        %v6577 = vcombine.low %v6534, %v6536
        %v6579 = vunpack.c.l.s4 1966171168
        %v6580 = vunpack.c.0.s8 %v6579
        %v6581 = vlaneseq
        %v6582 = vshrl.u32 %v6581, 7
        %v6583 = vsub.s32 %v6580, %v6582
        %v6584 = vrot.slane %v6574, %v6583
        %v6586 = vunpack.c.l.s4 1966171168
        %v6587 = vunpack.c.0.s8 %v6586
        %v6588 = vlaneseq
        %v6589 = vshrl.u32 %v6588, 7
        %v6590 = vsub.s32 %v6587, %v6589
        %v6591 = vrot.slane %v6575, %v6590
        %v6593 = vunpack.c.l.s4 1966171168
        %v6594 = vunpack.c.0.s8 %v6593
        %v6595 = vlaneseq
        %v6596 = vshrl.u32 %v6595, 7
        %v6597 = vsub.s32 %v6594, %v6596
        %v6598 = vrot.slane %v6576, %v6597
        %v6600 = vunpack.c.l.s4 1966171168
        %v6601 = vunpack.c.0.s8 %v6600
        %v6602 = vlaneseq
        %v6603 = vshrl.u32 %v6602, 7
        %v6604 = vsub.s32 %v6601, %v6603
        %v6605 = vrot.slane %v6577, %v6604
        %v6606 = vcombine.low %v6584, %v6591
        %v6607 = vcombine.high %v6584, %v6591
        %v6608 = vcombine.low %v6598, %v6605
        %v6609 = vcombine.high %v6598, %v6605
        %v6611 = vunpack.c.l.s4 1966171168
        %v6612 = vunpack.c.0.s8 %v6611
        %v6613 = vlaneseq
        %v6614 = vshrl.u32 %v6613, 7
        %v6615 = vsub.s32 %v6612, %v6614
        %v6616 = vrot.slane %v6606, %v6615
        %v6618 = vunpack.c.l.s4 1966171168
        %v6619 = vunpack.c.0.s8 %v6618
        %v6620 = vlaneseq
        %v6621 = vshrl.u32 %v6620, 7
        %v6622 = vsub.s32 %v6619, %v6621
        %v6623 = vrot.slane %v6607, %v6622
        %v6625 = vunpack.c.l.s4 1966171168
        %v6626 = vunpack.c.0.s8 %v6625
        %v6627 = vlaneseq
        %v6628 = vshrl.u32 %v6627, 7
        %v6629 = vsub.s32 %v6626, %v6628
        %v6630 = vrot.slane %v6608, %v6629
        %v6632 = vunpack.c.l.s4 1966171168
        %v6633 = vunpack.c.0.s8 %v6632
        %v6634 = vlaneseq
        %v6635 = vshrl.u32 %v6634, 7
        %v6636 = vsub.s32 %v6633, %v6635
        %v6637 = vrot.slane %v6609, %v6636
        %v6638 = vcombine.low %v6616, %v6630
        %v6639 = vcombine.low %v6623, %v6637
        %v6641 = vsel %vm5913, %v6639, 0
        %6643 = vmatprep.subr.mxu0 0.0
        %6644 = vmatpush1.msra.mxu0 %v6538
        %6645 = vmatprep.subr.mxu0 0.0
        %6646 = vmatpush1.msra.mxu0 %v6539
        %6647 = vmatprep.subr.mxu0 0.0
        %6648 = vmatpush1.msra.mxu0 %v6540
        %6649 = vmatprep.subr.mxu0 0.0
        %6650 = vmatpush1.msra.mxu0 %v6541
        %6651 = vmatprep.subr.mxu0 0.0
        %6652 = vmatpush1.msra.mxu0 %v6542
        %6653 = vmatprep.subr.mxu0 0.0
        %6654 = vmatpush1.msra.mxu0 %v6543
        %6655 = vmatprep.subr.mxu0 0.0
        %6656 = vmatpush1.msra.mxu0 %v6544
        %6657 = vmatprep.subr.mxu0 0.0
        %6658 = vmatpush1.msra.mxu0 %v6545
        %6659 = vmatprep.subr.mxu0 0.0
        %6660 = vmatpush1.msra.mxu0 %v6546
        %6661 = vmatprep.subr.mxu0 0.0
        %6662 = vmatpush1.msra.mxu0 %v6547
        %6663 = vmatprep.subr.mxu0 0.0
        %6664 = vmatpush1.msra.mxu0 %v6548
        %6665 = vmatprep.subr.mxu0 0.0
        %6666 = vmatpush1.msra.mxu0 %v6549
        %6667 = vmatprep.subr.mxu0 0.0
        %6668 = vmatpush1.msra.mxu0 %v6550
        %6669 = vmatprep.subr.mxu0 0.0
        %6670 = vmatpush1.msra.mxu0 %v6551
        %6671 = vmatprep.subr.mxu0 0.0
        %6672 = vmatpush1.msra.mxu0 %v6552
        %6673 = vmatprep.subr.mxu0 0.0
        %6674 = vmatpush1.msra.mxu0 %v6553
        %6675 = vmatprep.subr.mxu0 0.0
        %6676 = vmatpush1.msra.mxu0 %v6554
        %6677 = vmatprep.subr.mxu0 0.0
        %6678 = vmatpush1.msra.mxu0 %v6555
        %6679 = vmatprep.subr.mxu0 0.0
        %6680 = vmatpush1.msra.mxu0 %v6556
        %6681 = vmatprep.subr.mxu0 0.0
        %6682 = vmatpush1.msra.mxu0 %v6557
        %6683 = vmatprep.subr.mxu0 0.0
        %6684 = vmatpush1.msra.mxu0 %v6558
        %6685 = vmatprep.subr.mxu0 0.0
        %6686 = vmatpush1.msra.mxu0 %v6559
        %6687 = vmatprep.subr.mxu0 0.0
        %6688 = vmatpush1.msra.mxu0 %v6560
        %6689 = vmatprep.subr.mxu0 0.0
        %6690 = vmatpush1.msra.mxu0 %v6561
        %6691 = vmatprep.subr.mxu0 0.0
        %6692 = vmatpush1.msra.mxu0 %v6562
        %6693 = vmatprep.subr.mxu0 0.0
        %6694 = vmatpush1.msra.mxu0 %v6563
        %6695 = vmatprep.subr.mxu0 0.0
        %6696 = vmatpush1.msra.mxu0 %v6564
        %6697 = vmatprep.subr.mxu0 0.0
        %6698 = vmatpush1.msra.mxu0 %v6565
        %6699 = vmatprep.subr.mxu0 0.0
        %6700 = vmatpush1.msra.mxu0 0.0
        %6701 = vmatprep.subr.mxu0 0.0
        %6702 = vmatpush1.msra.mxu0 0.0
        %6703 = vmatprep.subr.mxu0 0.0
        %6704 = vmatpush1.msra.mxu0 0.0
        %6705 = vmatprep.subr.mxu0 0.0
        %6706 = vmatpush1.msra.mxu0 0.0
        %6707 = vmatprep.mubr.f32.mxu0 %v6641
        %6708 = vmatmul.mubr.f32.gmra.mrb[0].mxu0 %v6638
        %v6709 = vpop.f32.mrb[0].mxu0
        %v6710 = vadd.f32 0.0, %v6709
        %v6711 = vpop.f32.mrb[0].mxu0
        %6712 = vdwg.mxu0
        %v6713 = vadd.f32 %v6520, %v6710
        %s6714 = scalar_lea.vmem %s323, 4
        %v6715 = vld [vmem:[%s6714] ss:$8 sm:$0x3]
        %s6716 = scalar_lea.vmem %s323, 36
        %v6717 = vld [vmem:[%s6716] ss:$8 sm:$0x3]
        %s6718 = scalar_lea.vmem %s323, 68
        %v6719 = vld [vmem:[%s6718] ss:$8 sm:$0x3]
        %s6720 = scalar_lea.vmem %s323, 100
        %v6721 = vld [vmem:[%s6720] ss:$8 sm:$0x3]
        %s6722 = scalar_lea.vmem %s323, 132
        %v6723 = vld [vmem:[%s6722] ss:$8 sm:$0x3]
        %s6724 = scalar_lea.vmem %s323, 164
        %v6725 = vld [vmem:[%s6724] ss:$8 sm:$0x3]
        %s6726 = scalar_lea.vmem %s323, 196
        %v6727 = vld [vmem:[%s6726] ss:$8 sm:$0x3]
        %s6728 = scalar_lea.vmem %s323, 228
        %v6729 = vld [vmem:[%s6728] ss:$8 sm:$0x3]
        %s6730 = scalar_lea.vmem %s5, 896
        %v6731 = vld [vmem:[%s6730] sm:$0xff]
        %v6732 = vld [vmem:[%s6730 + $0x8] sm:$0xff]
        %v6733 = vld [vmem:[%s6730 + $0x10] sm:$0xff]
        %v6734 = vld [vmem:[%s6730 + $0x18] sm:$0xff]
        %v6735 = vld [vmem:[%s6730 + $0x20] sm:$0xff]
        %v6736 = vld [vmem:[%s6730 + $0x28] sm:$0xff]
        %v6737 = vld [vmem:[%s6730 + $0x30] sm:$0xff]
        %v6738 = vld [vmem:[%s6730 + $0x38] sm:$0xff]
        %v6739 = vld [vmem:[%s6730 + $0x40] sm:$0xff]
        %v6740 = vld [vmem:[%s6730 + $0x48] sm:$0xff]
        %v6741 = vld [vmem:[%s6730 + $0x50] sm:$0xff]
        %v6742 = vld [vmem:[%s6730 + $0x58] sm:$0xff]
        %v6743 = vld [vmem:[%s6730 + $0x60] sm:$0xff]
        %v6744 = vld [vmem:[%s6730 + $0x68] sm:$0xff]
        %v6745 = vld [vmem:[%s6730 + $0x70] sm:$0xff]
        %v6746 = vld [vmem:[%s6730 + $0x78] sm:$0xff]
        %v6747 = vld [vmem:[%s6730 + $0x80] sm:$0xff]
        %v6748 = vld [vmem:[%s6730 + $0x88] sm:$0xff]
        %v6749 = vld [vmem:[%s6730 + $0x90] sm:$0xff]
        %v6750 = vld [vmem:[%s6730 + $0x98] sm:$0xff]
        %v6751 = vld [vmem:[%s6730 + $0xa0] sm:$0xff]
        %v6752 = vld [vmem:[%s6730 + $0xa8] sm:$0xff]
        %v6753 = vld [vmem:[%s6730 + $0xb0] sm:$0xff]
        %v6754 = vld [vmem:[%s6730 + $0xb8] sm:$0xff]
        %v6755 = vld [vmem:[%s6730 + $0xc0] sm:$0xff]
        %v6756 = vld [vmem:[%s6730 + $0xc8] sm:$0xff]
        %v6757 = vld [vmem:[%s6730 + $0xd0] sm:$0xff]
        %v6758 = vld [vmem:[%s6730 + $0xd8] sm:$0xff]
        %v6767 = vcombine.low %v6715, %v6717
        %v6768 = vcombine.low %v6719, %v6721
        %v6769 = vcombine.low %v6723, %v6725
        %v6770 = vcombine.low %v6727, %v6729
        %v6772 = vunpack.c.l.s4 1966171168
        %v6773 = vunpack.c.0.s8 %v6772
        %v6774 = vlaneseq
        %v6775 = vshrl.u32 %v6774, 7
        %v6776 = vsub.s32 %v6773, %v6775
        %v6777 = vrot.slane %v6767, %v6776
        %v6779 = vunpack.c.l.s4 1966171168
        %v6780 = vunpack.c.0.s8 %v6779
        %v6781 = vlaneseq
        %v6782 = vshrl.u32 %v6781, 7
        %v6783 = vsub.s32 %v6780, %v6782
        %v6784 = vrot.slane %v6768, %v6783
        %v6786 = vunpack.c.l.s4 1966171168
        %v6787 = vunpack.c.0.s8 %v6786
        %v6788 = vlaneseq
        %v6789 = vshrl.u32 %v6788, 7
        %v6790 = vsub.s32 %v6787, %v6789
        %v6791 = vrot.slane %v6769, %v6790
        %v6793 = vunpack.c.l.s4 1966171168
        %v6794 = vunpack.c.0.s8 %v6793
        %v6795 = vlaneseq
        %v6796 = vshrl.u32 %v6795, 7
        %v6797 = vsub.s32 %v6794, %v6796
        %v6798 = vrot.slane %v6770, %v6797
        %v6799 = vcombine.low %v6777, %v6784
        %v6800 = vcombine.high %v6777, %v6784
        %v6801 = vcombine.low %v6791, %v6798
        %v6802 = vcombine.high %v6791, %v6798
        %v6804 = vunpack.c.l.s4 1966171168
        %v6805 = vunpack.c.0.s8 %v6804
        %v6806 = vlaneseq
        %v6807 = vshrl.u32 %v6806, 7
        %v6808 = vsub.s32 %v6805, %v6807
        %v6809 = vrot.slane %v6799, %v6808
        %v6811 = vunpack.c.l.s4 1966171168
        %v6812 = vunpack.c.0.s8 %v6811
        %v6813 = vlaneseq
        %v6814 = vshrl.u32 %v6813, 7
        %v6815 = vsub.s32 %v6812, %v6814
        %v6816 = vrot.slane %v6800, %v6815
        %v6818 = vunpack.c.l.s4 1966171168
        %v6819 = vunpack.c.0.s8 %v6818
        %v6820 = vlaneseq
        %v6821 = vshrl.u32 %v6820, 7
        %v6822 = vsub.s32 %v6819, %v6821
        %v6823 = vrot.slane %v6801, %v6822
        %v6825 = vunpack.c.l.s4 1966171168
        %v6826 = vunpack.c.0.s8 %v6825
        %v6827 = vlaneseq
        %v6828 = vshrl.u32 %v6827, 7
        %v6829 = vsub.s32 %v6826, %v6828
        %v6830 = vrot.slane %v6802, %v6829
        %v6831 = vcombine.low %v6809, %v6823
        %v6832 = vcombine.low %v6816, %v6830
        %v6834 = vsel %vm5913, %v6832, 0
        %6836 = vmatprep.subr.mxu0 0.0
        %6837 = vmatpush1.msra.mxu0 %v6731
        %6838 = vmatprep.subr.mxu0 0.0
        %6839 = vmatpush1.msra.mxu0 %v6732
        %6840 = vmatprep.subr.mxu0 0.0
        %6841 = vmatpush1.msra.mxu0 %v6733
        %6842 = vmatprep.subr.mxu0 0.0
        %6843 = vmatpush1.msra.mxu0 %v6734
        %6844 = vmatprep.subr.mxu0 0.0
        %6845 = vmatpush1.msra.mxu0 %v6735
        %6846 = vmatprep.subr.mxu0 0.0
        %6847 = vmatpush1.msra.mxu0 %v6736
        %6848 = vmatprep.subr.mxu0 0.0
        %6849 = vmatpush1.msra.mxu0 %v6737
        %6850 = vmatprep.subr.mxu0 0.0
        %6851 = vmatpush1.msra.mxu0 %v6738
        %6852 = vmatprep.subr.mxu0 0.0
        %6853 = vmatpush1.msra.mxu0 %v6739
        %6854 = vmatprep.subr.mxu0 0.0
        %6855 = vmatpush1.msra.mxu0 %v6740
        %6856 = vmatprep.subr.mxu0 0.0
        %6857 = vmatpush1.msra.mxu0 %v6741
        %6858 = vmatprep.subr.mxu0 0.0
        %6859 = vmatpush1.msra.mxu0 %v6742
        %6860 = vmatprep.subr.mxu0 0.0
        %6861 = vmatpush1.msra.mxu0 %v6743
        %6862 = vmatprep.subr.mxu0 0.0
        %6863 = vmatpush1.msra.mxu0 %v6744
        %6864 = vmatprep.subr.mxu0 0.0
        %6865 = vmatpush1.msra.mxu0 %v6745
        %6866 = vmatprep.subr.mxu0 0.0
        %6867 = vmatpush1.msra.mxu0 %v6746
        %6868 = vmatprep.subr.mxu0 0.0
        %6869 = vmatpush1.msra.mxu0 %v6747
        %6870 = vmatprep.subr.mxu0 0.0
        %6871 = vmatpush1.msra.mxu0 %v6748
        %6872 = vmatprep.subr.mxu0 0.0
        %6873 = vmatpush1.msra.mxu0 %v6749
        %6874 = vmatprep.subr.mxu0 0.0
        %6875 = vmatpush1.msra.mxu0 %v6750
        %6876 = vmatprep.subr.mxu0 0.0
        %6877 = vmatpush1.msra.mxu0 %v6751
        %6878 = vmatprep.subr.mxu0 0.0
        %6879 = vmatpush1.msra.mxu0 %v6752
        %6880 = vmatprep.subr.mxu0 0.0
        %6881 = vmatpush1.msra.mxu0 %v6753
        %6882 = vmatprep.subr.mxu0 0.0
        %6883 = vmatpush1.msra.mxu0 %v6754
        %6884 = vmatprep.subr.mxu0 0.0
        %6885 = vmatpush1.msra.mxu0 %v6755
        %6886 = vmatprep.subr.mxu0 0.0
        %6887 = vmatpush1.msra.mxu0 %v6756
        %6888 = vmatprep.subr.mxu0 0.0
        %6889 = vmatpush1.msra.mxu0 %v6757
        %6890 = vmatprep.subr.mxu0 0.0
        %6891 = vmatpush1.msra.mxu0 %v6758
        %6892 = vmatprep.subr.mxu0 0.0
        %6893 = vmatpush1.msra.mxu0 0.0
        %6894 = vmatprep.subr.mxu0 0.0
        %6895 = vmatpush1.msra.mxu0 0.0
        %6896 = vmatprep.subr.mxu0 0.0
        %6897 = vmatpush1.msra.mxu0 0.0
        %6898 = vmatprep.subr.mxu0 0.0
        %6899 = vmatpush1.msra.mxu0 0.0
        %6900 = vmatprep.mubr.f32.mxu0 %v6834
        %6901 = vmatmul.mubr.f32.gmra.mrb[0].mxu0 %v6831
        %v6902 = vpop.f32.mrb[0].mxu0
        %v6903 = vadd.f32 0.0, %v6902
        %v6904 = vpop.f32.mrb[0].mxu0
        %6905 = vdwg.mxu0
        %v6906 = vadd.f32 %v6713, %v6903
        %s6907 = scalar_lea.vmem %s323, 5
        %v6908 = vld [vmem:[%s6907] ss:$8 sm:$0x3]
        %s6909 = scalar_lea.vmem %s323, 37
        %v6910 = vld [vmem:[%s6909] ss:$8 sm:$0x3]
        %s6911 = scalar_lea.vmem %s323, 69
        %v6912 = vld [vmem:[%s6911] ss:$8 sm:$0x3]
        %s6913 = scalar_lea.vmem %s323, 101
        %v6914 = vld [vmem:[%s6913] ss:$8 sm:$0x3]
        %s6915 = scalar_lea.vmem %s323, 133
        %v6916 = vld [vmem:[%s6915] ss:$8 sm:$0x3]
        %s6917 = scalar_lea.vmem %s323, 165
        %v6918 = vld [vmem:[%s6917] ss:$8 sm:$0x3]
        %s6919 = scalar_lea.vmem %s323, 197
        %v6920 = vld [vmem:[%s6919] ss:$8 sm:$0x3]
        %s6921 = scalar_lea.vmem %s323, 229
        %v6922 = vld [vmem:[%s6921] ss:$8 sm:$0x3]
        %s6923 = scalar_lea.vmem %s5, 1120
        %v6924 = vld [vmem:[%s6923] sm:$0xff]
        %v6925 = vld [vmem:[%s6923 + $0x8] sm:$0xff]
        %v6926 = vld [vmem:[%s6923 + $0x10] sm:$0xff]
        %v6927 = vld [vmem:[%s6923 + $0x18] sm:$0xff]
        %v6928 = vld [vmem:[%s6923 + $0x20] sm:$0xff]
        %v6929 = vld [vmem:[%s6923 + $0x28] sm:$0xff]
        %v6930 = vld [vmem:[%s6923 + $0x30] sm:$0xff]
        %v6931 = vld [vmem:[%s6923 + $0x38] sm:$0xff]
        %v6932 = vld [vmem:[%s6923 + $0x40] sm:$0xff]
        %v6933 = vld [vmem:[%s6923 + $0x48] sm:$0xff]
        %v6934 = vld [vmem:[%s6923 + $0x50] sm:$0xff]
        %v6935 = vld [vmem:[%s6923 + $0x58] sm:$0xff]
        %v6936 = vld [vmem:[%s6923 + $0x60] sm:$0xff]
        %v6937 = vld [vmem:[%s6923 + $0x68] sm:$0xff]
        %v6938 = vld [vmem:[%s6923 + $0x70] sm:$0xff]
        %v6939 = vld [vmem:[%s6923 + $0x78] sm:$0xff]
        %v6940 = vld [vmem:[%s6923 + $0x80] sm:$0xff]
        %v6941 = vld [vmem:[%s6923 + $0x88] sm:$0xff]
        %v6942 = vld [vmem:[%s6923 + $0x90] sm:$0xff]
        %v6943 = vld [vmem:[%s6923 + $0x98] sm:$0xff]
        %v6944 = vld [vmem:[%s6923 + $0xa0] sm:$0xff]
        %v6945 = vld [vmem:[%s6923 + $0xa8] sm:$0xff]
        %v6946 = vld [vmem:[%s6923 + $0xb0] sm:$0xff]
        %v6947 = vld [vmem:[%s6923 + $0xb8] sm:$0xff]
        %v6948 = vld [vmem:[%s6923 + $0xc0] sm:$0xff]
        %v6949 = vld [vmem:[%s6923 + $0xc8] sm:$0xff]
        %v6950 = vld [vmem:[%s6923 + $0xd0] sm:$0xff]
        %v6951 = vld [vmem:[%s6923 + $0xd8] sm:$0xff]
        %v6960 = vcombine.low %v6908, %v6910
        %v6961 = vcombine.low %v6912, %v6914
        %v6962 = vcombine.low %v6916, %v6918
        %v6963 = vcombine.low %v6920, %v6922
        %v6965 = vunpack.c.l.s4 1966171168
        %v6966 = vunpack.c.0.s8 %v6965
        %v6967 = vlaneseq
        %v6968 = vshrl.u32 %v6967, 7
        %v6969 = vsub.s32 %v6966, %v6968
        %v6970 = vrot.slane %v6960, %v6969
        %v6972 = vunpack.c.l.s4 1966171168
        %v6973 = vunpack.c.0.s8 %v6972
        %v6974 = vlaneseq
        %v6975 = vshrl.u32 %v6974, 7
        %v6976 = vsub.s32 %v6973, %v6975
        %v6977 = vrot.slane %v6961, %v6976
        %v6979 = vunpack.c.l.s4 1966171168
        %v6980 = vunpack.c.0.s8 %v6979
        %v6981 = vlaneseq
        %v6982 = vshrl.u32 %v6981, 7
        %v6983 = vsub.s32 %v6980, %v6982
        %v6984 = vrot.slane %v6962, %v6983
        %v6986 = vunpack.c.l.s4 1966171168
        %v6987 = vunpack.c.0.s8 %v6986
        %v6988 = vlaneseq
        %v6989 = vshrl.u32 %v6988, 7
        %v6990 = vsub.s32 %v6987, %v6989
        %v6991 = vrot.slane %v6963, %v6990
        %v6992 = vcombine.low %v6970, %v6977
        %v6993 = vcombine.high %v6970, %v6977
        %v6994 = vcombine.low %v6984, %v6991
        %v6995 = vcombine.high %v6984, %v6991
        %v6997 = vunpack.c.l.s4 1966171168
        %v6998 = vunpack.c.0.s8 %v6997
        %v6999 = vlaneseq
        %v7000 = vshrl.u32 %v6999, 7
        %v7001 = vsub.s32 %v6998, %v7000
        %v7002 = vrot.slane %v6992, %v7001
        %v7004 = vunpack.c.l.s4 1966171168
        %v7005 = vunpack.c.0.s8 %v7004
        %v7006 = vlaneseq
        %v7007 = vshrl.u32 %v7006, 7
        %v7008 = vsub.s32 %v7005, %v7007
        %v7009 = vrot.slane %v6993, %v7008
        %v7011 = vunpack.c.l.s4 1966171168
        %v7012 = vunpack.c.0.s8 %v7011
        %v7013 = vlaneseq
        %v7014 = vshrl.u32 %v7013, 7
        %v7015 = vsub.s32 %v7012, %v7014
        %v7016 = vrot.slane %v6994, %v7015
        %v7018 = vunpack.c.l.s4 1966171168
        %v7019 = vunpack.c.0.s8 %v7018
        %v7020 = vlaneseq
        %v7021 = vshrl.u32 %v7020, 7
        %v7022 = vsub.s32 %v7019, %v7021
        %v7023 = vrot.slane %v6995, %v7022
        %v7024 = vcombine.low %v7002, %v7016
        %v7025 = vcombine.low %v7009, %v7023
        %v7027 = vsel %vm5913, %v7025, 0
        %7029 = vmatprep.subr.mxu0 0.0
        %7030 = vmatpush1.msra.mxu0 %v6924
        %7031 = vmatprep.subr.mxu0 0.0
        %7032 = vmatpush1.msra.mxu0 %v6925
        %7033 = vmatprep.subr.mxu0 0.0
        %7034 = vmatpush1.msra.mxu0 %v6926
        %7035 = vmatprep.subr.mxu0 0.0
        %7036 = vmatpush1.msra.mxu0 %v6927
        %7037 = vmatprep.subr.mxu0 0.0
        %7038 = vmatpush1.msra.mxu0 %v6928
        %7039 = vmatprep.subr.mxu0 0.0
        %7040 = vmatpush1.msra.mxu0 %v6929
        %7041 = vmatprep.subr.mxu0 0.0
        %7042 = vmatpush1.msra.mxu0 %v6930
        %7043 = vmatprep.subr.mxu0 0.0
        %7044 = vmatpush1.msra.mxu0 %v6931
        %7045 = vmatprep.subr.mxu0 0.0
        %7046 = vmatpush1.msra.mxu0 %v6932
        %7047 = vmatprep.subr.mxu0 0.0
        %7048 = vmatpush1.msra.mxu0 %v6933
        %7049 = vmatprep.subr.mxu0 0.0
        %7050 = vmatpush1.msra.mxu0 %v6934
        %7051 = vmatprep.subr.mxu0 0.0
        %7052 = vmatpush1.msra.mxu0 %v6935
        %7053 = vmatprep.subr.mxu0 0.0
        %7054 = vmatpush1.msra.mxu0 %v6936
        %7055 = vmatprep.subr.mxu0 0.0
        %7056 = vmatpush1.msra.mxu0 %v6937
        %7057 = vmatprep.subr.mxu0 0.0
        %7058 = vmatpush1.msra.mxu0 %v6938
        %7059 = vmatprep.subr.mxu0 0.0
        %7060 = vmatpush1.msra.mxu0 %v6939
        %7061 = vmatprep.subr.mxu0 0.0
        %7062 = vmatpush1.msra.mxu0 %v6940
        %7063 = vmatprep.subr.mxu0 0.0
        %7064 = vmatpush1.msra.mxu0 %v6941
        %7065 = vmatprep.subr.mxu0 0.0
        %7066 = vmatpush1.msra.mxu0 %v6942
        %7067 = vmatprep.subr.mxu0 0.0
        %7068 = vmatpush1.msra.mxu0 %v6943
        %7069 = vmatprep.subr.mxu0 0.0
        %7070 = vmatpush1.msra.mxu0 %v6944
        %7071 = vmatprep.subr.mxu0 0.0
        %7072 = vmatpush1.msra.mxu0 %v6945
        %7073 = vmatprep.subr.mxu0 0.0
        %7074 = vmatpush1.msra.mxu0 %v6946
        %7075 = vmatprep.subr.mxu0 0.0
        %7076 = vmatpush1.msra.mxu0 %v6947
        %7077 = vmatprep.subr.mxu0 0.0
        %7078 = vmatpush1.msra.mxu0 %v6948
        %7079 = vmatprep.subr.mxu0 0.0
        %7080 = vmatpush1.msra.mxu0 %v6949
        %7081 = vmatprep.subr.mxu0 0.0
        %7082 = vmatpush1.msra.mxu0 %v6950
        %7083 = vmatprep.subr.mxu0 0.0
        %7084 = vmatpush1.msra.mxu0 %v6951
        %7085 = vmatprep.subr.mxu0 0.0
        %7086 = vmatpush1.msra.mxu0 0.0
        %7087 = vmatprep.subr.mxu0 0.0
        %7088 = vmatpush1.msra.mxu0 0.0
        %7089 = vmatprep.subr.mxu0 0.0
        %7090 = vmatpush1.msra.mxu0 0.0
        %7091 = vmatprep.subr.mxu0 0.0
        %7092 = vmatpush1.msra.mxu0 0.0
        %7093 = vmatprep.mubr.f32.mxu0 %v7027
        %7094 = vmatmul.mubr.f32.gmra.mrb[0].mxu0 %v7024
        %v7095 = vpop.f32.mrb[0].mxu0
        %v7096 = vadd.f32 0.0, %v7095
        %v7097 = vpop.f32.mrb[0].mxu0
        %7098 = vdwg.mxu0
        %v7099 = vadd.f32 %v6906, %v7096
        %s7100 = scalar_lea.vmem %s323, 6
        %v7101 = vld [vmem:[%s7100] ss:$8 sm:$0x3]
        %s7102 = scalar_lea.vmem %s323, 38
        %v7103 = vld [vmem:[%s7102] ss:$8 sm:$0x3]
        %s7104 = scalar_lea.vmem %s323, 70
        %v7105 = vld [vmem:[%s7104] ss:$8 sm:$0x3]
        %s7106 = scalar_lea.vmem %s323, 102
        %v7107 = vld [vmem:[%s7106] ss:$8 sm:$0x3]
        %s7108 = scalar_lea.vmem %s323, 134
        %v7109 = vld [vmem:[%s7108] ss:$8 sm:$0x3]
        %s7110 = scalar_lea.vmem %s323, 166
        %v7111 = vld [vmem:[%s7110] ss:$8 sm:$0x3]
        %s7112 = scalar_lea.vmem %s323, 198
        %v7113 = vld [vmem:[%s7112] ss:$8 sm:$0x3]
        %s7114 = scalar_lea.vmem %s323, 230
        %v7115 = vld [vmem:[%s7114] ss:$8 sm:$0x3]
        %s7116 = scalar_lea.vmem %s5, 1344
        %v7117 = vld [vmem:[%s7116] sm:$0xff]
        %v7118 = vld [vmem:[%s7116 + $0x8] sm:$0xff]
        %v7119 = vld [vmem:[%s7116 + $0x10] sm:$0xff]
        %v7120 = vld [vmem:[%s7116 + $0x18] sm:$0xff]
        %v7121 = vld [vmem:[%s7116 + $0x20] sm:$0xff]
        %v7122 = vld [vmem:[%s7116 + $0x28] sm:$0xff]
        %v7123 = vld [vmem:[%s7116 + $0x30] sm:$0xff]
        %v7124 = vld [vmem:[%s7116 + $0x38] sm:$0xff]
        %v7125 = vld [vmem:[%s7116 + $0x40] sm:$0xff]
        %v7126 = vld [vmem:[%s7116 + $0x48] sm:$0xff]
        %v7127 = vld [vmem:[%s7116 + $0x50] sm:$0xff]
        %v7128 = vld [vmem:[%s7116 + $0x58] sm:$0xff]
        %v7129 = vld [vmem:[%s7116 + $0x60] sm:$0xff]
        %v7130 = vld [vmem:[%s7116 + $0x68] sm:$0xff]
        %v7131 = vld [vmem:[%s7116 + $0x70] sm:$0xff]
        %v7132 = vld [vmem:[%s7116 + $0x78] sm:$0xff]
        %v7133 = vld [vmem:[%s7116 + $0x80] sm:$0xff]
        %v7134 = vld [vmem:[%s7116 + $0x88] sm:$0xff]
        %v7135 = vld [vmem:[%s7116 + $0x90] sm:$0xff]
        %v7136 = vld [vmem:[%s7116 + $0x98] sm:$0xff]
        %v7137 = vld [vmem:[%s7116 + $0xa0] sm:$0xff]
        %v7138 = vld [vmem:[%s7116 + $0xa8] sm:$0xff]
        %v7139 = vld [vmem:[%s7116 + $0xb0] sm:$0xff]
        %v7140 = vld [vmem:[%s7116 + $0xb8] sm:$0xff]
        %v7141 = vld [vmem:[%s7116 + $0xc0] sm:$0xff]
        %v7142 = vld [vmem:[%s7116 + $0xc8] sm:$0xff]
        %v7143 = vld [vmem:[%s7116 + $0xd0] sm:$0xff]
        %v7144 = vld [vmem:[%s7116 + $0xd8] sm:$0xff]
        %v7153 = vcombine.low %v7101, %v7103
        %v7154 = vcombine.low %v7105, %v7107
        %v7155 = vcombine.low %v7109, %v7111
        %v7156 = vcombine.low %v7113, %v7115
        %v7158 = vunpack.c.l.s4 1966171168
        %v7159 = vunpack.c.0.s8 %v7158
        %v7160 = vlaneseq
        %v7161 = vshrl.u32 %v7160, 7
        %v7162 = vsub.s32 %v7159, %v7161
        %v7163 = vrot.slane %v7153, %v7162
        %v7165 = vunpack.c.l.s4 1966171168
        %v7166 = vunpack.c.0.s8 %v7165
        %v7167 = vlaneseq
        %v7168 = vshrl.u32 %v7167, 7
        %v7169 = vsub.s32 %v7166, %v7168
        %v7170 = vrot.slane %v7154, %v7169
        %v7172 = vunpack.c.l.s4 1966171168
        %v7173 = vunpack.c.0.s8 %v7172
        %v7174 = vlaneseq
        %v7175 = vshrl.u32 %v7174, 7
        %v7176 = vsub.s32 %v7173, %v7175
        %v7177 = vrot.slane %v7155, %v7176
        %v7179 = vunpack.c.l.s4 1966171168
        %v7180 = vunpack.c.0.s8 %v7179
        %v7181 = vlaneseq
        %v7182 = vshrl.u32 %v7181, 7
        %v7183 = vsub.s32 %v7180, %v7182
        %v7184 = vrot.slane %v7156, %v7183
        %v7185 = vcombine.low %v7163, %v7170
        %v7186 = vcombine.high %v7163, %v7170
        %v7187 = vcombine.low %v7177, %v7184
        %v7188 = vcombine.high %v7177, %v7184
        %v7190 = vunpack.c.l.s4 1966171168
        %v7191 = vunpack.c.0.s8 %v7190
        %v7192 = vlaneseq
        %v7193 = vshrl.u32 %v7192, 7
        %v7194 = vsub.s32 %v7191, %v7193
        %v7195 = vrot.slane %v7185, %v7194
        %v7197 = vunpack.c.l.s4 1966171168
        %v7198 = vunpack.c.0.s8 %v7197
        %v7199 = vlaneseq
        %v7200 = vshrl.u32 %v7199, 7
        %v7201 = vsub.s32 %v7198, %v7200
        %v7202 = vrot.slane %v7186, %v7201
        %v7204 = vunpack.c.l.s4 1966171168
        %v7205 = vunpack.c.0.s8 %v7204
        %v7206 = vlaneseq
        %v7207 = vshrl.u32 %v7206, 7
        %v7208 = vsub.s32 %v7205, %v7207
        %v7209 = vrot.slane %v7187, %v7208
        %v7211 = vunpack.c.l.s4 1966171168
        %v7212 = vunpack.c.0.s8 %v7211
        %v7213 = vlaneseq
        %v7214 = vshrl.u32 %v7213, 7
        %v7215 = vsub.s32 %v7212, %v7214
        %v7216 = vrot.slane %v7188, %v7215
        %v7217 = vcombine.low %v7195, %v7209
        %v7218 = vcombine.low %v7202, %v7216
        %v7220 = vsel %vm5913, %v7218, 0
        %7222 = vmatprep.subr.mxu0 0.0
        %7223 = vmatpush1.msra.mxu0 %v7117
        %7224 = vmatprep.subr.mxu0 0.0
        %7225 = vmatpush1.msra.mxu0 %v7118
        %7226 = vmatprep.subr.mxu0 0.0
        %7227 = vmatpush1.msra.mxu0 %v7119
        %7228 = vmatprep.subr.mxu0 0.0
        %7229 = vmatpush1.msra.mxu0 %v7120
        %7230 = vmatprep.subr.mxu0 0.0
        %7231 = vmatpush1.msra.mxu0 %v7121
        %7232 = vmatprep.subr.mxu0 0.0
        %7233 = vmatpush1.msra.mxu0 %v7122
        %7234 = vmatprep.subr.mxu0 0.0
        %7235 = vmatpush1.msra.mxu0 %v7123
        %7236 = vmatprep.subr.mxu0 0.0
        %7237 = vmatpush1.msra.mxu0 %v7124
        %7238 = vmatprep.subr.mxu0 0.0
        %7239 = vmatpush1.msra.mxu0 %v7125
        %7240 = vmatprep.subr.mxu0 0.0
        %7241 = vmatpush1.msra.mxu0 %v7126
        %7242 = vmatprep.subr.mxu0 0.0
        %7243 = vmatpush1.msra.mxu0 %v7127
        %7244 = vmatprep.subr.mxu0 0.0
        %7245 = vmatpush1.msra.mxu0 %v7128
        %7246 = vmatprep.subr.mxu0 0.0
        %7247 = vmatpush1.msra.mxu0 %v7129
        %7248 = vmatprep.subr.mxu0 0.0
        %7249 = vmatpush1.msra.mxu0 %v7130
        %7250 = vmatprep.subr.mxu0 0.0
        %7251 = vmatpush1.msra.mxu0 %v7131
        %7252 = vmatprep.subr.mxu0 0.0
        %7253 = vmatpush1.msra.mxu0 %v7132
        %7254 = vmatprep.subr.mxu0 0.0
        %7255 = vmatpush1.msra.mxu0 %v7133
        %7256 = vmatprep.subr.mxu0 0.0
        %7257 = vmatpush1.msra.mxu0 %v7134
        %7258 = vmatprep.subr.mxu0 0.0
        %7259 = vmatpush1.msra.mxu0 %v7135
        %7260 = vmatprep.subr.mxu0 0.0
        %7261 = vmatpush1.msra.mxu0 %v7136
        %7262 = vmatprep.subr.mxu0 0.0
        %7263 = vmatpush1.msra.mxu0 %v7137
        %7264 = vmatprep.subr.mxu0 0.0
        %7265 = vmatpush1.msra.mxu0 %v7138
        %7266 = vmatprep.subr.mxu0 0.0
        %7267 = vmatpush1.msra.mxu0 %v7139
        %7268 = vmatprep.subr.mxu0 0.0
        %7269 = vmatpush1.msra.mxu0 %v7140
        %7270 = vmatprep.subr.mxu0 0.0
        %7271 = vmatpush1.msra.mxu0 %v7141
        %7272 = vmatprep.subr.mxu0 0.0
        %7273 = vmatpush1.msra.mxu0 %v7142
        %7274 = vmatprep.subr.mxu0 0.0
        %7275 = vmatpush1.msra.mxu0 %v7143
        %7276 = vmatprep.subr.mxu0 0.0
        %7277 = vmatpush1.msra.mxu0 %v7144
        %7278 = vmatprep.subr.mxu0 0.0
        %7279 = vmatpush1.msra.mxu0 0.0
        %7280 = vmatprep.subr.mxu0 0.0
        %7281 = vmatpush1.msra.mxu0 0.0
        %7282 = vmatprep.subr.mxu0 0.0
        %7283 = vmatpush1.msra.mxu0 0.0
        %7284 = vmatprep.subr.mxu0 0.0
        %7285 = vmatpush1.msra.mxu0 0.0
        %7286 = vmatprep.mubr.f32.mxu0 %v7220
        %7287 = vmatmul.mubr.f32.gmra.mrb[0].mxu0 %v7217
        %v7288 = vpop.f32.mrb[0].mxu0
        %v7289 = vadd.f32 0.0, %v7288
        %v7290 = vpop.f32.mrb[0].mxu0
        %7291 = vdwg.mxu0
        %v7292 = vadd.f32 %v7099, %v7289
        %s7293 = scalar_lea.vmem %s323, 7
        %v7294 = vld [vmem:[%s7293] ss:$8 sm:$0x3]
        %s7295 = scalar_lea.vmem %s323, 39
        %v7296 = vld [vmem:[%s7295] ss:$8 sm:$0x3]
        %s7297 = scalar_lea.vmem %s323, 71
        %v7298 = vld [vmem:[%s7297] ss:$8 sm:$0x3]
        %s7299 = scalar_lea.vmem %s323, 103
        %v7300 = vld [vmem:[%s7299] ss:$8 sm:$0x3]
        %s7301 = scalar_lea.vmem %s323, 135
        %v7302 = vld [vmem:[%s7301] ss:$8 sm:$0x3]
        %s7303 = scalar_lea.vmem %s323, 167
        %v7304 = vld [vmem:[%s7303] ss:$8 sm:$0x3]
        %s7305 = scalar_lea.vmem %s323, 199
        %v7306 = vld [vmem:[%s7305] ss:$8 sm:$0x3]
        %s7307 = scalar_lea.vmem %s323, 231
        %v7308 = vld [vmem:[%s7307] ss:$8 sm:$0x3]
        %s7309 = scalar_lea.vmem %s5, 1568
        %v7310 = vld [vmem:[%s7309] sm:$0xff]
        %v7311 = vld [vmem:[%s7309 + $0x8] sm:$0xff]
        %v7312 = vld [vmem:[%s7309 + $0x10] sm:$0xff]
        %v7313 = vld [vmem:[%s7309 + $0x18] sm:$0xff]
        %v7314 = vld [vmem:[%s7309 + $0x20] sm:$0xff]
        %v7315 = vld [vmem:[%s7309 + $0x28] sm:$0xff]
        %v7316 = vld [vmem:[%s7309 + $0x30] sm:$0xff]
        %v7317 = vld [vmem:[%s7309 + $0x38] sm:$0xff]
        %v7318 = vld [vmem:[%s7309 + $0x40] sm:$0xff]
        %v7319 = vld [vmem:[%s7309 + $0x48] sm:$0xff]
        %v7320 = vld [vmem:[%s7309 + $0x50] sm:$0xff]
        %v7321 = vld [vmem:[%s7309 + $0x58] sm:$0xff]
        %v7322 = vld [vmem:[%s7309 + $0x60] sm:$0xff]
        %v7323 = vld [vmem:[%s7309 + $0x68] sm:$0xff]
        %v7324 = vld [vmem:[%s7309 + $0x70] sm:$0xff]
        %v7325 = vld [vmem:[%s7309 + $0x78] sm:$0xff]
        %v7326 = vld [vmem:[%s7309 + $0x80] sm:$0xff]
        %v7327 = vld [vmem:[%s7309 + $0x88] sm:$0xff]
        %v7328 = vld [vmem:[%s7309 + $0x90] sm:$0xff]
        %v7329 = vld [vmem:[%s7309 + $0x98] sm:$0xff]
        %v7330 = vld [vmem:[%s7309 + $0xa0] sm:$0xff]
        %v7331 = vld [vmem:[%s7309 + $0xa8] sm:$0xff]
        %v7332 = vld [vmem:[%s7309 + $0xb0] sm:$0xff]
        %v7333 = vld [vmem:[%s7309 + $0xb8] sm:$0xff]
        %v7334 = vld [vmem:[%s7309 + $0xc0] sm:$0xff]
        %v7335 = vld [vmem:[%s7309 + $0xc8] sm:$0xff]
        %v7336 = vld [vmem:[%s7309 + $0xd0] sm:$0xff]
        %v7337 = vld [vmem:[%s7309 + $0xd8] sm:$0xff]
        %v7346 = vcombine.low %v7294, %v7296
        %v7347 = vcombine.low %v7298, %v7300
        %v7348 = vcombine.low %v7302, %v7304
        %v7349 = vcombine.low %v7306, %v7308
        %v7351 = vunpack.c.l.s4 1966171168
        %v7352 = vunpack.c.0.s8 %v7351
        %v7353 = vlaneseq
        %v7354 = vshrl.u32 %v7353, 7
        %v7355 = vsub.s32 %v7352, %v7354
        %v7356 = vrot.slane %v7346, %v7355
        %v7358 = vunpack.c.l.s4 1966171168
        %v7359 = vunpack.c.0.s8 %v7358
        %v7360 = vlaneseq
        %v7361 = vshrl.u32 %v7360, 7
        %v7362 = vsub.s32 %v7359, %v7361
        %v7363 = vrot.slane %v7347, %v7362
        %v7365 = vunpack.c.l.s4 1966171168
        %v7366 = vunpack.c.0.s8 %v7365
        %v7367 = vlaneseq
        %v7368 = vshrl.u32 %v7367, 7
        %v7369 = vsub.s32 %v7366, %v7368
        %v7370 = vrot.slane %v7348, %v7369
        %v7372 = vunpack.c.l.s4 1966171168
        %v7373 = vunpack.c.0.s8 %v7372
        %v7374 = vlaneseq
        %v7375 = vshrl.u32 %v7374, 7
        %v7376 = vsub.s32 %v7373, %v7375
        %v7377 = vrot.slane %v7349, %v7376
        %v7378 = vcombine.low %v7356, %v7363
        %v7379 = vcombine.high %v7356, %v7363
        %v7380 = vcombine.low %v7370, %v7377
        %v7381 = vcombine.high %v7370, %v7377
        %v7383 = vunpack.c.l.s4 1966171168
        %v7384 = vunpack.c.0.s8 %v7383
        %v7385 = vlaneseq
        %v7386 = vshrl.u32 %v7385, 7
        %v7387 = vsub.s32 %v7384, %v7386
        %v7388 = vrot.slane %v7378, %v7387
        %v7390 = vunpack.c.l.s4 1966171168
        %v7391 = vunpack.c.0.s8 %v7390
        %v7392 = vlaneseq
        %v7393 = vshrl.u32 %v7392, 7
        %v7394 = vsub.s32 %v7391, %v7393
        %v7395 = vrot.slane %v7379, %v7394
        %v7397 = vunpack.c.l.s4 1966171168
        %v7398 = vunpack.c.0.s8 %v7397
        %v7399 = vlaneseq
        %v7400 = vshrl.u32 %v7399, 7
        %v7401 = vsub.s32 %v7398, %v7400
        %v7402 = vrot.slane %v7380, %v7401
        %v7404 = vunpack.c.l.s4 1966171168
        %v7405 = vunpack.c.0.s8 %v7404
        %v7406 = vlaneseq
        %v7407 = vshrl.u32 %v7406, 7
        %v7408 = vsub.s32 %v7405, %v7407
        %v7409 = vrot.slane %v7381, %v7408
        %v7410 = vcombine.low %v7388, %v7402
        %v7411 = vcombine.low %v7395, %v7409
        %v7413 = vsel %vm5913, %v7411, 0
        %7415 = vmatprep.subr.mxu0 0.0
        %7416 = vmatpush1.msra.mxu0 %v7310
        %7417 = vmatprep.subr.mxu0 0.0
        %7418 = vmatpush1.msra.mxu0 %v7311
        %7419 = vmatprep.subr.mxu0 0.0
        %7420 = vmatpush1.msra.mxu0 %v7312
        %7421 = vmatprep.subr.mxu0 0.0
        %7422 = vmatpush1.msra.mxu0 %v7313
        %7423 = vmatprep.subr.mxu0 0.0
        %7424 = vmatpush1.msra.mxu0 %v7314
        %7425 = vmatprep.subr.mxu0 0.0
        %7426 = vmatpush1.msra.mxu0 %v7315
        %7427 = vmatprep.subr.mxu0 0.0
        %7428 = vmatpush1.msra.mxu0 %v7316
        %7429 = vmatprep.subr.mxu0 0.0
        %7430 = vmatpush1.msra.mxu0 %v7317
        %7431 = vmatprep.subr.mxu0 0.0
        %7432 = vmatpush1.msra.mxu0 %v7318
        %7433 = vmatprep.subr.mxu0 0.0
        %7434 = vmatpush1.msra.mxu0 %v7319
        %7435 = vmatprep.subr.mxu0 0.0
        %7436 = vmatpush1.msra.mxu0 %v7320
        %7437 = vmatprep.subr.mxu0 0.0
        %7438 = vmatpush1.msra.mxu0 %v7321
        %7439 = vmatprep.subr.mxu0 0.0
        %7440 = vmatpush1.msra.mxu0 %v7322
        %7441 = vmatprep.subr.mxu0 0.0
        %7442 = vmatpush1.msra.mxu0 %v7323
        %7443 = vmatprep.subr.mxu0 0.0
        %7444 = vmatpush1.msra.mxu0 %v7324
        %7445 = vmatprep.subr.mxu0 0.0
        %7446 = vmatpush1.msra.mxu0 %v7325
        %7447 = vmatprep.subr.mxu0 0.0
        %7448 = vmatpush1.msra.mxu0 %v7326
        %7449 = vmatprep.subr.mxu0 0.0
        %7450 = vmatpush1.msra.mxu0 %v7327
        %7451 = vmatprep.subr.mxu0 0.0
        %7452 = vmatpush1.msra.mxu0 %v7328
        %7453 = vmatprep.subr.mxu0 0.0
        %7454 = vmatpush1.msra.mxu0 %v7329
        %7455 = vmatprep.subr.mxu0 0.0
        %7456 = vmatpush1.msra.mxu0 %v7330
        %7457 = vmatprep.subr.mxu0 0.0
        %7458 = vmatpush1.msra.mxu0 %v7331
        %7459 = vmatprep.subr.mxu0 0.0
        %7460 = vmatpush1.msra.mxu0 %v7332
        %7461 = vmatprep.subr.mxu0 0.0
        %7462 = vmatpush1.msra.mxu0 %v7333
        %7463 = vmatprep.subr.mxu0 0.0
        %7464 = vmatpush1.msra.mxu0 %v7334
        %7465 = vmatprep.subr.mxu0 0.0
        %7466 = vmatpush1.msra.mxu0 %v7335
        %7467 = vmatprep.subr.mxu0 0.0
        %7468 = vmatpush1.msra.mxu0 %v7336
        %7469 = vmatprep.subr.mxu0 0.0
        %7470 = vmatpush1.msra.mxu0 %v7337
        %7471 = vmatprep.subr.mxu0 0.0
        %7472 = vmatpush1.msra.mxu0 0.0
        %7473 = vmatprep.subr.mxu0 0.0
        %7474 = vmatpush1.msra.mxu0 0.0
        %7475 = vmatprep.subr.mxu0 0.0
        %7476 = vmatpush1.msra.mxu0 0.0
        %7477 = vmatprep.subr.mxu0 0.0
        %7478 = vmatpush1.msra.mxu0 0.0
        %7479 = vmatprep.mubr.f32.mxu0 %v7413
        %7480 = vmatmul.mubr.f32.gmra.mrb[0].mxu0 %v7410
        %v7481 = vpop.f32.mrb[0].mxu0
        %v7482 = vadd.f32 0.0, %v7481
        %v7483 = vpop.f32.mrb[0].mxu0
        %7484 = vdwg.mxu0
        %v7485 = vadd.f32 %v7292, %v7482
        %s7486 = scalar_lea.vmem %s323, 16
        %v7487 = vld [vmem:[%s7486] ss:$8 sm:$0x3]
        %s7488 = scalar_lea.vmem %s323, 48
        %v7489 = vld [vmem:[%s7488] ss:$8 sm:$0x3]
        %s7490 = scalar_lea.vmem %s323, 80
        %v7491 = vld [vmem:[%s7490] ss:$8 sm:$0x3]
        %s7492 = scalar_lea.vmem %s323, 112
        %v7493 = vld [vmem:[%s7492] ss:$8 sm:$0x3]
        %s7494 = scalar_lea.vmem %s323, 144
        %v7495 = vld [vmem:[%s7494] ss:$8 sm:$0x3]
        %s7496 = scalar_lea.vmem %s323, 176
        %v7497 = vld [vmem:[%s7496] ss:$8 sm:$0x3]
        %s7498 = scalar_lea.vmem %s323, 208
        %v7499 = vld [vmem:[%s7498] ss:$8 sm:$0x3]
        %s7500 = scalar_lea.vmem %s323, 240
        %v7501 = vld [vmem:[%s7500] ss:$8 sm:$0x3]
        %s7502 = scalar_lea.vmem %s5, 1792
        %v7503 = vld [vmem:[%s7502] sm:$0xff]
        %v7504 = vld [vmem:[%s7502 + $0x8] sm:$0xff]
        %v7505 = vld [vmem:[%s7502 + $0x10] sm:$0xff]
        %v7506 = vld [vmem:[%s7502 + $0x18] sm:$0xff]
        %v7507 = vld [vmem:[%s7502 + $0x20] sm:$0xff]
        %v7508 = vld [vmem:[%s7502 + $0x28] sm:$0xff]
        %v7509 = vld [vmem:[%s7502 + $0x30] sm:$0xff]
        %v7510 = vld [vmem:[%s7502 + $0x38] sm:$0xff]
        %v7511 = vld [vmem:[%s7502 + $0x40] sm:$0xff]
        %v7512 = vld [vmem:[%s7502 + $0x48] sm:$0xff]
        %v7513 = vld [vmem:[%s7502 + $0x50] sm:$0xff]
        %v7514 = vld [vmem:[%s7502 + $0x58] sm:$0xff]
        %v7515 = vld [vmem:[%s7502 + $0x60] sm:$0xff]
        %v7516 = vld [vmem:[%s7502 + $0x68] sm:$0xff]
        %v7517 = vld [vmem:[%s7502 + $0x70] sm:$0xff]
        %v7518 = vld [vmem:[%s7502 + $0x78] sm:$0xff]
        %v7519 = vld [vmem:[%s7502 + $0x80] sm:$0xff]
        %v7520 = vld [vmem:[%s7502 + $0x88] sm:$0xff]
        %v7521 = vld [vmem:[%s7502 + $0x90] sm:$0xff]
        %v7522 = vld [vmem:[%s7502 + $0x98] sm:$0xff]
        %v7523 = vld [vmem:[%s7502 + $0xa0] sm:$0xff]
        %v7524 = vld [vmem:[%s7502 + $0xa8] sm:$0xff]
        %v7525 = vld [vmem:[%s7502 + $0xb0] sm:$0xff]
        %v7526 = vld [vmem:[%s7502 + $0xb8] sm:$0xff]
        %v7527 = vld [vmem:[%s7502 + $0xc0] sm:$0xff]
        %v7528 = vld [vmem:[%s7502 + $0xc8] sm:$0xff]
        %v7529 = vld [vmem:[%s7502 + $0xd0] sm:$0xff]
        %v7530 = vld [vmem:[%s7502 + $0xd8] sm:$0xff]
        %v7539 = vcombine.low %v7487, %v7489
        %v7540 = vcombine.low %v7491, %v7493
        %v7541 = vcombine.low %v7495, %v7497
        %v7542 = vcombine.low %v7499, %v7501
        %v7544 = vunpack.c.l.s4 1966171168
        %v7545 = vunpack.c.0.s8 %v7544
        %v7546 = vlaneseq
        %v7547 = vshrl.u32 %v7546, 7
        %v7548 = vsub.s32 %v7545, %v7547
        %v7549 = vrot.slane %v7539, %v7548
        %v7551 = vunpack.c.l.s4 1966171168
        %v7552 = vunpack.c.0.s8 %v7551
        %v7553 = vlaneseq
        %v7554 = vshrl.u32 %v7553, 7
        %v7555 = vsub.s32 %v7552, %v7554
        %v7556 = vrot.slane %v7540, %v7555
        %v7558 = vunpack.c.l.s4 1966171168
        %v7559 = vunpack.c.0.s8 %v7558
        %v7560 = vlaneseq
        %v7561 = vshrl.u32 %v7560, 7
        %v7562 = vsub.s32 %v7559, %v7561
        %v7563 = vrot.slane %v7541, %v7562
        %v7565 = vunpack.c.l.s4 1966171168
        %v7566 = vunpack.c.0.s8 %v7565
        %v7567 = vlaneseq
        %v7568 = vshrl.u32 %v7567, 7
        %v7569 = vsub.s32 %v7566, %v7568
        %v7570 = vrot.slane %v7542, %v7569
        %v7571 = vcombine.low %v7549, %v7556
        %v7572 = vcombine.high %v7549, %v7556
        %v7573 = vcombine.low %v7563, %v7570
        %v7574 = vcombine.high %v7563, %v7570
        %v7576 = vunpack.c.l.s4 1966171168
        %v7577 = vunpack.c.0.s8 %v7576
        %v7578 = vlaneseq
        %v7579 = vshrl.u32 %v7578, 7
        %v7580 = vsub.s32 %v7577, %v7579
        %v7581 = vrot.slane %v7571, %v7580
        %v7583 = vunpack.c.l.s4 1966171168
        %v7584 = vunpack.c.0.s8 %v7583
        %v7585 = vlaneseq
        %v7586 = vshrl.u32 %v7585, 7
        %v7587 = vsub.s32 %v7584, %v7586
        %v7588 = vrot.slane %v7572, %v7587
        %v7590 = vunpack.c.l.s4 1966171168
        %v7591 = vunpack.c.0.s8 %v7590
        %v7592 = vlaneseq
        %v7593 = vshrl.u32 %v7592, 7
        %v7594 = vsub.s32 %v7591, %v7593
        %v7595 = vrot.slane %v7573, %v7594
        %v7597 = vunpack.c.l.s4 1966171168
        %v7598 = vunpack.c.0.s8 %v7597
        %v7599 = vlaneseq
        %v7600 = vshrl.u32 %v7599, 7
        %v7601 = vsub.s32 %v7598, %v7600
        %v7602 = vrot.slane %v7574, %v7601
        %v7603 = vcombine.low %v7581, %v7595
        %v7604 = vcombine.low %v7588, %v7602
        %v7606 = vsel %vm5913, %v7604, 0
        %7608 = vmatprep.subr.mxu0 0.0
        %7609 = vmatpush1.msra.mxu0 %v7503
        %7610 = vmatprep.subr.mxu0 0.0
        %7611 = vmatpush1.msra.mxu0 %v7504
        %7612 = vmatprep.subr.mxu0 0.0
        %7613 = vmatpush1.msra.mxu0 %v7505
        %7614 = vmatprep.subr.mxu0 0.0
        %7615 = vmatpush1.msra.mxu0 %v7506
        %7616 = vmatprep.subr.mxu0 0.0
        %7617 = vmatpush1.msra.mxu0 %v7507
        %7618 = vmatprep.subr.mxu0 0.0
        %7619 = vmatpush1.msra.mxu0 %v7508
        %7620 = vmatprep.subr.mxu0 0.0
        %7621 = vmatpush1.msra.mxu0 %v7509
        %7622 = vmatprep.subr.mxu0 0.0
        %7623 = vmatpush1.msra.mxu0 %v7510
        %7624 = vmatprep.subr.mxu0 0.0
        %7625 = vmatpush1.msra.mxu0 %v7511
        %7626 = vmatprep.subr.mxu0 0.0
        %7627 = vmatpush1.msra.mxu0 %v7512
        %7628 = vmatprep.subr.mxu0 0.0
        %7629 = vmatpush1.msra.mxu0 %v7513
        %7630 = vmatprep.subr.mxu0 0.0
        %7631 = vmatpush1.msra.mxu0 %v7514
        %7632 = vmatprep.subr.mxu0 0.0
        %7633 = vmatpush1.msra.mxu0 %v7515
        %7634 = vmatprep.subr.mxu0 0.0
        %7635 = vmatpush1.msra.mxu0 %v7516
        %7636 = vmatprep.subr.mxu0 0.0
        %7637 = vmatpush1.msra.mxu0 %v7517
        %7638 = vmatprep.subr.mxu0 0.0
        %7639 = vmatpush1.msra.mxu0 %v7518
        %7640 = vmatprep.subr.mxu0 0.0
        %7641 = vmatpush1.msra.mxu0 %v7519
        %7642 = vmatprep.subr.mxu0 0.0
        %7643 = vmatpush1.msra.mxu0 %v7520
        %7644 = vmatprep.subr.mxu0 0.0
        %7645 = vmatpush1.msra.mxu0 %v7521
        %7646 = vmatprep.subr.mxu0 0.0
        %7647 = vmatpush1.msra.mxu0 %v7522
        %7648 = vmatprep.subr.mxu0 0.0
        %7649 = vmatpush1.msra.mxu0 %v7523
        %7650 = vmatprep.subr.mxu0 0.0
        %7651 = vmatpush1.msra.mxu0 %v7524
        %7652 = vmatprep.subr.mxu0 0.0
        %7653 = vmatpush1.msra.mxu0 %v7525
        %7654 = vmatprep.subr.mxu0 0.0
        %7655 = vmatpush1.msra.mxu0 %v7526
        %7656 = vmatprep.subr.mxu0 0.0
        %7657 = vmatpush1.msra.mxu0 %v7527
        %7658 = vmatprep.subr.mxu0 0.0
        %7659 = vmatpush1.msra.mxu0 %v7528
        %7660 = vmatprep.subr.mxu0 0.0
        %7661 = vmatpush1.msra.mxu0 %v7529
        %7662 = vmatprep.subr.mxu0 0.0
        %7663 = vmatpush1.msra.mxu0 %v7530
        %7664 = vmatprep.subr.mxu0 0.0
        %7665 = vmatpush1.msra.mxu0 0.0
        %7666 = vmatprep.subr.mxu0 0.0
        %7667 = vmatpush1.msra.mxu0 0.0
        %7668 = vmatprep.subr.mxu0 0.0
        %7669 = vmatpush1.msra.mxu0 0.0
        %7670 = vmatprep.subr.mxu0 0.0
        %7671 = vmatpush1.msra.mxu0 0.0
        %7672 = vmatprep.mubr.f32.mxu0 %v7606
        %7673 = vmatmul.mubr.f32.gmra.mrb[0].mxu0 %v7603
        %v7674 = vpop.f32.mrb[0].mxu0
        %v7675 = vadd.f32 0.0, %v7674
        %v7676 = vpop.f32.mrb[0].mxu0
        %7677 = vdwg.mxu0
        %v7678 = vadd.f32 %v7485, %v7675
        %s7679 = scalar_lea.vmem %s323, 17
        %v7680 = vld [vmem:[%s7679] ss:$8 sm:$0x3]
        %s7681 = scalar_lea.vmem %s323, 49
        %v7682 = vld [vmem:[%s7681] ss:$8 sm:$0x3]
        %s7683 = scalar_lea.vmem %s323, 81
        %v7684 = vld [vmem:[%s7683] ss:$8 sm:$0x3]
        %s7685 = scalar_lea.vmem %s323, 113
        %v7686 = vld [vmem:[%s7685] ss:$8 sm:$0x3]
        %s7687 = scalar_lea.vmem %s323, 145
        %v7688 = vld [vmem:[%s7687] ss:$8 sm:$0x3]
        %s7689 = scalar_lea.vmem %s323, 177
        %v7690 = vld [vmem:[%s7689] ss:$8 sm:$0x3]
        %s7691 = scalar_lea.vmem %s323, 209
        %v7692 = vld [vmem:[%s7691] ss:$8 sm:$0x3]
        %s7693 = scalar_lea.vmem %s323, 241
        %v7694 = vld [vmem:[%s7693] ss:$8 sm:$0x3]
        %s7695 = scalar_lea.vmem %s5, 2016
        %v7696 = vld [vmem:[%s7695] sm:$0xff]
        %v7697 = vld [vmem:[%s7695 + $0x8] sm:$0xff]
        %v7698 = vld [vmem:[%s7695 + $0x10] sm:$0xff]
        %v7699 = vld [vmem:[%s7695 + $0x18] sm:$0xff]
        %v7700 = vld [vmem:[%s7695 + $0x20] sm:$0xff]
        %v7701 = vld [vmem:[%s7695 + $0x28] sm:$0xff]
        %v7702 = vld [vmem:[%s7695 + $0x30] sm:$0xff]
        %v7703 = vld [vmem:[%s7695 + $0x38] sm:$0xff]
        %v7704 = vld [vmem:[%s7695 + $0x40] sm:$0xff]
        %v7705 = vld [vmem:[%s7695 + $0x48] sm:$0xff]
        %v7706 = vld [vmem:[%s7695 + $0x50] sm:$0xff]
        %v7707 = vld [vmem:[%s7695 + $0x58] sm:$0xff]
        %v7708 = vld [vmem:[%s7695 + $0x60] sm:$0xff]
        %v7709 = vld [vmem:[%s7695 + $0x68] sm:$0xff]
        %v7710 = vld [vmem:[%s7695 + $0x70] sm:$0xff]
        %v7711 = vld [vmem:[%s7695 + $0x78] sm:$0xff]
        %v7712 = vld [vmem:[%s7695 + $0x80] sm:$0xff]
        %v7713 = vld [vmem:[%s7695 + $0x88] sm:$0xff]
        %v7714 = vld [vmem:[%s7695 + $0x90] sm:$0xff]
        %v7715 = vld [vmem:[%s7695 + $0x98] sm:$0xff]
        %v7716 = vld [vmem:[%s7695 + $0xa0] sm:$0xff]
        %v7717 = vld [vmem:[%s7695 + $0xa8] sm:$0xff]
        %v7718 = vld [vmem:[%s7695 + $0xb0] sm:$0xff]
        %v7719 = vld [vmem:[%s7695 + $0xb8] sm:$0xff]
        %v7720 = vld [vmem:[%s7695 + $0xc0] sm:$0xff]
        %v7721 = vld [vmem:[%s7695 + $0xc8] sm:$0xff]
        %v7722 = vld [vmem:[%s7695 + $0xd0] sm:$0xff]
        %v7723 = vld [vmem:[%s7695 + $0xd8] sm:$0xff]
        %v7732 = vcombine.low %v7680, %v7682
        %v7733 = vcombine.low %v7684, %v7686
        %v7734 = vcombine.low %v7688, %v7690
        %v7735 = vcombine.low %v7692, %v7694
        %v7737 = vunpack.c.l.s4 1966171168
        %v7738 = vunpack.c.0.s8 %v7737
        %v7739 = vlaneseq
        %v7740 = vshrl.u32 %v7739, 7
        %v7741 = vsub.s32 %v7738, %v7740
        %v7742 = vrot.slane %v7732, %v7741
        %v7744 = vunpack.c.l.s4 1966171168
        %v7745 = vunpack.c.0.s8 %v7744
        %v7746 = vlaneseq
        %v7747 = vshrl.u32 %v7746, 7
        %v7748 = vsub.s32 %v7745, %v7747
        %v7749 = vrot.slane %v7733, %v7748
        %v7751 = vunpack.c.l.s4 1966171168
        %v7752 = vunpack.c.0.s8 %v7751
        %v7753 = vlaneseq
        %v7754 = vshrl.u32 %v7753, 7
        %v7755 = vsub.s32 %v7752, %v7754
        %v7756 = vrot.slane %v7734, %v7755
        %v7758 = vunpack.c.l.s4 1966171168
        %v7759 = vunpack.c.0.s8 %v7758
        %v7760 = vlaneseq
        %v7761 = vshrl.u32 %v7760, 7
        %v7762 = vsub.s32 %v7759, %v7761
        %v7763 = vrot.slane %v7735, %v7762
        %v7764 = vcombine.low %v7742, %v7749
        %v7765 = vcombine.high %v7742, %v7749
        %v7766 = vcombine.low %v7756, %v7763
        %v7767 = vcombine.high %v7756, %v7763
        %v7769 = vunpack.c.l.s4 1966171168
        %v7770 = vunpack.c.0.s8 %v7769
        %v7771 = vlaneseq
        %v7772 = vshrl.u32 %v7771, 7
        %v7773 = vsub.s32 %v7770, %v7772
        %v7774 = vrot.slane %v7764, %v7773
        %v7776 = vunpack.c.l.s4 1966171168
        %v7777 = vunpack.c.0.s8 %v7776
        %v7778 = vlaneseq
        %v7779 = vshrl.u32 %v7778, 7
        %v7780 = vsub.s32 %v7777, %v7779
        %v7781 = vrot.slane %v7765, %v7780
        %v7783 = vunpack.c.l.s4 1966171168
        %v7784 = vunpack.c.0.s8 %v7783
        %v7785 = vlaneseq
        %v7786 = vshrl.u32 %v7785, 7
        %v7787 = vsub.s32 %v7784, %v7786
        %v7788 = vrot.slane %v7766, %v7787
        %v7790 = vunpack.c.l.s4 1966171168
        %v7791 = vunpack.c.0.s8 %v7790
        %v7792 = vlaneseq
        %v7793 = vshrl.u32 %v7792, 7
        %v7794 = vsub.s32 %v7791, %v7793
        %v7795 = vrot.slane %v7767, %v7794
        %v7796 = vcombine.low %v7774, %v7788
        %v7797 = vcombine.low %v7781, %v7795
        %v7799 = vsel %vm5913, %v7797, 0
        %7801 = vmatprep.subr.mxu0 0.0
        %7802 = vmatpush1.msra.mxu0 %v7696
        %7803 = vmatprep.subr.mxu0 0.0
        %7804 = vmatpush1.msra.mxu0 %v7697
        %7805 = vmatprep.subr.mxu0 0.0
        %7806 = vmatpush1.msra.mxu0 %v7698
        %7807 = vmatprep.subr.mxu0 0.0
        %7808 = vmatpush1.msra.mxu0 %v7699
        %7809 = vmatprep.subr.mxu0 0.0
        %7810 = vmatpush1.msra.mxu0 %v7700
        %7811 = vmatprep.subr.mxu0 0.0
        %7812 = vmatpush1.msra.mxu0 %v7701
        %7813 = vmatprep.subr.mxu0 0.0
        %7814 = vmatpush1.msra.mxu0 %v7702
        %7815 = vmatprep.subr.mxu0 0.0
        %7816 = vmatpush1.msra.mxu0 %v7703
        %7817 = vmatprep.subr.mxu0 0.0
        %7818 = vmatpush1.msra.mxu0 %v7704
        %7819 = vmatprep.subr.mxu0 0.0
        %7820 = vmatpush1.msra.mxu0 %v7705
        %7821 = vmatprep.subr.mxu0 0.0
        %7822 = vmatpush1.msra.mxu0 %v7706
        %7823 = vmatprep.subr.mxu0 0.0
        %7824 = vmatpush1.msra.mxu0 %v7707
        %7825 = vmatprep.subr.mxu0 0.0
        %7826 = vmatpush1.msra.mxu0 %v7708
        %7827 = vmatprep.subr.mxu0 0.0
        %7828 = vmatpush1.msra.mxu0 %v7709
        %7829 = vmatprep.subr.mxu0 0.0
        %7830 = vmatpush1.msra.mxu0 %v7710
        %7831 = vmatprep.subr.mxu0 0.0
        %7832 = vmatpush1.msra.mxu0 %v7711
        %7833 = vmatprep.subr.mxu0 0.0
        %7834 = vmatpush1.msra.mxu0 %v7712
        %7835 = vmatprep.subr.mxu0 0.0
        %7836 = vmatpush1.msra.mxu0 %v7713
        %7837 = vmatprep.subr.mxu0 0.0
        %7838 = vmatpush1.msra.mxu0 %v7714
        %7839 = vmatprep.subr.mxu0 0.0
        %7840 = vmatpush1.msra.mxu0 %v7715
        %7841 = vmatprep.subr.mxu0 0.0
        %7842 = vmatpush1.msra.mxu0 %v7716
        %7843 = vmatprep.subr.mxu0 0.0
        %7844 = vmatpush1.msra.mxu0 %v7717
        %7845 = vmatprep.subr.mxu0 0.0
        %7846 = vmatpush1.msra.mxu0 %v7718
        %7847 = vmatprep.subr.mxu0 0.0
        %7848 = vmatpush1.msra.mxu0 %v7719
        %7849 = vmatprep.subr.mxu0 0.0
        %7850 = vmatpush1.msra.mxu0 %v7720
        %7851 = vmatprep.subr.mxu0 0.0
        %7852 = vmatpush1.msra.mxu0 %v7721
        %7853 = vmatprep.subr.mxu0 0.0
        %7854 = vmatpush1.msra.mxu0 %v7722
        %7855 = vmatprep.subr.mxu0 0.0
        %7856 = vmatpush1.msra.mxu0 %v7723
        %7857 = vmatprep.subr.mxu0 0.0
        %7858 = vmatpush1.msra.mxu0 0.0
        %7859 = vmatprep.subr.mxu0 0.0
        %7860 = vmatpush1.msra.mxu0 0.0
        %7861 = vmatprep.subr.mxu0 0.0
        %7862 = vmatpush1.msra.mxu0 0.0
        %7863 = vmatprep.subr.mxu0 0.0
        %7864 = vmatpush1.msra.mxu0 0.0
        %7865 = vmatprep.mubr.f32.mxu0 %v7799
        %7866 = vmatmul.mubr.f32.gmra.mrb[0].mxu0 %v7796
        %v7867 = vpop.f32.mrb[0].mxu0
        %v7868 = vadd.f32 0.0, %v7867
        %v7869 = vpop.f32.mrb[0].mxu0
        %7870 = vdwg.mxu0
        %v7871 = vadd.f32 %v7678, %v7868
        %s7872 = scalar_lea.vmem %s323, 18
        %v7873 = vld [vmem:[%s7872] ss:$8 sm:$0x3]
        %s7874 = scalar_lea.vmem %s323, 50
        %v7875 = vld [vmem:[%s7874] ss:$8 sm:$0x3]
        %s7876 = scalar_lea.vmem %s323, 82
        %v7877 = vld [vmem:[%s7876] ss:$8 sm:$0x3]
        %s7878 = scalar_lea.vmem %s323, 114
        %v7879 = vld [vmem:[%s7878] ss:$8 sm:$0x3]
        %s7880 = scalar_lea.vmem %s323, 146
        %v7881 = vld [vmem:[%s7880] ss:$8 sm:$0x3]
        %s7882 = scalar_lea.vmem %s323, 178
        %v7883 = vld [vmem:[%s7882] ss:$8 sm:$0x3]
        %s7884 = scalar_lea.vmem %s323, 210
        %v7885 = vld [vmem:[%s7884] ss:$8 sm:$0x3]
        %s7886 = scalar_lea.vmem %s323, 242
        %v7887 = vld [vmem:[%s7886] ss:$8 sm:$0x3]
        %s7888 = scalar_lea.vmem %s5, 2240
        %v7889 = vld [vmem:[%s7888] sm:$0xff]
        %v7890 = vld [vmem:[%s7888 + $0x8] sm:$0xff]
        %v7891 = vld [vmem:[%s7888 + $0x10] sm:$0xff]
        %v7892 = vld [vmem:[%s7888 + $0x18] sm:$0xff]
        %v7893 = vld [vmem:[%s7888 + $0x20] sm:$0xff]
        %v7894 = vld [vmem:[%s7888 + $0x28] sm:$0xff]
        %v7895 = vld [vmem:[%s7888 + $0x30] sm:$0xff]
        %v7896 = vld [vmem:[%s7888 + $0x38] sm:$0xff]
        %v7897 = vld [vmem:[%s7888 + $0x40] sm:$0xff]
        %v7898 = vld [vmem:[%s7888 + $0x48] sm:$0xff]
        %v7899 = vld [vmem:[%s7888 + $0x50] sm:$0xff]
        %v7900 = vld [vmem:[%s7888 + $0x58] sm:$0xff]
        %v7901 = vld [vmem:[%s7888 + $0x60] sm:$0xff]
        %v7902 = vld [vmem:[%s7888 + $0x68] sm:$0xff]
        %v7903 = vld [vmem:[%s7888 + $0x70] sm:$0xff]
        %v7904 = vld [vmem:[%s7888 + $0x78] sm:$0xff]
        %v7905 = vld [vmem:[%s7888 + $0x80] sm:$0xff]
        %v7906 = vld [vmem:[%s7888 + $0x88] sm:$0xff]
        %v7907 = vld [vmem:[%s7888 + $0x90] sm:$0xff]
        %v7908 = vld [vmem:[%s7888 + $0x98] sm:$0xff]
        %v7909 = vld [vmem:[%s7888 + $0xa0] sm:$0xff]
        %v7910 = vld [vmem:[%s7888 + $0xa8] sm:$0xff]
        %v7911 = vld [vmem:[%s7888 + $0xb0] sm:$0xff]
        %v7912 = vld [vmem:[%s7888 + $0xb8] sm:$0xff]
        %v7913 = vld [vmem:[%s7888 + $0xc0] sm:$0xff]
        %v7914 = vld [vmem:[%s7888 + $0xc8] sm:$0xff]
        %v7915 = vld [vmem:[%s7888 + $0xd0] sm:$0xff]
        %v7916 = vld [vmem:[%s7888 + $0xd8] sm:$0xff]
        %v7925 = vcombine.low %v7873, %v7875
        %v7926 = vcombine.low %v7877, %v7879
        %v7927 = vcombine.low %v7881, %v7883
        %v7928 = vcombine.low %v7885, %v7887
        %v7930 = vunpack.c.l.s4 1966171168
        %v7931 = vunpack.c.0.s8 %v7930
        %v7932 = vlaneseq
        %v7933 = vshrl.u32 %v7932, 7
        %v7934 = vsub.s32 %v7931, %v7933
        %v7935 = vrot.slane %v7925, %v7934
        %v7937 = vunpack.c.l.s4 1966171168
        %v7938 = vunpack.c.0.s8 %v7937
        %v7939 = vlaneseq
        %v7940 = vshrl.u32 %v7939, 7
        %v7941 = vsub.s32 %v7938, %v7940
        %v7942 = vrot.slane %v7926, %v7941
        %v7944 = vunpack.c.l.s4 1966171168
        %v7945 = vunpack.c.0.s8 %v7944
        %v7946 = vlaneseq
        %v7947 = vshrl.u32 %v7946, 7
        %v7948 = vsub.s32 %v7945, %v7947
        %v7949 = vrot.slane %v7927, %v7948
        %v7951 = vunpack.c.l.s4 1966171168
        %v7952 = vunpack.c.0.s8 %v7951
        %v7953 = vlaneseq
        %v7954 = vshrl.u32 %v7953, 7
        %v7955 = vsub.s32 %v7952, %v7954
        %v7956 = vrot.slane %v7928, %v7955
        %v7957 = vcombine.low %v7935, %v7942
        %v7958 = vcombine.high %v7935, %v7942
        %v7959 = vcombine.low %v7949, %v7956
        %v7960 = vcombine.high %v7949, %v7956
        %v7962 = vunpack.c.l.s4 1966171168
        %v7963 = vunpack.c.0.s8 %v7962
        %v7964 = vlaneseq
        %v7965 = vshrl.u32 %v7964, 7
        %v7966 = vsub.s32 %v7963, %v7965
        %v7967 = vrot.slane %v7957, %v7966
        %v7969 = vunpack.c.l.s4 1966171168
        %v7970 = vunpack.c.0.s8 %v7969
        %v7971 = vlaneseq
        %v7972 = vshrl.u32 %v7971, 7
        %v7973 = vsub.s32 %v7970, %v7972
        %v7974 = vrot.slane %v7958, %v7973
        %v7976 = vunpack.c.l.s4 1966171168
        %v7977 = vunpack.c.0.s8 %v7976
        %v7978 = vlaneseq
        %v7979 = vshrl.u32 %v7978, 7
        %v7980 = vsub.s32 %v7977, %v7979
        %v7981 = vrot.slane %v7959, %v7980
        %v7983 = vunpack.c.l.s4 1966171168
        %v7984 = vunpack.c.0.s8 %v7983
        %v7985 = vlaneseq
        %v7986 = vshrl.u32 %v7985, 7
        %v7987 = vsub.s32 %v7984, %v7986
        %v7988 = vrot.slane %v7960, %v7987
        %v7989 = vcombine.low %v7967, %v7981
        %v7990 = vcombine.low %v7974, %v7988
        %v7992 = vsel %vm5913, %v7990, 0
        %7994 = vmatprep.subr.mxu0 0.0
        %7995 = vmatpush1.msra.mxu0 %v7889
        %7996 = vmatprep.subr.mxu0 0.0
        %7997 = vmatpush1.msra.mxu0 %v7890
        %7998 = vmatprep.subr.mxu0 0.0
        %7999 = vmatpush1.msra.mxu0 %v7891
        %8000 = vmatprep.subr.mxu0 0.0
        %8001 = vmatpush1.msra.mxu0 %v7892
        %8002 = vmatprep.subr.mxu0 0.0
        %8003 = vmatpush1.msra.mxu0 %v7893
        %8004 = vmatprep.subr.mxu0 0.0
        %8005 = vmatpush1.msra.mxu0 %v7894
        %8006 = vmatprep.subr.mxu0 0.0
        %8007 = vmatpush1.msra.mxu0 %v7895
        %8008 = vmatprep.subr.mxu0 0.0
        %8009 = vmatpush1.msra.mxu0 %v7896
        %8010 = vmatprep.subr.mxu0 0.0
        %8011 = vmatpush1.msra.mxu0 %v7897
        %8012 = vmatprep.subr.mxu0 0.0
        %8013 = vmatpush1.msra.mxu0 %v7898
        %8014 = vmatprep.subr.mxu0 0.0
        %8015 = vmatpush1.msra.mxu0 %v7899
        %8016 = vmatprep.subr.mxu0 0.0
        %8017 = vmatpush1.msra.mxu0 %v7900
        %8018 = vmatprep.subr.mxu0 0.0
        %8019 = vmatpush1.msra.mxu0 %v7901
        %8020 = vmatprep.subr.mxu0 0.0
        %8021 = vmatpush1.msra.mxu0 %v7902
        %8022 = vmatprep.subr.mxu0 0.0
        %8023 = vmatpush1.msra.mxu0 %v7903
        %8024 = vmatprep.subr.mxu0 0.0
        %8025 = vmatpush1.msra.mxu0 %v7904
        %8026 = vmatprep.subr.mxu0 0.0
        %8027 = vmatpush1.msra.mxu0 %v7905
        %8028 = vmatprep.subr.mxu0 0.0
        %8029 = vmatpush1.msra.mxu0 %v7906
        %8030 = vmatprep.subr.mxu0 0.0
        %8031 = vmatpush1.msra.mxu0 %v7907
        %8032 = vmatprep.subr.mxu0 0.0
        %8033 = vmatpush1.msra.mxu0 %v7908
        %8034 = vmatprep.subr.mxu0 0.0
        %8035 = vmatpush1.msra.mxu0 %v7909
        %8036 = vmatprep.subr.mxu0 0.0
        %8037 = vmatpush1.msra.mxu0 %v7910
        %8038 = vmatprep.subr.mxu0 0.0
        %8039 = vmatpush1.msra.mxu0 %v7911
        %8040 = vmatprep.subr.mxu0 0.0
        %8041 = vmatpush1.msra.mxu0 %v7912
        %8042 = vmatprep.subr.mxu0 0.0
        %8043 = vmatpush1.msra.mxu0 %v7913
        %8044 = vmatprep.subr.mxu0 0.0
        %8045 = vmatpush1.msra.mxu0 %v7914
        %8046 = vmatprep.subr.mxu0 0.0
        %8047 = vmatpush1.msra.mxu0 %v7915
        %8048 = vmatprep.subr.mxu0 0.0
        %8049 = vmatpush1.msra.mxu0 %v7916
        %8050 = vmatprep.subr.mxu0 0.0
        %8051 = vmatpush1.msra.mxu0 0.0
        %8052 = vmatprep.subr.mxu0 0.0
        %8053 = vmatpush1.msra.mxu0 0.0
        %8054 = vmatprep.subr.mxu0 0.0
        %8055 = vmatpush1.msra.mxu0 0.0
        %8056 = vmatprep.subr.mxu0 0.0
        %8057 = vmatpush1.msra.mxu0 0.0
        %8058 = vmatprep.mubr.f32.mxu0 %v7992
        %8059 = vmatmul.mubr.f32.gmra.mrb[0].mxu0 %v7989
        %v8060 = vpop.f32.mrb[0].mxu0
        %v8061 = vadd.f32 0.0, %v8060
        %v8062 = vpop.f32.mrb[0].mxu0
        %8063 = vdwg.mxu0
        %v8064 = vadd.f32 %v7871, %v8061
        %s8065 = scalar_lea.vmem %s323, 19
        %v8066 = vld [vmem:[%s8065] ss:$8 sm:$0x3]
        %s8067 = scalar_lea.vmem %s323, 51
        %v8068 = vld [vmem:[%s8067] ss:$8 sm:$0x3]
        %s8069 = scalar_lea.vmem %s323, 83
        %v8070 = vld [vmem:[%s8069] ss:$8 sm:$0x3]
        %s8071 = scalar_lea.vmem %s323, 115
        %v8072 = vld [vmem:[%s8071] ss:$8 sm:$0x3]
        %s8073 = scalar_lea.vmem %s323, 147
        %v8074 = vld [vmem:[%s8073] ss:$8 sm:$0x3]
        %s8075 = scalar_lea.vmem %s323, 179
        %v8076 = vld [vmem:[%s8075] ss:$8 sm:$0x3]
        %s8077 = scalar_lea.vmem %s323, 211
        %v8078 = vld [vmem:[%s8077] ss:$8 sm:$0x3]
        %s8079 = scalar_lea.vmem %s323, 243
        %v8080 = vld [vmem:[%s8079] ss:$8 sm:$0x3]
        %s8081 = scalar_lea.vmem %s5, 2464
        %v8082 = vld [vmem:[%s8081] sm:$0xff]
        %v8083 = vld [vmem:[%s8081 + $0x8] sm:$0xff]
        %v8084 = vld [vmem:[%s8081 + $0x10] sm:$0xff]
        %v8085 = vld [vmem:[%s8081 + $0x18] sm:$0xff]
        %v8086 = vld [vmem:[%s8081 + $0x20] sm:$0xff]
        %v8087 = vld [vmem:[%s8081 + $0x28] sm:$0xff]
        %v8088 = vld [vmem:[%s8081 + $0x30] sm:$0xff]
        %v8089 = vld [vmem:[%s8081 + $0x38] sm:$0xff]
        %v8090 = vld [vmem:[%s8081 + $0x40] sm:$0xff]
        %v8091 = vld [vmem:[%s8081 + $0x48] sm:$0xff]
        %v8092 = vld [vmem:[%s8081 + $0x50] sm:$0xff]
        %v8093 = vld [vmem:[%s8081 + $0x58] sm:$0xff]
        %v8094 = vld [vmem:[%s8081 + $0x60] sm:$0xff]
        %v8095 = vld [vmem:[%s8081 + $0x68] sm:$0xff]
        %v8096 = vld [vmem:[%s8081 + $0x70] sm:$0xff]
        %v8097 = vld [vmem:[%s8081 + $0x78] sm:$0xff]
        %v8098 = vld [vmem:[%s8081 + $0x80] sm:$0xff]
        %v8099 = vld [vmem:[%s8081 + $0x88] sm:$0xff]
        %v8100 = vld [vmem:[%s8081 + $0x90] sm:$0xff]
        %v8101 = vld [vmem:[%s8081 + $0x98] sm:$0xff]
        %v8102 = vld [vmem:[%s8081 + $0xa0] sm:$0xff]
        %v8103 = vld [vmem:[%s8081 + $0xa8] sm:$0xff]
        %v8104 = vld [vmem:[%s8081 + $0xb0] sm:$0xff]
        %v8105 = vld [vmem:[%s8081 + $0xb8] sm:$0xff]
        %v8106 = vld [vmem:[%s8081 + $0xc0] sm:$0xff]
        %v8107 = vld [vmem:[%s8081 + $0xc8] sm:$0xff]
        %v8108 = vld [vmem:[%s8081 + $0xd0] sm:$0xff]
        %v8109 = vld [vmem:[%s8081 + $0xd8] sm:$0xff]
        %v8118 = vcombine.low %v8066, %v8068
        %v8119 = vcombine.low %v8070, %v8072
        %v8120 = vcombine.low %v8074, %v8076
        %v8121 = vcombine.low %v8078, %v8080
        %v8123 = vunpack.c.l.s4 1966171168
        %v8124 = vunpack.c.0.s8 %v8123
        %v8125 = vlaneseq
        %v8126 = vshrl.u32 %v8125, 7
        %v8127 = vsub.s32 %v8124, %v8126
        %v8128 = vrot.slane %v8118, %v8127
        %v8130 = vunpack.c.l.s4 1966171168
        %v8131 = vunpack.c.0.s8 %v8130
        %v8132 = vlaneseq
        %v8133 = vshrl.u32 %v8132, 7
        %v8134 = vsub.s32 %v8131, %v8133
        %v8135 = vrot.slane %v8119, %v8134
        %v8137 = vunpack.c.l.s4 1966171168
        %v8138 = vunpack.c.0.s8 %v8137
        %v8139 = vlaneseq
        %v8140 = vshrl.u32 %v8139, 7
        %v8141 = vsub.s32 %v8138, %v8140
        %v8142 = vrot.slane %v8120, %v8141
        %v8144 = vunpack.c.l.s4 1966171168
        %v8145 = vunpack.c.0.s8 %v8144
        %v8146 = vlaneseq
        %v8147 = vshrl.u32 %v8146, 7
        %v8148 = vsub.s32 %v8145, %v8147
        %v8149 = vrot.slane %v8121, %v8148
        %v8150 = vcombine.low %v8128, %v8135
        %v8151 = vcombine.high %v8128, %v8135
        %v8152 = vcombine.low %v8142, %v8149
        %v8153 = vcombine.high %v8142, %v8149
        %v8155 = vunpack.c.l.s4 1966171168
        %v8156 = vunpack.c.0.s8 %v8155
        %v8157 = vlaneseq
        %v8158 = vshrl.u32 %v8157, 7
        %v8159 = vsub.s32 %v8156, %v8158
        %v8160 = vrot.slane %v8150, %v8159
        %v8162 = vunpack.c.l.s4 1966171168
        %v8163 = vunpack.c.0.s8 %v8162
        %v8164 = vlaneseq
        %v8165 = vshrl.u32 %v8164, 7
        %v8166 = vsub.s32 %v8163, %v8165
        %v8167 = vrot.slane %v8151, %v8166
        %v8169 = vunpack.c.l.s4 1966171168
        %v8170 = vunpack.c.0.s8 %v8169
        %v8171 = vlaneseq
        %v8172 = vshrl.u32 %v8171, 7
        %v8173 = vsub.s32 %v8170, %v8172
        %v8174 = vrot.slane %v8152, %v8173
        %v8176 = vunpack.c.l.s4 1966171168
        %v8177 = vunpack.c.0.s8 %v8176
        %v8178 = vlaneseq
        %v8179 = vshrl.u32 %v8178, 7
        %v8180 = vsub.s32 %v8177, %v8179
        %v8181 = vrot.slane %v8153, %v8180
        %v8182 = vcombine.low %v8160, %v8174
        %v8183 = vcombine.low %v8167, %v8181
        %v8185 = vsel %vm5913, %v8183, 0
        %8187 = vmatprep.subr.mxu0 0.0
        %8188 = vmatpush1.msra.mxu0 %v8082
        %8189 = vmatprep.subr.mxu0 0.0
        %8190 = vmatpush1.msra.mxu0 %v8083
        %8191 = vmatprep.subr.mxu0 0.0
        %8192 = vmatpush1.msra.mxu0 %v8084
        %8193 = vmatprep.subr.mxu0 0.0
        %8194 = vmatpush1.msra.mxu0 %v8085
        %8195 = vmatprep.subr.mxu0 0.0
        %8196 = vmatpush1.msra.mxu0 %v8086
        %8197 = vmatprep.subr.mxu0 0.0
        %8198 = vmatpush1.msra.mxu0 %v8087
        %8199 = vmatprep.subr.mxu0 0.0
        %8200 = vmatpush1.msra.mxu0 %v8088
        %8201 = vmatprep.subr.mxu0 0.0
        %8202 = vmatpush1.msra.mxu0 %v8089
        %8203 = vmatprep.subr.mxu0 0.0
        %8204 = vmatpush1.msra.mxu0 %v8090
        %8205 = vmatprep.subr.mxu0 0.0
        %8206 = vmatpush1.msra.mxu0 %v8091
        %8207 = vmatprep.subr.mxu0 0.0
        %8208 = vmatpush1.msra.mxu0 %v8092
        %8209 = vmatprep.subr.mxu0 0.0
        %8210 = vmatpush1.msra.mxu0 %v8093
        %8211 = vmatprep.subr.mxu0 0.0
        %8212 = vmatpush1.msra.mxu0 %v8094
        %8213 = vmatprep.subr.mxu0 0.0
        %8214 = vmatpush1.msra.mxu0 %v8095
        %8215 = vmatprep.subr.mxu0 0.0
        %8216 = vmatpush1.msra.mxu0 %v8096
        %8217 = vmatprep.subr.mxu0 0.0
        %8218 = vmatpush1.msra.mxu0 %v8097
        %8219 = vmatprep.subr.mxu0 0.0
        %8220 = vmatpush1.msra.mxu0 %v8098
        %8221 = vmatprep.subr.mxu0 0.0
        %8222 = vmatpush1.msra.mxu0 %v8099
        %8223 = vmatprep.subr.mxu0 0.0
        %8224 = vmatpush1.msra.mxu0 %v8100
        %8225 = vmatprep.subr.mxu0 0.0
        %8226 = vmatpush1.msra.mxu0 %v8101
        %8227 = vmatprep.subr.mxu0 0.0
        %8228 = vmatpush1.msra.mxu0 %v8102
        %8229 = vmatprep.subr.mxu0 0.0
        %8230 = vmatpush1.msra.mxu0 %v8103
        %8231 = vmatprep.subr.mxu0 0.0
        %8232 = vmatpush1.msra.mxu0 %v8104
        %8233 = vmatprep.subr.mxu0 0.0
        %8234 = vmatpush1.msra.mxu0 %v8105
        %8235 = vmatprep.subr.mxu0 0.0
        %8236 = vmatpush1.msra.mxu0 %v8106
        %8237 = vmatprep.subr.mxu0 0.0
        %8238 = vmatpush1.msra.mxu0 %v8107
        %8239 = vmatprep.subr.mxu0 0.0
        %8240 = vmatpush1.msra.mxu0 %v8108
        %8241 = vmatprep.subr.mxu0 0.0
        %8242 = vmatpush1.msra.mxu0 %v8109
        %8243 = vmatprep.subr.mxu0 0.0
        %8244 = vmatpush1.msra.mxu0 0.0
        %8245 = vmatprep.subr.mxu0 0.0
        %8246 = vmatpush1.msra.mxu0 0.0
        %8247 = vmatprep.subr.mxu0 0.0
        %8248 = vmatpush1.msra.mxu0 0.0
        %8249 = vmatprep.subr.mxu0 0.0
        %8250 = vmatpush1.msra.mxu0 0.0
        %8251 = vmatprep.mubr.f32.mxu0 %v8185
        %8252 = vmatmul.mubr.f32.gmra.mrb[0].mxu0 %v8182
        %v8253 = vpop.f32.mrb[0].mxu0
        %v8254 = vadd.f32 0.0, %v8253
        %v8255 = vpop.f32.mrb[0].mxu0
        %8256 = vdwg.mxu0
        %v8257 = vadd.f32 %v8064, %v8254
        %s8258 = scalar_lea.vmem %s323, 20
        %v8259 = vld [vmem:[%s8258] ss:$8 sm:$0x3]
        %s8260 = scalar_lea.vmem %s323, 52
        %v8261 = vld [vmem:[%s8260] ss:$8 sm:$0x3]
        %s8262 = scalar_lea.vmem %s323, 84
        %v8263 = vld [vmem:[%s8262] ss:$8 sm:$0x3]
        %s8264 = scalar_lea.vmem %s323, 116
        %v8265 = vld [vmem:[%s8264] ss:$8 sm:$0x3]
        %s8266 = scalar_lea.vmem %s323, 148
        %v8267 = vld [vmem:[%s8266] ss:$8 sm:$0x3]
        %s8268 = scalar_lea.vmem %s323, 180
        %v8269 = vld [vmem:[%s8268] ss:$8 sm:$0x3]
        %s8270 = scalar_lea.vmem %s323, 212
        %v8271 = vld [vmem:[%s8270] ss:$8 sm:$0x3]
        %s8272 = scalar_lea.vmem %s323, 244
        %v8273 = vld [vmem:[%s8272] ss:$8 sm:$0x3]
        %s8274 = scalar_lea.vmem %s5, 2688
        %v8275 = vld [vmem:[%s8274] sm:$0xff]
        %v8276 = vld [vmem:[%s8274 + $0x8] sm:$0xff]
        %v8277 = vld [vmem:[%s8274 + $0x10] sm:$0xff]
        %v8278 = vld [vmem:[%s8274 + $0x18] sm:$0xff]
        %v8279 = vld [vmem:[%s8274 + $0x20] sm:$0xff]
        %v8280 = vld [vmem:[%s8274 + $0x28] sm:$0xff]
        %v8281 = vld [vmem:[%s8274 + $0x30] sm:$0xff]
        %v8282 = vld [vmem:[%s8274 + $0x38] sm:$0xff]
        %v8283 = vld [vmem:[%s8274 + $0x40] sm:$0xff]
        %v8284 = vld [vmem:[%s8274 + $0x48] sm:$0xff]
        %v8285 = vld [vmem:[%s8274 + $0x50] sm:$0xff]
        %v8286 = vld [vmem:[%s8274 + $0x58] sm:$0xff]
        %v8287 = vld [vmem:[%s8274 + $0x60] sm:$0xff]
        %v8288 = vld [vmem:[%s8274 + $0x68] sm:$0xff]
        %v8289 = vld [vmem:[%s8274 + $0x70] sm:$0xff]
        %v8290 = vld [vmem:[%s8274 + $0x78] sm:$0xff]
        %v8291 = vld [vmem:[%s8274 + $0x80] sm:$0xff]
        %v8292 = vld [vmem:[%s8274 + $0x88] sm:$0xff]
        %v8293 = vld [vmem:[%s8274 + $0x90] sm:$0xff]
        %v8294 = vld [vmem:[%s8274 + $0x98] sm:$0xff]
        %v8295 = vld [vmem:[%s8274 + $0xa0] sm:$0xff]
        %v8296 = vld [vmem:[%s8274 + $0xa8] sm:$0xff]
        %v8297 = vld [vmem:[%s8274 + $0xb0] sm:$0xff]
        %v8298 = vld [vmem:[%s8274 + $0xb8] sm:$0xff]
        %v8299 = vld [vmem:[%s8274 + $0xc0] sm:$0xff]
        %v8300 = vld [vmem:[%s8274 + $0xc8] sm:$0xff]
        %v8301 = vld [vmem:[%s8274 + $0xd0] sm:$0xff]
        %v8302 = vld [vmem:[%s8274 + $0xd8] sm:$0xff]
        %v8311 = vcombine.low %v8259, %v8261
        %v8312 = vcombine.low %v8263, %v8265
        %v8313 = vcombine.low %v8267, %v8269
        %v8314 = vcombine.low %v8271, %v8273
        %v8316 = vunpack.c.l.s4 1966171168
        %v8317 = vunpack.c.0.s8 %v8316
        %v8318 = vlaneseq
        %v8319 = vshrl.u32 %v8318, 7
        %v8320 = vsub.s32 %v8317, %v8319
        %v8321 = vrot.slane %v8311, %v8320
        %v8323 = vunpack.c.l.s4 1966171168
        %v8324 = vunpack.c.0.s8 %v8323
        %v8325 = vlaneseq
        %v8326 = vshrl.u32 %v8325, 7
        %v8327 = vsub.s32 %v8324, %v8326
        %v8328 = vrot.slane %v8312, %v8327
        %v8330 = vunpack.c.l.s4 1966171168
        %v8331 = vunpack.c.0.s8 %v8330
        %v8332 = vlaneseq
        %v8333 = vshrl.u32 %v8332, 7
        %v8334 = vsub.s32 %v8331, %v8333
        %v8335 = vrot.slane %v8313, %v8334
        %v8337 = vunpack.c.l.s4 1966171168
        %v8338 = vunpack.c.0.s8 %v8337
        %v8339 = vlaneseq
        %v8340 = vshrl.u32 %v8339, 7
        %v8341 = vsub.s32 %v8338, %v8340
        %v8342 = vrot.slane %v8314, %v8341
        %v8343 = vcombine.low %v8321, %v8328
        %v8344 = vcombine.high %v8321, %v8328
        %v8345 = vcombine.low %v8335, %v8342
        %v8346 = vcombine.high %v8335, %v8342
        %v8348 = vunpack.c.l.s4 1966171168
        %v8349 = vunpack.c.0.s8 %v8348
        %v8350 = vlaneseq
        %v8351 = vshrl.u32 %v8350, 7
        %v8352 = vsub.s32 %v8349, %v8351
        %v8353 = vrot.slane %v8343, %v8352
        %v8355 = vunpack.c.l.s4 1966171168
        %v8356 = vunpack.c.0.s8 %v8355
        %v8357 = vlaneseq
        %v8358 = vshrl.u32 %v8357, 7
        %v8359 = vsub.s32 %v8356, %v8358
        %v8360 = vrot.slane %v8344, %v8359
        %v8362 = vunpack.c.l.s4 1966171168
        %v8363 = vunpack.c.0.s8 %v8362
        %v8364 = vlaneseq
        %v8365 = vshrl.u32 %v8364, 7
        %v8366 = vsub.s32 %v8363, %v8365
        %v8367 = vrot.slane %v8345, %v8366
        %v8369 = vunpack.c.l.s4 1966171168
        %v8370 = vunpack.c.0.s8 %v8369
        %v8371 = vlaneseq
        %v8372 = vshrl.u32 %v8371, 7
        %v8373 = vsub.s32 %v8370, %v8372
        %v8374 = vrot.slane %v8346, %v8373
        %v8375 = vcombine.low %v8353, %v8367
        %v8376 = vcombine.low %v8360, %v8374
        %v8378 = vsel %vm5913, %v8376, 0
        %8380 = vmatprep.subr.mxu0 0.0
        %8381 = vmatpush1.msra.mxu0 %v8275
        %8382 = vmatprep.subr.mxu0 0.0
        %8383 = vmatpush1.msra.mxu0 %v8276
        %8384 = vmatprep.subr.mxu0 0.0
        %8385 = vmatpush1.msra.mxu0 %v8277
        %8386 = vmatprep.subr.mxu0 0.0
        %8387 = vmatpush1.msra.mxu0 %v8278
        %8388 = vmatprep.subr.mxu0 0.0
        %8389 = vmatpush1.msra.mxu0 %v8279
        %8390 = vmatprep.subr.mxu0 0.0
        %8391 = vmatpush1.msra.mxu0 %v8280
        %8392 = vmatprep.subr.mxu0 0.0
        %8393 = vmatpush1.msra.mxu0 %v8281
        %8394 = vmatprep.subr.mxu0 0.0
        %8395 = vmatpush1.msra.mxu0 %v8282
        %8396 = vmatprep.subr.mxu0 0.0
        %8397 = vmatpush1.msra.mxu0 %v8283
        %8398 = vmatprep.subr.mxu0 0.0
        %8399 = vmatpush1.msra.mxu0 %v8284
        %8400 = vmatprep.subr.mxu0 0.0
        %8401 = vmatpush1.msra.mxu0 %v8285
        %8402 = vmatprep.subr.mxu0 0.0
        %8403 = vmatpush1.msra.mxu0 %v8286
        %8404 = vmatprep.subr.mxu0 0.0
        %8405 = vmatpush1.msra.mxu0 %v8287
        %8406 = vmatprep.subr.mxu0 0.0
        %8407 = vmatpush1.msra.mxu0 %v8288
        %8408 = vmatprep.subr.mxu0 0.0
        %8409 = vmatpush1.msra.mxu0 %v8289
        %8410 = vmatprep.subr.mxu0 0.0
        %8411 = vmatpush1.msra.mxu0 %v8290
        %8412 = vmatprep.subr.mxu0 0.0
        %8413 = vmatpush1.msra.mxu0 %v8291
        %8414 = vmatprep.subr.mxu0 0.0
        %8415 = vmatpush1.msra.mxu0 %v8292
        %8416 = vmatprep.subr.mxu0 0.0
        %8417 = vmatpush1.msra.mxu0 %v8293
        %8418 = vmatprep.subr.mxu0 0.0
        %8419 = vmatpush1.msra.mxu0 %v8294
        %8420 = vmatprep.subr.mxu0 0.0
        %8421 = vmatpush1.msra.mxu0 %v8295
        %8422 = vmatprep.subr.mxu0 0.0
        %8423 = vmatpush1.msra.mxu0 %v8296
        %8424 = vmatprep.subr.mxu0 0.0
        %8425 = vmatpush1.msra.mxu0 %v8297
        %8426 = vmatprep.subr.mxu0 0.0
        %8427 = vmatpush1.msra.mxu0 %v8298
        %8428 = vmatprep.subr.mxu0 0.0
        %8429 = vmatpush1.msra.mxu0 %v8299
        %8430 = vmatprep.subr.mxu0 0.0
        %8431 = vmatpush1.msra.mxu0 %v8300
        %8432 = vmatprep.subr.mxu0 0.0
        %8433 = vmatpush1.msra.mxu0 %v8301
        %8434 = vmatprep.subr.mxu0 0.0
        %8435 = vmatpush1.msra.mxu0 %v8302
        %8436 = vmatprep.subr.mxu0 0.0
        %8437 = vmatpush1.msra.mxu0 0.0
        %8438 = vmatprep.subr.mxu0 0.0
        %8439 = vmatpush1.msra.mxu0 0.0
        %8440 = vmatprep.subr.mxu0 0.0
        %8441 = vmatpush1.msra.mxu0 0.0
        %8442 = vmatprep.subr.mxu0 0.0
        %8443 = vmatpush1.msra.mxu0 0.0
        %8444 = vmatprep.mubr.f32.mxu0 %v8378
        %8445 = vmatmul.mubr.f32.gmra.mrb[0].mxu0 %v8375
        %v8446 = vpop.f32.mrb[0].mxu0
        %v8447 = vadd.f32 0.0, %v8446
        %v8448 = vpop.f32.mrb[0].mxu0
        %8449 = vdwg.mxu0
        %v8450 = vadd.f32 %v8257, %v8447
        %s8451 = scalar_lea.vmem %s323, 21
        %v8452 = vld [vmem:[%s8451] ss:$8 sm:$0x3]
        %s8453 = scalar_lea.vmem %s323, 53
        %v8454 = vld [vmem:[%s8453] ss:$8 sm:$0x3]
        %s8455 = scalar_lea.vmem %s323, 85
        %v8456 = vld [vmem:[%s8455] ss:$8 sm:$0x3]
        %s8457 = scalar_lea.vmem %s323, 117
        %v8458 = vld [vmem:[%s8457] ss:$8 sm:$0x3]
        %s8459 = scalar_lea.vmem %s323, 149
        %v8460 = vld [vmem:[%s8459] ss:$8 sm:$0x3]
        %s8461 = scalar_lea.vmem %s323, 181
        %v8462 = vld [vmem:[%s8461] ss:$8 sm:$0x3]
        %s8463 = scalar_lea.vmem %s323, 213
        %v8464 = vld [vmem:[%s8463] ss:$8 sm:$0x3]
        %s8465 = scalar_lea.vmem %s323, 245
        %v8466 = vld [vmem:[%s8465] ss:$8 sm:$0x3]
        %s8467 = scalar_lea.vmem %s5, 2912
        %v8468 = vld [vmem:[%s8467] sm:$0xff]
        %v8469 = vld [vmem:[%s8467 + $0x8] sm:$0xff]
        %v8470 = vld [vmem:[%s8467 + $0x10] sm:$0xff]
        %v8471 = vld [vmem:[%s8467 + $0x18] sm:$0xff]
        %v8472 = vld [vmem:[%s8467 + $0x20] sm:$0xff]
        %v8473 = vld [vmem:[%s8467 + $0x28] sm:$0xff]
        %v8474 = vld [vmem:[%s8467 + $0x30] sm:$0xff]
        %v8475 = vld [vmem:[%s8467 + $0x38] sm:$0xff]
        %v8476 = vld [vmem:[%s8467 + $0x40] sm:$0xff]
        %v8477 = vld [vmem:[%s8467 + $0x48] sm:$0xff]
        %v8478 = vld [vmem:[%s8467 + $0x50] sm:$0xff]
        %v8479 = vld [vmem:[%s8467 + $0x58] sm:$0xff]
        %v8480 = vld [vmem:[%s8467 + $0x60] sm:$0xff]
        %v8481 = vld [vmem:[%s8467 + $0x68] sm:$0xff]
        %v8482 = vld [vmem:[%s8467 + $0x70] sm:$0xff]
        %v8483 = vld [vmem:[%s8467 + $0x78] sm:$0xff]
        %v8484 = vld [vmem:[%s8467 + $0x80] sm:$0xff]
        %v8485 = vld [vmem:[%s8467 + $0x88] sm:$0xff]
        %v8486 = vld [vmem:[%s8467 + $0x90] sm:$0xff]
        %v8487 = vld [vmem:[%s8467 + $0x98] sm:$0xff]
        %v8488 = vld [vmem:[%s8467 + $0xa0] sm:$0xff]
        %v8489 = vld [vmem:[%s8467 + $0xa8] sm:$0xff]
        %v8490 = vld [vmem:[%s8467 + $0xb0] sm:$0xff]
        %v8491 = vld [vmem:[%s8467 + $0xb8] sm:$0xff]
        %v8492 = vld [vmem:[%s8467 + $0xc0] sm:$0xff]
        %v8493 = vld [vmem:[%s8467 + $0xc8] sm:$0xff]
        %v8494 = vld [vmem:[%s8467 + $0xd0] sm:$0xff]
        %v8495 = vld [vmem:[%s8467 + $0xd8] sm:$0xff]
        %v8504 = vcombine.low %v8452, %v8454
        %v8505 = vcombine.low %v8456, %v8458
        %v8506 = vcombine.low %v8460, %v8462
        %v8507 = vcombine.low %v8464, %v8466
        %v8509 = vunpack.c.l.s4 1966171168
        %v8510 = vunpack.c.0.s8 %v8509
        %v8511 = vlaneseq
        %v8512 = vshrl.u32 %v8511, 7
        %v8513 = vsub.s32 %v8510, %v8512
        %v8514 = vrot.slane %v8504, %v8513
        %v8516 = vunpack.c.l.s4 1966171168
        %v8517 = vunpack.c.0.s8 %v8516
        %v8518 = vlaneseq
        %v8519 = vshrl.u32 %v8518, 7
        %v8520 = vsub.s32 %v8517, %v8519
        %v8521 = vrot.slane %v8505, %v8520
        %v8523 = vunpack.c.l.s4 1966171168
        %v8524 = vunpack.c.0.s8 %v8523
        %v8525 = vlaneseq
        %v8526 = vshrl.u32 %v8525, 7
        %v8527 = vsub.s32 %v8524, %v8526
        %v8528 = vrot.slane %v8506, %v8527
        %v8530 = vunpack.c.l.s4 1966171168
        %v8531 = vunpack.c.0.s8 %v8530
        %v8532 = vlaneseq
        %v8533 = vshrl.u32 %v8532, 7
        %v8534 = vsub.s32 %v8531, %v8533
        %v8535 = vrot.slane %v8507, %v8534
        %v8536 = vcombine.low %v8514, %v8521
        %v8537 = vcombine.high %v8514, %v8521
        %v8538 = vcombine.low %v8528, %v8535
        %v8539 = vcombine.high %v8528, %v8535
        %v8541 = vunpack.c.l.s4 1966171168
        %v8542 = vunpack.c.0.s8 %v8541
        %v8543 = vlaneseq
        %v8544 = vshrl.u32 %v8543, 7
        %v8545 = vsub.s32 %v8542, %v8544
        %v8546 = vrot.slane %v8536, %v8545
        %v8548 = vunpack.c.l.s4 1966171168
        %v8549 = vunpack.c.0.s8 %v8548
        %v8550 = vlaneseq
        %v8551 = vshrl.u32 %v8550, 7
        %v8552 = vsub.s32 %v8549, %v8551
        %v8553 = vrot.slane %v8537, %v8552
        %v8555 = vunpack.c.l.s4 1966171168
        %v8556 = vunpack.c.0.s8 %v8555
        %v8557 = vlaneseq
        %v8558 = vshrl.u32 %v8557, 7
        %v8559 = vsub.s32 %v8556, %v8558
        %v8560 = vrot.slane %v8538, %v8559
        %v8562 = vunpack.c.l.s4 1966171168
        %v8563 = vunpack.c.0.s8 %v8562
        %v8564 = vlaneseq
        %v8565 = vshrl.u32 %v8564, 7
        %v8566 = vsub.s32 %v8563, %v8565
        %v8567 = vrot.slane %v8539, %v8566
        %v8568 = vcombine.low %v8546, %v8560
        %v8569 = vcombine.low %v8553, %v8567
        %v8571 = vsel %vm5913, %v8569, 0
        %8573 = vmatprep.subr.mxu0 0.0
        %8574 = vmatpush1.msra.mxu0 %v8468
        %8575 = vmatprep.subr.mxu0 0.0
        %8576 = vmatpush1.msra.mxu0 %v8469
        %8577 = vmatprep.subr.mxu0 0.0
        %8578 = vmatpush1.msra.mxu0 %v8470
        %8579 = vmatprep.subr.mxu0 0.0
        %8580 = vmatpush1.msra.mxu0 %v8471
        %8581 = vmatprep.subr.mxu0 0.0
        %8582 = vmatpush1.msra.mxu0 %v8472
        %8583 = vmatprep.subr.mxu0 0.0
        %8584 = vmatpush1.msra.mxu0 %v8473
        %8585 = vmatprep.subr.mxu0 0.0
        %8586 = vmatpush1.msra.mxu0 %v8474
        %8587 = vmatprep.subr.mxu0 0.0
        %8588 = vmatpush1.msra.mxu0 %v8475
        %8589 = vmatprep.subr.mxu0 0.0
        %8590 = vmatpush1.msra.mxu0 %v8476
        %8591 = vmatprep.subr.mxu0 0.0
        %8592 = vmatpush1.msra.mxu0 %v8477
        %8593 = vmatprep.subr.mxu0 0.0
        %8594 = vmatpush1.msra.mxu0 %v8478
        %8595 = vmatprep.subr.mxu0 0.0
        %8596 = vmatpush1.msra.mxu0 %v8479
        %8597 = vmatprep.subr.mxu0 0.0
        %8598 = vmatpush1.msra.mxu0 %v8480
        %8599 = vmatprep.subr.mxu0 0.0
        %8600 = vmatpush1.msra.mxu0 %v8481
        %8601 = vmatprep.subr.mxu0 0.0
        %8602 = vmatpush1.msra.mxu0 %v8482
        %8603 = vmatprep.subr.mxu0 0.0
        %8604 = vmatpush1.msra.mxu0 %v8483
        %8605 = vmatprep.subr.mxu0 0.0
        %8606 = vmatpush1.msra.mxu0 %v8484
        %8607 = vmatprep.subr.mxu0 0.0
        %8608 = vmatpush1.msra.mxu0 %v8485
        %8609 = vmatprep.subr.mxu0 0.0
        %8610 = vmatpush1.msra.mxu0 %v8486
        %8611 = vmatprep.subr.mxu0 0.0
        %8612 = vmatpush1.msra.mxu0 %v8487
        %8613 = vmatprep.subr.mxu0 0.0
        %8614 = vmatpush1.msra.mxu0 %v8488
        %8615 = vmatprep.subr.mxu0 0.0
        %8616 = vmatpush1.msra.mxu0 %v8489
        %8617 = vmatprep.subr.mxu0 0.0
        %8618 = vmatpush1.msra.mxu0 %v8490
        %8619 = vmatprep.subr.mxu0 0.0
        %8620 = vmatpush1.msra.mxu0 %v8491
        %8621 = vmatprep.subr.mxu0 0.0
        %8622 = vmatpush1.msra.mxu0 %v8492
        %8623 = vmatprep.subr.mxu0 0.0
        %8624 = vmatpush1.msra.mxu0 %v8493
        %8625 = vmatprep.subr.mxu0 0.0
        %8626 = vmatpush1.msra.mxu0 %v8494
        %8627 = vmatprep.subr.mxu0 0.0
        %8628 = vmatpush1.msra.mxu0 %v8495
        %8629 = vmatprep.subr.mxu0 0.0
        %8630 = vmatpush1.msra.mxu0 0.0
        %8631 = vmatprep.subr.mxu0 0.0
        %8632 = vmatpush1.msra.mxu0 0.0
        %8633 = vmatprep.subr.mxu0 0.0
        %8634 = vmatpush1.msra.mxu0 0.0
        %8635 = vmatprep.subr.mxu0 0.0
        %8636 = vmatpush1.msra.mxu0 0.0
        %8637 = vmatprep.mubr.f32.mxu0 %v8571
        %8638 = vmatmul.mubr.f32.gmra.mrb[0].mxu0 %v8568
        %v8639 = vpop.f32.mrb[0].mxu0
        %v8640 = vadd.f32 0.0, %v8639
        %v8641 = vpop.f32.mrb[0].mxu0
        %8642 = vdwg.mxu0
        %v8643 = vadd.f32 %v8450, %v8640
        %v8644 = vld [vmem:[%s6] sm:$0x1]
        %v8646 = vlaneseq
        %v8647 = vshrl.u32 %v8646, 7
        %v8648 = vsub.s32 0, %v8647
        %v8649 = vrot.slane %v8644, %v8648
        %v8651 = vadd.f32 %v8643, %v8649
        %8652 = vst [vmem:[%s310] sm:$0xff] %v8651
        %s8653 = smul.u32 8, %s23
        %p8654 = scmp.lt.s32.totalorder %s8653, 15
        %s8655 = scalar_select %p8654, %s8653, 15
        %s8656 = smul.addr %s8655, 4
        %s8657 = smul.addr %s8656, 8
        %s8658 = scalar_lea.vmem %s7, %s8657
        %s8659 = sand.u32 %s209, 1
        %s8660 = scalar_lea.sflag [#allocation4], %s8659
        %s8661 = sand.u32 %s209, 1
        %s8662 = smul.addr %s8661, 8
        %s8663 = scalar_lea.vmem [#allocation3], %s8662
        // Predicated region
        $region49: #{forward_pallas.1} parent=47 // pred_check
          %p8664 = pneg %p193
        $region50: #{forward_pallas.1} parent=47 // pred_check_branch
          %8666 = sbr.rel (%p8664) target = $region52
        $region51: #{forward_pallas.1} parent=47 // pred_region
          %s8667 = smul.u32 8, %s23
        $region52: #{forward_pallas.1} parent=47 // pred_fallthru
          _
        // Predicated region
        $region53: #{forward_pallas.1} parent=47 // pred_check
          %p8668 = pneg %p219
        $region54: #{forward_pallas.1} parent=47 // pred_check_branch
          %8670 = sbr.rel (%p8668) target = $region56
        $region55: #{forward_pallas.1} parent=47 // pred_region
          %s8672 = ssub.s32 128, 128
          %8673 = vsyncadd %s8660, %s8672
          %s8674 = smul.addr %s23, 128
          %s8675 = scalar_lea.hbm %s8, %s8674
          %s8677 = sshll.u32 %s8663, 4
          %s8678 = int_to_ptr.vmem [resolvable:$true] %s8677
          %8680 = dma.vmem_to_hbm [thread:$0]  %s8678, 128, %s8675, %s8660
        $region56: #{forward_pallas.1} parent=47 // pred_fallthru
          _
      $region48: #{forward_pallas.1} parent=5 // pred_fallthru
        _
      %p8681 = scmp.le.s32.totalorder 2, %s18
      // Predicated region
      $region57: #{forward_pallas.1} parent=5 // pred_check
        %p8682 = pneg %p8681
      $region58: #{forward_pallas.1} parent=5 // pred_check_branch
        %8684 = sbr.rel (%p8682) target = $region60
      $region59: #{forward_pallas.1} parent=5 // pred_region
        %s8685 = ssub.s32 %s18, 2
        // Predicated region
        $region61: #{forward_pallas.1} parent=59 // pred_check
          %p8686 = pneg %p199
        $region62: #{forward_pallas.1} parent=59 // pred_check_branch
          %8688 = sbr.rel (%p8686) target = $region64
        $region63: #{forward_pallas.1} parent=59 // pred_region
          %s8689 = smul.u32 8, %s24
          %p8690 = scmp.lt.s32.totalorder %s8689, 15
          %s8691 = scalar_select %p8690, %s8689, 15
          %s8692 = smul.addr %s8691, 4
          %s8693 = smul.addr %s8692, 8
          %s8694 = scalar_lea.vmem %s7, %s8693
        $region64: #{forward_pallas.1} parent=59 // pred_fallthru
          _
        // Predicated region
        $region65: #{forward_pallas.1} parent=59 // pred_check
          %p8695 = pneg %p225
        $region66: #{forward_pallas.1} parent=59 // pred_check_branch
          %8697 = sbr.rel (%p8695) target = $region68
        $region67: #{forward_pallas.1} parent=59 // pred_region
          %s8698 = sand.u32 %s210, 1
          %s8699 = scalar_lea.sflag [#allocation4], %s8698
          %s8700 = sand.u32 %s210, 1
          %s8701 = smul.addr %s8700, 8
          %s8702 = scalar_lea.vmem [#allocation3], %s8701
          %8703 = dma.done %s8699, 128
        $region68: #{forward_pallas.1} parent=59 // pred_fallthru
          _
      $region60: #{forward_pallas.1} parent=5 // pred_fallthru
        _
    $region6: #{forward_pallas.1} parent=1 // loop_footer
      %s22 = sadd.s32 1, %s18
    $region7: #{forward_pallas.1} parent=1 // loop_footer_branch
      %17 = sbr.rel target = $region3
    $region8: #{forward_pallas.1} parent=1 // loop_exit
      _
    %8704 = vsyncpa [#allocation4], 1
    %s8705 = scalar_lea.sflag [#allocation4], 1
    %8706 = vsyncpa %s8705, 1

</llo_original>
